<compile_context>
chip_gen: v7x
topology: tpu7x:2x2x1
jax: 0.10.0
libtpu: 0.0.40
codegen_flags: <defaults>
</compile_context>

<pallas_src>
import jax
import jax.numpy as jnp
from jax import lax
from jax.experimental import pallas as pl
from jax.experimental.pallas import tpu as pltpu
import numpy as np


def _round_up(x, m):
    return (x + m - 1) // m * m


def _row_tile(T_pad, Bp, want_rows):
    """Largest row tile Bp*d with d | T_pad and Bp*d <= want_rows (>= Bp)."""
    best = 1
    for d in range(1, T_pad + 1):
        if T_pad % d == 0 and d * Bp <= want_rows:
            best = d
    return best * Bp


def _vmem_kwargs(per_call_bytes):
    """Raise the scoped VMEM limit only when the smallest default (16 MiB on
    v5e) would not fit, keeping headroom below physical VMEM."""
    need = int(per_call_bytes)
    if need <= 14 * 1024 * 1024:
        return {}
    cap = 64 * 1024 * 1024
    try:
        cap = int(pltpu.get_tpu_info().vmem_capacity_bytes)
    except Exception:  # pragma: no cover - conservative fallback
        pass
    return {"vmem_limit_bytes": int(min(need + (4 << 20), int(cap * 0.85)))}


def _pad_gate_cols(w, H, Hp):
    """Pad the 4H gate axis per-gate (i,f,g,o) to 4*Hp so slices stay aligned."""
    lead = w.shape[:-1]
    w4 = w.reshape(lead + (4, H))
    w4 = jnp.pad(w4, [(0, 0)] * len(lead) + [(0, 0), (0, Hp - H)])
    return w4.reshape(lead + (4 * Hp,))


# ----------------------------------------------------------------------------
# Pallas kernels
# ----------------------------------------------------------------------------
def input_proj_kernel(x_ref, w_ref, b_ref, o_ref):
    """One row tile of x @ W + b (first layer: x is the embedding)."""
    o_ref[...] = (jnp.dot(x_ref[...], w_ref[...],
                          preferred_element_type=jnp.float32)
                  + b_ref[...]).astype(o_ref.dtype)


def input_proj2_kernel(xf_ref, xb_ref, wf_ref, wb_ref, b_ref, o_ref):
    """xf @ Wf + xb @ Wb + b -- consumes the two direction slabs of the
    previous layer directly (no concatenate)."""
    y = jnp.dot(xf_ref[...], wf_ref[...], preferred_element_type=jnp.float32)
    y = y + jnp.dot(xb_ref[...], wb_ref[...], preferred_element_type=jnp.float32)
    o_ref[...] = (y + b_ref[...]).astype(o_ref.dtype)


def lstm_recurrence_kernel(len_ref, gxf_ref, gxb_ref, whf_ref, whb_ref,
                           outf_ref, outb_ref,
                           hf_sc, cf_sc, hb_sc, cb_sc):
    """Fused fwd+bwd LSTM recurrence over one time chunk.

    gxf_ref : (Tc, Bp, 4*Hp) bf16  precomputed x@W_ih+b, forward gate block,
                                   time chunk c (increasing)
    gxb_ref : (Tc, Bp, 4*Hp) bf16  backward gate block, time chunk n-1-c
    whf/whb : (Hp, 4*Hp) f32       recurrent weights (zero-padded)
    len_ref : (Bp, 1) int32        valid lengths per (padded) batch row
    outf/outb: (Tc, Bp, Hp) f32    per-timestep hidden output (0 at padded steps)
    h*/c* scratch: (Bp, Hp) f32    state carried across time chunks
    """
    n_chunks = pl.num_programs(0)
    c_idx = pl.program_id(0)
    Tc, Bp, four_hp = gxf_ref.shape
    Hp = four_hp // 4

    @pl.when(c_idx == 0)
    def _():
        hf_sc[...] = jnp.zeros_like(hf_sc)
        cf_sc[...] = jnp.zeros_like(cf_sc)
        hb_sc[...] = jnp.zeros_like(hb_sc)
        cb_sc[...] = jnp.zeros_like(cb_sc)

    lens = len_ref[...]                      # (Bp, 1) int32
    w_hh_f = whf_ref[...]
    w_hh_b = whb_ref[...]
    t0_f = c_idx * Tc                        # global time offset, forward chunk
    t0_b = (n_chunks - 1 - c_idx) * Tc       # global time offset, backward chunk

    def sigmoid(x):
        # One tanh EUP pass instead of exp + reciprocal (mathematically exact).
        return 0.5 * jnp.tanh(0.5 * x) + 0.5

    def cell(gates, c_prev):
        i = sigmoid(gates[:, 0 * Hp:1 * Hp])
        f = sigmoid(gates[:, 1 * Hp:2 * Hp])
        g = jnp.tanh(gates[:, 2 * Hp:3 * Hp])
        o = sigmoid(gates[:, 3 * Hp:4 * Hp])
        c_new = f * c_prev + i * g
        h_new = o * jnp.tanh(c_new)
        return h_new, c_new

    def body(s, carry):
        hf, cf, hb, cb = carry
        sb = Tc - 1 - s                      # backward chain walks the chunk reversed
        # Two independent h @ W_hh chains per step -> the scheduler can overlap
        # MXU / EUP / VPU work of the two directions (key win on 1-TC chips).
        gates_f = gxf_ref[s].astype(jnp.float32) + jnp.dot(
            hf, w_hh_f, preferred_element_type=jnp.float32)
        gates_b = gxb_ref[sb].astype(jnp.float32) + jnp.dot(
            hb, w_hh_b, preferred_element_type=jnp.float32)
        hf_new, cf_new = cell(gates_f, cf)
        hb_new, cb_new = cell(gates_b, cb)
        mf = ((t0_f + s) < lens).astype(jnp.float32)    # (Bp, 1) {0,1}
        mb = ((t0_b + sb) < lens).astype(jnp.float32)
        outf_ref[s] = hf_new * mf                        # padded steps -> 0
        outb_ref[sb] = hb_new * mb
        # State only advances on valid steps (single multiply interpolation).
        return (hf + mf * (hf_new - hf), cf + mf * (cf_new - cf),
                hb + mb * (hb_new - hb), cb + mb * (cb_new - cb))

    init = (hf_sc[...], cf_sc[...], hb_sc[...], cb_sc[...])
    hf, cf, hb, cb = lax.fori_loop(0, Tc, body, init, unroll=min(Tc, 8))
    hf_sc[...] = hf
    cf_sc[...] = cf
    hb_sc[...] = hb
    cb_sc[...] = cb


def head_kernel(xf_ref, xb_ref, wfc_f_ref, wfc_b_ref, bfc_ref,
                wcl_ref, bcl_ref, o_ref):
    """fc -> ELU(alpha=0.01) -> classifier on a row tile of the two
    direction slabs (consumed directly, no concatenate)."""
    lin = jnp.dot(xf_ref[...], wfc_f_ref[...], preferred_element_type=jnp.float32)
    lin = lin + jnp.dot(xb_ref[...], wfc_b_ref[...], preferred_element_type=jnp.float32)
    lin = lin + bfc_ref[...]
    alpha = 0.01
    elu = jnp.where(lin > 0, lin, alpha * (jnp.exp(lin) - 1.0))
    o_ref[...] = (jnp.dot(elu, wcl_ref[...], preferred_element_type=jnp.float32)
                  + bcl_ref[...])


# ----------------------------------------------------------------------------
# Wrappers
# ----------------------------------------------------------------------------
def input_projection(x_parts, w_parts, bias, tile, out_dtype=jnp.bfloat16):
    """sum_i x_parts[i] @ w_parts[i] + bias, row-tiled; bf16 output."""
    N = x_parts[0].shape[0]
    M = bias.shape[1]
    kernel = input_proj_kernel if len(x_parts) == 1 else input_proj2_kernel
    in_specs = [pl.BlockSpec((tile, x.shape[1]), lambda i: (i, 0)) for x in x_parts]
    in_specs += [pl.BlockSpec(w.shape, lambda i: (0, 0)) for w in w_parts]
    in_specs += [pl.BlockSpec((1, M), lambda i: (0, 0))]
    est = (sum(tile * x.shape[1] * 4 * 2 for x in x_parts)
           + sum(w.shape[0] * w.shape[1] * 4 * 2 for w in w_parts)
           + tile * M * 2 * 2 + tile * M * 4 + (1 << 20))
    return pl.pallas_call(
        kernel,
        out_shape=jax.ShapeDtypeStruct((N, M), out_dtype),
        grid=(N // tile,),
        in_specs=in_specs,
        out_specs=pl.BlockSpec((tile, M), lambda i: (i, 0)),
        compiler_params=pltpu.CompilerParams(
            dimension_semantics=("parallel",), **_vmem_kwargs(est)),
    )(*x_parts, *w_parts, bias)


def bilstm_layer(x_parts, lens_col, lp, H, Tc, T_pad, Bp):
    """One bidirectional LSTM layer.

    x_parts : 1 flat slab (T_pad*Bp, E) for the first layer, or the previous
              layer's two lane-padded direction slabs (T_pad*Bp, Hp_in).
    Returns (out_f, out_b, Hp): two (T_pad*Bp, Hp) f32 slabs (padded rows /
    lanes / timesteps are exactly zero).
    """
    Hp = _round_up(H, 128)
    N = T_pad * Bp

    # --- Input-projection weights: (K, 8*Hp) = [fwd gates | bwd gates] -------
    if len(x_parts) == 1:
        w_parts = (jnp.concatenate([_pad_gate_cols(lp["wih_f"], H, Hp),
                                    _pad_gate_cols(lp["wih_b"], H, Hp)], axis=1),)
    else:
        Hp_in = x_parts[0].shape[1]
        H_in = lp["wih_f"].shape[0] // 2

        def part(rows):
            w = jnp.concatenate([_pad_gate_cols(lp["wih_f"][rows], H, Hp),
                                 _pad_gate_cols(lp["wih_b"][rows], H, Hp)], axis=1)
            return jnp.pad(w, ((0, Hp_in - H_in), (0, 0)))   # zero rows match zero lanes

        w_parts = (part(slice(0, H_in)), part(slice(H_in, 2 * H_in)))

    bias = jnp.concatenate([_pad_gate_cols(lp["b_f"], H, Hp),
                            _pad_gate_cols(lp["b_b"], H, Hp)], axis=1)  # (1, 8Hp)

    # --- Hoisted input projection: one gridded MXU matmul, bf16 gx -----------
    tile = _row_tile(T_pad, Bp, 1024)
    gx2d = input_projection(x_parts, w_parts, bias, tile)               # (N, 8Hp) bf16
    gx = gx2d.reshape(T_pad, Bp, 8 * Hp)                                # free reshape

    # --- Recurrent weights, zero-padded (keeps padded lanes exactly 0) -------
    whh_f = _pad_gate_cols(jnp.pad(lp["whh_f"], ((0, Hp - H), (0, 0))), H, Hp)
    whh_b = _pad_gate_cols(jnp.pad(lp["whh_b"], ((0, Hp - H), (0, 0))), H, Hp)

    # --- Time-chunked, direction-fused recurrence ----------------------------
    n_chunks = T_pad // Tc
    est = (2 * 2 * Tc * Bp * 4 * Hp * 2       # gx chunks (2 dirs, 2 buffers, bf16)
           + 2 * 2 * Tc * Bp * Hp * 4         # out chunks (2 dirs, 2 buffers)
           + 2 * 2 * Hp * 4 * Hp * 4          # recurrent weights
           + 4 * Bp * Hp * 4 + (1 << 20))
    out_f, out_b = pl.pallas_call(
        lstm_recurrence_kernel,
        out_shape=(jax.ShapeDtypeStruct((T_pad, Bp, Hp), jnp.float32),
                   jax.ShapeDtypeStruct((T_pad, Bp, Hp), jnp.float32)),
        grid=(n_chunks,),
        in_specs=[
            pl.BlockSpec((Bp, 1), lambda c: (0, 0)),
            # forward gate block of chunk c
            pl.BlockSpec((Tc, Bp, 4 * Hp), lambda c: (c, 0, 0)),
            # backward gate block of chunk n-1-c (reverse time order)
            pl.BlockSpec((Tc, Bp, 4 * Hp), lambda c: (n_chunks - 1 - c, 0, 1)),
            pl.BlockSpec((Hp, 4 * Hp), lambda c: (0, 0)),
            pl.BlockSpec((Hp, 4 * Hp), lambda c: (0, 0)),
        ],
        out_specs=[
            pl.BlockSpec((Tc, Bp, Hp), lambda c: (c, 0, 0)),
            pl.BlockSpec((Tc, Bp, Hp), lambda c: (n_chunks - 1 - c, 0, 0)),
        ],
        scratch_shapes=[pltpu.VMEM((Bp, Hp), jnp.float32)] * 4,
        compiler_params=pltpu.CompilerParams(
            dimension_semantics=("arbitrary",), **_vmem_kwargs(est)),
    )(lens_col, gx, gx, whh_f, whh_b)

    return out_f.reshape(N, Hp), out_b.reshape(N, Hp), Hp


def head(xf2d, xb2d, params, Hp, tile):
    """fc + ELU + classifier, row-tiled, lane-dense (128-wide) output.

    Consumes the two direction slabs directly with row-split, zero-padded fc
    weights (no concatenate of the LSTM output)."""
    N = xf2d.shape[0]
    H2, L = params["w_fc"].shape
    H = H2 // 2
    tag = params["w_cl"].shape[1]
    Lp = _round_up(L, 128)
    tag_p = _round_up(tag, 128)

    wfc_f = jnp.pad(params["w_fc"][:H], ((0, Hp - H), (0, Lp - L)))
    wfc_b = jnp.pad(params["w_fc"][H:], ((0, Hp - H), (0, Lp - L)))
    bfc = jnp.pad(params["b_fc"], ((0, 0), (0, Lp - L)))
    wcl = jnp.pad(params["w_cl"], ((0, Lp - L), (0, tag_p - tag)))
    bcl = jnp.pad(params["b_cl"], ((0, 0), (0, tag_p - tag)))

    est = (2 * tile * Hp * 4 * 2 + 2 * Hp * Lp * 4 * 2 + Lp * tag_p * 4 * 2
           + tile * tag_p * 4 * 2 + tile * Lp * 4 + (1 << 20))
    out = pl.pallas_call(
        head_kernel,
        out_shape=jax.ShapeDtypeStruct((N, tag_p), jnp.float32),
        grid=(N // tile,),
        in_specs=[pl.BlockSpec((tile, Hp), lambda i: (i, 0)),
                  pl.BlockSpec((tile, Hp), lambda i: (i, 0)),
                  pl.BlockSpec((Hp, Lp), lambda i: (0, 0)),
                  pl.BlockSpec((Hp, Lp), lambda i: (0, 0)),
                  pl.BlockSpec((1, Lp), lambda i: (0, 0)),
                  pl.BlockSpec((Lp, tag_p), lambda i: (0, 0)),
                  pl.BlockSpec((1, tag_p), lambda i: (0, 0))],
        out_specs=pl.BlockSpec((tile, tag_p), lambda i: (i, 0)),
        compiler_params=pltpu.CompilerParams(
            dimension_semantics=("parallel",), **_vmem_kwargs(est)),
    )(xf2d, xb2d, wfc_f, wfc_b, bfc, wcl, bcl)
    return out[:, :tag]


def bilstm_forward(params, sen, sen_len, *, t_chunk=16):
    # Embedding lookup (glue; gather stays in plain JAX).
    emb = jnp.take(params["embedding"], sen, axis=0).astype(jnp.float32)  # (B,T,E)
    B, T, E = emb.shape
    Bp = _round_up(max(B, 8), 8)
    Tc = min(t_chunk, T)
    T_pad = _round_up(T, Tc)

    x = jnp.transpose(emb, (1, 0, 2))                                     # (T,B,E)
    if T_pad != T or Bp != B:
        x = jnp.pad(x, ((0, T_pad - T), (0, Bp - B), (0, 0)))             # (T_pad,Bp,E)
    lens = jnp.pad(sen_len.astype(jnp.int32), (0, Bp - B)).reshape(Bp, 1)

    x_parts = (x.reshape(T_pad * Bp, E),)
    Hp = None
    for lp in params["lstm"]:
        H = lp["whh_f"].shape[0]
        out_f, out_b, Hp = bilstm_layer(x_parts, lens, lp, H, Tc, T_pad, Bp)
        x_parts = (out_f, out_b)

    # Dropout is identity (eval-mode).
    tile = _row_tile(T_pad, Bp, 2048)
    pred = head(x_parts[0], x_parts[1], params, Hp, tile)                 # (T_pad*Bp,tag)
    tag = params["w_cl"].shape[1]
    pred = pred.reshape(T_pad, Bp, tag)[:T, :B]
    return jnp.transpose(pred, (1, 0, 2))                                 # (B,T,tag)


# ----------------------------------------------------------------------------
# Pure-JAX reference (same math, no Pallas, no padding) for correctness check
# ----------------------------------------------------------------------------
def _cell_ref(x_t, h, c, w_i, w_h, b, H):
    gates = x_t @ w_i + h @ w_h + b
    i = jax.nn.sigmoid(gates[:, 0 * H:1 * H])
    f = jax.nn.sigmoid(gates[:, 1 * H:2 * H])
    g = jnp.tanh(gates[:, 2 * H:3 * H])
    o = jax.nn.sigmoid(gates[:, 3 * H:4 * H])
    c_new = f * c + i * g
    return o * jnp.tanh(c_new), c_new


def reference_forward(params, sen, sen_len):
    emb = jnp.take(params["embedding"], sen, axis=0).astype(jnp.float32)
    x = jnp.transpose(emb, (1, 0, 2))
    lens = sen_len.astype(jnp.int32).reshape(-1, 1)
    T, B, _ = x.shape
    for lp in params["lstm"]:
        H = lp["whh_f"].shape[0]
        h = jnp.zeros((B, H)); c = jnp.zeros((B, H))
        outs_f = []
        for t in range(T):
            h_new, c_new = _cell_ref(x[t], h, c, lp["wih_f"], lp["whh_f"], lp["b_f"], H)
            valid = t < lens
            outs_f.append(jnp.where(valid, h_new, 0.0))
            h = jnp.where(valid, h_new, h); c = jnp.where(valid, c_new, c)
        h = jnp.zeros((B, H)); c = jnp.zeros((B, H))
        outs_b = [None] * T
        for s in range(T):
            t = T - 1 - s
            h_new, c_new = _cell_ref(x[t], h, c, lp["wih_b"], lp["whh_b"], lp["b_b"], H)
            valid = t < lens
            outs_b[t] = jnp.where(valid, h_new, 0.0)
            h = jnp.where(valid, h_new, h); c = jnp.where(valid, c_new, c)
        x = jnp.concatenate([jnp.stack(outs_f), jnp.stack(outs_b)], axis=-1)
    out = jnp.transpose(x, (1, 0, 2))
    B_, T_, two_h = out.shape
    flat = out.reshape(B_ * T_, two_h)
    lin = flat @ params["w_fc"] + params["b_fc"]
    elu = jnp.where(lin > 0, lin, 0.01 * (jnp.exp(lin) - 1.0))
    pred = elu @ params["w_cl"] + params["b_cl"]
    return pred.reshape(B_, T_, -1)


# ----------------------------------------------------------------------------
# Deterministic parameter init
# ----------------------------------------------------------------------------
def init_params(key, vocab_size, embedding_dim, linear_out_dim, hidden_dim,
                lstm_layers, tag_size):
    ks = list(jax.random.split(key, 3 + lstm_layers))
    scale = 0.1
    params = {}
    params["embedding"] = scale * jax.random.normal(
        ks[0], (vocab_size, embedding_dim), jnp.float32)

    layers = []
    for l in range(lstm_layers):
        d_in = embedding_dim if l == 0 else 2 * hidden_dim
        lk = jax.random.split(ks[3 + l], 6)
        layers.append({
            # Pre-transposed: (D_in, 4H) / (H, 4H); combined bias (1, 4H).
            "wih_f": scale * jax.random.normal(lk[0], (d_in, 4 * hidden_dim), jnp.float32),
            "whh_f": scale * jax.random.normal(lk[1], (hidden_dim, 4 * hidden_dim), jnp.float32),
            "b_f":   scale * jax.random.normal(lk[2], (1, 4 * hidden_dim), jnp.float32),
            "wih_b": scale * jax.random.normal(lk[3], (d_in, 4 * hidden_dim), jnp.float32),
            "whh_b": scale * jax.random.normal(lk[4], (hidden_dim, 4 * hidden_dim), jnp.float32),
            "b_b":   scale * jax.random.normal(lk[5], (1, 4 * hidden_dim), jnp.float32),
        })
    params["lstm"] = layers

    fk = jax.random.split(ks[1], 2)
    params["w_fc"] = scale * jax.random.normal(
        fk[0], (2 * hidden_dim, linear_out_dim), jnp.float32)
    params["b_fc"] = scale * jax.random.normal(fk[1], (1, linear_out_dim), jnp.float32)

    ck = jax.random.split(ks[2], 2)
    params["w_cl"] = scale * jax.random.normal(
        ck[0], (linear_out_dim, tag_size), jnp.float32)
    params["b_cl"] = scale * jax.random.normal(ck[1], (1, tag_size), jnp.float32)
    return params


# ----------------------------------------------------------------------------
if __name__ == "__main__":
    vocab_size = 100
    embedding_dim = 32
    hidden_dim = 32
    linear_out_dim = 64
    lstm_layers = 1
    tag_size = 8
    B, T = 2, 8

    key = jax.random.PRNGKey(0)
    k_param, k_sen = jax.random.split(key)
    params = init_params(k_param, vocab_size, embedding_dim, linear_out_dim,
                         hidden_dim, lstm_layers, tag_size)

    sen = jax.random.randint(k_sen, (B, T), 0, vocab_size, dtype=jnp.int32)
    sen_len = jnp.array([T, 5], dtype=jnp.int32)   # max(sen_len) == T

    pred = jax.jit(bilstm_forward)(params, sen, sen_len)
    pred = jax.block_until_ready(pred)

    ref = reference_forward(params, sen, sen_len)
    assert pred.shape == (B, T, tag_size), pred.shape
    # gx is intentionally stored in bf16 (f32 accumulation), so allow a small
    # tolerance above pure-f32.
    np.testing.assert_allclose(np.asarray(pred), np.asarray(ref),
                               rtol=5e-3, atol=2e-3)
    print("KERNEL_OK")
</pallas_src>

<mosaic_0001>
module attributes {stable_mosaic.version = 11 : i64} {
  func.func @input_proj_kernel(%arg0: i32, %arg1: memref<64x32xf32, #tpu.memory_space<vmem>>, %arg2: memref<32x1024xf32, #tpu.memory_space<vmem>>, %arg3: memref<1x1024xf32, #tpu.memory_space<vmem>>, %arg4: memref<64x1024xbf16, #tpu.memory_space<vmem>>) attributes {dimension_semantics = [#tpu.dimension_semantics<parallel>], iteration_bounds = array<i64: 1>, scalar_prefetch = 0 : i64, scratch_operands = 0 : i64, tpu.core_type = #tpu.core_type<tc>, window_params = [{transform_indices = @transform_0, window_bounds = array<i64: 64, 32>}, {pipeline_mode = #tpu.pipeline_mode<synchronous>, transform_indices = @transform_1, window_bounds = array<i64: 32, 1024>}, {pipeline_mode = #tpu.pipeline_mode<synchronous>, transform_indices = @transform_2, window_bounds = array<i64: 1, 1024>}, {transform_indices = @transform_3, window_bounds = array<i64: 64, 1024>}]} {
    %c0 = arith.constant 0 : index
    %c0_0 = arith.constant 0 : index
    %0 = vector.load %arg1[%c0, %c0_0] : memref<64x32xf32, #tpu.memory_space<vmem>>, vector<64x32xf32>
    %c0_1 = arith.constant 0 : index
    %c0_2 = arith.constant 0 : index
    %1 = vector.load %arg2[%c0_1, %c0_2] : memref<32x1024xf32, #tpu.memory_space<vmem>>, vector<32x1024xf32>
    %cst = arith.constant dense<0.000000e+00> : vector<64x1024xf32>
    %2 = tpu.matmul %0, %1, %cst {dimension_numbers = #tpu.dot_dimension_numbers<[1], [0], [0], [1], [0, 0, 1, 1], [], []>} : vector<64x32xf32>, vector<32x1024xf32>, vector<64x1024xf32> -> vector<64x1024xf32>
    %c0_3 = arith.constant 0 : index
    %c0_4 = arith.constant 0 : index
    %3 = vector.load %arg3[%c0_3, %c0_4] : memref<1x1024xf32, #tpu.memory_space<vmem>>, vector<1x1024xf32>
    %4 = vector.broadcast %3 : vector<1x1024xf32> to vector<64x1024xf32>
    %5 = arith.addf %2, %4 : vector<64x1024xf32>
    %6 = arith.truncf %5 : vector<64x1024xf32> to vector<64x1024xbf16>
    %c0_5 = arith.constant 0 : index
    %c0_6 = arith.constant 0 : index
    %7 = vector.load %arg4[%c0_5, %c0_6] : memref<64x1024xbf16, #tpu.memory_space<vmem>>, vector<64x1024xbf16>
    tpu.vector_store %arg4[%c0_5, %c0_6], %6 {strides = array<i32>} : memref<64x1024xbf16, #tpu.memory_space<vmem>>, vector<64x1024xbf16>,
    return
  }
  func.func @transform_0(%arg0: i32) -> (i32, i32) {
    %c0_i32 = arith.constant 0 : i32
    %c0_i32_0 = arith.constant 0 : i32
    return %arg0, %c0_i32 : i32, i32
  }
  func.func @transform_1(%arg0: i32) -> (i32, i32) {
    %c0_i32 = arith.constant 0 : i32
    %c0_i32_0 = arith.constant 0 : i32
    %c0_i32_1 = arith.constant 0 : i32
    return %c0_i32, %c0_i32_0 : i32, i32
  }
  func.func @transform_2(%arg0: i32) -> (i32, i32) {
    %c0_i32 = arith.constant 0 : i32
    %c0_i32_0 = arith.constant 0 : i32
    %c0_i32_1 = arith.constant 0 : i32
    return %c0_i32, %c0_i32_0 : i32, i32
  }
  func.func @transform_3(%arg0: i32) -> (i32, i32) {
    %c0_i32 = arith.constant 0 : i32
    %c0_i32_0 = arith.constant 0 : i32
    return %arg0, %c0_i32 : i32, i32
  }
}

module attributes {stable_mosaic.version = 11 : i64} {
  func.func @head_kernel(%arg0: i32, %arg1: memref<64x128xf32, #tpu.memory_space<vmem>>, %arg2: memref<64x128xf32, #tpu.memory_space<vmem>>, %arg3: memref<128x128xf32, #tpu.memory_space<vmem>>, %arg4: memref<128x128xf32, #tpu.memory_space<vmem>>, %arg5: memref<1x128xf32, #tpu.memory_space<vmem>>, %arg6: memref<128x128xf32, #tpu.memory_space<vmem>>, %arg7: memref<1x128xf32, #tpu.memory_space<vmem>>, %arg8: memref<64x128xf32, #tpu.memory_space<vmem>>) attributes {dimension_semantics = [#tpu.dimension_semantics<parallel>], iteration_bounds = array<i64: 1>, scalar_prefetch = 0 : i64, scratch_operands = 0 : i64, tpu.core_type = #tpu.core_type<tc>, window_params = [{transform_indices = @transform_0, window_bounds = array<i64: 64, 128>}, {transform_indices = @transform_1, window_bounds = array<i64: 64, 128>}, {pipeline_mode = #tpu.pipeline_mode<synchronous>, transform_indices = @transform_2, window_bounds = array<i64: 128, 128>}, {pipeline_mode = #tpu.pipeline_mode<synchronous>, transform_indices = @transform_3, window_bounds = array<i64: 128, 128>}, {pipeline_mode = #tpu.pipeline_mode<synchronous>, transform_indices = @transform_4, window_bounds = array<i64: 1, 128>}, {pipeline_mode = #tpu.pipeline_mode<synchronous>, transform_indices = @transform_5, window_bounds = array<i64: 128, 128>}, {pipeline_mode = #tpu.pipeline_mode<synchronous>, transform_indices = @transform_6, window_bounds = array<i64: 1, 128>}, {transform_indices = @transform_7, window_bounds = array<i64: 64, 128>}]} {
    %c0 = arith.constant 0 : index
    %c0_0 = arith.constant 0 : index
    %0 = vector.load %arg1[%c0, %c0_0] : memref<64x128xf32, #tpu.memory_space<vmem>>, vector<64x128xf32>
    %c0_1 = arith.constant 0 : index
    %c0_2 = arith.constant 0 : index
    %1 = vector.load %arg3[%c0_1, %c0_2] : memref<128x128xf32, #tpu.memory_space<vmem>>, vector<128x128xf32>
    %cst = arith.constant dense<0.000000e+00> : vector<64x128xf32>
    %2 = tpu.matmul %0, %1, %cst {dimension_numbers = #tpu.dot_dimension_numbers<[1], [0], [0], [1], [0, 0, 1, 1], [], []>} : vector<64x128xf32>, vector<128x128xf32>, vector<64x128xf32> -> vector<64x128xf32>
    %c0_3 = arith.constant 0 : index
    %c0_4 = arith.constant 0 : index
    %3 = vector.load %arg2[%c0_3, %c0_4] : memref<64x128xf32, #tpu.memory_space<vmem>>, vector<64x128xf32>
    %c0_5 = arith.constant 0 : index
    %c0_6 = arith.constant 0 : index
    %4 = vector.load %arg4[%c0_5, %c0_6] : memref<128x128xf32, #tpu.memory_space<vmem>>, vector<128x128xf32>
    %cst_7 = arith.constant dense<0.000000e+00> : vector<64x128xf32>
    %5 = tpu.matmul %3, %4, %cst_7 {dimension_numbers = #tpu.dot_dimension_numbers<[1], [0], [0], [1], [0, 0, 1, 1], [], []>} : vector<64x128xf32>, vector<128x128xf32>, vector<64x128xf32> -> vector<64x128xf32>
    %6 = arith.addf %2, %5 : vector<64x128xf32>
    %c0_8 = arith.constant 0 : index
    %c0_9 = arith.constant 0 : index
    %7 = vector.load %arg5[%c0_8, %c0_9] : memref<1x128xf32, #tpu.memory_space<vmem>>, vector<1x128xf32>
    %8 = vector.broadcast %7 : vector<1x128xf32> to vector<64x128xf32>
    %9 = arith.addf %6, %8 : vector<64x128xf32>
    %cst_10 = arith.constant 0.000000e+00 : f32
    %10 = vector.broadcast %cst_10 : f32 to vector<64x128xf32>
    %11 = arith.cmpf ogt, %9, %10 : vector<64x128xf32>
    %12 = math.exp %9 : vector<64x128xf32>
    %cst_11 = arith.constant 1.000000e+00 : f32
    %13 = vector.broadcast %cst_11 : f32 to vector<64x128xf32>
    %14 = arith.subf %12, %13 : vector<64x128xf32>
    %cst_12 = arith.constant 0.00999999977 : f32
    %15 = vector.broadcast %cst_12 : f32 to vector<64x128xf32>
    %16 = arith.mulf %15, %14 : vector<64x128xf32>
    %17 = arith.select %11, %9, %16 : vector<64x128xi1>, vector<64x128xf32>
    %c0_13 = arith.constant 0 : index
    %c0_14 = arith.constant 0 : index
    %18 = vector.load %arg6[%c0_13, %c0_14] : memref<128x128xf32, #tpu.memory_space<vmem>>, vector<128x128xf32>
    %cst_15 = arith.constant dense<0.000000e+00> : vector<64x128xf32>
    %19 = tpu.matmul %17, %18, %cst_15 {dimension_numbers = #tpu.dot_dimension_numbers<[1], [0], [0], [1], [0, 0, 1, 1], [], []>} : vector<64x128xf32>, vector<128x128xf32>, vector<64x128xf32> -> vector<64x128xf32>
    %c0_16 = arith.constant 0 : index
    %c0_17 = arith.constant 0 : index
    %20 = vector.load %arg7[%c0_16, %c0_17] : memref<1x128xf32, #tpu.memory_space<vmem>>, vector<1x128xf32>
    %21 = vector.broadcast %20 : vector<1x128xf32> to vector<64x128xf32>
    %22 = arith.addf %19, %21 : vector<64x128xf32>
    %c0_18 = arith.constant 0 : index
    %c0_19 = arith.constant 0 : index
    %23 = vector.load %arg8[%c0_18, %c0_19] : memref<64x128xf32, #tpu.memory_space<vmem>>, vector<64x128xf32>
    tpu.vector_store %arg8[%c0_18, %c0_19], %22 {strides = array<i32>} : memref<64x128xf32, #tpu.memory_space<vmem>>, vector<64x128xf32>,
    return
  }
  func.func @transform_0(%arg0: i32) -> (i32, i32) {
    %c0_i32 = arith.constant 0 : i32
    %c0_i32_0 = arith.constant 0 : i32
    return %arg0, %c0_i32 : i32, i32
  }
  func.func @transform_1(%arg0: i32) -> (i32, i32) {
    %c0_i32 = arith.constant 0 : i32
    %c0_i32_0 = arith.constant 0 : i32
    return %arg0, %c0_i32 : i32, i32
  }
  func.func @transform_2(%arg0: i32) -> (i32, i32) {
    %c0_i32 = arith.constant 0 : i32
    %c0_i32_0 = arith.constant 0 : i32
    %c0_i32_1 = arith.constant 0 : i32
    return %c0_i32, %c0_i32_0 : i32, i32
  }
  func.func @transform_3(%arg0: i32) -> (i32, i32) {
    %c0_i32 = arith.constant 0 : i32
    %c0_i32_0 = arith.constant 0 : i32
    %c0_i32_1 = arith.constant 0 : i32
    return %c0_i32, %c0_i32_0 : i32, i32
  }
  func.func @transform_4(%arg0: i32) -> (i32, i32) {
    %c0_i32 = arith.constant 0 : i32
    %c0_i32_0 = arith.constant 0 : i32
    %c0_i32_1 = arith.constant 0 : i32
    return %c0_i32, %c0_i32_0 : i32, i32
  }
  func.func @transform_5(%arg0: i32) -> (i32, i32) {
    %c0_i32 = arith.constant 0 : i32
    %c0_i32_0 = arith.constant 0 : i32
    %c0_i32_1 = arith.constant 0 : i32
    return %c0_i32, %c0_i32_0 : i32, i32
  }
  func.func @transform_6(%arg0: i32) -> (i32, i32) {
    %c0_i32 = arith.constant 0 : i32
    %c0_i32_0 = arith.constant 0 : i32
    %c0_i32_1 = arith.constant 0 : i32
    return %c0_i32, %c0_i32_0 : i32, i32
  }
  func.func @transform_7(%arg0: i32) -> (i32, i32) {
    %c0_i32 = arith.constant 0 : i32
    %c0_i32_0 = arith.constant 0 : i32
    return %arg0, %c0_i32 : i32, i32
  }
}

module attributes {stable_mosaic.version = 11 : i64} {
  func.func @lstm_recurrence_kernel(%arg0: i32, %arg1: memref<8x1xi32, #tpu.memory_space<vmem>>, %arg2: memref<8x8x512xbf16, #tpu.memory_space<vmem>>, %arg3: memref<8x8x512xbf16, #tpu.memory_space<vmem>>, %arg4: memref<128x512xf32, #tpu.memory_space<vmem>>, %arg5: memref<128x512xf32, #tpu.memory_space<vmem>>, %arg6: memref<8x8x128xf32, #tpu.memory_space<vmem>>, %arg7: memref<8x8x128xf32, #tpu.memory_space<vmem>>, %arg8: memref<8x128xf32, #tpu.memory_space<vmem>>, %arg9: memref<8x128xf32, #tpu.memory_space<vmem>>, %arg10: memref<8x128xf32, #tpu.memory_space<vmem>>, %arg11: memref<8x128xf32, #tpu.memory_space<vmem>>) attributes {dimension_semantics = [#tpu.dimension_semantics<arbitrary>], iteration_bounds = array<i64: 1>, scalar_prefetch = 0 : i64, scratch_operands = 4 : i64, tpu.core_type = #tpu.core_type<tc>, window_params = [{pipeline_mode = #tpu.pipeline_mode<synchronous>, transform_indices = @transform_0, window_bounds = array<i64: 8, 1>}, {transform_indices = @transform_1, window_bounds = array<i64: 8, 8, 512>}, {transform_indices = @transform_2, window_bounds = array<i64: 8, 8, 512>}, {pipeline_mode = #tpu.pipeline_mode<synchronous>, transform_indices = @transform_3, window_bounds = array<i64: 128, 512>}, {pipeline_mode = #tpu.pipeline_mode<synchronous>, transform_indices = @transform_4, window_bounds = array<i64: 128, 512>}, {transform_indices = @transform_5, window_bounds = array<i64: 8, 8, 128>}, {transform_indices = @transform_6, window_bounds = array<i64: 8, 8, 128>}]} {
    %c0_i32 = arith.constant 0 : i32
    %0 = arith.cmpi eq, %arg0, %c0_i32 : i32
    %1 = arith.extui %0 : i1 to i32
    %c0_i32_0 = arith.constant 0 : i32
    %2 = arith.cmpi ne, %1, %c0_i32_0 : i32
    scf.if %2 {
      %cst_257 = arith.constant 0.000000e+00 : f32
      %921 = vector.broadcast %cst_257 : f32 to vector<8x128xf32>
      %c0_258 = arith.constant 0 : index
      %c0_259 = arith.constant 0 : index
      %922 = vector.load %arg8[%c0_258, %c0_259] : memref<8x128xf32, #tpu.memory_space<vmem>>, vector<8x128xf32>
      tpu.vector_store %arg8[%c0_258, %c0_259], %921 {strides = array<i32>} : memref<8x128xf32, #tpu.memory_space<vmem>>, vector<8x128xf32>,
      %cst_260 = arith.constant 0.000000e+00 : f32
      %923 = vector.broadcast %cst_260 : f32 to vector<8x128xf32>
      %c0_261 = arith.constant 0 : index
      %c0_262 = arith.constant 0 : index
      %924 = vector.load %arg9[%c0_261, %c0_262] : memref<8x128xf32, #tpu.memory_space<vmem>>, vector<8x128xf32>
      tpu.vector_store %arg9[%c0_261, %c0_262], %923 {strides = array<i32>} : memref<8x128xf32, #tpu.memory_space<vmem>>, vector<8x128xf32>,
      %cst_263 = arith.constant 0.000000e+00 : f32
      %925 = vector.broadcast %cst_263 : f32 to vector<8x128xf32>
      %c0_264 = arith.constant 0 : index
      %c0_265 = arith.constant 0 : index
      %926 = vector.load %arg10[%c0_264, %c0_265] : memref<8x128xf32, #tpu.memory_space<vmem>>, vector<8x128xf32>
      tpu.vector_store %arg10[%c0_264, %c0_265], %925 {strides = array<i32>} : memref<8x128xf32, #tpu.memory_space<vmem>>, vector<8x128xf32>,
      %cst_266 = arith.constant 0.000000e+00 : f32
      %927 = vector.broadcast %cst_266 : f32 to vector<8x128xf32>
      %c0_267 = arith.constant 0 : index
      %c0_268 = arith.constant 0 : index
      %928 = vector.load %arg11[%c0_267, %c0_268] : memref<8x128xf32, #tpu.memory_space<vmem>>, vector<8x128xf32>
      tpu.vector_store %arg11[%c0_267, %c0_268], %927 {strides = array<i32>} : memref<8x128xf32, #tpu.memory_space<vmem>>, vector<8x128xf32>,
    } else {
    }
    %c0 = arith.constant 0 : index
    %c0_1 = arith.constant 0 : index
    %3 = vector.load %arg1[%c0, %c0_1] : memref<8x1xi32, #tpu.memory_space<vmem>>, vector<8x1xi32>
    %c0_2 = arith.constant 0 : index
    %c0_3 = arith.constant 0 : index
    %4 = vector.load %arg4[%c0_2, %c0_3] : memref<128x512xf32, #tpu.memory_space<vmem>>, vector<128x512xf32>
    %c0_4 = arith.constant 0 : index
    %c0_5 = arith.constant 0 : index
    %5 = vector.load %arg5[%c0_4, %c0_5] : memref<128x512xf32, #tpu.memory_space<vmem>>, vector<128x512xf32>
    %c8_i32 = arith.constant 8 : i32
    %6 = arith.muli %arg0, %c8_i32 : i32
    %c0_i32_6 = arith.constant 0 : i32
    %7 = arith.subi %c0_i32_6, %arg0 : i32
    %c8_i32_7 = arith.constant 8 : i32
    %8 = arith.muli %7, %c8_i32_7 : i32
    %c0_8 = arith.constant 0 : index
    %c0_9 = arith.constant 0 : index
    %9 = vector.load %arg8[%c0_8, %c0_9] : memref<8x128xf32, #tpu.memory_space<vmem>>, vector<8x128xf32>
    %c0_10 = arith.constant 0 : index
    %c0_11 = arith.constant 0 : index
    %10 = vector.load %arg9[%c0_10, %c0_11] : memref<8x128xf32, #tpu.memory_space<vmem>>, vector<8x128xf32>
    %c0_12 = arith.constant 0 : index
    %c0_13 = arith.constant 0 : index
    %11 = vector.load %arg10[%c0_12, %c0_13] : memref<8x128xf32, #tpu.memory_space<vmem>>, vector<8x128xf32>
    %c0_14 = arith.constant 0 : index
    %c0_15 = arith.constant 0 : index
    %12 = vector.load %arg11[%c0_14, %c0_15] : memref<8x128xf32, #tpu.memory_space<vmem>>, vector<8x128xf32>
    %c0_i32_16 = arith.constant 0 : i32
    %c7_i32 = arith.constant 7 : i32
    %13 = arith.subi %c7_i32, %c0_i32_16 : i32
    %14 = arith.index_cast %c0_i32_16 : i32 to index
    %c0_17 = arith.constant 0 : index
    %c0_18 = arith.constant 0 : index
    %15 = vector.load %arg2[%14, %c0_17, %c0_18] : memref<8x8x512xbf16, #tpu.memory_space<vmem>>, vector<1x8x512xbf16>
    %16 = vector.shape_cast %15 : vector<1x8x512xbf16> to vector<8x512xbf16>
    %17 = arith.extf %16 : vector<8x512xbf16> to vector<8x512xf32>
    %cst = arith.constant dense<0.000000e+00> : vector<8x512xf32>
    %18 = tpu.matmul %9, %4, %cst {dimension_numbers = #tpu.dot_dimension_numbers<[1], [0], [0], [1], [0, 0, 1, 1], [], []>} : vector<8x128xf32>, vector<128x512xf32>, vector<8x512xf32> -> vector<8x512xf32>
    %19 = arith.addf %17, %18 : vector<8x512xf32>
    %20 = arith.index_cast %13 : i32 to index
    %c0_19 = arith.constant 0 : index
    %c0_20 = arith.constant 0 : index
    %21 = vector.load %arg3[%20, %c0_19, %c0_20] : memref<8x8x512xbf16, #tpu.memory_space<vmem>>, vector<1x8x512xbf16>
    %22 = vector.shape_cast %21 : vector<1x8x512xbf16> to vector<8x512xbf16>
    %23 = arith.extf %22 : vector<8x512xbf16> to vector<8x512xf32>
    %cst_21 = arith.constant dense<0.000000e+00> : vector<8x512xf32>
    %24 = tpu.matmul %11, %5, %cst_21 {dimension_numbers = #tpu.dot_dimension_numbers<[1], [0], [0], [1], [0, 0, 1, 1], [], []>} : vector<8x128xf32>, vector<128x512xf32>, vector<8x512xf32> -> vector<8x512xf32>
    %25 = arith.addf %23, %24 : vector<8x512xf32>
    %26 = vector.extract_strided_slice %19 {offsets = [0, 0], sizes = [8, 128], strides = [1, 1]} : vector<8x512xf32> to vector<8x128xf32>
    %cst_22 = arith.constant 5.000000e-01 : f32
    %27 = vector.broadcast %cst_22 : f32 to vector<8x128xf32>
    %28 = arith.mulf %27, %26 : vector<8x128xf32>
    %29 = math.tanh %28 : vector<8x128xf32>
    %cst_23 = arith.constant 5.000000e-01 : f32
    %30 = vector.broadcast %cst_23 : f32 to vector<8x128xf32>
    %31 = arith.mulf %30, %29 : vector<8x128xf32>
    %cst_24 = arith.constant 5.000000e-01 : f32
    %32 = vector.broadcast %cst_24 : f32 to vector<8x128xf32>
    %33 = arith.addf %31, %32 : vector<8x128xf32>
    %34 = vector.extract_strided_slice %19 {offsets = [0, 128], sizes = [8, 128], strides = [1, 1]} : vector<8x512xf32> to vector<8x128xf32>
    %cst_25 = arith.constant 5.000000e-01 : f32
    %35 = vector.broadcast %cst_25 : f32 to vector<8x128xf32>
    %36 = arith.mulf %35, %34 : vector<8x128xf32>
    %37 = math.tanh %36 : vector<8x128xf32>
    %cst_26 = arith.constant 5.000000e-01 : f32
    %38 = vector.broadcast %cst_26 : f32 to vector<8x128xf32>
    %39 = arith.mulf %38, %37 : vector<8x128xf32>
    %cst_27 = arith.constant 5.000000e-01 : f32
    %40 = vector.broadcast %cst_27 : f32 to vector<8x128xf32>
    %41 = arith.addf %39, %40 : vector<8x128xf32>
    %42 = vector.extract_strided_slice %19 {offsets = [0, 256], sizes = [8, 128], strides = [1, 1]} : vector<8x512xf32> to vector<8x128xf32>
    %43 = math.tanh %42 : vector<8x128xf32>
    %44 = vector.extract_strided_slice %19 {offsets = [0, 384], sizes = [8, 128], strides = [1, 1]} : vector<8x512xf32> to vector<8x128xf32>
    %cst_28 = arith.constant 5.000000e-01 : f32
    %45 = vector.broadcast %cst_28 : f32 to vector<8x128xf32>
    %46 = arith.mulf %45, %44 : vector<8x128xf32>
    %47 = math.tanh %46 : vector<8x128xf32>
    %cst_29 = arith.constant 5.000000e-01 : f32
    %48 = vector.broadcast %cst_29 : f32 to vector<8x128xf32>
    %49 = arith.mulf %48, %47 : vector<8x128xf32>
    %cst_30 = arith.constant 5.000000e-01 : f32
    %50 = vector.broadcast %cst_30 : f32 to vector<8x128xf32>
    %51 = arith.addf %49, %50 : vector<8x128xf32>
    %52 = arith.mulf %41, %10 : vector<8x128xf32>
    %53 = arith.mulf %33, %43 : vector<8x128xf32>
    %54 = arith.addf %52, %53 : vector<8x128xf32>
    %55 = math.tanh %54 : vector<8x128xf32>
    %56 = arith.mulf %51, %55 : vector<8x128xf32>
    %57 = vector.extract_strided_slice %25 {offsets = [0, 0], sizes = [8, 128], strides = [1, 1]} : vector<8x512xf32> to vector<8x128xf32>
    %cst_31 = arith.constant 5.000000e-01 : f32
    %58 = vector.broadcast %cst_31 : f32 to vector<8x128xf32>
    %59 = arith.mulf %58, %57 : vector<8x128xf32>
    %60 = math.tanh %59 : vector<8x128xf32>
    %cst_32 = arith.constant 5.000000e-01 : f32
    %61 = vector.broadcast %cst_32 : f32 to vector<8x128xf32>
    %62 = arith.mulf %61, %60 : vector<8x128xf32>
    %cst_33 = arith.constant 5.000000e-01 : f32
    %63 = vector.broadcast %cst_33 : f32 to vector<8x128xf32>
    %64 = arith.addf %62, %63 : vector<8x128xf32>
    %65 = vector.extract_strided_slice %25 {offsets = [0, 128], sizes = [8, 128], strides = [1, 1]} : vector<8x512xf32> to vector<8x128xf32>
    %cst_34 = arith.constant 5.000000e-01 : f32
    %66 = vector.broadcast %cst_34 : f32 to vector<8x128xf32>
    %67 = arith.mulf %66, %65 : vector<8x128xf32>
    %68 = math.tanh %67 : vector<8x128xf32>
    %cst_35 = arith.constant 5.000000e-01 : f32
    %69 = vector.broadcast %cst_35 : f32 to vector<8x128xf32>
    %70 = arith.mulf %69, %68 : vector<8x128xf32>
    %cst_36 = arith.constant 5.000000e-01 : f32
    %71 = vector.broadcast %cst_36 : f32 to vector<8x128xf32>
    %72 = arith.addf %70, %71 : vector<8x128xf32>
    %73 = vector.extract_strided_slice %25 {offsets = [0, 256], sizes = [8, 128], strides = [1, 1]} : vector<8x512xf32> to vector<8x128xf32>
    %74 = math.tanh %73 : vector<8x128xf32>
    %75 = vector.extract_strided_slice %25 {offsets = [0, 384], sizes = [8, 128], strides = [1, 1]} : vector<8x512xf32> to vector<8x128xf32>
    %cst_37 = arith.constant 5.000000e-01 : f32
    %76 = vector.broadcast %cst_37 : f32 to vector<8x128xf32>
    %77 = arith.mulf %76, %75 : vector<8x128xf32>
    %78 = math.tanh %77 : vector<8x128xf32>
    %cst_38 = arith.constant 5.000000e-01 : f32
    %79 = vector.broadcast %cst_38 : f32 to vector<8x128xf32>
    %80 = arith.mulf %79, %78 : vector<8x128xf32>
    %cst_39 = arith.constant 5.000000e-01 : f32
    %81 = vector.broadcast %cst_39 : f32 to vector<8x128xf32>
    %82 = arith.addf %80, %81 : vector<8x128xf32>
    %83 = arith.mulf %72, %12 : vector<8x128xf32>
    %84 = arith.mulf %64, %74 : vector<8x128xf32>
    %85 = arith.addf %83, %84 : vector<8x128xf32>
    %86 = math.tanh %85 : vector<8x128xf32>
    %87 = arith.mulf %82, %86 : vector<8x128xf32>
    %88 = arith.addi %6, %c0_i32_16 : i32
    %89 = vector.broadcast %88 : i32 to vector<8x1xi32>
    %90 = arith.cmpi slt, %89, %3 : vector<8x1xi32>
    %91 = arith.extui %90 : vector<8x1xi1> to vector<8x1xi32>
    %92 = arith.sitofp %91 : vector<8x1xi32> to vector<8x1xf32>
    %93 = arith.addi %8, %13 : i32
    %94 = vector.broadcast %93 : i32 to vector<8x1xi32>
    %95 = arith.cmpi slt, %94, %3 : vector<8x1xi32>
    %96 = arith.extui %95 : vector<8x1xi1> to vector<8x1xi32>
    %97 = arith.sitofp %96 : vector<8x1xi32> to vector<8x1xf32>
    %98 = vector.broadcast %92 : vector<8x1xf32> to vector<8x128xf32>
    %99 = arith.mulf %56, %98 : vector<8x128xf32>
    %100 = arith.index_cast %c0_i32_16 : i32 to index
    %c0_40 = arith.constant 0 : index
    %c0_41 = arith.constant 0 : index
    %101 = vector.load %arg6[%100, %c0_40, %c0_41] : memref<8x8x128xf32, #tpu.memory_space<vmem>>, vector<1x8x128xf32>
    %102 = vector.shape_cast %101 : vector<1x8x128xf32> to vector<8x128xf32>
    %103 = vector.shape_cast %99 : vector<8x128xf32> to vector<1x8x128xf32>
    tpu.vector_store %arg6[%100, %c0_40, %c0_41], %103 {strides = array<i32>} : memref<8x8x128xf32, #tpu.memory_space<vmem>>, vector<1x8x128xf32>,
    %104 = vector.broadcast %97 : vector<8x1xf32> to vector<8x128xf32>
    %105 = arith.mulf %87, %104 : vector<8x128xf32>
    %106 = arith.index_cast %13 : i32 to index
    %c0_42 = arith.constant 0 : index
    %c0_43 = arith.constant 0 : index
    %107 = vector.load %arg7[%106, %c0_42, %c0_43] : memref<8x8x128xf32, #tpu.memory_space<vmem>>, vector<1x8x128xf32>
    %108 = vector.shape_cast %107 : vector<1x8x128xf32> to vector<8x128xf32>
    %109 = vector.shape_cast %105 : vector<8x128xf32> to vector<1x8x128xf32>
    tpu.vector_store %arg7[%106, %c0_42, %c0_43], %109 {strides = array<i32>} : memref<8x8x128xf32, #tpu.memory_space<vmem>>, vector<1x8x128xf32>,
    %110 = arith.subf %56, %9 : vector<8x128xf32>
    %111 = vector.broadcast %92 : vector<8x1xf32> to vector<8x128xf32>
    %112 = arith.mulf %111, %110 : vector<8x128xf32>
    %113 = arith.addf %9, %112 : vector<8x128xf32>
    %114 = arith.subf %54, %10 : vector<8x128xf32>
    %115 = vector.broadcast %92 : vector<8x1xf32> to vector<8x128xf32>
    %116 = arith.mulf %115, %114 : vector<8x128xf32>
    %117 = arith.addf %10, %116 : vector<8x128xf32>
    %118 = arith.subf %87, %11 : vector<8x128xf32>
    %119 = vector.broadcast %97 : vector<8x1xf32> to vector<8x128xf32>
    %120 = arith.mulf %119, %118 : vector<8x128xf32>
    %121 = arith.addf %11, %120 : vector<8x128xf32>
    %122 = arith.subf %85, %12 : vector<8x128xf32>
    %123 = vector.broadcast %97 : vector<8x1xf32> to vector<8x128xf32>
    %124 = arith.mulf %123, %122 : vector<8x128xf32>
    %125 = arith.addf %12, %124 : vector<8x128xf32>
    %c1_i32 = arith.constant 1 : i32
    %c7_i32_44 = arith.constant 7 : i32
    %126 = arith.subi %c7_i32_44, %c1_i32 : i32
    %127 = arith.index_cast %c1_i32 : i32 to index
    %c0_45 = arith.constant 0 : index
    %c0_46 = arith.constant 0 : index
    %128 = vector.load %arg2[%127, %c0_45, %c0_46] : memref<8x8x512xbf16, #tpu.memory_space<vmem>>, vector<1x8x512xbf16>
    %129 = vector.shape_cast %128 : vector<1x8x512xbf16> to vector<8x512xbf16>
    %130 = arith.extf %129 : vector<8x512xbf16> to vector<8x512xf32>
    %cst_47 = arith.constant dense<0.000000e+00> : vector<8x512xf32>
    %131 = tpu.matmul %113, %4, %cst_47 {dimension_numbers = #tpu.dot_dimension_numbers<[1], [0], [0], [1], [0, 0, 1, 1], [], []>} : vector<8x128xf32>, vector<128x512xf32>, vector<8x512xf32> -> vector<8x512xf32>
    %132 = arith.addf %130, %131 : vector<8x512xf32>
    %133 = arith.index_cast %126 : i32 to index
    %c0_48 = arith.constant 0 : index
    %c0_49 = arith.constant 0 : index
    %134 = vector.load %arg3[%133, %c0_48, %c0_49] : memref<8x8x512xbf16, #tpu.memory_space<vmem>>, vector<1x8x512xbf16>
    %135 = vector.shape_cast %134 : vector<1x8x512xbf16> to vector<8x512xbf16>
    %136 = arith.extf %135 : vector<8x512xbf16> to vector<8x512xf32>
    %cst_50 = arith.constant dense<0.000000e+00> : vector<8x512xf32>
    %137 = tpu.matmul %121, %5, %cst_50 {dimension_numbers = #tpu.dot_dimension_numbers<[1], [0], [0], [1], [0, 0, 1, 1], [], []>} : vector<8x128xf32>, vector<128x512xf32>, vector<8x512xf32> -> vector<8x512xf32>
    %138 = arith.addf %136, %137 : vector<8x512xf32>
    %139 = vector.extract_strided_slice %132 {offsets = [0, 0], sizes = [8, 128], strides = [1, 1]} : vector<8x512xf32> to vector<8x128xf32>
    %cst_51 = arith.constant 5.000000e-01 : f32
    %140 = vector.broadcast %cst_51 : f32 to vector<8x128xf32>
    %141 = arith.mulf %140, %139 : vector<8x128xf32>
    %142 = math.tanh %141 : vector<8x128xf32>
    %cst_52 = arith.constant 5.000000e-01 : f32
    %143 = vector.broadcast %cst_52 : f32 to vector<8x128xf32>
    %144 = arith.mulf %143, %142 : vector<8x128xf32>
    %cst_53 = arith.constant 5.000000e-01 : f32
    %145 = vector.broadcast %cst_53 : f32 to vector<8x128xf32>
    %146 = arith.addf %144, %145 : vector<8x128xf32>
    %147 = vector.extract_strided_slice %132 {offsets = [0, 128], sizes = [8, 128], strides = [1, 1]} : vector<8x512xf32> to vector<8x128xf32>
    %cst_54 = arith.constant 5.000000e-01 : f32
    %148 = vector.broadcast %cst_54 : f32 to vector<8x128xf32>
    %149 = arith.mulf %148, %147 : vector<8x128xf32>
    %150 = math.tanh %149 : vector<8x128xf32>
    %cst_55 = arith.constant 5.000000e-01 : f32
    %151 = vector.broadcast %cst_55 : f32 to vector<8x128xf32>
    %152 = arith.mulf %151, %150 : vector<8x128xf32>
    %cst_56 = arith.constant 5.000000e-01 : f32
    %153 = vector.broadcast %cst_56 : f32 to vector<8x128xf32>
    %154 = arith.addf %152, %153 : vector<8x128xf32>
    %155 = vector.extract_strided_slice %132 {offsets = [0, 256], sizes = [8, 128], strides = [1, 1]} : vector<8x512xf32> to vector<8x128xf32>
    %156 = math.tanh %155 : vector<8x128xf32>
    %157 = vector.extract_strided_slice %132 {offsets = [0, 384], sizes = [8, 128], strides = [1, 1]} : vector<8x512xf32> to vector<8x128xf32>
    %cst_57 = arith.constant 5.000000e-01 : f32
    %158 = vector.broadcast %cst_57 : f32 to vector<8x128xf32>
    %159 = arith.mulf %158, %157 : vector<8x128xf32>
    %160 = math.tanh %159 : vector<8x128xf32>
    %cst_58 = arith.constant 5.000000e-01 : f32
    %161 = vector.broadcast %cst_58 : f32 to vector<8x128xf32>
    %162 = arith.mulf %161, %160 : vector<8x128xf32>
    %cst_59 = arith.constant 5.000000e-01 : f32
    %163 = vector.broadcast %cst_59 : f32 to vector<8x128xf32>
    %164 = arith.addf %162, %163 : vector<8x128xf32>
    %165 = arith.mulf %154, %117 : vector<8x128xf32>
    %166 = arith.mulf %146, %156 : vector<8x128xf32>
    %167 = arith.addf %165, %166 : vector<8x128xf32>
    %168 = math.tanh %167 : vector<8x128xf32>
    %169 = arith.mulf %164, %168 : vector<8x128xf32>
    %170 = vector.extract_strided_slice %138 {offsets = [0, 0], sizes = [8, 128], strides = [1, 1]} : vector<8x512xf32> to vector<8x128xf32>
    %cst_60 = arith.constant 5.000000e-01 : f32
    %171 = vector.broadcast %cst_60 : f32 to vector<8x128xf32>
    %172 = arith.mulf %171, %170 : vector<8x128xf32>
    %173 = math.tanh %172 : vector<8x128xf32>
    %cst_61 = arith.constant 5.000000e-01 : f32
    %174 = vector.broadcast %cst_61 : f32 to vector<8x128xf32>
    %175 = arith.mulf %174, %173 : vector<8x128xf32>
    %cst_62 = arith.constant 5.000000e-01 : f32
    %176 = vector.broadcast %cst_62 : f32 to vector<8x128xf32>
    %177 = arith.addf %175, %176 : vector<8x128xf32>
    %178 = vector.extract_strided_slice %138 {offsets = [0, 128], sizes = [8, 128], strides = [1, 1]} : vector<8x512xf32> to vector<8x128xf32>
    %cst_63 = arith.constant 5.000000e-01 : f32
    %179 = vector.broadcast %cst_63 : f32 to vector<8x128xf32>
    %180 = arith.mulf %179, %178 : vector<8x128xf32>
    %181 = math.tanh %180 : vector<8x128xf32>
    %cst_64 = arith.constant 5.000000e-01 : f32
    %182 = vector.broadcast %cst_64 : f32 to vector<8x128xf32>
    %183 = arith.mulf %182, %181 : vector<8x128xf32>
    %cst_65 = arith.constant 5.000000e-01 : f32
    %184 = vector.broadcast %cst_65 : f32 to vector<8x128xf32>
    %185 = arith.addf %183, %184 : vector<8x128xf32>
    %186 = vector.extract_strided_slice %138 {offsets = [0, 256], sizes = [8, 128], strides = [1, 1]} : vector<8x512xf32> to vector<8x128xf32>
    %187 = math.tanh %186 : vector<8x128xf32>
    %188 = vector.extract_strided_slice %138 {offsets = [0, 384], sizes = [8, 128], strides = [1, 1]} : vector<8x512xf32> to vector<8x128xf32>
    %cst_66 = arith.constant 5.000000e-01 : f32
    %189 = vector.broadcast %cst_66 : f32 to vector<8x128xf32>
    %190 = arith.mulf %189, %188 : vector<8x128xf32>
    %191 = math.tanh %190 : vector<8x128xf32>
    %cst_67 = arith.constant 5.000000e-01 : f32
    %192 = vector.broadcast %cst_67 : f32 to vector<8x128xf32>
    %193 = arith.mulf %192, %191 : vector<8x128xf32>
    %cst_68 = arith.constant 5.000000e-01 : f32
    %194 = vector.broadcast %cst_68 : f32 to vector<8x128xf32>
    %195 = arith.addf %193, %194 : vector<8x128xf32>
    %196 = arith.mulf %185, %125 : vector<8x128xf32>
    %197 = arith.mulf %177, %187 : vector<8x128xf32>
    %198 = arith.addf %196, %197 : vector<8x128xf32>
    %199 = math.tanh %198 : vector<8x128xf32>
    %200 = arith.mulf %195, %199 : vector<8x128xf32>
    %201 = arith.addi %6, %c1_i32 : i32
    %202 = vector.broadcast %201 : i32 to vector<8x1xi32>
    %203 = arith.cmpi slt, %202, %3 : vector<8x1xi32>
    %204 = arith.extui %203 : vector<8x1xi1> to vector<8x1xi32>
    %205 = arith.sitofp %204 : vector<8x1xi32> to vector<8x1xf32>
    %206 = arith.addi %8, %126 : i32
    %207 = vector.broadcast %206 : i32 to vector<8x1xi32>
    %208 = arith.cmpi slt, %207, %3 : vector<8x1xi32>
    %209 = arith.extui %208 : vector<8x1xi1> to vector<8x1xi32>
    %210 = arith.sitofp %209 : vector<8x1xi32> to vector<8x1xf32>
    %211 = vector.broadcast %205 : vector<8x1xf32> to vector<8x128xf32>
    %212 = arith.mulf %169, %211 : vector<8x128xf32>
    %213 = arith.index_cast %c1_i32 : i32 to index
    %c0_69 = arith.constant 0 : index
    %c0_70 = arith.constant 0 : index
    %214 = vector.load %arg6[%213, %c0_69, %c0_70] : memref<8x8x128xf32, #tpu.memory_space<vmem>>, vector<1x8x128xf32>
    %215 = vector.shape_cast %214 : vector<1x8x128xf32> to vector<8x128xf32>
    %216 = vector.shape_cast %212 : vector<8x128xf32> to vector<1x8x128xf32>
    tpu.vector_store %arg6[%213, %c0_69, %c0_70], %216 {strides = array<i32>} : memref<8x8x128xf32, #tpu.memory_space<vmem>>, vector<1x8x128xf32>,
    %217 = vector.broadcast %210 : vector<8x1xf32> to vector<8x128xf32>
    %218 = arith.mulf %200, %217 : vector<8x128xf32>
    %219 = arith.index_cast %126 : i32 to index
    %c0_71 = arith.constant 0 : index
    %c0_72 = arith.constant 0 : index
    %220 = vector.load %arg7[%219, %c0_71, %c0_72] : memref<8x8x128xf32, #tpu.memory_space<vmem>>, vector<1x8x128xf32>
    %221 = vector.shape_cast %220 : vector<1x8x128xf32> to vector<8x128xf32>
    %222 = vector.shape_cast %218 : vector<8x128xf32> to vector<1x8x128xf32>
    tpu.vector_store %arg7[%219, %c0_71, %c0_72], %222 {strides = array<i32>} : memref<8x8x128xf32, #tpu.memory_space<vmem>>, vector<1x8x128xf32>,
    %223 = arith.subf %169, %113 : vector<8x128xf32>
    %224 = vector.broadcast %205 : vector<8x1xf32> to vector<8x128xf32>
    %225 = arith.mulf %224, %223 : vector<8x128xf32>
    %226 = arith.addf %113, %225 : vector<8x128xf32>
    %227 = arith.subf %167, %117 : vector<8x128xf32>
    %228 = vector.broadcast %205 : vector<8x1xf32> to vector<8x128xf32>
    %229 = arith.mulf %228, %227 : vector<8x128xf32>
    %230 = arith.addf %117, %229 : vector<8x128xf32>
    %231 = arith.subf %200, %121 : vector<8x128xf32>
    %232 = vector.broadcast %210 : vector<8x1xf32> to vector<8x128xf32>
    %233 = arith.mulf %232, %231 : vector<8x128xf32>
    %234 = arith.addf %121, %233 : vector<8x128xf32>
    %235 = arith.subf %198, %125 : vector<8x128xf32>
    %236 = vector.broadcast %210 : vector<8x1xf32> to vector<8x128xf32>
    %237 = arith.mulf %236, %235 : vector<8x128xf32>
    %238 = arith.addf %125, %237 : vector<8x128xf32>
    %c2_i32 = arith.constant 2 : i32
    %c7_i32_73 = arith.constant 7 : i32
    %239 = arith.subi %c7_i32_73, %c2_i32 : i32
    %240 = arith.index_cast %c2_i32 : i32 to index
    %c0_74 = arith.constant 0 : index
    %c0_75 = arith.constant 0 : index
    %241 = vector.load %arg2[%240, %c0_74, %c0_75] : memref<8x8x512xbf16, #tpu.memory_space<vmem>>, vector<1x8x512xbf16>
    %242 = vector.shape_cast %241 : vector<1x8x512xbf16> to vector<8x512xbf16>
    %243 = arith.extf %242 : vector<8x512xbf16> to vector<8x512xf32>
    %cst_76 = arith.constant dense<0.000000e+00> : vector<8x512xf32>
    %244 = tpu.matmul %226, %4, %cst_76 {dimension_numbers = #tpu.dot_dimension_numbers<[1], [0], [0], [1], [0, 0, 1, 1], [], []>} : vector<8x128xf32>, vector<128x512xf32>, vector<8x512xf32> -> vector<8x512xf32>
    %245 = arith.addf %243, %244 : vector<8x512xf32>
    %246 = arith.index_cast %239 : i32 to index
    %c0_77 = arith.constant 0 : index
    %c0_78 = arith.constant 0 : index
    %247 = vector.load %arg3[%246, %c0_77, %c0_78] : memref<8x8x512xbf16, #tpu.memory_space<vmem>>, vector<1x8x512xbf16>
    %248 = vector.shape_cast %247 : vector<1x8x512xbf16> to vector<8x512xbf16>
    %249 = arith.extf %248 : vector<8x512xbf16> to vector<8x512xf32>
    %cst_79 = arith.constant dense<0.000000e+00> : vector<8x512xf32>
    %250 = tpu.matmul %234, %5, %cst_79 {dimension_numbers = #tpu.dot_dimension_numbers<[1], [0], [0], [1], [0, 0, 1, 1], [], []>} : vector<8x128xf32>, vector<128x512xf32>, vector<8x512xf32> -> vector<8x512xf32>
    %251 = arith.addf %249, %250 : vector<8x512xf32>
    %252 = vector.extract_strided_slice %245 {offsets = [0, 0], sizes = [8, 128], strides = [1, 1]} : vector<8x512xf32> to vector<8x128xf32>
    %cst_80 = arith.constant 5.000000e-01 : f32
    %253 = vector.broadcast %cst_80 : f32 to vector<8x128xf32>
    %254 = arith.mulf %253, %252 : vector<8x128xf32>
    %255 = math.tanh %254 : vector<8x128xf32>
    %cst_81 = arith.constant 5.000000e-01 : f32
    %256 = vector.broadcast %cst_81 : f32 to vector<8x128xf32>
    %257 = arith.mulf %256, %255 : vector<8x128xf32>
    %cst_82 = arith.constant 5.000000e-01 : f32
    %258 = vector.broadcast %cst_82 : f32 to vector<8x128xf32>
    %259 = arith.addf %257, %258 : vector<8x128xf32>
    %260 = vector.extract_strided_slice %245 {offsets = [0, 128], sizes = [8, 128], strides = [1, 1]} : vector<8x512xf32> to vector<8x128xf32>
    %cst_83 = arith.constant 5.000000e-01 : f32
    %261 = vector.broadcast %cst_83 : f32 to vector<8x128xf32>
    %262 = arith.mulf %261, %260 : vector<8x128xf32>
    %263 = math.tanh %262 : vector<8x128xf32>
    %cst_84 = arith.constant 5.000000e-01 : f32
    %264 = vector.broadcast %cst_84 : f32 to vector<8x128xf32>
    %265 = arith.mulf %264, %263 : vector<8x128xf32>
    %cst_85 = arith.constant 5.000000e-01 : f32
    %266 = vector.broadcast %cst_85 : f32 to vector<8x128xf32>
    %267 = arith.addf %265, %266 : vector<8x128xf32>
    %268 = vector.extract_strided_slice %245 {offsets = [0, 256], sizes = [8, 128], strides = [1, 1]} : vector<8x512xf32> to vector<8x128xf32>
    %269 = math.tanh %268 : vector<8x128xf32>
    %270 = vector.extract_strided_slice %245 {offsets = [0, 384], sizes = [8, 128], strides = [1, 1]} : vector<8x512xf32> to vector<8x128xf32>
    %cst_86 = arith.constant 5.000000e-01 : f32
    %271 = vector.broadcast %cst_86 : f32 to vector<8x128xf32>
    %272 = arith.mulf %271, %270 : vector<8x128xf32>
    %273 = math.tanh %272 : vector<8x128xf32>
    %cst_87 = arith.constant 5.000000e-01 : f32
    %274 = vector.broadcast %cst_87 : f32 to vector<8x128xf32>
    %275 = arith.mulf %274, %273 : vector<8x128xf32>
    %cst_88 = arith.constant 5.000000e-01 : f32
    %276 = vector.broadcast %cst_88 : f32 to vector<8x128xf32>
    %277 = arith.addf %275, %276 : vector<8x128xf32>
    %278 = arith.mulf %267, %230 : vector<8x128xf32>
    %279 = arith.mulf %259, %269 : vector<8x128xf32>
    %280 = arith.addf %278, %279 : vector<8x128xf32>
    %281 = math.tanh %280 : vector<8x128xf32>
    %282 = arith.mulf %277, %281 : vector<8x128xf32>
    %283 = vector.extract_strided_slice %251 {offsets = [0, 0], sizes = [8, 128], strides = [1, 1]} : vector<8x512xf32> to vector<8x128xf32>
    %cst_89 = arith.constant 5.000000e-01 : f32
    %284 = vector.broadcast %cst_89 : f32 to vector<8x128xf32>
    %285 = arith.mulf %284, %283 : vector<8x128xf32>
    %286 = math.tanh %285 : vector<8x128xf32>
    %cst_90 = arith.constant 5.000000e-01 : f32
    %287 = vector.broadcast %cst_90 : f32 to vector<8x128xf32>
    %288 = arith.mulf %287, %286 : vector<8x128xf32>
    %cst_91 = arith.constant 5.000000e-01 : f32
    %289 = vector.broadcast %cst_91 : f32 to vector<8x128xf32>
    %290 = arith.addf %288, %289 : vector<8x128xf32>
    %291 = vector.extract_strided_slice %251 {offsets = [0, 128], sizes = [8, 128], strides = [1, 1]} : vector<8x512xf32> to vector<8x128xf32>
    %cst_92 = arith.constant 5.000000e-01 : f32
    %292 = vector.broadcast %cst_92 : f32 to vector<8x128xf32>
    %293 = arith.mulf %292, %291 : vector<8x128xf32>
    %294 = math.tanh %293 : vector<8x128xf32>
    %cst_93 = arith.constant 5.000000e-01 : f32
    %295 = vector.broadcast %cst_93 : f32 to vector<8x128xf32>
    %296 = arith.mulf %295, %294 : vector<8x128xf32>
    %cst_94 = arith.constant 5.000000e-01 : f32
    %297 = vector.broadcast %cst_94 : f32 to vector<8x128xf32>
    %298 = arith.addf %296, %297 : vector<8x128xf32>
    %299 = vector.extract_strided_slice %251 {offsets = [0, 256], sizes = [8, 128], strides = [1, 1]} : vector<8x512xf32> to vector<8x128xf32>
    %300 = math.tanh %299 : vector<8x128xf32>
    %301 = vector.extract_strided_slice %251 {offsets = [0, 384], sizes = [8, 128], strides = [1, 1]} : vector<8x512xf32> to vector<8x128xf32>
    %cst_95 = arith.constant 5.000000e-01 : f32
    %302 = vector.broadcast %cst_95 : f32 to vector<8x128xf32>
    %303 = arith.mulf %302, %301 : vector<8x128xf32>
    %304 = math.tanh %303 : vector<8x128xf32>
    %cst_96 = arith.constant 5.000000e-01 : f32
    %305 = vector.broadcast %cst_96 : f32 to vector<8x128xf32>
    %306 = arith.mulf %305, %304 : vector<8x128xf32>
    %cst_97 = arith.constant 5.000000e-01 : f32
    %307 = vector.broadcast %cst_97 : f32 to vector<8x128xf32>
    %308 = arith.addf %306, %307 : vector<8x128xf32>
    %309 = arith.mulf %298, %238 : vector<8x128xf32>
    %310 = arith.mulf %290, %300 : vector<8x128xf32>
    %311 = arith.addf %309, %310 : vector<8x128xf32>
    %312 = math.tanh %311 : vector<8x128xf32>
    %313 = arith.mulf %308, %312 : vector<8x128xf32>
    %314 = arith.addi %6, %c2_i32 : i32
    %315 = vector.broadcast %314 : i32 to vector<8x1xi32>
    %316 = arith.cmpi slt, %315, %3 : vector<8x1xi32>
    %317 = arith.extui %316 : vector<8x1xi1> to vector<8x1xi32>
    %318 = arith.sitofp %317 : vector<8x1xi32> to vector<8x1xf32>
    %319 = arith.addi %8, %239 : i32
    %320 = vector.broadcast %319 : i32 to vector<8x1xi32>
    %321 = arith.cmpi slt, %320, %3 : vector<8x1xi32>
    %322 = arith.extui %321 : vector<8x1xi1> to vector<8x1xi32>
    %323 = arith.sitofp %322 : vector<8x1xi32> to vector<8x1xf32>
    %324 = vector.broadcast %318 : vector<8x1xf32> to vector<8x128xf32>
    %325 = arith.mulf %282, %324 : vector<8x128xf32>
    %326 = arith.index_cast %c2_i32 : i32 to index
    %c0_98 = arith.constant 0 : index
    %c0_99 = arith.constant 0 : index
    %327 = vector.load %arg6[%326, %c0_98, %c0_99] : memref<8x8x128xf32, #tpu.memory_space<vmem>>, vector<1x8x128xf32>
    %328 = vector.shape_cast %327 : vector<1x8x128xf32> to vector<8x128xf32>
    %329 = vector.shape_cast %325 : vector<8x128xf32> to vector<1x8x128xf32>
    tpu.vector_store %arg6[%326, %c0_98, %c0_99], %329 {strides = array<i32>} : memref<8x8x128xf32, #tpu.memory_space<vmem>>, vector<1x8x128xf32>,
    %330 = vector.broadcast %323 : vector<8x1xf32> to vector<8x128xf32>
    %331 = arith.mulf %313, %330 : vector<8x128xf32>
    %332 = arith.index_cast %239 : i32 to index
    %c0_100 = arith.constant 0 : index
    %c0_101 = arith.constant 0 : index
    %333 = vector.load %arg7[%332, %c0_100, %c0_101] : memref<8x8x128xf32, #tpu.memory_space<vmem>>, vector<1x8x128xf32>
    %334 = vector.shape_cast %333 : vector<1x8x128xf32> to vector<8x128xf32>
    %335 = vector.shape_cast %331 : vector<8x128xf32> to vector<1x8x128xf32>
    tpu.vector_store %arg7[%332, %c0_100, %c0_101], %335 {strides = array<i32>} : memref<8x8x128xf32, #tpu.memory_space<vmem>>, vector<1x8x128xf32>,
    %336 = arith.subf %282, %226 : vector<8x128xf32>
    %337 = vector.broadcast %318 : vector<8x1xf32> to vector<8x128xf32>
    %338 = arith.mulf %337, %336 : vector<8x128xf32>
    %339 = arith.addf %226, %338 : vector<8x128xf32>
    %340 = arith.subf %280, %230 : vector<8x128xf32>
    %341 = vector.broadcast %318 : vector<8x1xf32> to vector<8x128xf32>
    %342 = arith.mulf %341, %340 : vector<8x128xf32>
    %343 = arith.addf %230, %342 : vector<8x128xf32>
    %344 = arith.subf %313, %234 : vector<8x128xf32>
    %345 = vector.broadcast %323 : vector<8x1xf32> to vector<8x128xf32>
    %346 = arith.mulf %345, %344 : vector<8x128xf32>
    %347 = arith.addf %234, %346 : vector<8x128xf32>
    %348 = arith.subf %311, %238 : vector<8x128xf32>
    %349 = vector.broadcast %323 : vector<8x1xf32> to vector<8x128xf32>
    %350 = arith.mulf %349, %348 : vector<8x128xf32>
    %351 = arith.addf %238, %350 : vector<8x128xf32>
    %c3_i32 = arith.constant 3 : i32
    %c7_i32_102 = arith.constant 7 : i32
    %352 = arith.subi %c7_i32_102, %c3_i32 : i32
    %353 = arith.index_cast %c3_i32 : i32 to index
    %c0_103 = arith.constant 0 : index
    %c0_104 = arith.constant 0 : index
    %354 = vector.load %arg2[%353, %c0_103, %c0_104] : memref<8x8x512xbf16, #tpu.memory_space<vmem>>, vector<1x8x512xbf16>
    %355 = vector.shape_cast %354 : vector<1x8x512xbf16> to vector<8x512xbf16>
    %356 = arith.extf %355 : vector<8x512xbf16> to vector<8x512xf32>
    %cst_105 = arith.constant dense<0.000000e+00> : vector<8x512xf32>
    %357 = tpu.matmul %339, %4, %cst_105 {dimension_numbers = #tpu.dot_dimension_numbers<[1], [0], [0], [1], [0, 0, 1, 1], [], []>} : vector<8x128xf32>, vector<128x512xf32>, vector<8x512xf32> -> vector<8x512xf32>
    %358 = arith.addf %356, %357 : vector<8x512xf32>
    %359 = arith.index_cast %352 : i32 to index
    %c0_106 = arith.constant 0 : index
    %c0_107 = arith.constant 0 : index
    %360 = vector.load %arg3[%359, %c0_106, %c0_107] : memref<8x8x512xbf16, #tpu.memory_space<vmem>>, vector<1x8x512xbf16>
    %361 = vector.shape_cast %360 : vector<1x8x512xbf16> to vector<8x512xbf16>
    %362 = arith.extf %361 : vector<8x512xbf16> to vector<8x512xf32>
    %cst_108 = arith.constant dense<0.000000e+00> : vector<8x512xf32>
    %363 = tpu.matmul %347, %5, %cst_108 {dimension_numbers = #tpu.dot_dimension_numbers<[1], [0], [0], [1], [0, 0, 1, 1], [], []>} : vector<8x128xf32>, vector<128x512xf32>, vector<8x512xf32> -> vector<8x512xf32>
    %364 = arith.addf %362, %363 : vector<8x512xf32>
    %365 = vector.extract_strided_slice %358 {offsets = [0, 0], sizes = [8, 128], strides = [1, 1]} : vector<8x512xf32> to vector<8x128xf32>
    %cst_109 = arith.constant 5.000000e-01 : f32
    %366 = vector.broadcast %cst_109 : f32 to vector<8x128xf32>
    %367 = arith.mulf %366, %365 : vector<8x128xf32>
    %368 = math.tanh %367 : vector<8x128xf32>
    %cst_110 = arith.constant 5.000000e-01 : f32
    %369 = vector.broadcast %cst_110 : f32 to vector<8x128xf32>
    %370 = arith.mulf %369, %368 : vector<8x128xf32>
    %cst_111 = arith.constant 5.000000e-01 : f32
    %371 = vector.broadcast %cst_111 : f32 to vector<8x128xf32>
    %372 = arith.addf %370, %371 : vector<8x128xf32>
    %373 = vector.extract_strided_slice %358 {offsets = [0, 128], sizes = [8, 128], strides = [1, 1]} : vector<8x512xf32> to vector<8x128xf32>
    %cst_112 = arith.constant 5.000000e-01 : f32
    %374 = vector.broadcast %cst_112 : f32 to vector<8x128xf32>
    %375 = arith.mulf %374, %373 : vector<8x128xf32>
    %376 = math.tanh %375 : vector<8x128xf32>
    %cst_113 = arith.constant 5.000000e-01 : f32
    %377 = vector.broadcast %cst_113 : f32 to vector<8x128xf32>
    %378 = arith.mulf %377, %376 : vector<8x128xf32>
    %cst_114 = arith.constant 5.000000e-01 : f32
    %379 = vector.broadcast %cst_114 : f32 to vector<8x128xf32>
    %380 = arith.addf %378, %379 : vector<8x128xf32>
    %381 = vector.extract_strided_slice %358 {offsets = [0, 256], sizes = [8, 128], strides = [1, 1]} : vector<8x512xf32> to vector<8x128xf32>
    %382 = math.tanh %381 : vector<8x128xf32>
    %383 = vector.extract_strided_slice %358 {offsets = [0, 384], sizes = [8, 128], strides = [1, 1]} : vector<8x512xf32> to vector<8x128xf32>
    %cst_115 = arith.constant 5.000000e-01 : f32
    %384 = vector.broadcast %cst_115 : f32 to vector<8x128xf32>
    %385 = arith.mulf %384, %383 : vector<8x128xf32>
    %386 = math.tanh %385 : vector<8x128xf32>
    %cst_116 = arith.constant 5.000000e-01 : f32
    %387 = vector.broadcast %cst_116 : f32 to vector<8x128xf32>
    %388 = arith.mulf %387, %386 : vector<8x128xf32>
    %cst_117 = arith.constant 5.000000e-01 : f32
    %389 = vector.broadcast %cst_117 : f32 to vector<8x128xf32>
    %390 = arith.addf %388, %389 : vector<8x128xf32>
    %391 = arith.mulf %380, %343 : vector<8x128xf32>
    %392 = arith.mulf %372, %382 : vector<8x128xf32>
    %393 = arith.addf %391, %392 : vector<8x128xf32>
    %394 = math.tanh %393 : vector<8x128xf32>
    %395 = arith.mulf %390, %394 : vector<8x128xf32>
    %396 = vector.extract_strided_slice %364 {offsets = [0, 0], sizes = [8, 128], strides = [1, 1]} : vector<8x512xf32> to vector<8x128xf32>
    %cst_118 = arith.constant 5.000000e-01 : f32
    %397 = vector.broadcast %cst_118 : f32 to vector<8x128xf32>
    %398 = arith.mulf %397, %396 : vector<8x128xf32>
    %399 = math.tanh %398 : vector<8x128xf32>
    %cst_119 = arith.constant 5.000000e-01 : f32
    %400 = vector.broadcast %cst_119 : f32 to vector<8x128xf32>
    %401 = arith.mulf %400, %399 : vector<8x128xf32>
    %cst_120 = arith.constant 5.000000e-01 : f32
    %402 = vector.broadcast %cst_120 : f32 to vector<8x128xf32>
    %403 = arith.addf %401, %402 : vector<8x128xf32>
    %404 = vector.extract_strided_slice %364 {offsets = [0, 128], sizes = [8, 128], strides = [1, 1]} : vector<8x512xf32> to vector<8x128xf32>
    %cst_121 = arith.constant 5.000000e-01 : f32
    %405 = vector.broadcast %cst_121 : f32 to vector<8x128xf32>
    %406 = arith.mulf %405, %404 : vector<8x128xf32>
    %407 = math.tanh %406 : vector<8x128xf32>
    %cst_122 = arith.constant 5.000000e-01 : f32
    %408 = vector.broadcast %cst_122 : f32 to vector<8x128xf32>
    %409 = arith.mulf %408, %407 : vector<8x128xf32>
    %cst_123 = arith.constant 5.000000e-01 : f32
    %410 = vector.broadcast %cst_123 : f32 to vector<8x128xf32>
    %411 = arith.addf %409, %410 : vector<8x128xf32>
    %412 = vector.extract_strided_slice %364 {offsets = [0, 256], sizes = [8, 128], strides = [1, 1]} : vector<8x512xf32> to vector<8x128xf32>
    %413 = math.tanh %412 : vector<8x128xf32>
    %414 = vector.extract_strided_slice %364 {offsets = [0, 384], sizes = [8, 128], strides = [1, 1]} : vector<8x512xf32> to vector<8x128xf32>
    %cst_124 = arith.constant 5.000000e-01 : f32
    %415 = vector.broadcast %cst_124 : f32 to vector<8x128xf32>
    %416 = arith.mulf %415, %414 : vector<8x128xf32>
    %417 = math.tanh %416 : vector<8x128xf32>
    %cst_125 = arith.constant 5.000000e-01 : f32
    %418 = vector.broadcast %cst_125 : f32 to vector<8x128xf32>
    %419 = arith.mulf %418, %417 : vector<8x128xf32>
    %cst_126 = arith.constant 5.000000e-01 : f32
    %420 = vector.broadcast %cst_126 : f32 to vector<8x128xf32>
    %421 = arith.addf %419, %420 : vector<8x128xf32>
    %422 = arith.mulf %411, %351 : vector<8x128xf32>
    %423 = arith.mulf %403, %413 : vector<8x128xf32>
    %424 = arith.addf %422, %423 : vector<8x128xf32>
    %425 = math.tanh %424 : vector<8x128xf32>
    %426 = arith.mulf %421, %425 : vector<8x128xf32>
    %427 = arith.addi %6, %c3_i32 : i32
    %428 = vector.broadcast %427 : i32 to vector<8x1xi32>
    %429 = arith.cmpi slt, %428, %3 : vector<8x1xi32>
    %430 = arith.extui %429 : vector<8x1xi1> to vector<8x1xi32>
    %431 = arith.sitofp %430 : vector<8x1xi32> to vector<8x1xf32>
    %432 = arith.addi %8, %352 : i32
    %433 = vector.broadcast %432 : i32 to vector<8x1xi32>
    %434 = arith.cmpi slt, %433, %3 : vector<8x1xi32>
    %435 = arith.extui %434 : vector<8x1xi1> to vector<8x1xi32>
    %436 = arith.sitofp %435 : vector<8x1xi32> to vector<8x1xf32>
    %437 = vector.broadcast %431 : vector<8x1xf32> to vector<8x128xf32>
    %438 = arith.mulf %395, %437 : vector<8x128xf32>
    %439 = arith.index_cast %c3_i32 : i32 to index
    %c0_127 = arith.constant 0 : index
    %c0_128 = arith.constant 0 : index
    %440 = vector.load %arg6[%439, %c0_127, %c0_128] : memref<8x8x128xf32, #tpu.memory_space<vmem>>, vector<1x8x128xf32>
    %441 = vector.shape_cast %440 : vector<1x8x128xf32> to vector<8x128xf32>
    %442 = vector.shape_cast %438 : vector<8x128xf32> to vector<1x8x128xf32>
    tpu.vector_store %arg6[%439, %c0_127, %c0_128], %442 {strides = array<i32>} : memref<8x8x128xf32, #tpu.memory_space<vmem>>, vector<1x8x128xf32>,
    %443 = vector.broadcast %436 : vector<8x1xf32> to vector<8x128xf32>
    %444 = arith.mulf %426, %443 : vector<8x128xf32>
    %445 = arith.index_cast %352 : i32 to index
    %c0_129 = arith.constant 0 : index
    %c0_130 = arith.constant 0 : index
    %446 = vector.load %arg7[%445, %c0_129, %c0_130] : memref<8x8x128xf32, #tpu.memory_space<vmem>>, vector<1x8x128xf32>
    %447 = vector.shape_cast %446 : vector<1x8x128xf32> to vector<8x128xf32>
    %448 = vector.shape_cast %444 : vector<8x128xf32> to vector<1x8x128xf32>
    tpu.vector_store %arg7[%445, %c0_129, %c0_130], %448 {strides = array<i32>} : memref<8x8x128xf32, #tpu.memory_space<vmem>>, vector<1x8x128xf32>,
    %449 = arith.subf %395, %339 : vector<8x128xf32>
    %450 = vector.broadcast %431 : vector<8x1xf32> to vector<8x128xf32>
    %451 = arith.mulf %450, %449 : vector<8x128xf32>
    %452 = arith.addf %339, %451 : vector<8x128xf32>
    %453 = arith.subf %393, %343 : vector<8x128xf32>
    %454 = vector.broadcast %431 : vector<8x1xf32> to vector<8x128xf32>
    %455 = arith.mulf %454, %453 : vector<8x128xf32>
    %456 = arith.addf %343, %455 : vector<8x128xf32>
    %457 = arith.subf %426, %347 : vector<8x128xf32>
    %458 = vector.broadcast %436 : vector<8x1xf32> to vector<8x128xf32>
    %459 = arith.mulf %458, %457 : vector<8x128xf32>
    %460 = arith.addf %347, %459 : vector<8x128xf32>
    %461 = arith.subf %424, %351 : vector<8x128xf32>
    %462 = vector.broadcast %436 : vector<8x1xf32> to vector<8x128xf32>
    %463 = arith.mulf %462, %461 : vector<8x128xf32>
    %464 = arith.addf %351, %463 : vector<8x128xf32>
    %c4_i32 = arith.constant 4 : i32
    %c7_i32_131 = arith.constant 7 : i32
    %465 = arith.subi %c7_i32_131, %c4_i32 : i32
    %466 = arith.index_cast %c4_i32 : i32 to index
    %c0_132 = arith.constant 0 : index
    %c0_133 = arith.constant 0 : index
    %467 = vector.load %arg2[%466, %c0_132, %c0_133] : memref<8x8x512xbf16, #tpu.memory_space<vmem>>, vector<1x8x512xbf16>
    %468 = vector.shape_cast %467 : vector<1x8x512xbf16> to vector<8x512xbf16>
    %469 = arith.extf %468 : vector<8x512xbf16> to vector<8x512xf32>
    %cst_134 = arith.constant dense<0.000000e+00> : vector<8x512xf32>
    %470 = tpu.matmul %452, %4, %cst_134 {dimension_numbers = #tpu.dot_dimension_numbers<[1], [0], [0], [1], [0, 0, 1, 1], [], []>} : vector<8x128xf32>, vector<128x512xf32>, vector<8x512xf32> -> vector<8x512xf32>
    %471 = arith.addf %469, %470 : vector<8x512xf32>
    %472 = arith.index_cast %465 : i32 to index
    %c0_135 = arith.constant 0 : index
    %c0_136 = arith.constant 0 : index
    %473 = vector.load %arg3[%472, %c0_135, %c0_136] : memref<8x8x512xbf16, #tpu.memory_space<vmem>>, vector<1x8x512xbf16>
    %474 = vector.shape_cast %473 : vector<1x8x512xbf16> to vector<8x512xbf16>
    %475 = arith.extf %474 : vector<8x512xbf16> to vector<8x512xf32>
    %cst_137 = arith.constant dense<0.000000e+00> : vector<8x512xf32>
    %476 = tpu.matmul %460, %5, %cst_137 {dimension_numbers = #tpu.dot_dimension_numbers<[1], [0], [0], [1], [0, 0, 1, 1], [], []>} : vector<8x128xf32>, vector<128x512xf32>, vector<8x512xf32> -> vector<8x512xf32>
    %477 = arith.addf %475, %476 : vector<8x512xf32>
    %478 = vector.extract_strided_slice %471 {offsets = [0, 0], sizes = [8, 128], strides = [1, 1]} : vector<8x512xf32> to vector<8x128xf32>
    %cst_138 = arith.constant 5.000000e-01 : f32
    %479 = vector.broadcast %cst_138 : f32 to vector<8x128xf32>
    %480 = arith.mulf %479, %478 : vector<8x128xf32>
    %481 = math.tanh %480 : vector<8x128xf32>
    %cst_139 = arith.constant 5.000000e-01 : f32
    %482 = vector.broadcast %cst_139 : f32 to vector<8x128xf32>
    %483 = arith.mulf %482, %481 : vector<8x128xf32>
    %cst_140 = arith.constant 5.000000e-01 : f32
    %484 = vector.broadcast %cst_140 : f32 to vector<8x128xf32>
    %485 = arith.addf %483, %484 : vector<8x128xf32>
    %486 = vector.extract_strided_slice %471 {offsets = [0, 128], sizes = [8, 128], strides = [1, 1]} : vector<8x512xf32> to vector<8x128xf32>
    %cst_141 = arith.constant 5.000000e-01 : f32
    %487 = vector.broadcast %cst_141 : f32 to vector<8x128xf32>
    %488 = arith.mulf %487, %486 : vector<8x128xf32>
    %489 = math.tanh %488 : vector<8x128xf32>
    %cst_142 = arith.constant 5.000000e-01 : f32
    %490 = vector.broadcast %cst_142 : f32 to vector<8x128xf32>
    %491 = arith.mulf %490, %489 : vector<8x128xf32>
    %cst_143 = arith.constant 5.000000e-01 : f32
    %492 = vector.broadcast %cst_143 : f32 to vector<8x128xf32>
    %493 = arith.addf %491, %492 : vector<8x128xf32>
    %494 = vector.extract_strided_slice %471 {offsets = [0, 256], sizes = [8, 128], strides = [1, 1]} : vector<8x512xf32> to vector<8x128xf32>
    %495 = math.tanh %494 : vector<8x128xf32>
    %496 = vector.extract_strided_slice %471 {offsets = [0, 384], sizes = [8, 128], strides = [1, 1]} : vector<8x512xf32> to vector<8x128xf32>
    %cst_144 = arith.constant 5.000000e-01 : f32
    %497 = vector.broadcast %cst_144 : f32 to vector<8x128xf32>
    %498 = arith.mulf %497, %496 : vector<8x128xf32>
    %499 = math.tanh %498 : vector<8x128xf32>
    %cst_145 = arith.constant 5.000000e-01 : f32
    %500 = vector.broadcast %cst_145 : f32 to vector<8x128xf32>
    %501 = arith.mulf %500, %499 : vector<8x128xf32>
    %cst_146 = arith.constant 5.000000e-01 : f32
    %502 = vector.broadcast %cst_146 : f32 to vector<8x128xf32>
    %503 = arith.addf %501, %502 : vector<8x128xf32>
    %504 = arith.mulf %493, %456 : vector<8x128xf32>
    %505 = arith.mulf %485, %495 : vector<8x128xf32>
    %506 = arith.addf %504, %505 : vector<8x128xf32>
    %507 = math.tanh %506 : vector<8x128xf32>
    %508 = arith.mulf %503, %507 : vector<8x128xf32>
    %509 = vector.extract_strided_slice %477 {offsets = [0, 0], sizes = [8, 128], strides = [1, 1]} : vector<8x512xf32> to vector<8x128xf32>
    %cst_147 = arith.constant 5.000000e-01 : f32
    %510 = vector.broadcast %cst_147 : f32 to vector<8x128xf32>
    %511 = arith.mulf %510, %509 : vector<8x128xf32>
    %512 = math.tanh %511 : vector<8x128xf32>
    %cst_148 = arith.constant 5.000000e-01 : f32
    %513 = vector.broadcast %cst_148 : f32 to vector<8x128xf32>
    %514 = arith.mulf %513, %512 : vector<8x128xf32>
    %cst_149 = arith.constant 5.000000e-01 : f32
    %515 = vector.broadcast %cst_149 : f32 to vector<8x128xf32>
    %516 = arith.addf %514, %515 : vector<8x128xf32>
    %517 = vector.extract_strided_slice %477 {offsets = [0, 128], sizes = [8, 128], strides = [1, 1]} : vector<8x512xf32> to vector<8x128xf32>
    %cst_150 = arith.constant 5.000000e-01 : f32
    %518 = vector.broadcast %cst_150 : f32 to vector<8x128xf32>
    %519 = arith.mulf %518, %517 : vector<8x128xf32>
    %520 = math.tanh %519 : vector<8x128xf32>
    %cst_151 = arith.constant 5.000000e-01 : f32
    %521 = vector.broadcast %cst_151 : f32 to vector<8x128xf32>
    %522 = arith.mulf %521, %520 : vector<8x128xf32>
    %cst_152 = arith.constant 5.000000e-01 : f32
    %523 = vector.broadcast %cst_152 : f32 to vector<8x128xf32>
    %524 = arith.addf %522, %523 : vector<8x128xf32>
    %525 = vector.extract_strided_slice %477 {offsets = [0, 256], sizes = [8, 128], strides = [1, 1]} : vector<8x512xf32> to vector<8x128xf32>
    %526 = math.tanh %525 : vector<8x128xf32>
    %527 = vector.extract_strided_slice %477 {offsets = [0, 384], sizes = [8, 128], strides = [1, 1]} : vector<8x512xf32> to vector<8x128xf32>
    %cst_153 = arith.constant 5.000000e-01 : f32
    %528 = vector.broadcast %cst_153 : f32 to vector<8x128xf32>
    %529 = arith.mulf %528, %527 : vector<8x128xf32>
    %530 = math.tanh %529 : vector<8x128xf32>
    %cst_154 = arith.constant 5.000000e-01 : f32
    %531 = vector.broadcast %cst_154 : f32 to vector<8x128xf32>
    %532 = arith.mulf %531, %530 : vector<8x128xf32>
    %cst_155 = arith.constant 5.000000e-01 : f32
    %533 = vector.broadcast %cst_155 : f32 to vector<8x128xf32>
    %534 = arith.addf %532, %533 : vector<8x128xf32>
    %535 = arith.mulf %524, %464 : vector<8x128xf32>
    %536 = arith.mulf %516, %526 : vector<8x128xf32>
    %537 = arith.addf %535, %536 : vector<8x128xf32>
    %538 = math.tanh %537 : vector<8x128xf32>
    %539 = arith.mulf %534, %538 : vector<8x128xf32>
    %540 = arith.addi %6, %c4_i32 : i32
    %541 = vector.broadcast %540 : i32 to vector<8x1xi32>
    %542 = arith.cmpi slt, %541, %3 : vector<8x1xi32>
    %543 = arith.extui %542 : vector<8x1xi1> to vector<8x1xi32>
    %544 = arith.sitofp %543 : vector<8x1xi32> to vector<8x1xf32>
    %545 = arith.addi %8, %465 : i32
    %546 = vector.broadcast %545 : i32 to vector<8x1xi32>
    %547 = arith.cmpi slt, %546, %3 : vector<8x1xi32>
    %548 = arith.extui %547 : vector<8x1xi1> to vector<8x1xi32>
    %549 = arith.sitofp %548 : vector<8x1xi32> to vector<8x1xf32>
    %550 = vector.broadcast %544 : vector<8x1xf32> to vector<8x128xf32>
    %551 = arith.mulf %508, %550 : vector<8x128xf32>
    %552 = arith.index_cast %c4_i32 : i32 to index
    %c0_156 = arith.constant 0 : index
    %c0_157 = arith.constant 0 : index
    %553 = vector.load %arg6[%552, %c0_156, %c0_157] : memref<8x8x128xf32, #tpu.memory_space<vmem>>, vector<1x8x128xf32>
    %554 = vector.shape_cast %553 : vector<1x8x128xf32> to vector<8x128xf32>
    %555 = vector.shape_cast %551 : vector<8x128xf32> to vector<1x8x128xf32>
    tpu.vector_store %arg6[%552, %c0_156, %c0_157], %555 {strides = array<i32>} : memref<8x8x128xf32, #tpu.memory_space<vmem>>, vector<1x8x128xf32>,
    %556 = vector.broadcast %549 : vector<8x1xf32> to vector<8x128xf32>
    %557 = arith.mulf %539, %556 : vector<8x128xf32>
    %558 = arith.index_cast %465 : i32 to index
    %c0_158 = arith.constant 0 : index
    %c0_159 = arith.constant 0 : index
    %559 = vector.load %arg7[%558, %c0_158, %c0_159] : memref<8x8x128xf32, #tpu.memory_space<vmem>>, vector<1x8x128xf32>
    %560 = vector.shape_cast %559 : vector<1x8x128xf32> to vector<8x128xf32>
    %561 = vector.shape_cast %557 : vector<8x128xf32> to vector<1x8x128xf32>
    tpu.vector_store %arg7[%558, %c0_158, %c0_159], %561 {strides = array<i32>} : memref<8x8x128xf32, #tpu.memory_space<vmem>>, vector<1x8x128xf32>,
    %562 = arith.subf %508, %452 : vector<8x128xf32>
    %563 = vector.broadcast %544 : vector<8x1xf32> to vector<8x128xf32>
    %564 = arith.mulf %563, %562 : vector<8x128xf32>
    %565 = arith.addf %452, %564 : vector<8x128xf32>
    %566 = arith.subf %506, %456 : vector<8x128xf32>
    %567 = vector.broadcast %544 : vector<8x1xf32> to vector<8x128xf32>
    %568 = arith.mulf %567, %566 : vector<8x128xf32>
    %569 = arith.addf %456, %568 : vector<8x128xf32>
    %570 = arith.subf %539, %460 : vector<8x128xf32>
    %571 = vector.broadcast %549 : vector<8x1xf32> to vector<8x128xf32>
    %572 = arith.mulf %571, %570 : vector<8x128xf32>
    %573 = arith.addf %460, %572 : vector<8x128xf32>
    %574 = arith.subf %537, %464 : vector<8x128xf32>
    %575 = vector.broadcast %549 : vector<8x1xf32> to vector<8x128xf32>
    %576 = arith.mulf %575, %574 : vector<8x128xf32>
    %577 = arith.addf %464, %576 : vector<8x128xf32>
    %c5_i32 = arith.constant 5 : i32
    %c7_i32_160 = arith.constant 7 : i32
    %578 = arith.subi %c7_i32_160, %c5_i32 : i32
    %579 = arith.index_cast %c5_i32 : i32 to index
    %c0_161 = arith.constant 0 : index
    %c0_162 = arith.constant 0 : index
    %580 = vector.load %arg2[%579, %c0_161, %c0_162] : memref<8x8x512xbf16, #tpu.memory_space<vmem>>, vector<1x8x512xbf16>
    %581 = vector.shape_cast %580 : vector<1x8x512xbf16> to vector<8x512xbf16>
    %582 = arith.extf %581 : vector<8x512xbf16> to vector<8x512xf32>
    %cst_163 = arith.constant dense<0.000000e+00> : vector<8x512xf32>
    %583 = tpu.matmul %565, %4, %cst_163 {dimension_numbers = #tpu.dot_dimension_numbers<[1], [0], [0], [1], [0, 0, 1, 1], [], []>} : vector<8x128xf32>, vector<128x512xf32>, vector<8x512xf32> -> vector<8x512xf32>
    %584 = arith.addf %582, %583 : vector<8x512xf32>
    %585 = arith.index_cast %578 : i32 to index
    %c0_164 = arith.constant 0 : index
    %c0_165 = arith.constant 0 : index
    %586 = vector.load %arg3[%585, %c0_164, %c0_165] : memref<8x8x512xbf16, #tpu.memory_space<vmem>>, vector<1x8x512xbf16>
    %587 = vector.shape_cast %586 : vector<1x8x512xbf16> to vector<8x512xbf16>
    %588 = arith.extf %587 : vector<8x512xbf16> to vector<8x512xf32>
    %cst_166 = arith.constant dense<0.000000e+00> : vector<8x512xf32>
    %589 = tpu.matmul %573, %5, %cst_166 {dimension_numbers = #tpu.dot_dimension_numbers<[1], [0], [0], [1], [0, 0, 1, 1], [], []>} : vector<8x128xf32>, vector<128x512xf32>, vector<8x512xf32> -> vector<8x512xf32>
    %590 = arith.addf %588, %589 : vector<8x512xf32>
    %591 = vector.extract_strided_slice %584 {offsets = [0, 0], sizes = [8, 128], strides = [1, 1]} : vector<8x512xf32> to vector<8x128xf32>
    %cst_167 = arith.constant 5.000000e-01 : f32
    %592 = vector.broadcast %cst_167 : f32 to vector<8x128xf32>
    %593 = arith.mulf %592, %591 : vector<8x128xf32>
    %594 = math.tanh %593 : vector<8x128xf32>
    %cst_168 = arith.constant 5.000000e-01 : f32
    %595 = vector.broadcast %cst_168 : f32 to vector<8x128xf32>
    %596 = arith.mulf %595, %594 : vector<8x128xf32>
    %cst_169 = arith.constant 5.000000e-01 : f32
    %597 = vector.broadcast %cst_169 : f32 to vector<8x128xf32>
    %598 = arith.addf %596, %597 : vector<8x128xf32>
    %599 = vector.extract_strided_slice %584 {offsets = [0, 128], sizes = [8, 128], strides = [1, 1]} : vector<8x512xf32> to vector<8x128xf32>
    %cst_170 = arith.constant 5.000000e-01 : f32
    %600 = vector.broadcast %cst_170 : f32 to vector<8x128xf32>
    %601 = arith.mulf %600, %599 : vector<8x128xf32>
    %602 = math.tanh %601 : vector<8x128xf32>
    %cst_171 = arith.constant 5.000000e-01 : f32
    %603 = vector.broadcast %cst_171 : f32 to vector<8x128xf32>
    %604 = arith.mulf %603, %602 : vector<8x128xf32>
    %cst_172 = arith.constant 5.000000e-01 : f32
    %605 = vector.broadcast %cst_172 : f32 to vector<8x128xf32>
    %606 = arith.addf %604, %605 : vector<8x128xf32>
    %607 = vector.extract_strided_slice %584 {offsets = [0, 256], sizes = [8, 128], strides = [1, 1]} : vector<8x512xf32> to vector<8x128xf32>
    %608 = math.tanh %607 : vector<8x128xf32>
    %609 = vector.extract_strided_slice %584 {offsets = [0, 384], sizes = [8, 128], strides = [1, 1]} : vector<8x512xf32> to vector<8x128xf32>
    %cst_173 = arith.constant 5.000000e-01 : f32
    %610 = vector.broadcast %cst_173 : f32 to vector<8x128xf32>
    %611 = arith.mulf %610, %609 : vector<8x128xf32>
    %612 = math.tanh %611 : vector<8x128xf32>
    %cst_174 = arith.constant 5.000000e-01 : f32
    %613 = vector.broadcast %cst_174 : f32 to vector<8x128xf32>
    %614 = arith.mulf %613, %612 : vector<8x128xf32>
    %cst_175 = arith.constant 5.000000e-01 : f32
    %615 = vector.broadcast %cst_175 : f32 to vector<8x128xf32>
    %616 = arith.addf %614, %615 : vector<8x128xf32>
    %617 = arith.mulf %606, %569 : vector<8x128xf32>
    %618 = arith.mulf %598, %608 : vector<8x128xf32>
    %619 = arith.addf %617, %618 : vector<8x128xf32>
    %620 = math.tanh %619 : vector<8x128xf32>
    %621 = arith.mulf %616, %620 : vector<8x128xf32>
    %622 = vector.extract_strided_slice %590 {offsets = [0, 0], sizes = [8, 128], strides = [1, 1]} : vector<8x512xf32> to vector<8x128xf32>
    %cst_176 = arith.constant 5.000000e-01 : f32
    %623 = vector.broadcast %cst_176 : f32 to vector<8x128xf32>
    %624 = arith.mulf %623, %622 : vector<8x128xf32>
    %625 = math.tanh %624 : vector<8x128xf32>
    %cst_177 = arith.constant 5.000000e-01 : f32
    %626 = vector.broadcast %cst_177 : f32 to vector<8x128xf32>
    %627 = arith.mulf %626, %625 : vector<8x128xf32>
    %cst_178 = arith.constant 5.000000e-01 : f32
    %628 = vector.broadcast %cst_178 : f32 to vector<8x128xf32>
    %629 = arith.addf %627, %628 : vector<8x128xf32>
    %630 = vector.extract_strided_slice %590 {offsets = [0, 128], sizes = [8, 128], strides = [1, 1]} : vector<8x512xf32> to vector<8x128xf32>
    %cst_179 = arith.constant 5.000000e-01 : f32
    %631 = vector.broadcast %cst_179 : f32 to vector<8x128xf32>
    %632 = arith.mulf %631, %630 : vector<8x128xf32>
    %633 = math.tanh %632 : vector<8x128xf32>
    %cst_180 = arith.constant 5.000000e-01 : f32
    %634 = vector.broadcast %cst_180 : f32 to vector<8x128xf32>
    %635 = arith.mulf %634, %633 : vector<8x128xf32>
    %cst_181 = arith.constant 5.000000e-01 : f32
    %636 = vector.broadcast %cst_181 : f32 to vector<8x128xf32>
    %637 = arith.addf %635, %636 : vector<8x128xf32>
    %638 = vector.extract_strided_slice %590 {offsets = [0, 256], sizes = [8, 128], strides = [1, 1]} : vector<8x512xf32> to vector<8x128xf32>
    %639 = math.tanh %638 : vector<8x128xf32>
    %640 = vector.extract_strided_slice %590 {offsets = [0, 384], sizes = [8, 128], strides = [1, 1]} : vector<8x512xf32> to vector<8x128xf32>
    %cst_182 = arith.constant 5.000000e-01 : f32
    %641 = vector.broadcast %cst_182 : f32 to vector<8x128xf32>
    %642 = arith.mulf %641, %640 : vector<8x128xf32>
    %643 = math.tanh %642 : vector<8x128xf32>
    %cst_183 = arith.constant 5.000000e-01 : f32
    %644 = vector.broadcast %cst_183 : f32 to vector<8x128xf32>
    %645 = arith.mulf %644, %643 : vector<8x128xf32>
    %cst_184 = arith.constant 5.000000e-01 : f32
    %646 = vector.broadcast %cst_184 : f32 to vector<8x128xf32>
    %647 = arith.addf %645, %646 : vector<8x128xf32>
    %648 = arith.mulf %637, %577 : vector<8x128xf32>
    %649 = arith.mulf %629, %639 : vector<8x128xf32>
    %650 = arith.addf %648, %649 : vector<8x128xf32>
    %651 = math.tanh %650 : vector<8x128xf32>
    %652 = arith.mulf %647, %651 : vector<8x128xf32>
    %653 = arith.addi %6, %c5_i32 : i32
    %654 = vector.broadcast %653 : i32 to vector<8x1xi32>
    %655 = arith.cmpi slt, %654, %3 : vector<8x1xi32>
    %656 = arith.extui %655 : vector<8x1xi1> to vector<8x1xi32>
    %657 = arith.sitofp %656 : vector<8x1xi32> to vector<8x1xf32>
    %658 = arith.addi %8, %578 : i32
    %659 = vector.broadcast %658 : i32 to vector<8x1xi32>
    %660 = arith.cmpi slt, %659, %3 : vector<8x1xi32>
    %661 = arith.extui %660 : vector<8x1xi1> to vector<8x1xi32>
    %662 = arith.sitofp %661 : vector<8x1xi32> to vector<8x1xf32>
    %663 = vector.broadcast %657 : vector<8x1xf32> to vector<8x128xf32>
    %664 = arith.mulf %621, %663 : vector<8x128xf32>
    %665 = arith.index_cast %c5_i32 : i32 to index
    %c0_185 = arith.constant 0 : index
    %c0_186 = arith.constant 0 : index
    %666 = vector.load %arg6[%665, %c0_185, %c0_186] : memref<8x8x128xf32, #tpu.memory_space<vmem>>, vector<1x8x128xf32>
    %667 = vector.shape_cast %666 : vector<1x8x128xf32> to vector<8x128xf32>
    %668 = vector.shape_cast %664 : vector<8x128xf32> to vector<1x8x128xf32>
    tpu.vector_store %arg6[%665, %c0_185, %c0_186], %668 {strides = array<i32>} : memref<8x8x128xf32, #tpu.memory_space<vmem>>, vector<1x8x128xf32>,
    %669 = vector.broadcast %662 : vector<8x1xf32> to vector<8x128xf32>
    %670 = arith.mulf %652, %669 : vector<8x128xf32>
    %671 = arith.index_cast %578 : i32 to index
    %c0_187 = arith.constant 0 : index
    %c0_188 = arith.constant 0 : index
    %672 = vector.load %arg7[%671, %c0_187, %c0_188] : memref<8x8x128xf32, #tpu.memory_space<vmem>>, vector<1x8x128xf32>
    %673 = vector.shape_cast %672 : vector<1x8x128xf32> to vector<8x128xf32>
    %674 = vector.shape_cast %670 : vector<8x128xf32> to vector<1x8x128xf32>
    tpu.vector_store %arg7[%671, %c0_187, %c0_188], %674 {strides = array<i32>} : memref<8x8x128xf32, #tpu.memory_space<vmem>>, vector<1x8x128xf32>,
    %675 = arith.subf %621, %565 : vector<8x128xf32>
    %676 = vector.broadcast %657 : vector<8x1xf32> to vector<8x128xf32>
    %677 = arith.mulf %676, %675 : vector<8x128xf32>
    %678 = arith.addf %565, %677 : vector<8x128xf32>
    %679 = arith.subf %619, %569 : vector<8x128xf32>
    %680 = vector.broadcast %657 : vector<8x1xf32> to vector<8x128xf32>
    %681 = arith.mulf %680, %679 : vector<8x128xf32>
    %682 = arith.addf %569, %681 : vector<8x128xf32>
    %683 = arith.subf %652, %573 : vector<8x128xf32>
    %684 = vector.broadcast %662 : vector<8x1xf32> to vector<8x128xf32>
    %685 = arith.mulf %684, %683 : vector<8x128xf32>
    %686 = arith.addf %573, %685 : vector<8x128xf32>
    %687 = arith.subf %650, %577 : vector<8x128xf32>
    %688 = vector.broadcast %662 : vector<8x1xf32> to vector<8x128xf32>
    %689 = arith.mulf %688, %687 : vector<8x128xf32>
    %690 = arith.addf %577, %689 : vector<8x128xf32>
    %c6_i32 = arith.constant 6 : i32
    %c7_i32_189 = arith.constant 7 : i32
    %691 = arith.subi %c7_i32_189, %c6_i32 : i32
    %692 = arith.index_cast %c6_i32 : i32 to index
    %c0_190 = arith.constant 0 : index
    %c0_191 = arith.constant 0 : index
    %693 = vector.load %arg2[%692, %c0_190, %c0_191] : memref<8x8x512xbf16, #tpu.memory_space<vmem>>, vector<1x8x512xbf16>
    %694 = vector.shape_cast %693 : vector<1x8x512xbf16> to vector<8x512xbf16>
    %695 = arith.extf %694 : vector<8x512xbf16> to vector<8x512xf32>
    %cst_192 = arith.constant dense<0.000000e+00> : vector<8x512xf32>
    %696 = tpu.matmul %678, %4, %cst_192 {dimension_numbers = #tpu.dot_dimension_numbers<[1], [0], [0], [1], [0, 0, 1, 1], [], []>} : vector<8x128xf32>, vector<128x512xf32>, vector<8x512xf32> -> vector<8x512xf32>
    %697 = arith.addf %695, %696 : vector<8x512xf32>
    %698 = arith.index_cast %691 : i32 to index
    %c0_193 = arith.constant 0 : index
    %c0_194 = arith.constant 0 : index
    %699 = vector.load %arg3[%698, %c0_193, %c0_194] : memref<8x8x512xbf16, #tpu.memory_space<vmem>>, vector<1x8x512xbf16>
    %700 = vector.shape_cast %699 : vector<1x8x512xbf16> to vector<8x512xbf16>
    %701 = arith.extf %700 : vector<8x512xbf16> to vector<8x512xf32>
    %cst_195 = arith.constant dense<0.000000e+00> : vector<8x512xf32>
    %702 = tpu.matmul %686, %5, %cst_195 {dimension_numbers = #tpu.dot_dimension_numbers<[1], [0], [0], [1], [0, 0, 1, 1], [], []>} : vector<8x128xf32>, vector<128x512xf32>, vector<8x512xf32> -> vector<8x512xf32>
    %703 = arith.addf %701, %702 : vector<8x512xf32>
    %704 = vector.extract_strided_slice %697 {offsets = [0, 0], sizes = [8, 128], strides = [1, 1]} : vector<8x512xf32> to vector<8x128xf32>
    %cst_196 = arith.constant 5.000000e-01 : f32
    %705 = vector.broadcast %cst_196 : f32 to vector<8x128xf32>
    %706 = arith.mulf %705, %704 : vector<8x128xf32>
    %707 = math.tanh %706 : vector<8x128xf32>
    %cst_197 = arith.constant 5.000000e-01 : f32
    %708 = vector.broadcast %cst_197 : f32 to vector<8x128xf32>
    %709 = arith.mulf %708, %707 : vector<8x128xf32>
    %cst_198 = arith.constant 5.000000e-01 : f32
    %710 = vector.broadcast %cst_198 : f32 to vector<8x128xf32>
    %711 = arith.addf %709, %710 : vector<8x128xf32>
    %712 = vector.extract_strided_slice %697 {offsets = [0, 128], sizes = [8, 128], strides = [1, 1]} : vector<8x512xf32> to vector<8x128xf32>
    %cst_199 = arith.constant 5.000000e-01 : f32
    %713 = vector.broadcast %cst_199 : f32 to vector<8x128xf32>
    %714 = arith.mulf %713, %712 : vector<8x128xf32>
    %715 = math.tanh %714 : vector<8x128xf32>
    %cst_200 = arith.constant 5.000000e-01 : f32
    %716 = vector.broadcast %cst_200 : f32 to vector<8x128xf32>
    %717 = arith.mulf %716, %715 : vector<8x128xf32>
    %cst_201 = arith.constant 5.000000e-01 : f32
    %718 = vector.broadcast %cst_201 : f32 to vector<8x128xf32>
    %719 = arith.addf %717, %718 : vector<8x128xf32>
    %720 = vector.extract_strided_slice %697 {offsets = [0, 256], sizes = [8, 128], strides = [1, 1]} : vector<8x512xf32> to vector<8x128xf32>
    %721 = math.tanh %720 : vector<8x128xf32>
    %722 = vector.extract_strided_slice %697 {offsets = [0, 384], sizes = [8, 128], strides = [1, 1]} : vector<8x512xf32> to vector<8x128xf32>
    %cst_202 = arith.constant 5.000000e-01 : f32
    %723 = vector.broadcast %cst_202 : f32 to vector<8x128xf32>
    %724 = arith.mulf %723, %722 : vector<8x128xf32>
    %725 = math.tanh %724 : vector<8x128xf32>
    %cst_203 = arith.constant 5.000000e-01 : f32
    %726 = vector.broadcast %cst_203 : f32 to vector<8x128xf32>
    %727 = arith.mulf %726, %725 : vector<8x128xf32>
    %cst_204 = arith.constant 5.000000e-01 : f32
    %728 = vector.broadcast %cst_204 : f32 to vector<8x128xf32>
    %729 = arith.addf %727, %728 : vector<8x128xf32>
    %730 = arith.mulf %719, %682 : vector<8x128xf32>
    %731 = arith.mulf %711, %721 : vector<8x128xf32>
    %732 = arith.addf %730, %731 : vector<8x128xf32>
    %733 = math.tanh %732 : vector<8x128xf32>
    %734 = arith.mulf %729, %733 : vector<8x128xf32>
    %735 = vector.extract_strided_slice %703 {offsets = [0, 0], sizes = [8, 128], strides = [1, 1]} : vector<8x512xf32> to vector<8x128xf32>
    %cst_205 = arith.constant 5.000000e-01 : f32
    %736 = vector.broadcast %cst_205 : f32 to vector<8x128xf32>
    %737 = arith.mulf %736, %735 : vector<8x128xf32>
    %738 = math.tanh %737 : vector<8x128xf32>
    %cst_206 = arith.constant 5.000000e-01 : f32
    %739 = vector.broadcast %cst_206 : f32 to vector<8x128xf32>
    %740 = arith.mulf %739, %738 : vector<8x128xf32>
    %cst_207 = arith.constant 5.000000e-01 : f32
    %741 = vector.broadcast %cst_207 : f32 to vector<8x128xf32>
    %742 = arith.addf %740, %741 : vector<8x128xf32>
    %743 = vector.extract_strided_slice %703 {offsets = [0, 128], sizes = [8, 128], strides = [1, 1]} : vector<8x512xf32> to vector<8x128xf32>
    %cst_208 = arith.constant 5.000000e-01 : f32
    %744 = vector.broadcast %cst_208 : f32 to vector<8x128xf32>
    %745 = arith.mulf %744, %743 : vector<8x128xf32>
    %746 = math.tanh %745 : vector<8x128xf32>
    %cst_209 = arith.constant 5.000000e-01 : f32
    %747 = vector.broadcast %cst_209 : f32 to vector<8x128xf32>
    %748 = arith.mulf %747, %746 : vector<8x128xf32>
    %cst_210 = arith.constant 5.000000e-01 : f32
    %749 = vector.broadcast %cst_210 : f32 to vector<8x128xf32>
    %750 = arith.addf %748, %749 : vector<8x128xf32>
    %751 = vector.extract_strided_slice %703 {offsets = [0, 256], sizes = [8, 128], strides = [1, 1]} : vector<8x512xf32> to vector<8x128xf32>
    %752 = math.tanh %751 : vector<8x128xf32>
    %753 = vector.extract_strided_slice %703 {offsets = [0, 384], sizes = [8, 128], strides = [1, 1]} : vector<8x512xf32> to vector<8x128xf32>
    %cst_211 = arith.constant 5.000000e-01 : f32
    %754 = vector.broadcast %cst_211 : f32 to vector<8x128xf32>
    %755 = arith.mulf %754, %753 : vector<8x128xf32>
    %756 = math.tanh %755 : vector<8x128xf32>
    %cst_212 = arith.constant 5.000000e-01 : f32
    %757 = vector.broadcast %cst_212 : f32 to vector<8x128xf32>
    %758 = arith.mulf %757, %756 : vector<8x128xf32>
    %cst_213 = arith.constant 5.000000e-01 : f32
    %759 = vector.broadcast %cst_213 : f32 to vector<8x128xf32>
    %760 = arith.addf %758, %759 : vector<8x128xf32>
    %761 = arith.mulf %750, %690 : vector<8x128xf32>
    %762 = arith.mulf %742, %752 : vector<8x128xf32>
    %763 = arith.addf %761, %762 : vector<8x128xf32>
    %764 = math.tanh %763 : vector<8x128xf32>
    %765 = arith.mulf %760, %764 : vector<8x128xf32>
    %766 = arith.addi %6, %c6_i32 : i32
    %767 = vector.broadcast %766 : i32 to vector<8x1xi32>
    %768 = arith.cmpi slt, %767, %3 : vector<8x1xi32>
    %769 = arith.extui %768 : vector<8x1xi1> to vector<8x1xi32>
    %770 = arith.sitofp %769 : vector<8x1xi32> to vector<8x1xf32>
    %771 = arith.addi %8, %691 : i32
    %772 = vector.broadcast %771 : i32 to vector<8x1xi32>
    %773 = arith.cmpi slt, %772, %3 : vector<8x1xi32>
    %774 = arith.extui %773 : vector<8x1xi1> to vector<8x1xi32>
    %775 = arith.sitofp %774 : vector<8x1xi32> to vector<8x1xf32>
    %776 = vector.broadcast %770 : vector<8x1xf32> to vector<8x128xf32>
    %777 = arith.mulf %734, %776 : vector<8x128xf32>
    %778 = arith.index_cast %c6_i32 : i32 to index
    %c0_214 = arith.constant 0 : index
    %c0_215 = arith.constant 0 : index
    %779 = vector.load %arg6[%778, %c0_214, %c0_215] : memref<8x8x128xf32, #tpu.memory_space<vmem>>, vector<1x8x128xf32>
    %780 = vector.shape_cast %779 : vector<1x8x128xf32> to vector<8x128xf32>
    %781 = vector.shape_cast %777 : vector<8x128xf32> to vector<1x8x128xf32>
    tpu.vector_store %arg6[%778, %c0_214, %c0_215], %781 {strides = array<i32>} : memref<8x8x128xf32, #tpu.memory_space<vmem>>, vector<1x8x128xf32>,
    %782 = vector.broadcast %775 : vector<8x1xf32> to vector<8x128xf32>
    %783 = arith.mulf %765, %782 : vector<8x128xf32>
    %784 = arith.index_cast %691 : i32 to index
    %c0_216 = arith.constant 0 : index
    %c0_217 = arith.constant 0 : index
    %785 = vector.load %arg7[%784, %c0_216, %c0_217] : memref<8x8x128xf32, #tpu.memory_space<vmem>>, vector<1x8x128xf32>
    %786 = vector.shape_cast %785 : vector<1x8x128xf32> to vector<8x128xf32>
    %787 = vector.shape_cast %783 : vector<8x128xf32> to vector<1x8x128xf32>
    tpu.vector_store %arg7[%784, %c0_216, %c0_217], %787 {strides = array<i32>} : memref<8x8x128xf32, #tpu.memory_space<vmem>>, vector<1x8x128xf32>,
    %788 = arith.subf %734, %678 : vector<8x128xf32>
    %789 = vector.broadcast %770 : vector<8x1xf32> to vector<8x128xf32>
    %790 = arith.mulf %789, %788 : vector<8x128xf32>
    %791 = arith.addf %678, %790 : vector<8x128xf32>
    %792 = arith.subf %732, %682 : vector<8x128xf32>
    %793 = vector.broadcast %770 : vector<8x1xf32> to vector<8x128xf32>
    %794 = arith.mulf %793, %792 : vector<8x128xf32>
    %795 = arith.addf %682, %794 : vector<8x128xf32>
    %796 = arith.subf %765, %686 : vector<8x128xf32>
    %797 = vector.broadcast %775 : vector<8x1xf32> to vector<8x128xf32>
    %798 = arith.mulf %797, %796 : vector<8x128xf32>
    %799 = arith.addf %686, %798 : vector<8x128xf32>
    %800 = arith.subf %763, %690 : vector<8x128xf32>
    %801 = vector.broadcast %775 : vector<8x1xf32> to vector<8x128xf32>
    %802 = arith.mulf %801, %800 : vector<8x128xf32>
    %803 = arith.addf %690, %802 : vector<8x128xf32>
    %c7_i32_218 = arith.constant 7 : i32
    %c7_i32_219 = arith.constant 7 : i32
    %804 = arith.subi %c7_i32_219, %c7_i32_218 : i32
    %805 = arith.index_cast %c7_i32_218 : i32 to index
    %c0_220 = arith.constant 0 : index
    %c0_221 = arith.constant 0 : index
    %806 = vector.load %arg2[%805, %c0_220, %c0_221] : memref<8x8x512xbf16, #tpu.memory_space<vmem>>, vector<1x8x512xbf16>
    %807 = vector.shape_cast %806 : vector<1x8x512xbf16> to vector<8x512xbf16>
    %808 = arith.extf %807 : vector<8x512xbf16> to vector<8x512xf32>
    %cst_222 = arith.constant dense<0.000000e+00> : vector<8x512xf32>
    %809 = tpu.matmul %791, %4, %cst_222 {dimension_numbers = #tpu.dot_dimension_numbers<[1], [0], [0], [1], [0, 0, 1, 1], [], []>} : vector<8x128xf32>, vector<128x512xf32>, vector<8x512xf32> -> vector<8x512xf32>
    %810 = arith.addf %808, %809 : vector<8x512xf32>
    %811 = arith.index_cast %804 : i32 to index
    %c0_223 = arith.constant 0 : index
    %c0_224 = arith.constant 0 : index
    %812 = vector.load %arg3[%811, %c0_223, %c0_224] : memref<8x8x512xbf16, #tpu.memory_space<vmem>>, vector<1x8x512xbf16>
    %813 = vector.shape_cast %812 : vector<1x8x512xbf16> to vector<8x512xbf16>
    %814 = arith.extf %813 : vector<8x512xbf16> to vector<8x512xf32>
    %cst_225 = arith.constant dense<0.000000e+00> : vector<8x512xf32>
    %815 = tpu.matmul %799, %5, %cst_225 {dimension_numbers = #tpu.dot_dimension_numbers<[1], [0], [0], [1], [0, 0, 1, 1], [], []>} : vector<8x128xf32>, vector<128x512xf32>, vector<8x512xf32> -> vector<8x512xf32>
    %816 = arith.addf %814, %815 : vector<8x512xf32>
    %817 = vector.extract_strided_slice %810 {offsets = [0, 0], sizes = [8, 128], strides = [1, 1]} : vector<8x512xf32> to vector<8x128xf32>
    %cst_226 = arith.constant 5.000000e-01 : f32
    %818 = vector.broadcast %cst_226 : f32 to vector<8x128xf32>
    %819 = arith.mulf %818, %817 : vector<8x128xf32>
    %820 = math.tanh %819 : vector<8x128xf32>
    %cst_227 = arith.constant 5.000000e-01 : f32
    %821 = vector.broadcast %cst_227 : f32 to vector<8x128xf32>
    %822 = arith.mulf %821, %820 : vector<8x128xf32>
    %cst_228 = arith.constant 5.000000e-01 : f32
    %823 = vector.broadcast %cst_228 : f32 to vector<8x128xf32>
    %824 = arith.addf %822, %823 : vector<8x128xf32>
    %825 = vector.extract_strided_slice %810 {offsets = [0, 128], sizes = [8, 128], strides = [1, 1]} : vector<8x512xf32> to vector<8x128xf32>
    %cst_229 = arith.constant 5.000000e-01 : f32
    %826 = vector.broadcast %cst_229 : f32 to vector<8x128xf32>
    %827 = arith.mulf %826, %825 : vector<8x128xf32>
    %828 = math.tanh %827 : vector<8x128xf32>
    %cst_230 = arith.constant 5.000000e-01 : f32
    %829 = vector.broadcast %cst_230 : f32 to vector<8x128xf32>
    %830 = arith.mulf %829, %828 : vector<8x128xf32>
    %cst_231 = arith.constant 5.000000e-01 : f32
    %831 = vector.broadcast %cst_231 : f32 to vector<8x128xf32>
    %832 = arith.addf %830, %831 : vector<8x128xf32>
    %833 = vector.extract_strided_slice %810 {offsets = [0, 256], sizes = [8, 128], strides = [1, 1]} : vector<8x512xf32> to vector<8x128xf32>
    %834 = math.tanh %833 : vector<8x128xf32>
    %835 = vector.extract_strided_slice %810 {offsets = [0, 384], sizes = [8, 128], strides = [1, 1]} : vector<8x512xf32> to vector<8x128xf32>
    %cst_232 = arith.constant 5.000000e-01 : f32
    %836 = vector.broadcast %cst_232 : f32 to vector<8x128xf32>
    %837 = arith.mulf %836, %835 : vector<8x128xf32>
    %838 = math.tanh %837 : vector<8x128xf32>
    %cst_233 = arith.constant 5.000000e-01 : f32
    %839 = vector.broadcast %cst_233 : f32 to vector<8x128xf32>
    %840 = arith.mulf %839, %838 : vector<8x128xf32>
    %cst_234 = arith.constant 5.000000e-01 : f32
    %841 = vector.broadcast %cst_234 : f32 to vector<8x128xf32>
    %842 = arith.addf %840, %841 : vector<8x128xf32>
    %843 = arith.mulf %832, %795 : vector<8x128xf32>
    %844 = arith.mulf %824, %834 : vector<8x128xf32>
    %845 = arith.addf %843, %844 : vector<8x128xf32>
    %846 = math.tanh %845 : vector<8x128xf32>
    %847 = arith.mulf %842, %846 : vector<8x128xf32>
    %848 = vector.extract_strided_slice %816 {offsets = [0, 0], sizes = [8, 128], strides = [1, 1]} : vector<8x512xf32> to vector<8x128xf32>
    %cst_235 = arith.constant 5.000000e-01 : f32
    %849 = vector.broadcast %cst_235 : f32 to vector<8x128xf32>
    %850 = arith.mulf %849, %848 : vector<8x128xf32>
    %851 = math.tanh %850 : vector<8x128xf32>
    %cst_236 = arith.constant 5.000000e-01 : f32
    %852 = vector.broadcast %cst_236 : f32 to vector<8x128xf32>
    %853 = arith.mulf %852, %851 : vector<8x128xf32>
    %cst_237 = arith.constant 5.000000e-01 : f32
    %854 = vector.broadcast %cst_237 : f32 to vector<8x128xf32>
    %855 = arith.addf %853, %854 : vector<8x128xf32>
    %856 = vector.extract_strided_slice %816 {offsets = [0, 128], sizes = [8, 128], strides = [1, 1]} : vector<8x512xf32> to vector<8x128xf32>
    %cst_238 = arith.constant 5.000000e-01 : f32
    %857 = vector.broadcast %cst_238 : f32 to vector<8x128xf32>
    %858 = arith.mulf %857, %856 : vector<8x128xf32>
    %859 = math.tanh %858 : vector<8x128xf32>
    %cst_239 = arith.constant 5.000000e-01 : f32
    %860 = vector.broadcast %cst_239 : f32 to vector<8x128xf32>
    %861 = arith.mulf %860, %859 : vector<8x128xf32>
    %cst_240 = arith.constant 5.000000e-01 : f32
    %862 = vector.broadcast %cst_240 : f32 to vector<8x128xf32>
    %863 = arith.addf %861, %862 : vector<8x128xf32>
    %864 = vector.extract_strided_slice %816 {offsets = [0, 256], sizes = [8, 128], strides = [1, 1]} : vector<8x512xf32> to vector<8x128xf32>
    %865 = math.tanh %864 : vector<8x128xf32>
    %866 = vector.extract_strided_slice %816 {offsets = [0, 384], sizes = [8, 128], strides = [1, 1]} : vector<8x512xf32> to vector<8x128xf32>
    %cst_241 = arith.constant 5.000000e-01 : f32
    %867 = vector.broadcast %cst_241 : f32 to vector<8x128xf32>
    %868 = arith.mulf %867, %866 : vector<8x128xf32>
    %869 = math.tanh %868 : vector<8x128xf32>
    %cst_242 = arith.constant 5.000000e-01 : f32
    %870 = vector.broadcast %cst_242 : f32 to vector<8x128xf32>
    %871 = arith.mulf %870, %869 : vector<8x128xf32>
    %cst_243 = arith.constant 5.000000e-01 : f32
    %872 = vector.broadcast %cst_243 : f32 to vector<8x128xf32>
    %873 = arith.addf %871, %872 : vector<8x128xf32>
    %874 = arith.mulf %863, %803 : vector<8x128xf32>
    %875 = arith.mulf %855, %865 : vector<8x128xf32>
    %876 = arith.addf %874, %875 : vector<8x128xf32>
    %877 = math.tanh %876 : vector<8x128xf32>
    %878 = arith.mulf %873, %877 : vector<8x128xf32>
    %879 = arith.addi %6, %c7_i32_218 : i32
    %880 = vector.broadcast %879 : i32 to vector<8x1xi32>
    %881 = arith.cmpi slt, %880, %3 : vector<8x1xi32>
    %882 = arith.extui %881 : vector<8x1xi1> to vector<8x1xi32>
    %883 = arith.sitofp %882 : vector<8x1xi32> to vector<8x1xf32>
    %884 = arith.addi %8, %804 : i32
    %885 = vector.broadcast %884 : i32 to vector<8x1xi32>
    %886 = arith.cmpi slt, %885, %3 : vector<8x1xi32>
    %887 = arith.extui %886 : vector<8x1xi1> to vector<8x1xi32>
    %888 = arith.sitofp %887 : vector<8x1xi32> to vector<8x1xf32>
    %889 = vector.broadcast %883 : vector<8x1xf32> to vector<8x128xf32>
    %890 = arith.mulf %847, %889 : vector<8x128xf32>
    %891 = arith.index_cast %c7_i32_218 : i32 to index
    %c0_244 = arith.constant 0 : index
    %c0_245 = arith.constant 0 : index
    %892 = vector.load %arg6[%891, %c0_244, %c0_245] : memref<8x8x128xf32, #tpu.memory_space<vmem>>, vector<1x8x128xf32>
    %893 = vector.shape_cast %892 : vector<1x8x128xf32> to vector<8x128xf32>
    %894 = vector.shape_cast %890 : vector<8x128xf32> to vector<1x8x128xf32>
    tpu.vector_store %arg6[%891, %c0_244, %c0_245], %894 {strides = array<i32>} : memref<8x8x128xf32, #tpu.memory_space<vmem>>, vector<1x8x128xf32>,
    %895 = vector.broadcast %888 : vector<8x1xf32> to vector<8x128xf32>
    %896 = arith.mulf %878, %895 : vector<8x128xf32>
    %897 = arith.index_cast %804 : i32 to index
    %c0_246 = arith.constant 0 : index
    %c0_247 = arith.constant 0 : index
    %898 = vector.load %arg7[%897, %c0_246, %c0_247] : memref<8x8x128xf32, #tpu.memory_space<vmem>>, vector<1x8x128xf32>
    %899 = vector.shape_cast %898 : vector<1x8x128xf32> to vector<8x128xf32>
    %900 = vector.shape_cast %896 : vector<8x128xf32> to vector<1x8x128xf32>
    tpu.vector_store %arg7[%897, %c0_246, %c0_247], %900 {strides = array<i32>} : memref<8x8x128xf32, #tpu.memory_space<vmem>>, vector<1x8x128xf32>,
    %901 = arith.subf %847, %791 : vector<8x128xf32>
    %902 = vector.broadcast %883 : vector<8x1xf32> to vector<8x128xf32>
    %903 = arith.mulf %902, %901 : vector<8x128xf32>
    %904 = arith.addf %791, %903 : vector<8x128xf32>
    %905 = arith.subf %845, %795 : vector<8x128xf32>
    %906 = vector.broadcast %883 : vector<8x1xf32> to vector<8x128xf32>
    %907 = arith.mulf %906, %905 : vector<8x128xf32>
    %908 = arith.addf %795, %907 : vector<8x128xf32>
    %909 = arith.subf %878, %799 : vector<8x128xf32>
    %910 = vector.broadcast %888 : vector<8x1xf32> to vector<8x128xf32>
    %911 = arith.mulf %910, %909 : vector<8x128xf32>
    %912 = arith.addf %799, %911 : vector<8x128xf32>
    %913 = arith.subf %876, %803 : vector<8x128xf32>
    %914 = vector.broadcast %888 : vector<8x1xf32> to vector<8x128xf32>
    %915 = arith.mulf %914, %913 : vector<8x128xf32>
    %916 = arith.addf %803, %915 : vector<8x128xf32>
    %c8_i32_248 = arith.constant 8 : i32
    %c0_249 = arith.constant 0 : index
    %c0_250 = arith.constant 0 : index
    %917 = vector.load %arg8[%c0_249, %c0_250] : memref<8x128xf32, #tpu.memory_space<vmem>>, vector<8x128xf32>
    tpu.vector_store %arg8[%c0_249, %c0_250], %904 {strides = array<i32>} : memref<8x128xf32, #tpu.memory_space<vmem>>, vector<8x128xf32>,
    %c0_251 = arith.constant 0 : index
    %c0_252 = arith.constant 0 : index
    %918 = vector.load %arg9[%c0_251, %c0_252] : memref<8x128xf32, #tpu.memory_space<vmem>>, vector<8x128xf32>
    tpu.vector_store %arg9[%c0_251, %c0_252], %908 {strides = array<i32>} : memref<8x128xf32, #tpu.memory_space<vmem>>, vector<8x128xf32>,
    %c0_253 = arith.constant 0 : index
    %c0_254 = arith.constant 0 : index
    %919 = vector.load %arg10[%c0_253, %c0_254] : memref<8x128xf32, #tpu.memory_space<vmem>>, vector<8x128xf32>
    tpu.vector_store %arg10[%c0_253, %c0_254], %912 {strides = array<i32>} : memref<8x128xf32, #tpu.memory_space<vmem>>, vector<8x128xf32>,
    %c0_255 = arith.constant 0 : index
    %c0_256 = arith.constant 0 : index
    %920 = vector.load %arg11[%c0_255, %c0_256] : memref<8x128xf32, #tpu.memory_space<vmem>>, vector<8x128xf32>
    tpu.vector_store %arg11[%c0_255, %c0_256], %916 {strides = array<i32>} : memref<8x128xf32, #tpu.memory_space<vmem>>, vector<8x128xf32>,
    return
  }
  func.func @transform_0(%arg0: i32) -> (i32, i32) {
    %c0_i32 = arith.constant 0 : i32
    %c0_i32_0 = arith.constant 0 : i32
    %c0_i32_1 = arith.constant 0 : i32
    return %c0_i32, %c0_i32_0 : i32, i32
  }
  func.func @transform_1(%arg0: i32) -> (i32, i32, i32) {
    %c0_i32 = arith.constant 0 : i32
    %c0_i32_0 = arith.constant 0 : i32
    %c0_i32_1 = arith.constant 0 : i32
    return %arg0, %c0_i32, %c0_i32_0 : i32, i32, i32
  }
  func.func @transform_2(%arg0: i32) -> (i32, i32, i32) {
    %c0_i32 = arith.constant 0 : i32
    %0 = arith.subi %c0_i32, %arg0 : i32
    %c0_i32_0 = arith.constant 0 : i32
    %c1_i32 = arith.constant 1 : i32
    %c0_i32_1 = arith.constant 0 : i32
    return %0, %c0_i32_0, %c1_i32 : i32, i32, i32
  }
  func.func @transform_3(%arg0: i32) -> (i32, i32) {
    %c0_i32 = arith.constant 0 : i32
    %c0_i32_0 = arith.constant 0 : i32
    %c0_i32_1 = arith.constant 0 : i32
    return %c0_i32, %c0_i32_0 : i32, i32
  }
  func.func @transform_4(%arg0: i32) -> (i32, i32) {
    %c0_i32 = arith.constant 0 : i32
    %c0_i32_0 = arith.constant 0 : i32
    %c0_i32_1 = arith.constant 0 : i32
    return %c0_i32, %c0_i32_0 : i32, i32
  }
  func.func @transform_5(%arg0: i32) -> (i32, i32, i32) {
    %c0_i32 = arith.constant 0 : i32
    %c0_i32_0 = arith.constant 0 : i32
    %c0_i32_1 = arith.constant 0 : i32
    return %arg0, %c0_i32, %c0_i32_0 : i32, i32, i32
  }
  func.func @transform_6(%arg0: i32) -> (i32, i32, i32) {
    %c0_i32 = arith.constant 0 : i32
    %0 = arith.subi %c0_i32, %arg0 : i32
    %c0_i32_0 = arith.constant 0 : i32
    %c0_i32_1 = arith.constant 0 : i32
    %c0_i32_2 = arith.constant 0 : i32
    return %0, %c0_i32_0, %c0_i32_1 : i32, i32, i32
  }
}

</mosaic_0001>

<llo_original>
// kernel: bilstm_forward.5
$region0: #{bilstm_forward.5}
  #allocation0 [shape = 'u32[]', space=smem, size = 0x4, offset = 0x4, fixed_abs, tag = 'smem constant byte address 0x4 - core index']
  #allocation1 [shape = 'u32[144,128]{1,0:T(1,128)}', space=vmem, size = 0x12000, scoped, tag = 'internal scratch']
  %s0 = inlined_call_operand.vmem [shape: f32[64,128], index: 0, kind: input, shape index: {}]
  %s1 = inlined_call_operand.vmem [shape: f32[64,128], index: 1, kind: input, shape index: {}]
  %s2 = inlined_call_operand.vmem [shape: f32[128,128], index: 2, kind: input, shape index: {}]
  %s3 = inlined_call_operand.vmem [shape: f32[128,128], index: 3, kind: input, shape index: {}]
  %s4 = inlined_call_operand.vmem [shape: f32[1,128], index: 4, kind: input, shape index: {}]
  %s5 = inlined_call_operand.vmem [shape: f32[128,128], index: 5, kind: input, shape index: {}]
  %s6 = inlined_call_operand.vmem [shape: f32[1,128], index: 6, kind: input, shape index: {}]
  %s7 = inlined_call_operand.vmem [shape: f32[64,128], index: 7, kind: output, shape index: {}]
  %s8 = sld [smem:[#allocation0]]
  $region38: #{bilstm_forward.5} parent=0
    _
  %s10 = ssub.s32 1, %s8
  %s11 = scalar_select 0, %s10, %s8
  // Predicated region
  $region2: #{bilstm_forward.5} parent=0 // pred_check
    _
  $region3: #{bilstm_forward.5} parent=0 // pred_check_branch
    %13 = sbr.rel (0) target = $region5
  $region4: #{bilstm_forward.5} parent=0 // pred_region
    _
  $region5: #{bilstm_forward.5} parent=0 // pred_fallthru
    _
  // Predicated region
  $region6: #{bilstm_forward.5} parent=0 // pred_check
    _
  $region7: #{bilstm_forward.5} parent=0 // pred_check_branch
    %15 = sbr.rel (0) target = $region9
  $region8: #{bilstm_forward.5} parent=0 // pred_region
    _
  $region9: #{bilstm_forward.5} parent=0 // pred_fallthru
    _
  // Predicated region
  $region10: #{bilstm_forward.5} parent=0 // pred_check
    _
  $region11: #{bilstm_forward.5} parent=0 // pred_check_branch
    %17 = sbr.rel (0) target = $region13
  $region12: #{bilstm_forward.5} parent=0 // pred_region
    _
  $region13: #{bilstm_forward.5} parent=0 // pred_fallthru
    _
  // Predicated region
  $region14: #{bilstm_forward.5} parent=0 // pred_check
    _
  $region15: #{bilstm_forward.5} parent=0 // pred_check_branch
    %19 = sbr.rel (0) target = $region17
  $region16: #{bilstm_forward.5} parent=0 // pred_region
    _
  $region17: #{bilstm_forward.5} parent=0 // pred_fallthru
    _
  // Predicated region
  $region18: #{bilstm_forward.5} parent=0 // pred_check
    _
  $region19: #{bilstm_forward.5} parent=0 // pred_check_branch
    %21 = sbr.rel (0) target = $region21
  $region20: #{bilstm_forward.5} parent=0 // pred_region
    _
  $region21: #{bilstm_forward.5} parent=0 // pred_fallthru
    _
  // Predicated region
  $region22: #{bilstm_forward.5} parent=0 // pred_check
    _
  $region23: #{bilstm_forward.5} parent=0 // pred_check_branch
    %23 = sbr.rel (0) target = $region25
  $region24: #{bilstm_forward.5} parent=0 // pred_region
    _
  $region25: #{bilstm_forward.5} parent=0 // pred_fallthru
    _
  // Predicated region
  $region26: #{bilstm_forward.5} parent=0 // pred_check
    _
  $region27: #{bilstm_forward.5} parent=0 // pred_check_branch
    %25 = sbr.rel (0) target = $region29
  $region28: #{bilstm_forward.5} parent=0 // pred_region
    _
  $region29: #{bilstm_forward.5} parent=0 // pred_fallthru
    _
  %v26 = vld [vmem:[%s0] sm:$0xff]
  %v27 = vld [vmem:[%s0 + $0x8] sm:$0xff]
  %v28 = vld [vmem:[%s0 + $0x10] sm:$0xff]
  %v29 = vld [vmem:[%s0 + $0x18] sm:$0xff]
  %v30 = vld [vmem:[%s0 + $0x20] sm:$0xff]
  %v31 = vld [vmem:[%s0 + $0x28] sm:$0xff]
  %v32 = vld [vmem:[%s0 + $0x30] sm:$0xff]
  %v33 = vld [vmem:[%s0 + $0x38] sm:$0xff]
  %v34 = vld [vmem:[%s2] sm:$0xff]
  %v35 = vld [vmem:[%s2 + $0x8] sm:$0xff]
  %v36 = vld [vmem:[%s2 + $0x10] sm:$0xff]
  %v37 = vld [vmem:[%s2 + $0x18] sm:$0xff]
  %v38 = vld [vmem:[%s2 + $0x20] sm:$0xff]
  %v39 = vld [vmem:[%s2 + $0x28] sm:$0xff]
  %v40 = vld [vmem:[%s2 + $0x30] sm:$0xff]
  %v41 = vld [vmem:[%s2 + $0x38] sm:$0xff]
  %v42 = vld [vmem:[%s2 + $0x40] sm:$0xff]
  %v43 = vld [vmem:[%s2 + $0x48] sm:$0xff]
  %v44 = vld [vmem:[%s2 + $0x50] sm:$0xff]
  %v45 = vld [vmem:[%s2 + $0x58] sm:$0xff]
  %v46 = vld [vmem:[%s2 + $0x60] sm:$0xff]
  %v47 = vld [vmem:[%s2 + $0x68] sm:$0xff]
  %v48 = vld [vmem:[%s2 + $0x70] sm:$0xff]
  %v49 = vld [vmem:[%s2 + $0x78] sm:$0xff]
  %v50 = vld [vmem:[%s1] sm:$0xff]
  %v51 = vld [vmem:[%s1 + $0x8] sm:$0xff]
  %v52 = vld [vmem:[%s1 + $0x10] sm:$0xff]
  %v53 = vld [vmem:[%s1 + $0x18] sm:$0xff]
  %v54 = vld [vmem:[%s1 + $0x20] sm:$0xff]
  %v55 = vld [vmem:[%s1 + $0x28] sm:$0xff]
  %v56 = vld [vmem:[%s1 + $0x30] sm:$0xff]
  %v57 = vld [vmem:[%s1 + $0x38] sm:$0xff]
  %v58 = vld [vmem:[%s3] sm:$0xff]
  %v59 = vld [vmem:[%s3 + $0x8] sm:$0xff]
  %v60 = vld [vmem:[%s3 + $0x10] sm:$0xff]
  %v61 = vld [vmem:[%s3 + $0x18] sm:$0xff]
  %v62 = vld [vmem:[%s3 + $0x20] sm:$0xff]
  %v63 = vld [vmem:[%s3 + $0x28] sm:$0xff]
  %v64 = vld [vmem:[%s3 + $0x30] sm:$0xff]
  %v65 = vld [vmem:[%s3 + $0x38] sm:$0xff]
  %v66 = vld [vmem:[%s3 + $0x40] sm:$0xff]
  %v67 = vld [vmem:[%s3 + $0x48] sm:$0xff]
  %v68 = vld [vmem:[%s3 + $0x50] sm:$0xff]
  %v69 = vld [vmem:[%s3 + $0x58] sm:$0xff]
  %v70 = vld [vmem:[%s3 + $0x60] sm:$0xff]
  %v71 = vld [vmem:[%s3 + $0x68] sm:$0xff]
  %v72 = vld [vmem:[%s3 + $0x70] sm:$0xff]
  %v73 = vld [vmem:[%s3 + $0x78] sm:$0xff]
  %74 = vmatprep.subr.mxu0 0.0
  %75 = vmatpush1.msra.mxu0 %v58
  %76 = vmatprep.subr.mxu0 0.0
  %77 = vmatpush1.msra.mxu0 %v59
  %78 = vmatprep.subr.mxu0 0.0
  %79 = vmatpush1.msra.mxu0 %v60
  %80 = vmatprep.subr.mxu0 0.0
  %81 = vmatpush1.msra.mxu0 %v61
  %82 = vmatprep.subr.mxu0 0.0
  %83 = vmatpush1.msra.mxu0 %v62
  %84 = vmatprep.subr.mxu0 0.0
  %85 = vmatpush1.msra.mxu0 %v63
  %86 = vmatprep.subr.mxu0 0.0
  %87 = vmatpush1.msra.mxu0 %v64
  %88 = vmatprep.subr.mxu0 0.0
  %89 = vmatpush1.msra.mxu0 %v65
  %90 = vmatprep.subr.mxu0 0.0
  %91 = vmatpush1.msra.mxu0 %v66
  %92 = vmatprep.subr.mxu0 0.0
  %93 = vmatpush1.msra.mxu0 %v67
  %94 = vmatprep.subr.mxu0 0.0
  %95 = vmatpush1.msra.mxu0 %v68
  %96 = vmatprep.subr.mxu0 0.0
  %97 = vmatpush1.msra.mxu0 %v69
  %98 = vmatprep.subr.mxu0 0.0
  %99 = vmatpush1.msra.mxu0 %v70
  %100 = vmatprep.subr.mxu0 0.0
  %101 = vmatpush1.msra.mxu0 %v71
  %102 = vmatprep.subr.mxu0 0.0
  %103 = vmatpush1.msra.mxu0 %v72
  %104 = vmatprep.subr.mxu0 0.0
  %105 = vmatpush1.msra.mxu0 %v73
  %106 = vmatprep.subr.mxu0 0.0
  %107 = vmatpush1.msra.mxu0 0.0
  %108 = vmatprep.subr.mxu0 0.0
  %109 = vmatpush1.msra.mxu0 0.0
  %110 = vmatprep.subr.mxu0 0.0
  %111 = vmatpush1.msra.mxu0 0.0
  %112 = vmatprep.subr.mxu0 0.0
  %113 = vmatpush1.msra.mxu0 0.0
  %114 = vmatprep.subr.mxu0 0.0
  %115 = vmatpush1.msra.mxu0 0.0
  %116 = vmatprep.subr.mxu0 0.0
  %117 = vmatpush1.msra.mxu0 0.0
  %118 = vmatprep.subr.mxu0 0.0
  %119 = vmatpush1.msra.mxu0 0.0
  %120 = vmatprep.subr.mxu0 0.0
  %121 = vmatpush1.msra.mxu0 0.0
  %122 = vmatprep.subr.mxu0 0.0
  %123 = vmatpush1.msra.mxu0 0.0
  %124 = vmatprep.subr.mxu0 0.0
  %125 = vmatpush1.msra.mxu0 0.0
  %126 = vmatprep.subr.mxu0 0.0
  %127 = vmatpush1.msra.mxu0 0.0
  %128 = vmatprep.subr.mxu0 0.0
  %129 = vmatpush1.msra.mxu0 0.0
  %130 = vmatprep.subr.mxu0 0.0
  %131 = vmatpush1.msra.mxu0 0.0
  %132 = vmatprep.subr.mxu0 0.0
  %133 = vmatpush1.msra.mxu0 0.0
  %134 = vmatprep.subr.mxu0 0.0
  %135 = vmatpush1.msra.mxu0 0.0
  %136 = vmatprep.subr.mxu0 0.0
  %137 = vmatpush1.msra.mxu0 0.0
  %138 = vmatprep.mubr.f32.mxu0 0.0
  %139 = vmatmul.mubr.f32.gmra.mrb[0].mxu0 %v50
  %v140 = vpop.f32.mrb[0].mxu0
  %v141 = vadd.f32 0.0, %v140
  %v142 = vpop.f32.mrb[0].mxu0
  %143 = vmatprep.mubr.f32.mxu0 0.0
  %144 = vmatmul.mubr.f32.gmra.mrb[0].mxu0 %v51
  %v145 = vpop.f32.mrb[0].mxu0
  %v146 = vadd.f32 0.0, %v145
  %v147 = vpop.f32.mrb[0].mxu0
  %148 = vmatprep.mubr.f32.mxu0 0.0
  %149 = vmatmul.mubr.f32.gmra.mrb[0].mxu0 %v52
  %v150 = vpop.f32.mrb[0].mxu0
  %v151 = vadd.f32 0.0, %v150
  %v152 = vpop.f32.mrb[0].mxu0
  %153 = vmatprep.mubr.f32.mxu0 0.0
  %154 = vmatmul.mubr.f32.gmra.mrb[0].mxu0 %v53
  %v155 = vpop.f32.mrb[0].mxu0
  %v156 = vadd.f32 0.0, %v155
  %v157 = vpop.f32.mrb[0].mxu0
  %158 = vmatprep.mubr.f32.mxu0 0.0
  %159 = vmatmul.mubr.f32.gmra.mrb[0].mxu0 %v54
  %v160 = vpop.f32.mrb[0].mxu0
  %v161 = vadd.f32 0.0, %v160
  %v162 = vpop.f32.mrb[0].mxu0
  %163 = vmatprep.mubr.f32.mxu0 0.0
  %164 = vmatmul.mubr.f32.gmra.mrb[0].mxu0 %v55
  %v165 = vpop.f32.mrb[0].mxu0
  %v166 = vadd.f32 0.0, %v165
  %v167 = vpop.f32.mrb[0].mxu0
  %168 = vmatprep.mubr.f32.mxu0 0.0
  %169 = vmatmul.mubr.f32.gmra.mrb[0].mxu0 %v56
  %v170 = vpop.f32.mrb[0].mxu0
  %v171 = vadd.f32 0.0, %v170
  %v172 = vpop.f32.mrb[0].mxu0
  %173 = vmatprep.mubr.f32.mxu0 0.0
  %174 = vmatmul.mubr.f32.gmra.mrb[0].mxu0 %v57
  %v175 = vpop.f32.mrb[0].mxu0
  %v176 = vadd.f32 0.0, %v175
  %v177 = vpop.f32.mrb[0].mxu0
  %178 = vdwg.mxu0
  %179 = vmatprep.subr.mxu0 0.0
  %180 = vmatpush1.msra.mxu0 %v34
  %181 = vmatprep.subr.mxu0 0.0
  %182 = vmatpush1.msra.mxu0 %v35
  %183 = vmatprep.subr.mxu0 0.0
  %184 = vmatpush1.msra.mxu0 %v36
  %185 = vmatprep.subr.mxu0 0.0
  %186 = vmatpush1.msra.mxu0 %v37
  %187 = vmatprep.subr.mxu0 0.0
  %188 = vmatpush1.msra.mxu0 %v38
  %189 = vmatprep.subr.mxu0 0.0
  %190 = vmatpush1.msra.mxu0 %v39
  %191 = vmatprep.subr.mxu0 0.0
  %192 = vmatpush1.msra.mxu0 %v40
  %193 = vmatprep.subr.mxu0 0.0
  %194 = vmatpush1.msra.mxu0 %v41
  %195 = vmatprep.subr.mxu0 0.0
  %196 = vmatpush1.msra.mxu0 %v42
  %197 = vmatprep.subr.mxu0 0.0
  %198 = vmatpush1.msra.mxu0 %v43
  %199 = vmatprep.subr.mxu0 0.0
  %200 = vmatpush1.msra.mxu0 %v44
  %201 = vmatprep.subr.mxu0 0.0
  %202 = vmatpush1.msra.mxu0 %v45
  %203 = vmatprep.subr.mxu0 0.0
  %204 = vmatpush1.msra.mxu0 %v46
  %205 = vmatprep.subr.mxu0 0.0
  %206 = vmatpush1.msra.mxu0 %v47
  %207 = vmatprep.subr.mxu0 0.0
  %208 = vmatpush1.msra.mxu0 %v48
  %209 = vmatprep.subr.mxu0 0.0
  %210 = vmatpush1.msra.mxu0 %v49
  %211 = vmatprep.subr.mxu0 0.0
  %212 = vmatpush1.msra.mxu0 0.0
  %213 = vmatprep.subr.mxu0 0.0
  %214 = vmatpush1.msra.mxu0 0.0
  %215 = vmatprep.subr.mxu0 0.0
  %216 = vmatpush1.msra.mxu0 0.0
  %217 = vmatprep.subr.mxu0 0.0
  %218 = vmatpush1.msra.mxu0 0.0
  %219 = vmatprep.subr.mxu0 0.0
  %220 = vmatpush1.msra.mxu0 0.0
  %221 = vmatprep.subr.mxu0 0.0
  %222 = vmatpush1.msra.mxu0 0.0
  %223 = vmatprep.subr.mxu0 0.0
  %224 = vmatpush1.msra.mxu0 0.0
  %225 = vmatprep.subr.mxu0 0.0
  %226 = vmatpush1.msra.mxu0 0.0
  %227 = vmatprep.subr.mxu0 0.0
  %228 = vmatpush1.msra.mxu0 0.0
  %229 = vmatprep.subr.mxu0 0.0
  %230 = vmatpush1.msra.mxu0 0.0
  %231 = vmatprep.subr.mxu0 0.0
  %232 = vmatpush1.msra.mxu0 0.0
  %233 = vmatprep.subr.mxu0 0.0
  %234 = vmatpush1.msra.mxu0 0.0
  %235 = vmatprep.subr.mxu0 0.0
  %236 = vmatpush1.msra.mxu0 0.0
  %237 = vmatprep.subr.mxu0 0.0
  %238 = vmatpush1.msra.mxu0 0.0
  %239 = vmatprep.subr.mxu0 0.0
  %240 = vmatpush1.msra.mxu0 0.0
  %241 = vmatprep.subr.mxu0 0.0
  %242 = vmatpush1.msra.mxu0 0.0
  %243 = vmatprep.mubr.f32.mxu0 0.0
  %244 = vmatmul.mubr.f32.gmra.mrb[0].mxu0 %v26
  %v245 = vpop.f32.mrb[0].mxu0
  %v246 = vadd.f32 %v141, %v245
  %v247 = vpop.f32.mrb[0].mxu0
  %248 = vmatprep.mubr.f32.mxu0 0.0
  %249 = vmatmul.mubr.f32.gmra.mrb[0].mxu0 %v27
  %v250 = vpop.f32.mrb[0].mxu0
  %v251 = vadd.f32 %v146, %v250
  %v252 = vpop.f32.mrb[0].mxu0
  %253 = vmatprep.mubr.f32.mxu0 0.0
  %254 = vmatmul.mubr.f32.gmra.mrb[0].mxu0 %v28
  %v255 = vpop.f32.mrb[0].mxu0
  %v256 = vadd.f32 %v151, %v255
  %v257 = vpop.f32.mrb[0].mxu0
  %258 = vmatprep.mubr.f32.mxu0 0.0
  %259 = vmatmul.mubr.f32.gmra.mrb[0].mxu0 %v29
  %v260 = vpop.f32.mrb[0].mxu0
  %v261 = vadd.f32 %v156, %v260
  %v262 = vpop.f32.mrb[0].mxu0
  %263 = vmatprep.mubr.f32.mxu0 0.0
  %264 = vmatmul.mubr.f32.gmra.mrb[0].mxu0 %v30
  %v265 = vpop.f32.mrb[0].mxu0
  %v266 = vadd.f32 %v161, %v265
  %v267 = vpop.f32.mrb[0].mxu0
  %268 = vmatprep.mubr.f32.mxu0 0.0
  %269 = vmatmul.mubr.f32.gmra.mrb[0].mxu0 %v31
  %v270 = vpop.f32.mrb[0].mxu0
  %v271 = vadd.f32 %v166, %v270
  %v272 = vpop.f32.mrb[0].mxu0
  %273 = vmatprep.mubr.f32.mxu0 0.0
  %274 = vmatmul.mubr.f32.gmra.mrb[0].mxu0 %v32
  %v275 = vpop.f32.mrb[0].mxu0
  %v276 = vadd.f32 %v171, %v275
  %v277 = vpop.f32.mrb[0].mxu0
  %278 = vmatprep.mubr.f32.mxu0 0.0
  %279 = vmatmul.mubr.f32.gmra.mrb[0].mxu0 %v33
  %v280 = vpop.f32.mrb[0].mxu0
  %v281 = vadd.f32 %v176, %v280
  %v282 = vpop.f32.mrb[0].mxu0
  %283 = vdwg.mxu0
  %v284 = vld [vmem:[%s4] sm:$0x1]
  %v286 = vlaneseq
  %v287 = vshrl.u32 %v286, 7
  %v288 = vsub.s32 0, %v287
  %v289 = vrot.slane %v284, %v288
  %v291 = vadd.f32 %v246, %v289
  %v292 = vadd.f32 %v251, %v289
  %v293 = vadd.f32 %v256, %v289
  %v294 = vadd.f32 %v261, %v289
  %v295 = vadd.f32 %v266, %v289
  %v296 = vadd.f32 %v271, %v289
  %v297 = vadd.f32 %v276, %v289
  %v298 = vadd.f32 %v281, %v289
  %vm299 = vcmp.gt.f32.partialorder %v291, 0.0
  %vm300 = vcmp.gt.f32.partialorder %v292, 0.0
  %vm301 = vcmp.gt.f32.partialorder %v293, 0.0
  %vm302 = vcmp.gt.f32.partialorder %v294, 0.0
  %vm303 = vcmp.gt.f32.partialorder %v295, 0.0
  %vm304 = vcmp.gt.f32.partialorder %v296, 0.0
  %vm305 = vcmp.gt.f32.partialorder %v297, 0.0
  %vm306 = vcmp.gt.f32.partialorder %v298, 0.0
  %v307 = vmul.f32 %v291, 1.442695
  %v308 = vpow.pop %v307
  %v309 = vmul.f32 %v292, 1.442695
  %v310 = vpow.pop %v309
  %v311 = vmul.f32 %v293, 1.442695
  %v312 = vpow.pop %v311
  %v313 = vmul.f32 %v294, 1.442695
  %v314 = vpow.pop %v313
  %v315 = vmul.f32 %v295, 1.442695
  %v316 = vpow.pop %v315
  %v317 = vmul.f32 %v296, 1.442695
  %v318 = vpow.pop %v317
  %v319 = vmul.f32 %v297, 1.442695
  %v320 = vpow.pop %v319
  %v321 = vmul.f32 %v298, 1.442695
  %v322 = vpow.pop %v321
  %v323 = vsub.f32 %v308, 1.0
  %v324 = vsub.f32 %v310, 1.0
  %v325 = vsub.f32 %v312, 1.0
  %v326 = vsub.f32 %v314, 1.0
  %v327 = vsub.f32 %v316, 1.0
  %v328 = vsub.f32 %v318, 1.0
  %v329 = vsub.f32 %v320, 1.0
  %v330 = vsub.f32 %v322, 1.0
  %v331 = vmul.f32 %v323, 0.01
  %v332 = vmul.f32 %v324, 0.01
  %v333 = vmul.f32 %v325, 0.01
  %v334 = vmul.f32 %v326, 0.01
  %v335 = vmul.f32 %v327, 0.01
  %v336 = vmul.f32 %v328, 0.01
  %v337 = vmul.f32 %v329, 0.01
  %v338 = vmul.f32 %v330, 0.01
  %v339 = vsel %vm299, %v291, %v331
  %v340 = vsel %vm300, %v292, %v332
  %v341 = vsel %vm301, %v293, %v333
  %v342 = vsel %vm302, %v294, %v334
  %v343 = vsel %vm303, %v295, %v335
  %v344 = vsel %vm304, %v296, %v336
  %v345 = vsel %vm305, %v297, %v337
  %v346 = vsel %vm306, %v298, %v338
  %v347 = vld [vmem:[%s5] sm:$0xff]
  %v348 = vld [vmem:[%s5 + $0x8] sm:$0xff]
  %v349 = vld [vmem:[%s5 + $0x10] sm:$0xff]
  %v350 = vld [vmem:[%s5 + $0x18] sm:$0xff]
  %v351 = vld [vmem:[%s5 + $0x20] sm:$0xff]
  %v352 = vld [vmem:[%s5 + $0x28] sm:$0xff]
  %v353 = vld [vmem:[%s5 + $0x30] sm:$0xff]
  %v354 = vld [vmem:[%s5 + $0x38] sm:$0xff]
  %v355 = vld [vmem:[%s5 + $0x40] sm:$0xff]
  %v356 = vld [vmem:[%s5 + $0x48] sm:$0xff]
  %v357 = vld [vmem:[%s5 + $0x50] sm:$0xff]
  %v358 = vld [vmem:[%s5 + $0x58] sm:$0xff]
  %v359 = vld [vmem:[%s5 + $0x60] sm:$0xff]
  %v360 = vld [vmem:[%s5 + $0x68] sm:$0xff]
  %v361 = vld [vmem:[%s5 + $0x70] sm:$0xff]
  %v362 = vld [vmem:[%s5 + $0x78] sm:$0xff]
  %v363 = vld [vmem:[%s6] sm:$0x1]
  %v365 = vlaneseq
  %v366 = vshrl.u32 %v365, 7
  %v367 = vsub.s32 0, %v366
  %v368 = vrot.slane %v363, %v367
  %370 = vmatprep.subr.mxu0 0.0
  %371 = vmatpush1.msra.mxu0 %v347
  %372 = vmatprep.subr.mxu0 0.0
  %373 = vmatpush1.msra.mxu0 %v348
  %374 = vmatprep.subr.mxu0 0.0
  %375 = vmatpush1.msra.mxu0 %v349
  %376 = vmatprep.subr.mxu0 0.0
  %377 = vmatpush1.msra.mxu0 %v350
  %378 = vmatprep.subr.mxu0 0.0
  %379 = vmatpush1.msra.mxu0 %v351
  %380 = vmatprep.subr.mxu0 0.0
  %381 = vmatpush1.msra.mxu0 %v352
  %382 = vmatprep.subr.mxu0 0.0
  %383 = vmatpush1.msra.mxu0 %v353
  %384 = vmatprep.subr.mxu0 0.0
  %385 = vmatpush1.msra.mxu0 %v354
  %386 = vmatprep.subr.mxu0 0.0
  %387 = vmatpush1.msra.mxu0 %v355
  %388 = vmatprep.subr.mxu0 0.0
  %389 = vmatpush1.msra.mxu0 %v356
  %390 = vmatprep.subr.mxu0 0.0
  %391 = vmatpush1.msra.mxu0 %v357
  %392 = vmatprep.subr.mxu0 0.0
  %393 = vmatpush1.msra.mxu0 %v358
  %394 = vmatprep.subr.mxu0 0.0
  %395 = vmatpush1.msra.mxu0 %v359
  %396 = vmatprep.subr.mxu0 0.0
  %397 = vmatpush1.msra.mxu0 %v360
  %398 = vmatprep.subr.mxu0 0.0
  %399 = vmatpush1.msra.mxu0 %v361
  %400 = vmatprep.subr.mxu0 0.0
  %401 = vmatpush1.msra.mxu0 %v362
  %402 = vmatprep.subr.mxu0 0.0
  %403 = vmatpush1.msra.mxu0 0.0
  %404 = vmatprep.subr.mxu0 0.0
  %405 = vmatpush1.msra.mxu0 0.0
  %406 = vmatprep.subr.mxu0 0.0
  %407 = vmatpush1.msra.mxu0 0.0
  %408 = vmatprep.subr.mxu0 0.0
  %409 = vmatpush1.msra.mxu0 0.0
  %410 = vmatprep.subr.mxu0 0.0
  %411 = vmatpush1.msra.mxu0 0.0
  %412 = vmatprep.subr.mxu0 0.0
  %413 = vmatpush1.msra.mxu0 0.0
  %414 = vmatprep.subr.mxu0 0.0
  %415 = vmatpush1.msra.mxu0 0.0
  %416 = vmatprep.subr.mxu0 0.0
  %417 = vmatpush1.msra.mxu0 0.0
  %418 = vmatprep.subr.mxu0 0.0
  %419 = vmatpush1.msra.mxu0 0.0
  %420 = vmatprep.subr.mxu0 0.0
  %421 = vmatpush1.msra.mxu0 0.0
  %422 = vmatprep.subr.mxu0 0.0
  %423 = vmatpush1.msra.mxu0 0.0
  %424 = vmatprep.subr.mxu0 0.0
  %425 = vmatpush1.msra.mxu0 0.0
  %426 = vmatprep.subr.mxu0 0.0
  %427 = vmatpush1.msra.mxu0 0.0
  %428 = vmatprep.subr.mxu0 0.0
  %429 = vmatpush1.msra.mxu0 0.0
  %430 = vmatprep.subr.mxu0 0.0
  %431 = vmatpush1.msra.mxu0 0.0
  %432 = vmatprep.subr.mxu0 0.0
  %433 = vmatpush1.msra.mxu0 0.0
  %434 = vmatprep.mubr.f32.mxu0 0.0
  %435 = vmatmul.mubr.f32.gmra.mrb[0].mxu0 %v339
  %v436 = vpop.f32.mrb[0].mxu0
  %v437 = vadd.f32 %v368, %v436
  %v438 = vpop.f32.mrb[0].mxu0
  %439 = vmatprep.mubr.f32.mxu0 0.0
  %440 = vmatmul.mubr.f32.gmra.mrb[0].mxu0 %v340
  %v441 = vpop.f32.mrb[0].mxu0
  %v442 = vadd.f32 %v368, %v441
  %v443 = vpop.f32.mrb[0].mxu0
  %444 = vmatprep.mubr.f32.mxu0 0.0
  %445 = vmatmul.mubr.f32.gmra.mrb[0].mxu0 %v341
  %v446 = vpop.f32.mrb[0].mxu0
  %v447 = vadd.f32 %v368, %v446
  %v448 = vpop.f32.mrb[0].mxu0
  %449 = vmatprep.mubr.f32.mxu0 0.0
  %450 = vmatmul.mubr.f32.gmra.mrb[0].mxu0 %v342
  %v451 = vpop.f32.mrb[0].mxu0
  %v452 = vadd.f32 %v368, %v451
  %v453 = vpop.f32.mrb[0].mxu0
  %454 = vmatprep.mubr.f32.mxu0 0.0
  %455 = vmatmul.mubr.f32.gmra.mrb[0].mxu0 %v343
  %v456 = vpop.f32.mrb[0].mxu0
  %v457 = vadd.f32 %v368, %v456
  %v458 = vpop.f32.mrb[0].mxu0
  %459 = vmatprep.mubr.f32.mxu0 0.0
  %460 = vmatmul.mubr.f32.gmra.mrb[0].mxu0 %v344
  %v461 = vpop.f32.mrb[0].mxu0
  %v462 = vadd.f32 %v368, %v461
  %v463 = vpop.f32.mrb[0].mxu0
  %464 = vmatprep.mubr.f32.mxu0 0.0
  %465 = vmatmul.mubr.f32.gmra.mrb[0].mxu0 %v345
  %v466 = vpop.f32.mrb[0].mxu0
  %v467 = vadd.f32 %v368, %v466
  %v468 = vpop.f32.mrb[0].mxu0
  %469 = vmatprep.mubr.f32.mxu0 0.0
  %470 = vmatmul.mubr.f32.gmra.mrb[0].mxu0 %v346
  %v471 = vpop.f32.mrb[0].mxu0
  %v472 = vadd.f32 %v368, %v471
  %v473 = vpop.f32.mrb[0].mxu0
  %474 = vdwg.mxu0
  %475 = vst [vmem:[%s7] sm:$0xff] %v437
  %476 = vst [vmem:[%s7 + $0x8] sm:$0xff] %v442
  %477 = vst [vmem:[%s7 + $0x10] sm:$0xff] %v447
  %478 = vst [vmem:[%s7 + $0x18] sm:$0xff] %v452
  %479 = vst [vmem:[%s7 + $0x20] sm:$0xff] %v457
  %480 = vst [vmem:[%s7 + $0x28] sm:$0xff] %v462
  %481 = vst [vmem:[%s7 + $0x30] sm:$0xff] %v467
  %482 = vst [vmem:[%s7 + $0x38] sm:$0xff] %v472
  // Predicated region
  $region30: #{bilstm_forward.5} parent=0 // pred_check
    _
  $region31: #{bilstm_forward.5} parent=0 // pred_check_branch
    %484 = sbr.rel (0) target = $region33
  $region32: #{bilstm_forward.5} parent=0 // pred_region
    _
  $region33: #{bilstm_forward.5} parent=0 // pred_fallthru
    _
  // Predicated region
  $region34: #{bilstm_forward.5} parent=0 // pred_check
    _
  $region35: #{bilstm_forward.5} parent=0 // pred_check_branch
    %486 = sbr.rel (0) target = $region37
  $region36: #{bilstm_forward.5} parent=0 // pred_region
    _
  $region37: #{bilstm_forward.5} parent=0 // pred_fallthru
    _

// kernel: bilstm_forward.3
$region0: #{bilstm_forward.3}
  #allocation0 [shape = 'u32[]', space=smem, size = 0x4, offset = 0x4, fixed_abs, tag = 'smem constant byte address 0x4 - core index']
  #allocation1 [shape = 'u32[144,128]{1,0:T(1,128)}', space=vmem, size = 0x12000, scoped, tag = 'internal scratch']
  %s0 = inlined_call_operand.vmem [shape: f32[64,32], index: 0, kind: input, shape index: {}]
  %s1 = inlined_call_operand.vmem [shape: f32[32,1024], index: 1, kind: input, shape index: {}]
  %s2 = inlined_call_operand.vmem [shape: f32[1,1024], index: 2, kind: input, shape index: {}]
  %s3 = inlined_call_operand.vmem [shape: bf16[64,1024], index: 3, kind: output, shape index: {}]
  %s4 = sld [smem:[#allocation0]]
  $region22: #{bilstm_forward.3} parent=0
    _
  %s6 = ssub.s32 1, %s4
  %s7 = scalar_select 0, %s6, %s4
  // Predicated region
  $region2: #{bilstm_forward.3} parent=0 // pred_check
    _
  $region3: #{bilstm_forward.3} parent=0 // pred_check_branch
    %9 = sbr.rel (0) target = $region5
  $region4: #{bilstm_forward.3} parent=0 // pred_region
    _
  $region5: #{bilstm_forward.3} parent=0 // pred_fallthru
    _
  // Predicated region
  $region6: #{bilstm_forward.3} parent=0 // pred_check
    _
  $region7: #{bilstm_forward.3} parent=0 // pred_check_branch
    %11 = sbr.rel (0) target = $region9
  $region8: #{bilstm_forward.3} parent=0 // pred_region
    _
  $region9: #{bilstm_forward.3} parent=0 // pred_fallthru
    _
  // Predicated region
  $region10: #{bilstm_forward.3} parent=0 // pred_check
    _
  $region11: #{bilstm_forward.3} parent=0 // pred_check_branch
    %13 = sbr.rel (0) target = $region13
  $region12: #{bilstm_forward.3} parent=0 // pred_region
    _
  $region13: #{bilstm_forward.3} parent=0 // pred_fallthru
    _
  %v14 = vld [vmem:[%s0] sm:$0xff]
  %v15 = vld [vmem:[%s0 + $0x8] sm:$0xff]
  %v16 = vld [vmem:[%s0 + $0x10] sm:$0xff]
  %v17 = vld [vmem:[%s0 + $0x18] sm:$0xff]
  %v18 = vld [vmem:[%s0 + $0x20] sm:$0xff]
  %v19 = vld [vmem:[%s0 + $0x28] sm:$0xff]
  %v20 = vld [vmem:[%s0 + $0x30] sm:$0xff]
  %v21 = vld [vmem:[%s0 + $0x38] sm:$0xff]
  %v22 = vld [vmem:[%s1] sm:$0xff]
  %v23 = vld [vmem:[%s1 + $0x8] sm:$0xff]
  %v24 = vld [vmem:[%s1 + $0x10] sm:$0xff]
  %v25 = vld [vmem:[%s1 + $0x18] sm:$0xff]
  %v26 = vld [vmem:[%s1 + $0x20] sm:$0xff]
  %v27 = vld [vmem:[%s1 + $0x28] sm:$0xff]
  %v28 = vld [vmem:[%s1 + $0x30] sm:$0xff]
  %v29 = vld [vmem:[%s1 + $0x38] sm:$0xff]
  %v30 = vld [vmem:[%s1 + $0x40] sm:$0xff]
  %v31 = vld [vmem:[%s1 + $0x48] sm:$0xff]
  %v32 = vld [vmem:[%s1 + $0x50] sm:$0xff]
  %v33 = vld [vmem:[%s1 + $0x58] sm:$0xff]
  %v34 = vld [vmem:[%s1 + $0x60] sm:$0xff]
  %v35 = vld [vmem:[%s1 + $0x68] sm:$0xff]
  %v36 = vld [vmem:[%s1 + $0x70] sm:$0xff]
  %v37 = vld [vmem:[%s1 + $0x78] sm:$0xff]
  %v38 = vld [vmem:[%s1 + $0x80] sm:$0xff]
  %v39 = vld [vmem:[%s1 + $0x88] sm:$0xff]
  %v40 = vld [vmem:[%s1 + $0x90] sm:$0xff]
  %v41 = vld [vmem:[%s1 + $0x98] sm:$0xff]
  %v42 = vld [vmem:[%s1 + $0xa0] sm:$0xff]
  %v43 = vld [vmem:[%s1 + $0xa8] sm:$0xff]
  %v44 = vld [vmem:[%s1 + $0xb0] sm:$0xff]
  %v45 = vld [vmem:[%s1 + $0xb8] sm:$0xff]
  %v46 = vld [vmem:[%s1 + $0xc0] sm:$0xff]
  %v47 = vld [vmem:[%s1 + $0xc8] sm:$0xff]
  %v48 = vld [vmem:[%s1 + $0xd0] sm:$0xff]
  %v49 = vld [vmem:[%s1 + $0xd8] sm:$0xff]
  %v50 = vld [vmem:[%s1 + $0xe0] sm:$0xff]
  %v51 = vld [vmem:[%s1 + $0xe8] sm:$0xff]
  %v52 = vld [vmem:[%s1 + $0xf0] sm:$0xff]
  %v53 = vld [vmem:[%s1 + $0xf8] sm:$0xff]
  %v54 = vld [vmem:[%s2] sm:$0xff]
  %v56 = vlaneseq
  %v57 = vshrl.u32 %v56, 7
  %v58 = vsub.s32 0, %v57
  %v59 = vrot.slane %v54, %v58
  %v60 = vlaneseq
  %v61 = vshrl.u32 %v60, 7
  %v62 = vsub.s32 1, %v61
  %v63 = vrot.slane %v54, %v62
  %v64 = vlaneseq
  %v65 = vshrl.u32 %v64, 7
  %v66 = vsub.s32 2, %v65
  %v67 = vrot.slane %v54, %v66
  %v68 = vlaneseq
  %v69 = vshrl.u32 %v68, 7
  %v70 = vsub.s32 3, %v69
  %v71 = vrot.slane %v54, %v70
  %v72 = vlaneseq
  %v73 = vshrl.u32 %v72, 7
  %v74 = vsub.s32 4, %v73
  %v75 = vrot.slane %v54, %v74
  %v76 = vlaneseq
  %v77 = vshrl.u32 %v76, 7
  %v78 = vsub.s32 5, %v77
  %v79 = vrot.slane %v54, %v78
  %v80 = vlaneseq
  %v81 = vshrl.u32 %v80, 7
  %v82 = vsub.s32 6, %v81
  %v83 = vrot.slane %v54, %v82
  %v84 = vlaneseq
  %v85 = vshrl.u32 %v84, 7
  %v86 = vsub.s32 7, %v85
  %v87 = vrot.slane %v54, %v86
  %vm96 = vcmask 261120
  %v98 = vsel %vm96, %v14, 0
  %v101 = vsel %vm96, %v15, 0
  %v104 = vsel %vm96, %v16, 0
  %v107 = vsel %vm96, %v17, 0
  %v110 = vsel %vm96, %v18, 0
  %v113 = vsel %vm96, %v19, 0
  %v116 = vsel %vm96, %v20, 0
  %v119 = vsel %vm96, %v21, 0
  %121 = vmatprep.subr.mxu0 %v23
  %122 = vmatpush1.msra.mxu0 %v22
  %123 = vmatprep.subr.mxu0 %v31
  %124 = vmatpush1.msra.mxu0 %v30
  %125 = vmatprep.subr.mxu0 %v39
  %126 = vmatpush1.msra.mxu0 %v38
  %127 = vmatprep.subr.mxu0 %v47
  %128 = vmatpush1.msra.mxu0 %v46
  %129 = vmatprep.subr.mxu0 0.0
  %130 = vmatpush1.msra.mxu0 0.0
  %131 = vmatprep.subr.mxu0 0.0
  %132 = vmatpush1.msra.mxu0 0.0
  %133 = vmatprep.subr.mxu0 0.0
  %134 = vmatpush1.msra.mxu0 0.0
  %135 = vmatprep.subr.mxu0 0.0
  %136 = vmatpush1.msra.mxu0 0.0
  %137 = vmatprep.subr.mxu0 0.0
  %138 = vmatpush1.msra.mxu0 0.0
  %139 = vmatprep.subr.mxu0 0.0
  %140 = vmatpush1.msra.mxu0 0.0
  %141 = vmatprep.subr.mxu0 0.0
  %142 = vmatpush1.msra.mxu0 0.0
  %143 = vmatprep.subr.mxu0 0.0
  %144 = vmatpush1.msra.mxu0 0.0
  %145 = vmatprep.subr.mxu0 0.0
  %146 = vmatpush1.msra.mxu0 0.0
  %147 = vmatprep.subr.mxu0 0.0
  %148 = vmatpush1.msra.mxu0 0.0
  %149 = vmatprep.subr.mxu0 0.0
  %150 = vmatpush1.msra.mxu0 0.0
  %151 = vmatprep.subr.mxu0 0.0
  %152 = vmatpush1.msra.mxu0 0.0
  %153 = vmatprep.subr.mxu0 0.0
  %154 = vmatpush1.msra.mxu0 0.0
  %155 = vmatprep.subr.mxu0 0.0
  %156 = vmatpush1.msra.mxu0 0.0
  %157 = vmatprep.subr.mxu0 0.0
  %158 = vmatpush1.msra.mxu0 0.0
  %159 = vmatprep.subr.mxu0 0.0
  %160 = vmatpush1.msra.mxu0 0.0
  %161 = vmatprep.subr.mxu0 0.0
  %162 = vmatpush1.msra.mxu0 0.0
  %163 = vmatprep.subr.mxu0 0.0
  %164 = vmatpush1.msra.mxu0 0.0
  %165 = vmatprep.subr.mxu0 0.0
  %166 = vmatpush1.msra.mxu0 0.0
  %167 = vmatprep.subr.mxu0 0.0
  %168 = vmatpush1.msra.mxu0 0.0
  %169 = vmatprep.subr.mxu0 0.0
  %170 = vmatpush1.msra.mxu0 0.0
  %171 = vmatprep.subr.mxu0 0.0
  %172 = vmatpush1.msra.mxu0 0.0
  %173 = vmatprep.subr.mxu0 0.0
  %174 = vmatpush1.msra.mxu0 0.0
  %175 = vmatprep.subr.mxu0 0.0
  %176 = vmatpush1.msra.mxu0 0.0
  %177 = vmatprep.subr.mxu0 0.0
  %178 = vmatpush1.msra.mxu0 0.0
  %179 = vmatprep.subr.mxu0 0.0
  %180 = vmatpush1.msra.mxu0 0.0
  %181 = vmatprep.subr.mxu0 0.0
  %182 = vmatpush1.msra.mxu0 0.0
  %183 = vmatprep.subr.mxu0 0.0
  %184 = vmatpush1.msra.mxu0 0.0
  %185 = vmatprep.mubr.f32.mxu0 0.0
  %186 = vmatmul.mubr.f32.gmra.mrb[0].mxu0 %v98
  %v187 = vpop.f32.mrb[0].mxu0
  %v188 = vadd.f32 %v59, %v187
  %v189 = vpop.f32.mrb[0].mxu0
  %v190 = vadd.f32 %v63, %v189
  %191 = vmatprep.mubr.f32.mxu0 0.0
  %192 = vmatmul.mubr.f32.gmra.mrb[0].mxu0 %v101
  %v193 = vpop.f32.mrb[0].mxu0
  %v194 = vadd.f32 %v59, %v193
  %v195 = vpop.f32.mrb[0].mxu0
  %v196 = vadd.f32 %v63, %v195
  %197 = vmatprep.mubr.f32.mxu0 0.0
  %198 = vmatmul.mubr.f32.gmra.mrb[0].mxu0 %v104
  %v199 = vpop.f32.mrb[0].mxu0
  %v200 = vadd.f32 %v59, %v199
  %v201 = vpop.f32.mrb[0].mxu0
  %v202 = vadd.f32 %v63, %v201
  %203 = vmatprep.mubr.f32.mxu0 0.0
  %204 = vmatmul.mubr.f32.gmra.mrb[0].mxu0 %v107
  %v205 = vpop.f32.mrb[0].mxu0
  %v206 = vadd.f32 %v59, %v205
  %v207 = vpop.f32.mrb[0].mxu0
  %v208 = vadd.f32 %v63, %v207
  %209 = vmatprep.mubr.f32.mxu0 0.0
  %210 = vmatmul.mubr.f32.gmra.mrb[0].mxu0 %v110
  %v211 = vpop.f32.mrb[0].mxu0
  %v212 = vadd.f32 %v59, %v211
  %v213 = vpop.f32.mrb[0].mxu0
  %v214 = vadd.f32 %v63, %v213
  %215 = vmatprep.mubr.f32.mxu0 0.0
  %216 = vmatmul.mubr.f32.gmra.mrb[0].mxu0 %v113
  %v217 = vpop.f32.mrb[0].mxu0
  %v218 = vadd.f32 %v59, %v217
  %v219 = vpop.f32.mrb[0].mxu0
  %v220 = vadd.f32 %v63, %v219
  %221 = vmatprep.mubr.f32.mxu0 0.0
  %222 = vmatmul.mubr.f32.gmra.mrb[0].mxu0 %v116
  %v223 = vpop.f32.mrb[0].mxu0
  %v224 = vadd.f32 %v59, %v223
  %v225 = vpop.f32.mrb[0].mxu0
  %v226 = vadd.f32 %v63, %v225
  %227 = vmatprep.mubr.f32.mxu0 0.0
  %228 = vmatmul.mubr.f32.gmra.mrb[0].mxu0 %v119
  %v229 = vpop.f32.mrb[0].mxu0
  %v230 = vadd.f32 %v59, %v229
  %v231 = vpop.f32.mrb[0].mxu0
  %v232 = vadd.f32 %v63, %v231
  %233 = vdwg.mxu0
  %234 = vmatprep.subr.mxu0 %v25
  %235 = vmatpush1.msra.mxu0 %v24
  %236 = vmatprep.subr.mxu0 %v33
  %237 = vmatpush1.msra.mxu0 %v32
  %238 = vmatprep.subr.mxu0 %v41
  %239 = vmatpush1.msra.mxu0 %v40
  %240 = vmatprep.subr.mxu0 %v49
  %241 = vmatpush1.msra.mxu0 %v48
  %242 = vmatprep.subr.mxu0 0.0
  %243 = vmatpush1.msra.mxu0 0.0
  %244 = vmatprep.subr.mxu0 0.0
  %245 = vmatpush1.msra.mxu0 0.0
  %246 = vmatprep.subr.mxu0 0.0
  %247 = vmatpush1.msra.mxu0 0.0
  %248 = vmatprep.subr.mxu0 0.0
  %249 = vmatpush1.msra.mxu0 0.0
  %250 = vmatprep.subr.mxu0 0.0
  %251 = vmatpush1.msra.mxu0 0.0
  %252 = vmatprep.subr.mxu0 0.0
  %253 = vmatpush1.msra.mxu0 0.0
  %254 = vmatprep.subr.mxu0 0.0
  %255 = vmatpush1.msra.mxu0 0.0
  %256 = vmatprep.subr.mxu0 0.0
  %257 = vmatpush1.msra.mxu0 0.0
  %258 = vmatprep.subr.mxu0 0.0
  %259 = vmatpush1.msra.mxu0 0.0
  %260 = vmatprep.subr.mxu0 0.0
  %261 = vmatpush1.msra.mxu0 0.0
  %262 = vmatprep.subr.mxu0 0.0
  %263 = vmatpush1.msra.mxu0 0.0
  %264 = vmatprep.subr.mxu0 0.0
  %265 = vmatpush1.msra.mxu0 0.0
  %266 = vmatprep.subr.mxu0 0.0
  %267 = vmatpush1.msra.mxu0 0.0
  %268 = vmatprep.subr.mxu0 0.0
  %269 = vmatpush1.msra.mxu0 0.0
  %270 = vmatprep.subr.mxu0 0.0
  %271 = vmatpush1.msra.mxu0 0.0
  %272 = vmatprep.subr.mxu0 0.0
  %273 = vmatpush1.msra.mxu0 0.0
  %274 = vmatprep.subr.mxu0 0.0
  %275 = vmatpush1.msra.mxu0 0.0
  %276 = vmatprep.subr.mxu0 0.0
  %277 = vmatpush1.msra.mxu0 0.0
  %278 = vmatprep.subr.mxu0 0.0
  %279 = vmatpush1.msra.mxu0 0.0
  %280 = vmatprep.subr.mxu0 0.0
  %281 = vmatpush1.msra.mxu0 0.0
  %282 = vmatprep.subr.mxu0 0.0
  %283 = vmatpush1.msra.mxu0 0.0
  %284 = vmatprep.subr.mxu0 0.0
  %285 = vmatpush1.msra.mxu0 0.0
  %286 = vmatprep.subr.mxu0 0.0
  %287 = vmatpush1.msra.mxu0 0.0
  %288 = vmatprep.subr.mxu0 0.0
  %289 = vmatpush1.msra.mxu0 0.0
  %290 = vmatprep.subr.mxu0 0.0
  %291 = vmatpush1.msra.mxu0 0.0
  %292 = vmatprep.subr.mxu0 0.0
  %293 = vmatpush1.msra.mxu0 0.0
  %294 = vmatprep.subr.mxu0 0.0
  %295 = vmatpush1.msra.mxu0 0.0
  %296 = vmatprep.subr.mxu0 0.0
  %297 = vmatpush1.msra.mxu0 0.0
  %298 = vmatprep.mubr.f32.mxu0 0.0
  %299 = vmatmul.mubr.f32.gmra.mrb[0].mxu0 %v98
  %v300 = vpop.f32.mrb[0].mxu0
  %v301 = vadd.f32 %v67, %v300
  %v302 = vpop.f32.mrb[0].mxu0
  %v303 = vadd.f32 %v71, %v302
  %304 = vmatprep.mubr.f32.mxu0 0.0
  %305 = vmatmul.mubr.f32.gmra.mrb[0].mxu0 %v101
  %v306 = vpop.f32.mrb[0].mxu0
  %v307 = vadd.f32 %v67, %v306
  %v308 = vpop.f32.mrb[0].mxu0
  %v309 = vadd.f32 %v71, %v308
  %310 = vmatprep.mubr.f32.mxu0 0.0
  %311 = vmatmul.mubr.f32.gmra.mrb[0].mxu0 %v104
  %v312 = vpop.f32.mrb[0].mxu0
  %v313 = vadd.f32 %v67, %v312
  %v314 = vpop.f32.mrb[0].mxu0
  %v315 = vadd.f32 %v71, %v314
  %316 = vmatprep.mubr.f32.mxu0 0.0
  %317 = vmatmul.mubr.f32.gmra.mrb[0].mxu0 %v107
  %v318 = vpop.f32.mrb[0].mxu0
  %v319 = vadd.f32 %v67, %v318
  %v320 = vpop.f32.mrb[0].mxu0
  %v321 = vadd.f32 %v71, %v320
  %322 = vmatprep.mubr.f32.mxu0 0.0
  %323 = vmatmul.mubr.f32.gmra.mrb[0].mxu0 %v110
  %v324 = vpop.f32.mrb[0].mxu0
  %v325 = vadd.f32 %v67, %v324
  %v326 = vpop.f32.mrb[0].mxu0
  %v327 = vadd.f32 %v71, %v326
  %328 = vmatprep.mubr.f32.mxu0 0.0
  %329 = vmatmul.mubr.f32.gmra.mrb[0].mxu0 %v113
  %v330 = vpop.f32.mrb[0].mxu0
  %v331 = vadd.f32 %v67, %v330
  %v332 = vpop.f32.mrb[0].mxu0
  %v333 = vadd.f32 %v71, %v332
  %334 = vmatprep.mubr.f32.mxu0 0.0
  %335 = vmatmul.mubr.f32.gmra.mrb[0].mxu0 %v116
  %v336 = vpop.f32.mrb[0].mxu0
  %v337 = vadd.f32 %v67, %v336
  %v338 = vpop.f32.mrb[0].mxu0
  %v339 = vadd.f32 %v71, %v338
  %340 = vmatprep.mubr.f32.mxu0 0.0
  %341 = vmatmul.mubr.f32.gmra.mrb[0].mxu0 %v119
  %v342 = vpop.f32.mrb[0].mxu0
  %v343 = vadd.f32 %v67, %v342
  %v344 = vpop.f32.mrb[0].mxu0
  %v345 = vadd.f32 %v71, %v344
  %346 = vdwg.mxu0
  %347 = vmatprep.subr.mxu0 %v27
  %348 = vmatpush1.msra.mxu0 %v26
  %349 = vmatprep.subr.mxu0 %v35
  %350 = vmatpush1.msra.mxu0 %v34
  %351 = vmatprep.subr.mxu0 %v43
  %352 = vmatpush1.msra.mxu0 %v42
  %353 = vmatprep.subr.mxu0 %v51
  %354 = vmatpush1.msra.mxu0 %v50
  %355 = vmatprep.subr.mxu0 0.0
  %356 = vmatpush1.msra.mxu0 0.0
  %357 = vmatprep.subr.mxu0 0.0
  %358 = vmatpush1.msra.mxu0 0.0
  %359 = vmatprep.subr.mxu0 0.0
  %360 = vmatpush1.msra.mxu0 0.0
  %361 = vmatprep.subr.mxu0 0.0
  %362 = vmatpush1.msra.mxu0 0.0
  %363 = vmatprep.subr.mxu0 0.0
  %364 = vmatpush1.msra.mxu0 0.0
  %365 = vmatprep.subr.mxu0 0.0
  %366 = vmatpush1.msra.mxu0 0.0
  %367 = vmatprep.subr.mxu0 0.0
  %368 = vmatpush1.msra.mxu0 0.0
  %369 = vmatprep.subr.mxu0 0.0
  %370 = vmatpush1.msra.mxu0 0.0
  %371 = vmatprep.subr.mxu0 0.0
  %372 = vmatpush1.msra.mxu0 0.0
  %373 = vmatprep.subr.mxu0 0.0
  %374 = vmatpush1.msra.mxu0 0.0
  %375 = vmatprep.subr.mxu0 0.0
  %376 = vmatpush1.msra.mxu0 0.0
  %377 = vmatprep.subr.mxu0 0.0
  %378 = vmatpush1.msra.mxu0 0.0
  %379 = vmatprep.subr.mxu0 0.0
  %380 = vmatpush1.msra.mxu0 0.0
  %381 = vmatprep.subr.mxu0 0.0
  %382 = vmatpush1.msra.mxu0 0.0
  %383 = vmatprep.subr.mxu0 0.0
  %384 = vmatpush1.msra.mxu0 0.0
  %385 = vmatprep.subr.mxu0 0.0
  %386 = vmatpush1.msra.mxu0 0.0
  %387 = vmatprep.subr.mxu0 0.0
  %388 = vmatpush1.msra.mxu0 0.0
  %389 = vmatprep.subr.mxu0 0.0
  %390 = vmatpush1.msra.mxu0 0.0
  %391 = vmatprep.subr.mxu0 0.0
  %392 = vmatpush1.msra.mxu0 0.0
  %393 = vmatprep.subr.mxu0 0.0
  %394 = vmatpush1.msra.mxu0 0.0
  %395 = vmatprep.subr.mxu0 0.0
  %396 = vmatpush1.msra.mxu0 0.0
  %397 = vmatprep.subr.mxu0 0.0
  %398 = vmatpush1.msra.mxu0 0.0
  %399 = vmatprep.subr.mxu0 0.0
  %400 = vmatpush1.msra.mxu0 0.0
  %401 = vmatprep.subr.mxu0 0.0
  %402 = vmatpush1.msra.mxu0 0.0
  %403 = vmatprep.subr.mxu0 0.0
  %404 = vmatpush1.msra.mxu0 0.0
  %405 = vmatprep.subr.mxu0 0.0
  %406 = vmatpush1.msra.mxu0 0.0
  %407 = vmatprep.subr.mxu0 0.0
  %408 = vmatpush1.msra.mxu0 0.0
  %409 = vmatprep.subr.mxu0 0.0
  %410 = vmatpush1.msra.mxu0 0.0
  %411 = vmatprep.mubr.f32.mxu0 0.0
  %412 = vmatmul.mubr.f32.gmra.mrb[0].mxu0 %v98
  %v413 = vpop.f32.mrb[0].mxu0
  %v414 = vadd.f32 %v75, %v413
  %v415 = vpop.f32.mrb[0].mxu0
  %v416 = vadd.f32 %v79, %v415
  %417 = vmatprep.mubr.f32.mxu0 0.0
  %418 = vmatmul.mubr.f32.gmra.mrb[0].mxu0 %v101
  %v419 = vpop.f32.mrb[0].mxu0
  %v420 = vadd.f32 %v75, %v419
  %v421 = vpop.f32.mrb[0].mxu0
  %v422 = vadd.f32 %v79, %v421
  %423 = vmatprep.mubr.f32.mxu0 0.0
  %424 = vmatmul.mubr.f32.gmra.mrb[0].mxu0 %v104
  %v425 = vpop.f32.mrb[0].mxu0
  %v426 = vadd.f32 %v75, %v425
  %v427 = vpop.f32.mrb[0].mxu0
  %v428 = vadd.f32 %v79, %v427
  %429 = vmatprep.mubr.f32.mxu0 0.0
  %430 = vmatmul.mubr.f32.gmra.mrb[0].mxu0 %v107
  %v431 = vpop.f32.mrb[0].mxu0
  %v432 = vadd.f32 %v75, %v431
  %v433 = vpop.f32.mrb[0].mxu0
  %v434 = vadd.f32 %v79, %v433
  %435 = vmatprep.mubr.f32.mxu0 0.0
  %436 = vmatmul.mubr.f32.gmra.mrb[0].mxu0 %v110
  %v437 = vpop.f32.mrb[0].mxu0
  %v438 = vadd.f32 %v75, %v437
  %v439 = vpop.f32.mrb[0].mxu0
  %v440 = vadd.f32 %v79, %v439
  %441 = vmatprep.mubr.f32.mxu0 0.0
  %442 = vmatmul.mubr.f32.gmra.mrb[0].mxu0 %v113
  %v443 = vpop.f32.mrb[0].mxu0
  %v444 = vadd.f32 %v75, %v443
  %v445 = vpop.f32.mrb[0].mxu0
  %v446 = vadd.f32 %v79, %v445
  %447 = vmatprep.mubr.f32.mxu0 0.0
  %448 = vmatmul.mubr.f32.gmra.mrb[0].mxu0 %v116
  %v449 = vpop.f32.mrb[0].mxu0
  %v450 = vadd.f32 %v75, %v449
  %v451 = vpop.f32.mrb[0].mxu0
  %v452 = vadd.f32 %v79, %v451
  %453 = vmatprep.mubr.f32.mxu0 0.0
  %454 = vmatmul.mubr.f32.gmra.mrb[0].mxu0 %v119
  %v455 = vpop.f32.mrb[0].mxu0
  %v456 = vadd.f32 %v75, %v455
  %v457 = vpop.f32.mrb[0].mxu0
  %v458 = vadd.f32 %v79, %v457
  %459 = vdwg.mxu0
  %460 = vmatprep.subr.mxu0 %v29
  %461 = vmatpush1.msra.mxu0 %v28
  %462 = vmatprep.subr.mxu0 %v37
  %463 = vmatpush1.msra.mxu0 %v36
  %464 = vmatprep.subr.mxu0 %v45
  %465 = vmatpush1.msra.mxu0 %v44
  %466 = vmatprep.subr.mxu0 %v53
  %467 = vmatpush1.msra.mxu0 %v52
  %468 = vmatprep.subr.mxu0 0.0
  %469 = vmatpush1.msra.mxu0 0.0
  %470 = vmatprep.subr.mxu0 0.0
  %471 = vmatpush1.msra.mxu0 0.0
  %472 = vmatprep.subr.mxu0 0.0
  %473 = vmatpush1.msra.mxu0 0.0
  %474 = vmatprep.subr.mxu0 0.0
  %475 = vmatpush1.msra.mxu0 0.0
  %476 = vmatprep.subr.mxu0 0.0
  %477 = vmatpush1.msra.mxu0 0.0
  %478 = vmatprep.subr.mxu0 0.0
  %479 = vmatpush1.msra.mxu0 0.0
  %480 = vmatprep.subr.mxu0 0.0
  %481 = vmatpush1.msra.mxu0 0.0
  %482 = vmatprep.subr.mxu0 0.0
  %483 = vmatpush1.msra.mxu0 0.0
  %484 = vmatprep.subr.mxu0 0.0
  %485 = vmatpush1.msra.mxu0 0.0
  %486 = vmatprep.subr.mxu0 0.0
  %487 = vmatpush1.msra.mxu0 0.0
  %488 = vmatprep.subr.mxu0 0.0
  %489 = vmatpush1.msra.mxu0 0.0
  %490 = vmatprep.subr.mxu0 0.0
  %491 = vmatpush1.msra.mxu0 0.0
  %492 = vmatprep.subr.mxu0 0.0
  %493 = vmatpush1.msra.mxu0 0.0
  %494 = vmatprep.subr.mxu0 0.0
  %495 = vmatpush1.msra.mxu0 0.0
  %496 = vmatprep.subr.mxu0 0.0
  %497 = vmatpush1.msra.mxu0 0.0
  %498 = vmatprep.subr.mxu0 0.0
  %499 = vmatpush1.msra.mxu0 0.0
  %500 = vmatprep.subr.mxu0 0.0
  %501 = vmatpush1.msra.mxu0 0.0
  %502 = vmatprep.subr.mxu0 0.0
  %503 = vmatpush1.msra.mxu0 0.0
  %504 = vmatprep.subr.mxu0 0.0
  %505 = vmatpush1.msra.mxu0 0.0
  %506 = vmatprep.subr.mxu0 0.0
  %507 = vmatpush1.msra.mxu0 0.0
  %508 = vmatprep.subr.mxu0 0.0
  %509 = vmatpush1.msra.mxu0 0.0
  %510 = vmatprep.subr.mxu0 0.0
  %511 = vmatpush1.msra.mxu0 0.0
  %512 = vmatprep.subr.mxu0 0.0
  %513 = vmatpush1.msra.mxu0 0.0
  %514 = vmatprep.subr.mxu0 0.0
  %515 = vmatpush1.msra.mxu0 0.0
  %516 = vmatprep.subr.mxu0 0.0
  %517 = vmatpush1.msra.mxu0 0.0
  %518 = vmatprep.subr.mxu0 0.0
  %519 = vmatpush1.msra.mxu0 0.0
  %520 = vmatprep.subr.mxu0 0.0
  %521 = vmatpush1.msra.mxu0 0.0
  %522 = vmatprep.subr.mxu0 0.0
  %523 = vmatpush1.msra.mxu0 0.0
  %524 = vmatprep.mubr.f32.mxu0 0.0
  %525 = vmatmul.mubr.f32.gmra.mrb[0].mxu0 %v98
  %v526 = vpop.f32.mrb[0].mxu0
  %v527 = vadd.f32 %v83, %v526
  %v528 = vpop.f32.mrb[0].mxu0
  %v529 = vadd.f32 %v87, %v528
  %530 = vmatprep.mubr.f32.mxu0 0.0
  %531 = vmatmul.mubr.f32.gmra.mrb[0].mxu0 %v101
  %v532 = vpop.f32.mrb[0].mxu0
  %v533 = vadd.f32 %v83, %v532
  %v534 = vpop.f32.mrb[0].mxu0
  %v535 = vadd.f32 %v87, %v534
  %536 = vmatprep.mubr.f32.mxu0 0.0
  %537 = vmatmul.mubr.f32.gmra.mrb[0].mxu0 %v104
  %v538 = vpop.f32.mrb[0].mxu0
  %v539 = vadd.f32 %v83, %v538
  %v540 = vpop.f32.mrb[0].mxu0
  %v541 = vadd.f32 %v87, %v540
  %542 = vmatprep.mubr.f32.mxu0 0.0
  %543 = vmatmul.mubr.f32.gmra.mrb[0].mxu0 %v107
  %v544 = vpop.f32.mrb[0].mxu0
  %v545 = vadd.f32 %v83, %v544
  %v546 = vpop.f32.mrb[0].mxu0
  %v547 = vadd.f32 %v87, %v546
  %548 = vmatprep.mubr.f32.mxu0 0.0
  %549 = vmatmul.mubr.f32.gmra.mrb[0].mxu0 %v110
  %v550 = vpop.f32.mrb[0].mxu0
  %v551 = vadd.f32 %v83, %v550
  %v552 = vpop.f32.mrb[0].mxu0
  %v553 = vadd.f32 %v87, %v552
  %554 = vmatprep.mubr.f32.mxu0 0.0
  %555 = vmatmul.mubr.f32.gmra.mrb[0].mxu0 %v113
  %v556 = vpop.f32.mrb[0].mxu0
  %v557 = vadd.f32 %v83, %v556
  %v558 = vpop.f32.mrb[0].mxu0
  %v559 = vadd.f32 %v87, %v558
  %560 = vmatprep.mubr.f32.mxu0 0.0
  %561 = vmatmul.mubr.f32.gmra.mrb[0].mxu0 %v116
  %v562 = vpop.f32.mrb[0].mxu0
  %v563 = vadd.f32 %v83, %v562
  %v564 = vpop.f32.mrb[0].mxu0
  %v565 = vadd.f32 %v87, %v564
  %566 = vmatprep.mubr.f32.mxu0 0.0
  %567 = vmatmul.mubr.f32.gmra.mrb[0].mxu0 %v119
  %v568 = vpop.f32.mrb[0].mxu0
  %v569 = vadd.f32 %v83, %v568
  %v570 = vpop.f32.mrb[0].mxu0
  %v571 = vadd.f32 %v87, %v570
  %572 = vdwg.mxu0
  %v573 = vpack.c.bf16 %v194, %v188
  %v574 = vpack.c.bf16 %v196, %v190
  %v575 = vpack.c.bf16 %v307, %v301
  %v576 = vpack.c.bf16 %v309, %v303
  %v577 = vpack.c.bf16 %v420, %v414
  %v578 = vpack.c.bf16 %v422, %v416
  %v579 = vpack.c.bf16 %v533, %v527
  %v580 = vpack.c.bf16 %v535, %v529
  %v581 = vpack.c.bf16 %v206, %v200
  %v582 = vpack.c.bf16 %v208, %v202
  %v583 = vpack.c.bf16 %v319, %v313
  %v584 = vpack.c.bf16 %v321, %v315
  %v585 = vpack.c.bf16 %v432, %v426
  %v586 = vpack.c.bf16 %v434, %v428
  %v587 = vpack.c.bf16 %v545, %v539
  %v588 = vpack.c.bf16 %v547, %v541
  %v589 = vpack.c.bf16 %v218, %v212
  %v590 = vpack.c.bf16 %v220, %v214
  %v591 = vpack.c.bf16 %v331, %v325
  %v592 = vpack.c.bf16 %v333, %v327
  %v593 = vpack.c.bf16 %v444, %v438
  %v594 = vpack.c.bf16 %v446, %v440
  %v595 = vpack.c.bf16 %v557, %v551
  %v596 = vpack.c.bf16 %v559, %v553
  %v597 = vpack.c.bf16 %v230, %v224
  %v598 = vpack.c.bf16 %v232, %v226
  %v599 = vpack.c.bf16 %v343, %v337
  %v600 = vpack.c.bf16 %v345, %v339
  %v601 = vpack.c.bf16 %v456, %v450
  %v602 = vpack.c.bf16 %v458, %v452
  %v603 = vpack.c.bf16 %v569, %v563
  %v604 = vpack.c.bf16 %v571, %v565
  %v637 = vunpack.c.l.b16 %v573
  %v638 = vunpack.c.l.b16 %v574
  %v639 = vunpack.c.l.b16 %v575
  %v640 = vunpack.c.l.b16 %v576
  %v641 = vunpack.c.l.b16 %v577
  %v642 = vunpack.c.l.b16 %v578
  %v643 = vunpack.c.l.b16 %v579
  %v644 = vunpack.c.l.b16 %v580
  %v645 = vunpack.c.h.b16 %v573
  %v646 = vunpack.c.h.b16 %v574
  %v647 = vunpack.c.h.b16 %v575
  %v648 = vunpack.c.h.b16 %v576
  %v649 = vunpack.c.h.b16 %v577
  %v650 = vunpack.c.h.b16 %v578
  %v651 = vunpack.c.h.b16 %v579
  %v652 = vunpack.c.h.b16 %v580
  %v653 = vunpack.c.l.b16 %v581
  %v654 = vunpack.c.l.b16 %v582
  %v655 = vunpack.c.l.b16 %v583
  %v656 = vunpack.c.l.b16 %v584
  %v657 = vunpack.c.l.b16 %v585
  %v658 = vunpack.c.l.b16 %v586
  %v659 = vunpack.c.l.b16 %v587
  %v660 = vunpack.c.l.b16 %v588
  %v661 = vunpack.c.h.b16 %v581
  %v662 = vunpack.c.h.b16 %v582
  %v663 = vunpack.c.h.b16 %v583
  %v664 = vunpack.c.h.b16 %v584
  %v665 = vunpack.c.h.b16 %v585
  %v666 = vunpack.c.h.b16 %v586
  %v667 = vunpack.c.h.b16 %v587
  %v668 = vunpack.c.h.b16 %v588
  %v669 = vunpack.c.l.b16 %v589
  %v670 = vunpack.c.l.b16 %v590
  %v671 = vunpack.c.l.b16 %v591
  %v672 = vunpack.c.l.b16 %v592
  %v673 = vunpack.c.l.b16 %v593
  %v674 = vunpack.c.l.b16 %v594
  %v675 = vunpack.c.l.b16 %v595
  %v676 = vunpack.c.l.b16 %v596
  %v677 = vunpack.c.h.b16 %v589
  %v678 = vunpack.c.h.b16 %v590
  %v679 = vunpack.c.h.b16 %v591
  %v680 = vunpack.c.h.b16 %v592
  %v681 = vunpack.c.h.b16 %v593
  %v682 = vunpack.c.h.b16 %v594
  %v683 = vunpack.c.h.b16 %v595
  %v684 = vunpack.c.h.b16 %v596
  %v685 = vunpack.c.l.b16 %v597
  %v686 = vunpack.c.l.b16 %v598
  %v687 = vunpack.c.l.b16 %v599
  %v688 = vunpack.c.l.b16 %v600
  %v689 = vunpack.c.l.b16 %v601
  %v690 = vunpack.c.l.b16 %v602
  %v691 = vunpack.c.l.b16 %v603
  %v692 = vunpack.c.l.b16 %v604
  %v693 = vunpack.c.h.b16 %v597
  %v694 = vunpack.c.h.b16 %v598
  %v695 = vunpack.c.h.b16 %v599
  %v696 = vunpack.c.h.b16 %v600
  %v697 = vunpack.c.h.b16 %v601
  %v698 = vunpack.c.h.b16 %v602
  %v699 = vunpack.c.h.b16 %v603
  %v700 = vunpack.c.h.b16 %v604
  %v701 = vpack.c.b16 %v638, %v637
  %v702 = vpack.c.b16 %v640, %v639
  %v703 = vpack.c.b16 %v642, %v641
  %v704 = vpack.c.b16 %v644, %v643
  %v705 = vpack.c.b16 %v646, %v645
  %v706 = vpack.c.b16 %v648, %v647
  %v707 = vpack.c.b16 %v650, %v649
  %v708 = vpack.c.b16 %v652, %v651
  %v709 = vpack.c.b16 %v654, %v653
  %v710 = vpack.c.b16 %v656, %v655
  %v711 = vpack.c.b16 %v658, %v657
  %v712 = vpack.c.b16 %v660, %v659
  %v713 = vpack.c.b16 %v662, %v661
  %v714 = vpack.c.b16 %v664, %v663
  %v715 = vpack.c.b16 %v666, %v665
  %v716 = vpack.c.b16 %v668, %v667
  %v717 = vpack.c.b16 %v670, %v669
  %v718 = vpack.c.b16 %v672, %v671
  %v719 = vpack.c.b16 %v674, %v673
  %v720 = vpack.c.b16 %v676, %v675
  %v721 = vpack.c.b16 %v678, %v677
  %v722 = vpack.c.b16 %v680, %v679
  %v723 = vpack.c.b16 %v682, %v681
  %v724 = vpack.c.b16 %v684, %v683
  %v725 = vpack.c.b16 %v686, %v685
  %v726 = vpack.c.b16 %v688, %v687
  %v727 = vpack.c.b16 %v690, %v689
  %v728 = vpack.c.b16 %v692, %v691
  %v729 = vpack.c.b16 %v694, %v693
  %v730 = vpack.c.b16 %v696, %v695
  %v731 = vpack.c.b16 %v698, %v697
  %v732 = vpack.c.b16 %v700, %v699
  %765 = vst [vmem:[%s3] sm:$0xff] %v701
  %766 = vst [vmem:[%s3 + $0x8] sm:$0xff] %v702
  %767 = vst [vmem:[%s3 + $0x10] sm:$0xff] %v703
  %768 = vst [vmem:[%s3 + $0x18] sm:$0xff] %v704
  %769 = vst [vmem:[%s3 + $0x20] sm:$0xff] %v705
  %770 = vst [vmem:[%s3 + $0x28] sm:$0xff] %v706
  %771 = vst [vmem:[%s3 + $0x30] sm:$0xff] %v707
  %772 = vst [vmem:[%s3 + $0x38] sm:$0xff] %v708
  %773 = vst [vmem:[%s3 + $0x40] sm:$0xff] %v709
  %774 = vst [vmem:[%s3 + $0x48] sm:$0xff] %v710
  %775 = vst [vmem:[%s3 + $0x50] sm:$0xff] %v711
  %776 = vst [vmem:[%s3 + $0x58] sm:$0xff] %v712
  %777 = vst [vmem:[%s3 + $0x60] sm:$0xff] %v713
  %778 = vst [vmem:[%s3 + $0x68] sm:$0xff] %v714
  %779 = vst [vmem:[%s3 + $0x70] sm:$0xff] %v715
  %780 = vst [vmem:[%s3 + $0x78] sm:$0xff] %v716
  %781 = vst [vmem:[%s3 + $0x80] sm:$0xff] %v717
  %782 = vst [vmem:[%s3 + $0x88] sm:$0xff] %v718
  %783 = vst [vmem:[%s3 + $0x90] sm:$0xff] %v719
  %784 = vst [vmem:[%s3 + $0x98] sm:$0xff] %v720
  %785 = vst [vmem:[%s3 + $0xa0] sm:$0xff] %v721
  %786 = vst [vmem:[%s3 + $0xa8] sm:$0xff] %v722
  %787 = vst [vmem:[%s3 + $0xb0] sm:$0xff] %v723
  %788 = vst [vmem:[%s3 + $0xb8] sm:$0xff] %v724
  %789 = vst [vmem:[%s3 + $0xc0] sm:$0xff] %v725
  %790 = vst [vmem:[%s3 + $0xc8] sm:$0xff] %v726
  %791 = vst [vmem:[%s3 + $0xd0] sm:$0xff] %v727
  %792 = vst [vmem:[%s3 + $0xd8] sm:$0xff] %v728
  %793 = vst [vmem:[%s3 + $0xe0] sm:$0xff] %v729
  %794 = vst [vmem:[%s3 + $0xe8] sm:$0xff] %v730
  %795 = vst [vmem:[%s3 + $0xf0] sm:$0xff] %v731
  %796 = vst [vmem:[%s3 + $0xf8] sm:$0xff] %v732
  // Predicated region
  $region14: #{bilstm_forward.3} parent=0 // pred_check
    _
  $region15: #{bilstm_forward.3} parent=0 // pred_check_branch
    %798 = sbr.rel (0) target = $region17
  $region16: #{bilstm_forward.3} parent=0 // pred_region
    _
  $region17: #{bilstm_forward.3} parent=0 // pred_fallthru
    _
  // Predicated region
  $region18: #{bilstm_forward.3} parent=0 // pred_check
    _
  $region19: #{bilstm_forward.3} parent=0 // pred_check_branch
    %800 = sbr.rel (0) target = $region21
  $region20: #{bilstm_forward.3} parent=0 // pred_region
    _
  $region21: #{bilstm_forward.3} parent=0 // pred_fallthru
    _

// kernel: bilstm_forward.4
$region0: #{bilstm_forward.4}
  #allocation0 [shape = 'u32[]', space=smem, size = 0x4, offset = 0x4, fixed_abs, tag = 'smem constant byte address 0x4 - core index']
  #allocation1 [shape = 'u32[144,128]{1,0:T(1,128)}', space=vmem, size = 0x12000, scoped, tag = 'internal scratch']
  #allocation2 [shape = 'f32[8,128]{1,0:T(8,128)}', space=vmem, size = 0x1000, scoped, tag = 'scratch operand']
  #allocation3 [shape = 'f32[8,128]{1,0:T(8,128)}', space=vmem, size = 0x1000, scoped, tag = 'scratch operand']
  #allocation4 [shape = 'f32[8,128]{1,0:T(8,128)}', space=vmem, size = 0x1000, scoped, tag = 'scratch operand']
  #allocation5 [shape = 'f32[8,128]{1,0:T(8,128)}', space=vmem, size = 0x1000, scoped, tag = 'scratch operand']
  %s0 = inlined_call_operand.vmem [shape: s32[8,1], index: 0, kind: input, shape index: {}]
  %s1 = inlined_call_operand.vmem [shape: bf16[8,8,1024], index: 1, kind: input, shape index: {}, may-alias: {1,2}]
  %s2 = inlined_call_operand.vmem [shape: bf16[8,8,1024], index: 2, kind: input, shape index: {}, may-alias: {1,2}]
  %s3 = inlined_call_operand.vmem [shape: f32[128,512], index: 3, kind: input, shape index: {}]
  %s4 = inlined_call_operand.vmem [shape: f32[128,512], index: 4, kind: input, shape index: {}]
  %s5 = inlined_call_operand.vmem [shape: f32[8,8,128], index: 5, kind: output, shape index: {0}]
  %s6 = inlined_call_operand.vmem [shape: f32[8,8,128], index: 6, kind: output, shape index: {1}]
  %7 = xla_tuple %s5, %s6
  %s8 = sld [smem:[#allocation0]]
  $region88: #{bilstm_forward.4} parent=0
    _
  %s10 = ssub.s32 1, %s8
  %s11 = scalar_select 0, %s10, %s8
  $region1: #{bilstm_forward.4} parent=0
    #allocation6 [shape = 'u8[65536]{0}', space=vmem, size = 0x10000, scoped, tag = 'input window, operand 1, single buffered']
    #allocation7 [shape = 'u8[65536]{0}', space=vmem, size = 0x10000, scoped, tag = 'input window, operand 2, single buffered']
    // Predicated region
    $region2: #{bilstm_forward.4} parent=1 // pred_check
      _
    $region3: #{bilstm_forward.4} parent=1 // pred_check_branch
      %13 = sbr.rel (0) target = $region5
    $region4: #{bilstm_forward.4} parent=1 // pred_region
      _
    $region5: #{bilstm_forward.4} parent=1 // pred_fallthru
      _
    // Predicated region
    $region6: #{bilstm_forward.4} parent=1 // pred_check
      _
    $region7: #{bilstm_forward.4} parent=1 // pred_check_branch
      %15 = sbr.rel (0) target = $region9
    $region8: #{bilstm_forward.4} parent=1 // pred_region
      // Predicated region
      $region10: #{bilstm_forward.4} parent=8 // pred_check
        _
      $region11: #{bilstm_forward.4} parent=8 // pred_check_branch
        %17 = sbr.rel (0) target = $region13
      $region12: #{bilstm_forward.4} parent=8 // pred_region
        // Predicated region
        $region14: #{bilstm_forward.4} parent=12 // pred_check
          _
        $region15: #{bilstm_forward.4} parent=12 // pred_check_branch
          %19 = sbr.rel (0) target = $region17
        $region16: #{bilstm_forward.4} parent=12 // pred_region
          loop: start=0, step=1, limit=1
          $region18: #{bilstm_forward.4} parent=16 // loop_pre_header
            _
          $region19: #{bilstm_forward.4} parent=16 // loop_header
            %s21 = sphi 0, %s25
            %p22 = scmp.ge.s32.totalorder %s21, 1
            %s26 = sphi %s1, %s1
            %s27 = sphi [#allocation6], [#allocation6]
          $region20: #{bilstm_forward.4} parent=16 // loop_header_branch
            %24 = sbr.rel (%p22) target = $region24
          $region21: #{bilstm_forward.4} parent=16 // loop_body
            %v28 = vld [vmem:[%s26] sm:$0xff]
            %29 = vst [vmem:[%s27] sm:$0xff] %v28
            %v30 = vld [vmem:[%s26 + $0x8] sm:$0xff]
            %31 = vst [vmem:[%s27 + $0x8] sm:$0xff] %v30
            %v32 = vld [vmem:[%s26 + $0x20] sm:$0xff]
            %33 = vst [vmem:[%s27 + $0x10] sm:$0xff] %v32
            %v34 = vld [vmem:[%s26 + $0x28] sm:$0xff]
            %35 = vst [vmem:[%s27 + $0x18] sm:$0xff] %v34
            %v36 = vld [vmem:[%s26 + $0x40] sm:$0xff]
            %37 = vst [vmem:[%s27 + $0x20] sm:$0xff] %v36
            %v38 = vld [vmem:[%s26 + $0x48] sm:$0xff]
            %39 = vst [vmem:[%s27 + $0x28] sm:$0xff] %v38
            %v40 = vld [vmem:[%s26 + $0x60] sm:$0xff]
            %41 = vst [vmem:[%s27 + $0x30] sm:$0xff] %v40
            %v42 = vld [vmem:[%s26 + $0x68] sm:$0xff]
            %43 = vst [vmem:[%s27 + $0x38] sm:$0xff] %v42
            %v44 = vld [vmem:[%s26 + $0x80] sm:$0xff]
            %45 = vst [vmem:[%s27 + $0x40] sm:$0xff] %v44
            %v46 = vld [vmem:[%s26 + $0x88] sm:$0xff]
            %47 = vst [vmem:[%s27 + $0x48] sm:$0xff] %v46
            %v48 = vld [vmem:[%s26 + $0xa0] sm:$0xff]
            %49 = vst [vmem:[%s27 + $0x50] sm:$0xff] %v48
            %v50 = vld [vmem:[%s26 + $0xa8] sm:$0xff]
            %51 = vst [vmem:[%s27 + $0x58] sm:$0xff] %v50
            %v52 = vld [vmem:[%s26 + $0xc0] sm:$0xff]
            %53 = vst [vmem:[%s27 + $0x60] sm:$0xff] %v52
            %v54 = vld [vmem:[%s26 + $0xc8] sm:$0xff]
            %55 = vst [vmem:[%s27 + $0x68] sm:$0xff] %v54
            %v56 = vld [vmem:[%s26 + $0xe0] sm:$0xff]
            %57 = vst [vmem:[%s27 + $0x70] sm:$0xff] %v56
            %v58 = vld [vmem:[%s26 + $0xe8] sm:$0xff]
            %59 = vst [vmem:[%s27 + $0x78] sm:$0xff] %v58
          $region22: #{bilstm_forward.4} parent=16 // loop_footer
            %s25 = sadd.s32 1, %s21
          $region23: #{bilstm_forward.4} parent=16 // loop_footer_branch
            %20 = sbr.rel target = $region19
          $region24: #{bilstm_forward.4} parent=16 // loop_exit
            _
        $region17: #{bilstm_forward.4} parent=12 // pred_fallthru
          _
        // Predicated region
        $region25: #{bilstm_forward.4} parent=12 // pred_check
          _
        $region26: #{bilstm_forward.4} parent=12 // pred_check_branch
          %61 = sbr.rel target = $region28
        $region27: #{bilstm_forward.4} parent=12 // pred_region
          _
        $region28: #{bilstm_forward.4} parent=12 // pred_fallthru
          _
      $region13: #{bilstm_forward.4} parent=8 // pred_fallthru
        _
      %62 = vnop
    $region9: #{bilstm_forward.4} parent=1 // pred_fallthru
      _
    // Predicated region
    $region29: #{bilstm_forward.4} parent=1 // pred_check
      _
    $region30: #{bilstm_forward.4} parent=1 // pred_check_branch
      %64 = sbr.rel (0) target = $region32
    $region31: #{bilstm_forward.4} parent=1 // pred_region
      %s65 = ssub.s32 0, 0
      %s66 = smul.u32 8, %s65
      %s67 = smul.addr %s66, 8
      %s68 = sadd.s32 4, %s67
      %s69 = smul.addr %s68, 4
      %s70 = scalar_lea.vmem %s2, %s69
      // Predicated region
      $region33: #{bilstm_forward.4} parent=31 // pred_check
        _
      $region34: #{bilstm_forward.4} parent=31 // pred_check_branch
        %72 = sbr.rel (0) target = $region36
      $region35: #{bilstm_forward.4} parent=31 // pred_region
        // Predicated region
        $region37: #{bilstm_forward.4} parent=35 // pred_check
          _
        $region38: #{bilstm_forward.4} parent=35 // pred_check_branch
          %74 = sbr.rel (0) target = $region40
        $region39: #{bilstm_forward.4} parent=35 // pred_region
          loop: start=0, step=1, limit=1
          $region41: #{bilstm_forward.4} parent=39 // loop_pre_header
            _
          $region42: #{bilstm_forward.4} parent=39 // loop_header
            %s76 = sphi 0, %s80
            %p77 = scmp.ge.s32.totalorder %s76, 1
            %s81 = sphi %s70, %s70
            %s82 = sphi [#allocation7], [#allocation7]
          $region43: #{bilstm_forward.4} parent=39 // loop_header_branch
            %79 = sbr.rel (%p77) target = $region47
          $region44: #{bilstm_forward.4} parent=39 // loop_body
            %v83 = vld [vmem:[%s81] sm:$0xff]
            %84 = vst [vmem:[%s82] sm:$0xff] %v83
            %v85 = vld [vmem:[%s81 + $0x8] sm:$0xff]
            %86 = vst [vmem:[%s82 + $0x8] sm:$0xff] %v85
            %v87 = vld [vmem:[%s81 + $0x20] sm:$0xff]
            %88 = vst [vmem:[%s82 + $0x10] sm:$0xff] %v87
            %v89 = vld [vmem:[%s81 + $0x28] sm:$0xff]
            %90 = vst [vmem:[%s82 + $0x18] sm:$0xff] %v89
            %v91 = vld [vmem:[%s81 + $0x40] sm:$0xff]
            %92 = vst [vmem:[%s82 + $0x20] sm:$0xff] %v91
            %v93 = vld [vmem:[%s81 + $0x48] sm:$0xff]
            %94 = vst [vmem:[%s82 + $0x28] sm:$0xff] %v93
            %v95 = vld [vmem:[%s81 + $0x60] sm:$0xff]
            %96 = vst [vmem:[%s82 + $0x30] sm:$0xff] %v95
            %v97 = vld [vmem:[%s81 + $0x68] sm:$0xff]
            %98 = vst [vmem:[%s82 + $0x38] sm:$0xff] %v97
            %v99 = vld [vmem:[%s81 + $0x80] sm:$0xff]
            %100 = vst [vmem:[%s82 + $0x40] sm:$0xff] %v99
            %v101 = vld [vmem:[%s81 + $0x88] sm:$0xff]
            %102 = vst [vmem:[%s82 + $0x48] sm:$0xff] %v101
            %v103 = vld [vmem:[%s81 + $0xa0] sm:$0xff]
            %104 = vst [vmem:[%s82 + $0x50] sm:$0xff] %v103
            %v105 = vld [vmem:[%s81 + $0xa8] sm:$0xff]
            %106 = vst [vmem:[%s82 + $0x58] sm:$0xff] %v105
            %v107 = vld [vmem:[%s81 + $0xc0] sm:$0xff]
            %108 = vst [vmem:[%s82 + $0x60] sm:$0xff] %v107
            %v109 = vld [vmem:[%s81 + $0xc8] sm:$0xff]
            %110 = vst [vmem:[%s82 + $0x68] sm:$0xff] %v109
            %v111 = vld [vmem:[%s81 + $0xe0] sm:$0xff]
            %112 = vst [vmem:[%s82 + $0x70] sm:$0xff] %v111
            %v113 = vld [vmem:[%s81 + $0xe8] sm:$0xff]
            %114 = vst [vmem:[%s82 + $0x78] sm:$0xff] %v113
          $region45: #{bilstm_forward.4} parent=39 // loop_footer
            %s80 = sadd.s32 1, %s76
          $region46: #{bilstm_forward.4} parent=39 // loop_footer_branch
            %75 = sbr.rel target = $region42
          $region47: #{bilstm_forward.4} parent=39 // loop_exit
            _
        $region40: #{bilstm_forward.4} parent=35 // pred_fallthru
          _
        // Predicated region
        $region48: #{bilstm_forward.4} parent=35 // pred_check
          _
        $region49: #{bilstm_forward.4} parent=35 // pred_check_branch
          %116 = sbr.rel target = $region51
        $region50: #{bilstm_forward.4} parent=35 // pred_region
          _
        $region51: #{bilstm_forward.4} parent=35 // pred_fallthru
          _
      $region36: #{bilstm_forward.4} parent=31 // pred_fallthru
        _
      %117 = vnop
    $region32: #{bilstm_forward.4} parent=1 // pred_fallthru
      _
    // Predicated region
    $region52: #{bilstm_forward.4} parent=1 // pred_check
      _
    $region53: #{bilstm_forward.4} parent=1 // pred_check_branch
      %119 = sbr.rel (0) target = $region55
    $region54: #{bilstm_forward.4} parent=1 // pred_region
      _
    $region55: #{bilstm_forward.4} parent=1 // pred_fallthru
      _
    // Predicated region
    $region56: #{bilstm_forward.4} parent=1 // pred_check
      _
    $region57: #{bilstm_forward.4} parent=1 // pred_check_branch
      %121 = sbr.rel (0) target = $region59
    $region58: #{bilstm_forward.4} parent=1 // pred_region
      _
    $region59: #{bilstm_forward.4} parent=1 // pred_fallthru
      _
    // Predicated region
    $region60: #{bilstm_forward.4} parent=1 // pred_check
      _
    $region61: #{bilstm_forward.4} parent=1 // pred_check_branch
      %123 = sbr.rel (0) target = $region63
    $region62: #{bilstm_forward.4} parent=1 // pred_region
      _
    $region63: #{bilstm_forward.4} parent=1 // pred_fallthru
      _
    // Predicated region
    $region64: #{bilstm_forward.4} parent=1 // pred_check
      _
    $region65: #{bilstm_forward.4} parent=1 // pred_check_branch
      %125 = sbr.rel (0) target = $region67
    $region66: #{bilstm_forward.4} parent=1 // pred_region
      _
    $region67: #{bilstm_forward.4} parent=1 // pred_fallthru
      _
    %s126 = ssub.s32 0, 0
    %s127 = smul.u32 8, %s126
    %p128 = scmp.lt.s32.totalorder %s127, 7
    %s129 = scalar_select %p128, %s127, 7
    %s130 = smul.addr %s129, 8
    %s131 = scalar_lea.vmem %s6, %s130
    %s132 = ssub.s32 0, 0
    %s133 = smul.u32 8, %s132
    %s134 = ssub.s32 0, 0
    %s135 = smul.u32 8, %s134
    %p136 = scmp.lt.s32.totalorder %s135, 7
    %s137 = scalar_select %p136, %s135, 7
    %s138 = smul.addr %s137, 8
    %s139 = scalar_lea.vmem %s6, %s138
    %s140 = ssub.s32 0, 0
    %s141 = smul.u32 8, %s140
    %p142 = scmp.eq.s32.totalorder 0, 0
    // Predicated region
    $region68: #{bilstm_forward.4} parent=1 // pred_check
      %p143 = pneg %p142
    $region69: #{bilstm_forward.4} parent=1 // pred_check_branch
      %145 = sbr.rel (%p143) target = $region71
    $region70: #{bilstm_forward.4} parent=1 // pred_region
      %146 = vst [vmem:[#allocation2] sm:$0xff] 0.0
      %147 = vst [vmem:[#allocation3] sm:$0xff] 0.0
      %148 = vst [vmem:[#allocation4] sm:$0xff] 0.0
      %149 = vst [vmem:[#allocation5] sm:$0xff] 0.0
    $region71: #{bilstm_forward.4} parent=1 // pred_fallthru
      _
    %v150 = vld [vmem:[%s0] sm:$0xff]
    %v151 = vld [vmem:[%s3] sm:$0xff]
    %v152 = vld [vmem:[%s3 + $0x8] sm:$0xff]
    %v153 = vld [vmem:[%s3 + $0x10] sm:$0xff]
    %v154 = vld [vmem:[%s3 + $0x18] sm:$0xff]
    %v155 = vld [vmem:[%s3 + $0x20] sm:$0xff]
    %v156 = vld [vmem:[%s3 + $0x28] sm:$0xff]
    %v157 = vld [vmem:[%s3 + $0x30] sm:$0xff]
    %v158 = vld [vmem:[%s3 + $0x38] sm:$0xff]
    %v159 = vld [vmem:[%s3 + $0x40] sm:$0xff]
    %v160 = vld [vmem:[%s3 + $0x48] sm:$0xff]
    %v161 = vld [vmem:[%s3 + $0x50] sm:$0xff]
    %v162 = vld [vmem:[%s3 + $0x58] sm:$0xff]
    %v163 = vld [vmem:[%s3 + $0x60] sm:$0xff]
    %v164 = vld [vmem:[%s3 + $0x68] sm:$0xff]
    %v165 = vld [vmem:[%s3 + $0x70] sm:$0xff]
    %v166 = vld [vmem:[%s3 + $0x78] sm:$0xff]
    %v167 = vld [vmem:[%s3 + $0x80] sm:$0xff]
    %v168 = vld [vmem:[%s3 + $0x88] sm:$0xff]
    %v169 = vld [vmem:[%s3 + $0x90] sm:$0xff]
    %v170 = vld [vmem:[%s3 + $0x98] sm:$0xff]
    %v171 = vld [vmem:[%s3 + $0xa0] sm:$0xff]
    %v172 = vld [vmem:[%s3 + $0xa8] sm:$0xff]
    %v173 = vld [vmem:[%s3 + $0xb0] sm:$0xff]
    %v174 = vld [vmem:[%s3 + $0xb8] sm:$0xff]
    %v175 = vld [vmem:[%s3 + $0xc0] sm:$0xff]
    %v176 = vld [vmem:[%s3 + $0xc8] sm:$0xff]
    %v177 = vld [vmem:[%s3 + $0xd0] sm:$0xff]
    %v178 = vld [vmem:[%s3 + $0xd8] sm:$0xff]
    %v179 = vld [vmem:[%s3 + $0xe0] sm:$0xff]
    %v180 = vld [vmem:[%s3 + $0xe8] sm:$0xff]
    %v181 = vld [vmem:[%s3 + $0xf0] sm:$0xff]
    %v182 = vld [vmem:[%s3 + $0xf8] sm:$0xff]
    %v183 = vld [vmem:[%s3 + $0x100] sm:$0xff]
    %v184 = vld [vmem:[%s3 + $0x108] sm:$0xff]
    %v185 = vld [vmem:[%s3 + $0x110] sm:$0xff]
    %v186 = vld [vmem:[%s3 + $0x118] sm:$0xff]
    %v187 = vld [vmem:[%s3 + $0x120] sm:$0xff]
    %v188 = vld [vmem:[%s3 + $0x128] sm:$0xff]
    %v189 = vld [vmem:[%s3 + $0x130] sm:$0xff]
    %v190 = vld [vmem:[%s3 + $0x138] sm:$0xff]
    %v191 = vld [vmem:[%s3 + $0x140] sm:$0xff]
    %v192 = vld [vmem:[%s3 + $0x148] sm:$0xff]
    %v193 = vld [vmem:[%s3 + $0x150] sm:$0xff]
    %v194 = vld [vmem:[%s3 + $0x158] sm:$0xff]
    %v195 = vld [vmem:[%s3 + $0x160] sm:$0xff]
    %v196 = vld [vmem:[%s3 + $0x168] sm:$0xff]
    %v197 = vld [vmem:[%s3 + $0x170] sm:$0xff]
    %v198 = vld [vmem:[%s3 + $0x178] sm:$0xff]
    %v199 = vld [vmem:[%s3 + $0x180] sm:$0xff]
    %v200 = vld [vmem:[%s3 + $0x188] sm:$0xff]
    %v201 = vld [vmem:[%s3 + $0x190] sm:$0xff]
    %v202 = vld [vmem:[%s3 + $0x198] sm:$0xff]
    %v203 = vld [vmem:[%s3 + $0x1a0] sm:$0xff]
    %v204 = vld [vmem:[%s3 + $0x1a8] sm:$0xff]
    %v205 = vld [vmem:[%s3 + $0x1b0] sm:$0xff]
    %v206 = vld [vmem:[%s3 + $0x1b8] sm:$0xff]
    %v207 = vld [vmem:[%s3 + $0x1c0] sm:$0xff]
    %v208 = vld [vmem:[%s3 + $0x1c8] sm:$0xff]
    %v209 = vld [vmem:[%s3 + $0x1d0] sm:$0xff]
    %v210 = vld [vmem:[%s3 + $0x1d8] sm:$0xff]
    %v211 = vld [vmem:[%s3 + $0x1e0] sm:$0xff]
    %v212 = vld [vmem:[%s3 + $0x1e8] sm:$0xff]
    %v213 = vld [vmem:[%s3 + $0x1f0] sm:$0xff]
    %v214 = vld [vmem:[%s3 + $0x1f8] sm:$0xff]
    %v215 = vld [vmem:[%s4] sm:$0xff]
    %v216 = vld [vmem:[%s4 + $0x8] sm:$0xff]
    %v217 = vld [vmem:[%s4 + $0x10] sm:$0xff]
    %v218 = vld [vmem:[%s4 + $0x18] sm:$0xff]
    %v219 = vld [vmem:[%s4 + $0x20] sm:$0xff]
    %v220 = vld [vmem:[%s4 + $0x28] sm:$0xff]
    %v221 = vld [vmem:[%s4 + $0x30] sm:$0xff]
    %v222 = vld [vmem:[%s4 + $0x38] sm:$0xff]
    %v223 = vld [vmem:[%s4 + $0x40] sm:$0xff]
    %v224 = vld [vmem:[%s4 + $0x48] sm:$0xff]
    %v225 = vld [vmem:[%s4 + $0x50] sm:$0xff]
    %v226 = vld [vmem:[%s4 + $0x58] sm:$0xff]
    %v227 = vld [vmem:[%s4 + $0x60] sm:$0xff]
    %v228 = vld [vmem:[%s4 + $0x68] sm:$0xff]
    %v229 = vld [vmem:[%s4 + $0x70] sm:$0xff]
    %v230 = vld [vmem:[%s4 + $0x78] sm:$0xff]
    %v231 = vld [vmem:[%s4 + $0x80] sm:$0xff]
    %v232 = vld [vmem:[%s4 + $0x88] sm:$0xff]
    %v233 = vld [vmem:[%s4 + $0x90] sm:$0xff]
    %v234 = vld [vmem:[%s4 + $0x98] sm:$0xff]
    %v235 = vld [vmem:[%s4 + $0xa0] sm:$0xff]
    %v236 = vld [vmem:[%s4 + $0xa8] sm:$0xff]
    %v237 = vld [vmem:[%s4 + $0xb0] sm:$0xff]
    %v238 = vld [vmem:[%s4 + $0xb8] sm:$0xff]
    %v239 = vld [vmem:[%s4 + $0xc0] sm:$0xff]
    %v240 = vld [vmem:[%s4 + $0xc8] sm:$0xff]
    %v241 = vld [vmem:[%s4 + $0xd0] sm:$0xff]
    %v242 = vld [vmem:[%s4 + $0xd8] sm:$0xff]
    %v243 = vld [vmem:[%s4 + $0xe0] sm:$0xff]
    %v244 = vld [vmem:[%s4 + $0xe8] sm:$0xff]
    %v245 = vld [vmem:[%s4 + $0xf0] sm:$0xff]
    %v246 = vld [vmem:[%s4 + $0xf8] sm:$0xff]
    %v247 = vld [vmem:[%s4 + $0x100] sm:$0xff]
    %v248 = vld [vmem:[%s4 + $0x108] sm:$0xff]
    %v249 = vld [vmem:[%s4 + $0x110] sm:$0xff]
    %v250 = vld [vmem:[%s4 + $0x118] sm:$0xff]
    %v251 = vld [vmem:[%s4 + $0x120] sm:$0xff]
    %v252 = vld [vmem:[%s4 + $0x128] sm:$0xff]
    %v253 = vld [vmem:[%s4 + $0x130] sm:$0xff]
    %v254 = vld [vmem:[%s4 + $0x138] sm:$0xff]
    %v255 = vld [vmem:[%s4 + $0x140] sm:$0xff]
    %v256 = vld [vmem:[%s4 + $0x148] sm:$0xff]
    %v257 = vld [vmem:[%s4 + $0x150] sm:$0xff]
    %v258 = vld [vmem:[%s4 + $0x158] sm:$0xff]
    %v259 = vld [vmem:[%s4 + $0x160] sm:$0xff]
    %v260 = vld [vmem:[%s4 + $0x168] sm:$0xff]
    %v261 = vld [vmem:[%s4 + $0x170] sm:$0xff]
    %v262 = vld [vmem:[%s4 + $0x178] sm:$0xff]
    %v263 = vld [vmem:[%s4 + $0x180] sm:$0xff]
    %v264 = vld [vmem:[%s4 + $0x188] sm:$0xff]
    %v265 = vld [vmem:[%s4 + $0x190] sm:$0xff]
    %v266 = vld [vmem:[%s4 + $0x198] sm:$0xff]
    %v267 = vld [vmem:[%s4 + $0x1a0] sm:$0xff]
    %v268 = vld [vmem:[%s4 + $0x1a8] sm:$0xff]
    %v269 = vld [vmem:[%s4 + $0x1b0] sm:$0xff]
    %v270 = vld [vmem:[%s4 + $0x1b8] sm:$0xff]
    %v271 = vld [vmem:[%s4 + $0x1c0] sm:$0xff]
    %v272 = vld [vmem:[%s4 + $0x1c8] sm:$0xff]
    %v273 = vld [vmem:[%s4 + $0x1d0] sm:$0xff]
    %v274 = vld [vmem:[%s4 + $0x1d8] sm:$0xff]
    %v275 = vld [vmem:[%s4 + $0x1e0] sm:$0xff]
    %v276 = vld [vmem:[%s4 + $0x1e8] sm:$0xff]
    %v277 = vld [vmem:[%s4 + $0x1f0] sm:$0xff]
    %v278 = vld [vmem:[%s4 + $0x1f8] sm:$0xff]
    %s279 = smul.u32 0, 8
    %s280 = ssub.s32 0, 0
    %s281 = smul.u32 %s280, 8
    %v282 = vld [vmem:[#allocation2] sm:$0xff]
    %v283 = vld [vmem:[#allocation3] sm:$0xff]
    %v284 = vld [vmem:[#allocation4] sm:$0xff]
    %v285 = vld [vmem:[#allocation5] sm:$0xff]
    %v286 = vld [vmem:[#allocation6] sm:$0xff]
    %v287 = vld [vmem:[#allocation6 + $0x8] sm:$0xff]
    %v288 = vunpack.c.l.bf16 %v286
    %v289 = vunpack.c.h.bf16 %v286
    %v290 = vunpack.c.l.bf16 %v287
    %v291 = vunpack.c.h.bf16 %v287
    %292 = vmatprep.subr.mxu0 %v152
    %293 = vmatpush1.msra.mxu0 %v151
    %294 = vmatprep.subr.mxu0 %v156
    %295 = vmatpush1.msra.mxu0 %v155
    %296 = vmatprep.subr.mxu0 %v160
    %297 = vmatpush1.msra.mxu0 %v159
    %298 = vmatprep.subr.mxu0 %v164
    %299 = vmatpush1.msra.mxu0 %v163
    %300 = vmatprep.subr.mxu0 %v168
    %301 = vmatpush1.msra.mxu0 %v167
    %302 = vmatprep.subr.mxu0 %v172
    %303 = vmatpush1.msra.mxu0 %v171
    %304 = vmatprep.subr.mxu0 %v176
    %305 = vmatpush1.msra.mxu0 %v175
    %306 = vmatprep.subr.mxu0 %v180
    %307 = vmatpush1.msra.mxu0 %v179
    %308 = vmatprep.subr.mxu0 %v184
    %309 = vmatpush1.msra.mxu0 %v183
    %310 = vmatprep.subr.mxu0 %v188
    %311 = vmatpush1.msra.mxu0 %v187
    %312 = vmatprep.subr.mxu0 %v192
    %313 = vmatpush1.msra.mxu0 %v191
    %314 = vmatprep.subr.mxu0 %v196
    %315 = vmatpush1.msra.mxu0 %v195
    %316 = vmatprep.subr.mxu0 %v200
    %317 = vmatpush1.msra.mxu0 %v199
    %318 = vmatprep.subr.mxu0 %v204
    %319 = vmatpush1.msra.mxu0 %v203
    %320 = vmatprep.subr.mxu0 %v208
    %321 = vmatpush1.msra.mxu0 %v207
    %322 = vmatprep.subr.mxu0 %v212
    %323 = vmatpush1.msra.mxu0 %v211
    %324 = vmatprep.subr.mxu0 0.0
    %325 = vmatpush1.msra.mxu0 0.0
    %326 = vmatprep.subr.mxu0 0.0
    %327 = vmatpush1.msra.mxu0 0.0
    %328 = vmatprep.subr.mxu0 0.0
    %329 = vmatpush1.msra.mxu0 0.0
    %330 = vmatprep.subr.mxu0 0.0
    %331 = vmatpush1.msra.mxu0 0.0
    %332 = vmatprep.subr.mxu0 0.0
    %333 = vmatpush1.msra.mxu0 0.0
    %334 = vmatprep.subr.mxu0 0.0
    %335 = vmatpush1.msra.mxu0 0.0
    %336 = vmatprep.subr.mxu0 0.0
    %337 = vmatpush1.msra.mxu0 0.0
    %338 = vmatprep.subr.mxu0 0.0
    %339 = vmatpush1.msra.mxu0 0.0
    %340 = vmatprep.subr.mxu0 0.0
    %341 = vmatpush1.msra.mxu0 0.0
    %342 = vmatprep.subr.mxu0 0.0
    %343 = vmatpush1.msra.mxu0 0.0
    %344 = vmatprep.subr.mxu0 0.0
    %345 = vmatpush1.msra.mxu0 0.0
    %346 = vmatprep.subr.mxu0 0.0
    %347 = vmatpush1.msra.mxu0 0.0
    %348 = vmatprep.subr.mxu0 0.0
    %349 = vmatpush1.msra.mxu0 0.0
    %350 = vmatprep.subr.mxu0 0.0
    %351 = vmatpush1.msra.mxu0 0.0
    %352 = vmatprep.subr.mxu0 0.0
    %353 = vmatpush1.msra.mxu0 0.0
    %354 = vmatprep.subr.mxu0 0.0
    %355 = vmatpush1.msra.mxu0 0.0
    %356 = vmatprep.mubr.f32.mxu0 0.0
    %357 = vmatmul.mubr.f32.gmra.mrb[0].mxu0 %v282
    %v358 = vpop.f32.mrb[0].mxu0
    %v359 = vadd.f32 0.0, %v358
    %v360 = vpop.f32.mrb[0].mxu0
    %v361 = vadd.f32 0.0, %v360
    %362 = vdwg.mxu0
    %363 = vmatprep.subr.mxu0 %v154
    %364 = vmatpush1.msra.mxu0 %v153
    %365 = vmatprep.subr.mxu0 %v158
    %366 = vmatpush1.msra.mxu0 %v157
    %367 = vmatprep.subr.mxu0 %v162
    %368 = vmatpush1.msra.mxu0 %v161
    %369 = vmatprep.subr.mxu0 %v166
    %370 = vmatpush1.msra.mxu0 %v165
    %371 = vmatprep.subr.mxu0 %v170
    %372 = vmatpush1.msra.mxu0 %v169
    %373 = vmatprep.subr.mxu0 %v174
    %374 = vmatpush1.msra.mxu0 %v173
    %375 = vmatprep.subr.mxu0 %v178
    %376 = vmatpush1.msra.mxu0 %v177
    %377 = vmatprep.subr.mxu0 %v182
    %378 = vmatpush1.msra.mxu0 %v181
    %379 = vmatprep.subr.mxu0 %v186
    %380 = vmatpush1.msra.mxu0 %v185
    %381 = vmatprep.subr.mxu0 %v190
    %382 = vmatpush1.msra.mxu0 %v189
    %383 = vmatprep.subr.mxu0 %v194
    %384 = vmatpush1.msra.mxu0 %v193
    %385 = vmatprep.subr.mxu0 %v198
    %386 = vmatpush1.msra.mxu0 %v197
    %387 = vmatprep.subr.mxu0 %v202
    %388 = vmatpush1.msra.mxu0 %v201
    %389 = vmatprep.subr.mxu0 %v206
    %390 = vmatpush1.msra.mxu0 %v205
    %391 = vmatprep.subr.mxu0 %v210
    %392 = vmatpush1.msra.mxu0 %v209
    %393 = vmatprep.subr.mxu0 %v214
    %394 = vmatpush1.msra.mxu0 %v213
    %395 = vmatprep.subr.mxu0 0.0
    %396 = vmatpush1.msra.mxu0 0.0
    %397 = vmatprep.subr.mxu0 0.0
    %398 = vmatpush1.msra.mxu0 0.0
    %399 = vmatprep.subr.mxu0 0.0
    %400 = vmatpush1.msra.mxu0 0.0
    %401 = vmatprep.subr.mxu0 0.0
    %402 = vmatpush1.msra.mxu0 0.0
    %403 = vmatprep.subr.mxu0 0.0
    %404 = vmatpush1.msra.mxu0 0.0
    %405 = vmatprep.subr.mxu0 0.0
    %406 = vmatpush1.msra.mxu0 0.0
    %407 = vmatprep.subr.mxu0 0.0
    %408 = vmatpush1.msra.mxu0 0.0
    %409 = vmatprep.subr.mxu0 0.0
    %410 = vmatpush1.msra.mxu0 0.0
    %411 = vmatprep.subr.mxu0 0.0
    %412 = vmatpush1.msra.mxu0 0.0
    %413 = vmatprep.subr.mxu0 0.0
    %414 = vmatpush1.msra.mxu0 0.0
    %415 = vmatprep.subr.mxu0 0.0
    %416 = vmatpush1.msra.mxu0 0.0
    %417 = vmatprep.subr.mxu0 0.0
    %418 = vmatpush1.msra.mxu0 0.0
    %419 = vmatprep.subr.mxu0 0.0
    %420 = vmatpush1.msra.mxu0 0.0
    %421 = vmatprep.subr.mxu0 0.0
    %422 = vmatpush1.msra.mxu0 0.0
    %423 = vmatprep.subr.mxu0 0.0
    %424 = vmatpush1.msra.mxu0 0.0
    %425 = vmatprep.subr.mxu0 0.0
    %426 = vmatpush1.msra.mxu0 0.0
    %427 = vmatprep.mubr.f32.mxu0 0.0
    %428 = vmatmul.mubr.f32.gmra.mrb[0].mxu0 %v282
    %v429 = vpop.f32.mrb[0].mxu0
    %v430 = vadd.f32 0.0, %v429
    %v431 = vpop.f32.mrb[0].mxu0
    %v432 = vadd.f32 0.0, %v431
    %433 = vdwg.mxu0
    %v434 = vadd.f32 %v288, %v359
    %v435 = vadd.f32 %v289, %v361
    %v436 = vadd.f32 %v290, %v430
    %v437 = vadd.f32 %v291, %v432
    %s438 = scalar_lea.vmem [#allocation7], 112
    %v439 = vld [vmem:[%s438] sm:$0xff]
    %v440 = vld [vmem:[%s438 + $0x8] sm:$0xff]
    %v441 = vunpack.c.l.bf16 %v439
    %v442 = vunpack.c.h.bf16 %v439
    %v443 = vunpack.c.l.bf16 %v440
    %v444 = vunpack.c.h.bf16 %v440
    %445 = vmatprep.subr.mxu0 %v216
    %446 = vmatpush1.msra.mxu0 %v215
    %447 = vmatprep.subr.mxu0 %v220
    %448 = vmatpush1.msra.mxu0 %v219
    %449 = vmatprep.subr.mxu0 %v224
    %450 = vmatpush1.msra.mxu0 %v223
    %451 = vmatprep.subr.mxu0 %v228
    %452 = vmatpush1.msra.mxu0 %v227
    %453 = vmatprep.subr.mxu0 %v232
    %454 = vmatpush1.msra.mxu0 %v231
    %455 = vmatprep.subr.mxu0 %v236
    %456 = vmatpush1.msra.mxu0 %v235
    %457 = vmatprep.subr.mxu0 %v240
    %458 = vmatpush1.msra.mxu0 %v239
    %459 = vmatprep.subr.mxu0 %v244
    %460 = vmatpush1.msra.mxu0 %v243
    %461 = vmatprep.subr.mxu0 %v248
    %462 = vmatpush1.msra.mxu0 %v247
    %463 = vmatprep.subr.mxu0 %v252
    %464 = vmatpush1.msra.mxu0 %v251
    %465 = vmatprep.subr.mxu0 %v256
    %466 = vmatpush1.msra.mxu0 %v255
    %467 = vmatprep.subr.mxu0 %v260
    %468 = vmatpush1.msra.mxu0 %v259
    %469 = vmatprep.subr.mxu0 %v264
    %470 = vmatpush1.msra.mxu0 %v263
    %471 = vmatprep.subr.mxu0 %v268
    %472 = vmatpush1.msra.mxu0 %v267
    %473 = vmatprep.subr.mxu0 %v272
    %474 = vmatpush1.msra.mxu0 %v271
    %475 = vmatprep.subr.mxu0 %v276
    %476 = vmatpush1.msra.mxu0 %v275
    %477 = vmatprep.subr.mxu0 0.0
    %478 = vmatpush1.msra.mxu0 0.0
    %479 = vmatprep.subr.mxu0 0.0
    %480 = vmatpush1.msra.mxu0 0.0
    %481 = vmatprep.subr.mxu0 0.0
    %482 = vmatpush1.msra.mxu0 0.0
    %483 = vmatprep.subr.mxu0 0.0
    %484 = vmatpush1.msra.mxu0 0.0
    %485 = vmatprep.subr.mxu0 0.0
    %486 = vmatpush1.msra.mxu0 0.0
    %487 = vmatprep.subr.mxu0 0.0
    %488 = vmatpush1.msra.mxu0 0.0
    %489 = vmatprep.subr.mxu0 0.0
    %490 = vmatpush1.msra.mxu0 0.0
    %491 = vmatprep.subr.mxu0 0.0
    %492 = vmatpush1.msra.mxu0 0.0
    %493 = vmatprep.subr.mxu0 0.0
    %494 = vmatpush1.msra.mxu0 0.0
    %495 = vmatprep.subr.mxu0 0.0
    %496 = vmatpush1.msra.mxu0 0.0
    %497 = vmatprep.subr.mxu0 0.0
    %498 = vmatpush1.msra.mxu0 0.0
    %499 = vmatprep.subr.mxu0 0.0
    %500 = vmatpush1.msra.mxu0 0.0
    %501 = vmatprep.subr.mxu0 0.0
    %502 = vmatpush1.msra.mxu0 0.0
    %503 = vmatprep.subr.mxu0 0.0
    %504 = vmatpush1.msra.mxu0 0.0
    %505 = vmatprep.subr.mxu0 0.0
    %506 = vmatpush1.msra.mxu0 0.0
    %507 = vmatprep.subr.mxu0 0.0
    %508 = vmatpush1.msra.mxu0 0.0
    %509 = vmatprep.mubr.f32.mxu0 0.0
    %510 = vmatmul.mubr.f32.gmra.mrb[0].mxu0 %v284
    %v511 = vpop.f32.mrb[0].mxu0
    %v512 = vadd.f32 0.0, %v511
    %v513 = vpop.f32.mrb[0].mxu0
    %v514 = vadd.f32 0.0, %v513
    %515 = vdwg.mxu0
    %516 = vmatprep.subr.mxu0 %v218
    %517 = vmatpush1.msra.mxu0 %v217
    %518 = vmatprep.subr.mxu0 %v222
    %519 = vmatpush1.msra.mxu0 %v221
    %520 = vmatprep.subr.mxu0 %v226
    %521 = vmatpush1.msra.mxu0 %v225
    %522 = vmatprep.subr.mxu0 %v230
    %523 = vmatpush1.msra.mxu0 %v229
    %524 = vmatprep.subr.mxu0 %v234
    %525 = vmatpush1.msra.mxu0 %v233
    %526 = vmatprep.subr.mxu0 %v238
    %527 = vmatpush1.msra.mxu0 %v237
    %528 = vmatprep.subr.mxu0 %v242
    %529 = vmatpush1.msra.mxu0 %v241
    %530 = vmatprep.subr.mxu0 %v246
    %531 = vmatpush1.msra.mxu0 %v245
    %532 = vmatprep.subr.mxu0 %v250
    %533 = vmatpush1.msra.mxu0 %v249
    %534 = vmatprep.subr.mxu0 %v254
    %535 = vmatpush1.msra.mxu0 %v253
    %536 = vmatprep.subr.mxu0 %v258
    %537 = vmatpush1.msra.mxu0 %v257
    %538 = vmatprep.subr.mxu0 %v262
    %539 = vmatpush1.msra.mxu0 %v261
    %540 = vmatprep.subr.mxu0 %v266
    %541 = vmatpush1.msra.mxu0 %v265
    %542 = vmatprep.subr.mxu0 %v270
    %543 = vmatpush1.msra.mxu0 %v269
    %544 = vmatprep.subr.mxu0 %v274
    %545 = vmatpush1.msra.mxu0 %v273
    %546 = vmatprep.subr.mxu0 %v278
    %547 = vmatpush1.msra.mxu0 %v277
    %548 = vmatprep.subr.mxu0 0.0
    %549 = vmatpush1.msra.mxu0 0.0
    %550 = vmatprep.subr.mxu0 0.0
    %551 = vmatpush1.msra.mxu0 0.0
    %552 = vmatprep.subr.mxu0 0.0
    %553 = vmatpush1.msra.mxu0 0.0
    %554 = vmatprep.subr.mxu0 0.0
    %555 = vmatpush1.msra.mxu0 0.0
    %556 = vmatprep.subr.mxu0 0.0
    %557 = vmatpush1.msra.mxu0 0.0
    %558 = vmatprep.subr.mxu0 0.0
    %559 = vmatpush1.msra.mxu0 0.0
    %560 = vmatprep.subr.mxu0 0.0
    %561 = vmatpush1.msra.mxu0 0.0
    %562 = vmatprep.subr.mxu0 0.0
    %563 = vmatpush1.msra.mxu0 0.0
    %564 = vmatprep.subr.mxu0 0.0
    %565 = vmatpush1.msra.mxu0 0.0
    %566 = vmatprep.subr.mxu0 0.0
    %567 = vmatpush1.msra.mxu0 0.0
    %568 = vmatprep.subr.mxu0 0.0
    %569 = vmatpush1.msra.mxu0 0.0
    %570 = vmatprep.subr.mxu0 0.0
    %571 = vmatpush1.msra.mxu0 0.0
    %572 = vmatprep.subr.mxu0 0.0
    %573 = vmatpush1.msra.mxu0 0.0
    %574 = vmatprep.subr.mxu0 0.0
    %575 = vmatpush1.msra.mxu0 0.0
    %576 = vmatprep.subr.mxu0 0.0
    %577 = vmatpush1.msra.mxu0 0.0
    %578 = vmatprep.subr.mxu0 0.0
    %579 = vmatpush1.msra.mxu0 0.0
    %580 = vmatprep.mubr.f32.mxu0 0.0
    %581 = vmatmul.mubr.f32.gmra.mrb[0].mxu0 %v284
    %v582 = vpop.f32.mrb[0].mxu0
    %v583 = vadd.f32 0.0, %v582
    %v584 = vpop.f32.mrb[0].mxu0
    %v585 = vadd.f32 0.0, %v584
    %586 = vdwg.mxu0
    %v587 = vadd.f32 %v441, %v512
    %v588 = vadd.f32 %v442, %v514
    %v589 = vadd.f32 %v443, %v583
    %v590 = vadd.f32 %v444, %v585
    %v591 = vmul.f32 %v434, 0.5
    %v592 = vtanh.pop %v591
    %v593 = vmul.f32 %v592, 0.5
    %v594 = vadd.f32 %v593, 0.5
    %v595 = vmul.f32 %v435, 0.5
    %v596 = vtanh.pop %v595
    %v597 = vmul.f32 %v596, 0.5
    %v598 = vadd.f32 %v597, 0.5
    %v599 = vtanh.pop %v436
    %v600 = vmul.f32 %v437, 0.5
    %v601 = vtanh.pop %v600
    %v602 = vmul.f32 %v601, 0.5
    %v603 = vadd.f32 %v602, 0.5
    %v604 = vmul.f32 %v598, %v283
    %v605 = vmul.f32 %v594, %v599
    %v606 = vadd.f32 %v604, %v605
    %v607 = vtanh.pop %v606
    %v608 = vmul.f32 %v603, %v607
    %v609 = vmul.f32 %v587, 0.5
    %v610 = vtanh.pop %v609
    %v611 = vmul.f32 %v610, 0.5
    %v612 = vadd.f32 %v611, 0.5
    %v613 = vmul.f32 %v588, 0.5
    %v614 = vtanh.pop %v613
    %v615 = vmul.f32 %v614, 0.5
    %v616 = vadd.f32 %v615, 0.5
    %v617 = vtanh.pop %v589
    %v618 = vmul.f32 %v590, 0.5
    %v619 = vtanh.pop %v618
    %v620 = vmul.f32 %v619, 0.5
    %v621 = vadd.f32 %v620, 0.5
    %v622 = vmul.f32 %v616, %v285
    %v623 = vmul.f32 %v612, %v617
    %v624 = vadd.f32 %v622, %v623
    %v625 = vtanh.pop %v624
    %v626 = vmul.f32 %v621, %v625
    %v627 = vstv %s279
    %vm628 = vcmp.lt.s32.totalorder %v627, %v150
    %v629 = vsel %vm628, 1, 0
    %v630 = vcvt.s32.f32 %v629
    %s631 = sadd.s32 %s281, 7
    %v632 = vstv %s631
    %vm633 = vcmp.lt.s32.totalorder %v632, %v150
    %v634 = vsel %vm633, 1, 0
    %v635 = vcvt.s32.f32 %v634
    %637 = vset.pattern.permute.xlu0 0
    %638 = vperm.xlu0 %637, %v630
    %v639 = vpop.permute.xlu0 %638
    %v641 = vmul.f32 %v608, %v639
    %642 = vst [vmem:[%s5] sm:$0xff] %v641
    %644 = vset.pattern.permute.xlu0 0
    %645 = vperm.xlu0 %644, %v635
    %v646 = vpop.permute.xlu0 %645
    %v648 = vmul.f32 %v626, %v646
    %s649 = scalar_lea.vmem %s139, 56
    %650 = vst [vmem:[%s649] sm:$0xff] %v648
    %v651 = vsub.f32 %v608, %v282
    %v652 = vmul.f32 %v639, %v651
    %v653 = vadd.f32 %v282, %v652
    %v654 = vsub.f32 %v606, %v283
    %v655 = vmul.f32 %v639, %v654
    %v656 = vadd.f32 %v283, %v655
    %v657 = vsub.f32 %v626, %v284
    %v658 = vmul.f32 %v646, %v657
    %v659 = vadd.f32 %v284, %v658
    %v660 = vsub.f32 %v624, %v285
    %v661 = vmul.f32 %v646, %v660
    %v662 = vadd.f32 %v285, %v661
    %s663 = scalar_lea.vmem [#allocation6], 16
    %v664 = vld [vmem:[%s663] sm:$0xff]
    %v665 = vld [vmem:[%s663 + $0x8] sm:$0xff]
    %v666 = vunpack.c.l.bf16 %v664
    %v667 = vunpack.c.h.bf16 %v664
    %v668 = vunpack.c.l.bf16 %v665
    %v669 = vunpack.c.h.bf16 %v665
    %670 = vmatprep.subr.mxu0 %v152
    %671 = vmatpush1.msra.mxu0 %v151
    %672 = vmatprep.subr.mxu0 %v156
    %673 = vmatpush1.msra.mxu0 %v155
    %674 = vmatprep.subr.mxu0 %v160
    %675 = vmatpush1.msra.mxu0 %v159
    %676 = vmatprep.subr.mxu0 %v164
    %677 = vmatpush1.msra.mxu0 %v163
    %678 = vmatprep.subr.mxu0 %v168
    %679 = vmatpush1.msra.mxu0 %v167
    %680 = vmatprep.subr.mxu0 %v172
    %681 = vmatpush1.msra.mxu0 %v171
    %682 = vmatprep.subr.mxu0 %v176
    %683 = vmatpush1.msra.mxu0 %v175
    %684 = vmatprep.subr.mxu0 %v180
    %685 = vmatpush1.msra.mxu0 %v179
    %686 = vmatprep.subr.mxu0 %v184
    %687 = vmatpush1.msra.mxu0 %v183
    %688 = vmatprep.subr.mxu0 %v188
    %689 = vmatpush1.msra.mxu0 %v187
    %690 = vmatprep.subr.mxu0 %v192
    %691 = vmatpush1.msra.mxu0 %v191
    %692 = vmatprep.subr.mxu0 %v196
    %693 = vmatpush1.msra.mxu0 %v195
    %694 = vmatprep.subr.mxu0 %v200
    %695 = vmatpush1.msra.mxu0 %v199
    %696 = vmatprep.subr.mxu0 %v204
    %697 = vmatpush1.msra.mxu0 %v203
    %698 = vmatprep.subr.mxu0 %v208
    %699 = vmatpush1.msra.mxu0 %v207
    %700 = vmatprep.subr.mxu0 %v212
    %701 = vmatpush1.msra.mxu0 %v211
    %702 = vmatprep.subr.mxu0 0.0
    %703 = vmatpush1.msra.mxu0 0.0
    %704 = vmatprep.subr.mxu0 0.0
    %705 = vmatpush1.msra.mxu0 0.0
    %706 = vmatprep.subr.mxu0 0.0
    %707 = vmatpush1.msra.mxu0 0.0
    %708 = vmatprep.subr.mxu0 0.0
    %709 = vmatpush1.msra.mxu0 0.0
    %710 = vmatprep.subr.mxu0 0.0
    %711 = vmatpush1.msra.mxu0 0.0
    %712 = vmatprep.subr.mxu0 0.0
    %713 = vmatpush1.msra.mxu0 0.0
    %714 = vmatprep.subr.mxu0 0.0
    %715 = vmatpush1.msra.mxu0 0.0
    %716 = vmatprep.subr.mxu0 0.0
    %717 = vmatpush1.msra.mxu0 0.0
    %718 = vmatprep.subr.mxu0 0.0
    %719 = vmatpush1.msra.mxu0 0.0
    %720 = vmatprep.subr.mxu0 0.0
    %721 = vmatpush1.msra.mxu0 0.0
    %722 = vmatprep.subr.mxu0 0.0
    %723 = vmatpush1.msra.mxu0 0.0
    %724 = vmatprep.subr.mxu0 0.0
    %725 = vmatpush1.msra.mxu0 0.0
    %726 = vmatprep.subr.mxu0 0.0
    %727 = vmatpush1.msra.mxu0 0.0
    %728 = vmatprep.subr.mxu0 0.0
    %729 = vmatpush1.msra.mxu0 0.0
    %730 = vmatprep.subr.mxu0 0.0
    %731 = vmatpush1.msra.mxu0 0.0
    %732 = vmatprep.subr.mxu0 0.0
    %733 = vmatpush1.msra.mxu0 0.0
    %734 = vmatprep.mubr.f32.mxu0 0.0
    %735 = vmatmul.mubr.f32.gmra.mrb[0].mxu0 %v653
    %v736 = vpop.f32.mrb[0].mxu0
    %v737 = vadd.f32 0.0, %v736
    %v738 = vpop.f32.mrb[0].mxu0
    %v739 = vadd.f32 0.0, %v738
    %740 = vdwg.mxu0
    %741 = vmatprep.subr.mxu0 %v154
    %742 = vmatpush1.msra.mxu0 %v153
    %743 = vmatprep.subr.mxu0 %v158
    %744 = vmatpush1.msra.mxu0 %v157
    %745 = vmatprep.subr.mxu0 %v162
    %746 = vmatpush1.msra.mxu0 %v161
    %747 = vmatprep.subr.mxu0 %v166
    %748 = vmatpush1.msra.mxu0 %v165
    %749 = vmatprep.subr.mxu0 %v170
    %750 = vmatpush1.msra.mxu0 %v169
    %751 = vmatprep.subr.mxu0 %v174
    %752 = vmatpush1.msra.mxu0 %v173
    %753 = vmatprep.subr.mxu0 %v178
    %754 = vmatpush1.msra.mxu0 %v177
    %755 = vmatprep.subr.mxu0 %v182
    %756 = vmatpush1.msra.mxu0 %v181
    %757 = vmatprep.subr.mxu0 %v186
    %758 = vmatpush1.msra.mxu0 %v185
    %759 = vmatprep.subr.mxu0 %v190
    %760 = vmatpush1.msra.mxu0 %v189
    %761 = vmatprep.subr.mxu0 %v194
    %762 = vmatpush1.msra.mxu0 %v193
    %763 = vmatprep.subr.mxu0 %v198
    %764 = vmatpush1.msra.mxu0 %v197
    %765 = vmatprep.subr.mxu0 %v202
    %766 = vmatpush1.msra.mxu0 %v201
    %767 = vmatprep.subr.mxu0 %v206
    %768 = vmatpush1.msra.mxu0 %v205
    %769 = vmatprep.subr.mxu0 %v210
    %770 = vmatpush1.msra.mxu0 %v209
    %771 = vmatprep.subr.mxu0 %v214
    %772 = vmatpush1.msra.mxu0 %v213
    %773 = vmatprep.subr.mxu0 0.0
    %774 = vmatpush1.msra.mxu0 0.0
    %775 = vmatprep.subr.mxu0 0.0
    %776 = vmatpush1.msra.mxu0 0.0
    %777 = vmatprep.subr.mxu0 0.0
    %778 = vmatpush1.msra.mxu0 0.0
    %779 = vmatprep.subr.mxu0 0.0
    %780 = vmatpush1.msra.mxu0 0.0
    %781 = vmatprep.subr.mxu0 0.0
    %782 = vmatpush1.msra.mxu0 0.0
    %783 = vmatprep.subr.mxu0 0.0
    %784 = vmatpush1.msra.mxu0 0.0
    %785 = vmatprep.subr.mxu0 0.0
    %786 = vmatpush1.msra.mxu0 0.0
    %787 = vmatprep.subr.mxu0 0.0
    %788 = vmatpush1.msra.mxu0 0.0
    %789 = vmatprep.subr.mxu0 0.0
    %790 = vmatpush1.msra.mxu0 0.0
    %791 = vmatprep.subr.mxu0 0.0
    %792 = vmatpush1.msra.mxu0 0.0
    %793 = vmatprep.subr.mxu0 0.0
    %794 = vmatpush1.msra.mxu0 0.0
    %795 = vmatprep.subr.mxu0 0.0
    %796 = vmatpush1.msra.mxu0 0.0
    %797 = vmatprep.subr.mxu0 0.0
    %798 = vmatpush1.msra.mxu0 0.0
    %799 = vmatprep.subr.mxu0 0.0
    %800 = vmatpush1.msra.mxu0 0.0
    %801 = vmatprep.subr.mxu0 0.0
    %802 = vmatpush1.msra.mxu0 0.0
    %803 = vmatprep.subr.mxu0 0.0
    %804 = vmatpush1.msra.mxu0 0.0
    %805 = vmatprep.mubr.f32.mxu0 0.0
    %806 = vmatmul.mubr.f32.gmra.mrb[0].mxu0 %v653
    %v807 = vpop.f32.mrb[0].mxu0
    %v808 = vadd.f32 0.0, %v807
    %v809 = vpop.f32.mrb[0].mxu0
    %v810 = vadd.f32 0.0, %v809
    %811 = vdwg.mxu0
    %v812 = vadd.f32 %v666, %v737
    %v813 = vadd.f32 %v667, %v739
    %v814 = vadd.f32 %v668, %v808
    %v815 = vadd.f32 %v669, %v810
    %s816 = scalar_lea.vmem [#allocation7], 96
    %v817 = vld [vmem:[%s816] sm:$0xff]
    %v818 = vld [vmem:[%s816 + $0x8] sm:$0xff]
    %v819 = vunpack.c.l.bf16 %v817
    %v820 = vunpack.c.h.bf16 %v817
    %v821 = vunpack.c.l.bf16 %v818
    %v822 = vunpack.c.h.bf16 %v818
    %823 = vmatprep.subr.mxu0 %v216
    %824 = vmatpush1.msra.mxu0 %v215
    %825 = vmatprep.subr.mxu0 %v220
    %826 = vmatpush1.msra.mxu0 %v219
    %827 = vmatprep.subr.mxu0 %v224
    %828 = vmatpush1.msra.mxu0 %v223
    %829 = vmatprep.subr.mxu0 %v228
    %830 = vmatpush1.msra.mxu0 %v227
    %831 = vmatprep.subr.mxu0 %v232
    %832 = vmatpush1.msra.mxu0 %v231
    %833 = vmatprep.subr.mxu0 %v236
    %834 = vmatpush1.msra.mxu0 %v235
    %835 = vmatprep.subr.mxu0 %v240
    %836 = vmatpush1.msra.mxu0 %v239
    %837 = vmatprep.subr.mxu0 %v244
    %838 = vmatpush1.msra.mxu0 %v243
    %839 = vmatprep.subr.mxu0 %v248
    %840 = vmatpush1.msra.mxu0 %v247
    %841 = vmatprep.subr.mxu0 %v252
    %842 = vmatpush1.msra.mxu0 %v251
    %843 = vmatprep.subr.mxu0 %v256
    %844 = vmatpush1.msra.mxu0 %v255
    %845 = vmatprep.subr.mxu0 %v260
    %846 = vmatpush1.msra.mxu0 %v259
    %847 = vmatprep.subr.mxu0 %v264
    %848 = vmatpush1.msra.mxu0 %v263
    %849 = vmatprep.subr.mxu0 %v268
    %850 = vmatpush1.msra.mxu0 %v267
    %851 = vmatprep.subr.mxu0 %v272
    %852 = vmatpush1.msra.mxu0 %v271
    %853 = vmatprep.subr.mxu0 %v276
    %854 = vmatpush1.msra.mxu0 %v275
    %855 = vmatprep.subr.mxu0 0.0
    %856 = vmatpush1.msra.mxu0 0.0
    %857 = vmatprep.subr.mxu0 0.0
    %858 = vmatpush1.msra.mxu0 0.0
    %859 = vmatprep.subr.mxu0 0.0
    %860 = vmatpush1.msra.mxu0 0.0
    %861 = vmatprep.subr.mxu0 0.0
    %862 = vmatpush1.msra.mxu0 0.0
    %863 = vmatprep.subr.mxu0 0.0
    %864 = vmatpush1.msra.mxu0 0.0
    %865 = vmatprep.subr.mxu0 0.0
    %866 = vmatpush1.msra.mxu0 0.0
    %867 = vmatprep.subr.mxu0 0.0
    %868 = vmatpush1.msra.mxu0 0.0
    %869 = vmatprep.subr.mxu0 0.0
    %870 = vmatpush1.msra.mxu0 0.0
    %871 = vmatprep.subr.mxu0 0.0
    %872 = vmatpush1.msra.mxu0 0.0
    %873 = vmatprep.subr.mxu0 0.0
    %874 = vmatpush1.msra.mxu0 0.0
    %875 = vmatprep.subr.mxu0 0.0
    %876 = vmatpush1.msra.mxu0 0.0
    %877 = vmatprep.subr.mxu0 0.0
    %878 = vmatpush1.msra.mxu0 0.0
    %879 = vmatprep.subr.mxu0 0.0
    %880 = vmatpush1.msra.mxu0 0.0
    %881 = vmatprep.subr.mxu0 0.0
    %882 = vmatpush1.msra.mxu0 0.0
    %883 = vmatprep.subr.mxu0 0.0
    %884 = vmatpush1.msra.mxu0 0.0
    %885 = vmatprep.subr.mxu0 0.0
    %886 = vmatpush1.msra.mxu0 0.0
    %887 = vmatprep.mubr.f32.mxu0 0.0
    %888 = vmatmul.mubr.f32.gmra.mrb[0].mxu0 %v659
    %v889 = vpop.f32.mrb[0].mxu0
    %v890 = vadd.f32 0.0, %v889
    %v891 = vpop.f32.mrb[0].mxu0
    %v892 = vadd.f32 0.0, %v891
    %893 = vdwg.mxu0
    %894 = vmatprep.subr.mxu0 %v218
    %895 = vmatpush1.msra.mxu0 %v217
    %896 = vmatprep.subr.mxu0 %v222
    %897 = vmatpush1.msra.mxu0 %v221
    %898 = vmatprep.subr.mxu0 %v226
    %899 = vmatpush1.msra.mxu0 %v225
    %900 = vmatprep.subr.mxu0 %v230
    %901 = vmatpush1.msra.mxu0 %v229
    %902 = vmatprep.subr.mxu0 %v234
    %903 = vmatpush1.msra.mxu0 %v233
    %904 = vmatprep.subr.mxu0 %v238
    %905 = vmatpush1.msra.mxu0 %v237
    %906 = vmatprep.subr.mxu0 %v242
    %907 = vmatpush1.msra.mxu0 %v241
    %908 = vmatprep.subr.mxu0 %v246
    %909 = vmatpush1.msra.mxu0 %v245
    %910 = vmatprep.subr.mxu0 %v250
    %911 = vmatpush1.msra.mxu0 %v249
    %912 = vmatprep.subr.mxu0 %v254
    %913 = vmatpush1.msra.mxu0 %v253
    %914 = vmatprep.subr.mxu0 %v258
    %915 = vmatpush1.msra.mxu0 %v257
    %916 = vmatprep.subr.mxu0 %v262
    %917 = vmatpush1.msra.mxu0 %v261
    %918 = vmatprep.subr.mxu0 %v266
    %919 = vmatpush1.msra.mxu0 %v265
    %920 = vmatprep.subr.mxu0 %v270
    %921 = vmatpush1.msra.mxu0 %v269
    %922 = vmatprep.subr.mxu0 %v274
    %923 = vmatpush1.msra.mxu0 %v273
    %924 = vmatprep.subr.mxu0 %v278
    %925 = vmatpush1.msra.mxu0 %v277
    %926 = vmatprep.subr.mxu0 0.0
    %927 = vmatpush1.msra.mxu0 0.0
    %928 = vmatprep.subr.mxu0 0.0
    %929 = vmatpush1.msra.mxu0 0.0
    %930 = vmatprep.subr.mxu0 0.0
    %931 = vmatpush1.msra.mxu0 0.0
    %932 = vmatprep.subr.mxu0 0.0
    %933 = vmatpush1.msra.mxu0 0.0
    %934 = vmatprep.subr.mxu0 0.0
    %935 = vmatpush1.msra.mxu0 0.0
    %936 = vmatprep.subr.mxu0 0.0
    %937 = vmatpush1.msra.mxu0 0.0
    %938 = vmatprep.subr.mxu0 0.0
    %939 = vmatpush1.msra.mxu0 0.0
    %940 = vmatprep.subr.mxu0 0.0
    %941 = vmatpush1.msra.mxu0 0.0
    %942 = vmatprep.subr.mxu0 0.0
    %943 = vmatpush1.msra.mxu0 0.0
    %944 = vmatprep.subr.mxu0 0.0
    %945 = vmatpush1.msra.mxu0 0.0
    %946 = vmatprep.subr.mxu0 0.0
    %947 = vmatpush1.msra.mxu0 0.0
    %948 = vmatprep.subr.mxu0 0.0
    %949 = vmatpush1.msra.mxu0 0.0
    %950 = vmatprep.subr.mxu0 0.0
    %951 = vmatpush1.msra.mxu0 0.0
    %952 = vmatprep.subr.mxu0 0.0
    %953 = vmatpush1.msra.mxu0 0.0
    %954 = vmatprep.subr.mxu0 0.0
    %955 = vmatpush1.msra.mxu0 0.0
    %956 = vmatprep.subr.mxu0 0.0
    %957 = vmatpush1.msra.mxu0 0.0
    %958 = vmatprep.mubr.f32.mxu0 0.0
    %959 = vmatmul.mubr.f32.gmra.mrb[0].mxu0 %v659
    %v960 = vpop.f32.mrb[0].mxu0
    %v961 = vadd.f32 0.0, %v960
    %v962 = vpop.f32.mrb[0].mxu0
    %v963 = vadd.f32 0.0, %v962
    %964 = vdwg.mxu0
    %v965 = vadd.f32 %v819, %v890
    %v966 = vadd.f32 %v820, %v892
    %v967 = vadd.f32 %v821, %v961
    %v968 = vadd.f32 %v822, %v963
    %v969 = vmul.f32 %v812, 0.5
    %v970 = vtanh.pop %v969
    %v971 = vmul.f32 %v970, 0.5
    %v972 = vadd.f32 %v971, 0.5
    %v973 = vmul.f32 %v813, 0.5
    %v974 = vtanh.pop %v973
    %v975 = vmul.f32 %v974, 0.5
    %v976 = vadd.f32 %v975, 0.5
    %v977 = vtanh.pop %v814
    %v978 = vmul.f32 %v815, 0.5
    %v979 = vtanh.pop %v978
    %v980 = vmul.f32 %v979, 0.5
    %v981 = vadd.f32 %v980, 0.5
    %v982 = vmul.f32 %v976, %v656
    %v983 = vmul.f32 %v972, %v977
    %v984 = vadd.f32 %v982, %v983
    %v985 = vtanh.pop %v984
    %v986 = vmul.f32 %v981, %v985
    %v987 = vmul.f32 %v965, 0.5
    %v988 = vtanh.pop %v987
    %v989 = vmul.f32 %v988, 0.5
    %v990 = vadd.f32 %v989, 0.5
    %v991 = vmul.f32 %v966, 0.5
    %v992 = vtanh.pop %v991
    %v993 = vmul.f32 %v992, 0.5
    %v994 = vadd.f32 %v993, 0.5
    %v995 = vtanh.pop %v967
    %v996 = vmul.f32 %v968, 0.5
    %v997 = vtanh.pop %v996
    %v998 = vmul.f32 %v997, 0.5
    %v999 = vadd.f32 %v998, 0.5
    %v1000 = vmul.f32 %v994, %v662
    %v1001 = vmul.f32 %v990, %v995
    %v1002 = vadd.f32 %v1000, %v1001
    %v1003 = vtanh.pop %v1002
    %v1004 = vmul.f32 %v999, %v1003
    %s1005 = sadd.s32 %s279, 1
    %v1006 = vstv %s1005
    %vm1007 = vcmp.lt.s32.totalorder %v1006, %v150
    %v1008 = vsel %vm1007, 1, 0
    %v1009 = vcvt.s32.f32 %v1008
    %s1010 = sadd.s32 %s281, 6
    %v1011 = vstv %s1010
    %vm1012 = vcmp.lt.s32.totalorder %v1011, %v150
    %v1013 = vsel %vm1012, 1, 0
    %v1014 = vcvt.s32.f32 %v1013
    %1016 = vset.pattern.permute.xlu0 0
    %1017 = vperm.xlu0 %1016, %v1009
    %v1018 = vpop.permute.xlu0 %1017
    %v1020 = vmul.f32 %v986, %v1018
    %s1021 = scalar_lea.vmem %s5, 8
    %1022 = vst [vmem:[%s1021] sm:$0xff] %v1020
    %1024 = vset.pattern.permute.xlu0 0
    %1025 = vperm.xlu0 %1024, %v1014
    %v1026 = vpop.permute.xlu0 %1025
    %v1028 = vmul.f32 %v1004, %v1026
    %s1029 = scalar_lea.vmem %s139, 48
    %1030 = vst [vmem:[%s1029] sm:$0xff] %v1028
    %v1031 = vsub.f32 %v986, %v653
    %v1032 = vmul.f32 %v1018, %v1031
    %v1033 = vadd.f32 %v653, %v1032
    %v1034 = vsub.f32 %v984, %v656
    %v1035 = vmul.f32 %v1018, %v1034
    %v1036 = vadd.f32 %v656, %v1035
    %v1037 = vsub.f32 %v1004, %v659
    %v1038 = vmul.f32 %v1026, %v1037
    %v1039 = vadd.f32 %v659, %v1038
    %v1040 = vsub.f32 %v1002, %v662
    %v1041 = vmul.f32 %v1026, %v1040
    %v1042 = vadd.f32 %v662, %v1041
    %s1043 = scalar_lea.vmem [#allocation6], 32
    %v1044 = vld [vmem:[%s1043] sm:$0xff]
    %v1045 = vld [vmem:[%s1043 + $0x8] sm:$0xff]
    %v1046 = vunpack.c.l.bf16 %v1044
    %v1047 = vunpack.c.h.bf16 %v1044
    %v1048 = vunpack.c.l.bf16 %v1045
    %v1049 = vunpack.c.h.bf16 %v1045
    %1050 = vmatprep.subr.mxu0 %v152
    %1051 = vmatpush1.msra.mxu0 %v151
    %1052 = vmatprep.subr.mxu0 %v156
    %1053 = vmatpush1.msra.mxu0 %v155
    %1054 = vmatprep.subr.mxu0 %v160
    %1055 = vmatpush1.msra.mxu0 %v159
    %1056 = vmatprep.subr.mxu0 %v164
    %1057 = vmatpush1.msra.mxu0 %v163
    %1058 = vmatprep.subr.mxu0 %v168
    %1059 = vmatpush1.msra.mxu0 %v167
    %1060 = vmatprep.subr.mxu0 %v172
    %1061 = vmatpush1.msra.mxu0 %v171
    %1062 = vmatprep.subr.mxu0 %v176
    %1063 = vmatpush1.msra.mxu0 %v175
    %1064 = vmatprep.subr.mxu0 %v180
    %1065 = vmatpush1.msra.mxu0 %v179
    %1066 = vmatprep.subr.mxu0 %v184
    %1067 = vmatpush1.msra.mxu0 %v183
    %1068 = vmatprep.subr.mxu0 %v188
    %1069 = vmatpush1.msra.mxu0 %v187
    %1070 = vmatprep.subr.mxu0 %v192
    %1071 = vmatpush1.msra.mxu0 %v191
    %1072 = vmatprep.subr.mxu0 %v196
    %1073 = vmatpush1.msra.mxu0 %v195
    %1074 = vmatprep.subr.mxu0 %v200
    %1075 = vmatpush1.msra.mxu0 %v199
    %1076 = vmatprep.subr.mxu0 %v204
    %1077 = vmatpush1.msra.mxu0 %v203
    %1078 = vmatprep.subr.mxu0 %v208
    %1079 = vmatpush1.msra.mxu0 %v207
    %1080 = vmatprep.subr.mxu0 %v212
    %1081 = vmatpush1.msra.mxu0 %v211
    %1082 = vmatprep.subr.mxu0 0.0
    %1083 = vmatpush1.msra.mxu0 0.0
    %1084 = vmatprep.subr.mxu0 0.0
    %1085 = vmatpush1.msra.mxu0 0.0
    %1086 = vmatprep.subr.mxu0 0.0
    %1087 = vmatpush1.msra.mxu0 0.0
    %1088 = vmatprep.subr.mxu0 0.0
    %1089 = vmatpush1.msra.mxu0 0.0
    %1090 = vmatprep.subr.mxu0 0.0
    %1091 = vmatpush1.msra.mxu0 0.0
    %1092 = vmatprep.subr.mxu0 0.0
    %1093 = vmatpush1.msra.mxu0 0.0
    %1094 = vmatprep.subr.mxu0 0.0
    %1095 = vmatpush1.msra.mxu0 0.0
    %1096 = vmatprep.subr.mxu0 0.0
    %1097 = vmatpush1.msra.mxu0 0.0
    %1098 = vmatprep.subr.mxu0 0.0
    %1099 = vmatpush1.msra.mxu0 0.0
    %1100 = vmatprep.subr.mxu0 0.0
    %1101 = vmatpush1.msra.mxu0 0.0
    %1102 = vmatprep.subr.mxu0 0.0
    %1103 = vmatpush1.msra.mxu0 0.0
    %1104 = vmatprep.subr.mxu0 0.0
    %1105 = vmatpush1.msra.mxu0 0.0
    %1106 = vmatprep.subr.mxu0 0.0
    %1107 = vmatpush1.msra.mxu0 0.0
    %1108 = vmatprep.subr.mxu0 0.0
    %1109 = vmatpush1.msra.mxu0 0.0
    %1110 = vmatprep.subr.mxu0 0.0
    %1111 = vmatpush1.msra.mxu0 0.0
    %1112 = vmatprep.subr.mxu0 0.0
    %1113 = vmatpush1.msra.mxu0 0.0
    %1114 = vmatprep.mubr.f32.mxu0 0.0
    %1115 = vmatmul.mubr.f32.gmra.mrb[0].mxu0 %v1033
    %v1116 = vpop.f32.mrb[0].mxu0
    %v1117 = vadd.f32 0.0, %v1116
    %v1118 = vpop.f32.mrb[0].mxu0
    %v1119 = vadd.f32 0.0, %v1118
    %1120 = vdwg.mxu0
    %1121 = vmatprep.subr.mxu0 %v154
    %1122 = vmatpush1.msra.mxu0 %v153
    %1123 = vmatprep.subr.mxu0 %v158
    %1124 = vmatpush1.msra.mxu0 %v157
    %1125 = vmatprep.subr.mxu0 %v162
    %1126 = vmatpush1.msra.mxu0 %v161
    %1127 = vmatprep.subr.mxu0 %v166
    %1128 = vmatpush1.msra.mxu0 %v165
    %1129 = vmatprep.subr.mxu0 %v170
    %1130 = vmatpush1.msra.mxu0 %v169
    %1131 = vmatprep.subr.mxu0 %v174
    %1132 = vmatpush1.msra.mxu0 %v173
    %1133 = vmatprep.subr.mxu0 %v178
    %1134 = vmatpush1.msra.mxu0 %v177
    %1135 = vmatprep.subr.mxu0 %v182
    %1136 = vmatpush1.msra.mxu0 %v181
    %1137 = vmatprep.subr.mxu0 %v186
    %1138 = vmatpush1.msra.mxu0 %v185
    %1139 = vmatprep.subr.mxu0 %v190
    %1140 = vmatpush1.msra.mxu0 %v189
    %1141 = vmatprep.subr.mxu0 %v194
    %1142 = vmatpush1.msra.mxu0 %v193
    %1143 = vmatprep.subr.mxu0 %v198
    %1144 = vmatpush1.msra.mxu0 %v197
    %1145 = vmatprep.subr.mxu0 %v202
    %1146 = vmatpush1.msra.mxu0 %v201
    %1147 = vmatprep.subr.mxu0 %v206
    %1148 = vmatpush1.msra.mxu0 %v205
    %1149 = vmatprep.subr.mxu0 %v210
    %1150 = vmatpush1.msra.mxu0 %v209
    %1151 = vmatprep.subr.mxu0 %v214
    %1152 = vmatpush1.msra.mxu0 %v213
    %1153 = vmatprep.subr.mxu0 0.0
    %1154 = vmatpush1.msra.mxu0 0.0
    %1155 = vmatprep.subr.mxu0 0.0
    %1156 = vmatpush1.msra.mxu0 0.0
    %1157 = vmatprep.subr.mxu0 0.0
    %1158 = vmatpush1.msra.mxu0 0.0
    %1159 = vmatprep.subr.mxu0 0.0
    %1160 = vmatpush1.msra.mxu0 0.0
    %1161 = vmatprep.subr.mxu0 0.0
    %1162 = vmatpush1.msra.mxu0 0.0
    %1163 = vmatprep.subr.mxu0 0.0
    %1164 = vmatpush1.msra.mxu0 0.0
    %1165 = vmatprep.subr.mxu0 0.0
    %1166 = vmatpush1.msra.mxu0 0.0
    %1167 = vmatprep.subr.mxu0 0.0
    %1168 = vmatpush1.msra.mxu0 0.0
    %1169 = vmatprep.subr.mxu0 0.0
    %1170 = vmatpush1.msra.mxu0 0.0
    %1171 = vmatprep.subr.mxu0 0.0
    %1172 = vmatpush1.msra.mxu0 0.0
    %1173 = vmatprep.subr.mxu0 0.0
    %1174 = vmatpush1.msra.mxu0 0.0
    %1175 = vmatprep.subr.mxu0 0.0
    %1176 = vmatpush1.msra.mxu0 0.0
    %1177 = vmatprep.subr.mxu0 0.0
    %1178 = vmatpush1.msra.mxu0 0.0
    %1179 = vmatprep.subr.mxu0 0.0
    %1180 = vmatpush1.msra.mxu0 0.0
    %1181 = vmatprep.subr.mxu0 0.0
    %1182 = vmatpush1.msra.mxu0 0.0
    %1183 = vmatprep.subr.mxu0 0.0
    %1184 = vmatpush1.msra.mxu0 0.0
    %1185 = vmatprep.mubr.f32.mxu0 0.0
    %1186 = vmatmul.mubr.f32.gmra.mrb[0].mxu0 %v1033
    %v1187 = vpop.f32.mrb[0].mxu0
    %v1188 = vadd.f32 0.0, %v1187
    %v1189 = vpop.f32.mrb[0].mxu0
    %v1190 = vadd.f32 0.0, %v1189
    %1191 = vdwg.mxu0
    %v1192 = vadd.f32 %v1046, %v1117
    %v1193 = vadd.f32 %v1047, %v1119
    %v1194 = vadd.f32 %v1048, %v1188
    %v1195 = vadd.f32 %v1049, %v1190
    %s1196 = scalar_lea.vmem [#allocation7], 80
    %v1197 = vld [vmem:[%s1196] sm:$0xff]
    %v1198 = vld [vmem:[%s1196 + $0x8] sm:$0xff]
    %v1199 = vunpack.c.l.bf16 %v1197
    %v1200 = vunpack.c.h.bf16 %v1197
    %v1201 = vunpack.c.l.bf16 %v1198
    %v1202 = vunpack.c.h.bf16 %v1198
    %1203 = vmatprep.subr.mxu0 %v216
    %1204 = vmatpush1.msra.mxu0 %v215
    %1205 = vmatprep.subr.mxu0 %v220
    %1206 = vmatpush1.msra.mxu0 %v219
    %1207 = vmatprep.subr.mxu0 %v224
    %1208 = vmatpush1.msra.mxu0 %v223
    %1209 = vmatprep.subr.mxu0 %v228
    %1210 = vmatpush1.msra.mxu0 %v227
    %1211 = vmatprep.subr.mxu0 %v232
    %1212 = vmatpush1.msra.mxu0 %v231
    %1213 = vmatprep.subr.mxu0 %v236
    %1214 = vmatpush1.msra.mxu0 %v235
    %1215 = vmatprep.subr.mxu0 %v240
    %1216 = vmatpush1.msra.mxu0 %v239
    %1217 = vmatprep.subr.mxu0 %v244
    %1218 = vmatpush1.msra.mxu0 %v243
    %1219 = vmatprep.subr.mxu0 %v248
    %1220 = vmatpush1.msra.mxu0 %v247
    %1221 = vmatprep.subr.mxu0 %v252
    %1222 = vmatpush1.msra.mxu0 %v251
    %1223 = vmatprep.subr.mxu0 %v256
    %1224 = vmatpush1.msra.mxu0 %v255
    %1225 = vmatprep.subr.mxu0 %v260
    %1226 = vmatpush1.msra.mxu0 %v259
    %1227 = vmatprep.subr.mxu0 %v264
    %1228 = vmatpush1.msra.mxu0 %v263
    %1229 = vmatprep.subr.mxu0 %v268
    %1230 = vmatpush1.msra.mxu0 %v267
    %1231 = vmatprep.subr.mxu0 %v272
    %1232 = vmatpush1.msra.mxu0 %v271
    %1233 = vmatprep.subr.mxu0 %v276
    %1234 = vmatpush1.msra.mxu0 %v275
    %1235 = vmatprep.subr.mxu0 0.0
    %1236 = vmatpush1.msra.mxu0 0.0
    %1237 = vmatprep.subr.mxu0 0.0
    %1238 = vmatpush1.msra.mxu0 0.0
    %1239 = vmatprep.subr.mxu0 0.0
    %1240 = vmatpush1.msra.mxu0 0.0
    %1241 = vmatprep.subr.mxu0 0.0
    %1242 = vmatpush1.msra.mxu0 0.0
    %1243 = vmatprep.subr.mxu0 0.0
    %1244 = vmatpush1.msra.mxu0 0.0
    %1245 = vmatprep.subr.mxu0 0.0
    %1246 = vmatpush1.msra.mxu0 0.0
    %1247 = vmatprep.subr.mxu0 0.0
    %1248 = vmatpush1.msra.mxu0 0.0
    %1249 = vmatprep.subr.mxu0 0.0
    %1250 = vmatpush1.msra.mxu0 0.0
    %1251 = vmatprep.subr.mxu0 0.0
    %1252 = vmatpush1.msra.mxu0 0.0
    %1253 = vmatprep.subr.mxu0 0.0
    %1254 = vmatpush1.msra.mxu0 0.0
    %1255 = vmatprep.subr.mxu0 0.0
    %1256 = vmatpush1.msra.mxu0 0.0
    %1257 = vmatprep.subr.mxu0 0.0
    %1258 = vmatpush1.msra.mxu0 0.0
    %1259 = vmatprep.subr.mxu0 0.0
    %1260 = vmatpush1.msra.mxu0 0.0
    %1261 = vmatprep.subr.mxu0 0.0
    %1262 = vmatpush1.msra.mxu0 0.0
    %1263 = vmatprep.subr.mxu0 0.0
    %1264 = vmatpush1.msra.mxu0 0.0
    %1265 = vmatprep.subr.mxu0 0.0
    %1266 = vmatpush1.msra.mxu0 0.0
    %1267 = vmatprep.mubr.f32.mxu0 0.0
    %1268 = vmatmul.mubr.f32.gmra.mrb[0].mxu0 %v1039
    %v1269 = vpop.f32.mrb[0].mxu0
    %v1270 = vadd.f32 0.0, %v1269
    %v1271 = vpop.f32.mrb[0].mxu0
    %v1272 = vadd.f32 0.0, %v1271
    %1273 = vdwg.mxu0
    %1274 = vmatprep.subr.mxu0 %v218
    %1275 = vmatpush1.msra.mxu0 %v217
    %1276 = vmatprep.subr.mxu0 %v222
    %1277 = vmatpush1.msra.mxu0 %v221
    %1278 = vmatprep.subr.mxu0 %v226
    %1279 = vmatpush1.msra.mxu0 %v225
    %1280 = vmatprep.subr.mxu0 %v230
    %1281 = vmatpush1.msra.mxu0 %v229
    %1282 = vmatprep.subr.mxu0 %v234
    %1283 = vmatpush1.msra.mxu0 %v233
    %1284 = vmatprep.subr.mxu0 %v238
    %1285 = vmatpush1.msra.mxu0 %v237
    %1286 = vmatprep.subr.mxu0 %v242
    %1287 = vmatpush1.msra.mxu0 %v241
    %1288 = vmatprep.subr.mxu0 %v246
    %1289 = vmatpush1.msra.mxu0 %v245
    %1290 = vmatprep.subr.mxu0 %v250
    %1291 = vmatpush1.msra.mxu0 %v249
    %1292 = vmatprep.subr.mxu0 %v254
    %1293 = vmatpush1.msra.mxu0 %v253
    %1294 = vmatprep.subr.mxu0 %v258
    %1295 = vmatpush1.msra.mxu0 %v257
    %1296 = vmatprep.subr.mxu0 %v262
    %1297 = vmatpush1.msra.mxu0 %v261
    %1298 = vmatprep.subr.mxu0 %v266
    %1299 = vmatpush1.msra.mxu0 %v265
    %1300 = vmatprep.subr.mxu0 %v270
    %1301 = vmatpush1.msra.mxu0 %v269
    %1302 = vmatprep.subr.mxu0 %v274
    %1303 = vmatpush1.msra.mxu0 %v273
    %1304 = vmatprep.subr.mxu0 %v278
    %1305 = vmatpush1.msra.mxu0 %v277
    %1306 = vmatprep.subr.mxu0 0.0
    %1307 = vmatpush1.msra.mxu0 0.0
    %1308 = vmatprep.subr.mxu0 0.0
    %1309 = vmatpush1.msra.mxu0 0.0
    %1310 = vmatprep.subr.mxu0 0.0
    %1311 = vmatpush1.msra.mxu0 0.0
    %1312 = vmatprep.subr.mxu0 0.0
    %1313 = vmatpush1.msra.mxu0 0.0
    %1314 = vmatprep.subr.mxu0 0.0
    %1315 = vmatpush1.msra.mxu0 0.0
    %1316 = vmatprep.subr.mxu0 0.0
    %1317 = vmatpush1.msra.mxu0 0.0
    %1318 = vmatprep.subr.mxu0 0.0
    %1319 = vmatpush1.msra.mxu0 0.0
    %1320 = vmatprep.subr.mxu0 0.0
    %1321 = vmatpush1.msra.mxu0 0.0
    %1322 = vmatprep.subr.mxu0 0.0
    %1323 = vmatpush1.msra.mxu0 0.0
    %1324 = vmatprep.subr.mxu0 0.0
    %1325 = vmatpush1.msra.mxu0 0.0
    %1326 = vmatprep.subr.mxu0 0.0
    %1327 = vmatpush1.msra.mxu0 0.0
    %1328 = vmatprep.subr.mxu0 0.0
    %1329 = vmatpush1.msra.mxu0 0.0
    %1330 = vmatprep.subr.mxu0 0.0
    %1331 = vmatpush1.msra.mxu0 0.0
    %1332 = vmatprep.subr.mxu0 0.0
    %1333 = vmatpush1.msra.mxu0 0.0
    %1334 = vmatprep.subr.mxu0 0.0
    %1335 = vmatpush1.msra.mxu0 0.0
    %1336 = vmatprep.subr.mxu0 0.0
    %1337 = vmatpush1.msra.mxu0 0.0
    %1338 = vmatprep.mubr.f32.mxu0 0.0
    %1339 = vmatmul.mubr.f32.gmra.mrb[0].mxu0 %v1039
    %v1340 = vpop.f32.mrb[0].mxu0
    %v1341 = vadd.f32 0.0, %v1340
    %v1342 = vpop.f32.mrb[0].mxu0
    %v1343 = vadd.f32 0.0, %v1342
    %1344 = vdwg.mxu0
    %v1345 = vadd.f32 %v1199, %v1270
    %v1346 = vadd.f32 %v1200, %v1272
    %v1347 = vadd.f32 %v1201, %v1341
    %v1348 = vadd.f32 %v1202, %v1343
    %v1349 = vmul.f32 %v1192, 0.5
    %v1350 = vtanh.pop %v1349
    %v1351 = vmul.f32 %v1350, 0.5
    %v1352 = vadd.f32 %v1351, 0.5
    %v1353 = vmul.f32 %v1193, 0.5
    %v1354 = vtanh.pop %v1353
    %v1355 = vmul.f32 %v1354, 0.5
    %v1356 = vadd.f32 %v1355, 0.5
    %v1357 = vtanh.pop %v1194
    %v1358 = vmul.f32 %v1195, 0.5
    %v1359 = vtanh.pop %v1358
    %v1360 = vmul.f32 %v1359, 0.5
    %v1361 = vadd.f32 %v1360, 0.5
    %v1362 = vmul.f32 %v1356, %v1036
    %v1363 = vmul.f32 %v1352, %v1357
    %v1364 = vadd.f32 %v1362, %v1363
    %v1365 = vtanh.pop %v1364
    %v1366 = vmul.f32 %v1361, %v1365
    %v1367 = vmul.f32 %v1345, 0.5
    %v1368 = vtanh.pop %v1367
    %v1369 = vmul.f32 %v1368, 0.5
    %v1370 = vadd.f32 %v1369, 0.5
    %v1371 = vmul.f32 %v1346, 0.5
    %v1372 = vtanh.pop %v1371
    %v1373 = vmul.f32 %v1372, 0.5
    %v1374 = vadd.f32 %v1373, 0.5
    %v1375 = vtanh.pop %v1347
    %v1376 = vmul.f32 %v1348, 0.5
    %v1377 = vtanh.pop %v1376
    %v1378 = vmul.f32 %v1377, 0.5
    %v1379 = vadd.f32 %v1378, 0.5
    %v1380 = vmul.f32 %v1374, %v1042
    %v1381 = vmul.f32 %v1370, %v1375
    %v1382 = vadd.f32 %v1380, %v1381
    %v1383 = vtanh.pop %v1382
    %v1384 = vmul.f32 %v1379, %v1383
    %s1385 = sadd.s32 %s279, 2
    %v1386 = vstv %s1385
    %vm1387 = vcmp.lt.s32.totalorder %v1386, %v150
    %v1388 = vsel %vm1387, 1, 0
    %v1389 = vcvt.s32.f32 %v1388
    %s1390 = sadd.s32 %s281, 5
    %v1391 = vstv %s1390
    %vm1392 = vcmp.lt.s32.totalorder %v1391, %v150
    %v1393 = vsel %vm1392, 1, 0
    %v1394 = vcvt.s32.f32 %v1393
    %1396 = vset.pattern.permute.xlu0 0
    %1397 = vperm.xlu0 %1396, %v1389
    %v1398 = vpop.permute.xlu0 %1397
    %v1400 = vmul.f32 %v1366, %v1398
    %s1401 = scalar_lea.vmem %s5, 16
    %1402 = vst [vmem:[%s1401] sm:$0xff] %v1400
    %1404 = vset.pattern.permute.xlu0 0
    %1405 = vperm.xlu0 %1404, %v1394
    %v1406 = vpop.permute.xlu0 %1405
    %v1408 = vmul.f32 %v1384, %v1406
    %s1409 = scalar_lea.vmem %s139, 40
    %1410 = vst [vmem:[%s1409] sm:$0xff] %v1408
    %v1411 = vsub.f32 %v1366, %v1033
    %v1412 = vmul.f32 %v1398, %v1411
    %v1413 = vadd.f32 %v1033, %v1412
    %v1414 = vsub.f32 %v1364, %v1036
    %v1415 = vmul.f32 %v1398, %v1414
    %v1416 = vadd.f32 %v1036, %v1415
    %v1417 = vsub.f32 %v1384, %v1039
    %v1418 = vmul.f32 %v1406, %v1417
    %v1419 = vadd.f32 %v1039, %v1418
    %v1420 = vsub.f32 %v1382, %v1042
    %v1421 = vmul.f32 %v1406, %v1420
    %v1422 = vadd.f32 %v1042, %v1421
    %s1423 = scalar_lea.vmem [#allocation6], 48
    %v1424 = vld [vmem:[%s1423] sm:$0xff]
    %v1425 = vld [vmem:[%s1423 + $0x8] sm:$0xff]
    %v1426 = vunpack.c.l.bf16 %v1424
    %v1427 = vunpack.c.h.bf16 %v1424
    %v1428 = vunpack.c.l.bf16 %v1425
    %v1429 = vunpack.c.h.bf16 %v1425
    %1430 = vmatprep.subr.mxu0 %v152
    %1431 = vmatpush1.msra.mxu0 %v151
    %1432 = vmatprep.subr.mxu0 %v156
    %1433 = vmatpush1.msra.mxu0 %v155
    %1434 = vmatprep.subr.mxu0 %v160
    %1435 = vmatpush1.msra.mxu0 %v159
    %1436 = vmatprep.subr.mxu0 %v164
    %1437 = vmatpush1.msra.mxu0 %v163
    %1438 = vmatprep.subr.mxu0 %v168
    %1439 = vmatpush1.msra.mxu0 %v167
    %1440 = vmatprep.subr.mxu0 %v172
    %1441 = vmatpush1.msra.mxu0 %v171
    %1442 = vmatprep.subr.mxu0 %v176
    %1443 = vmatpush1.msra.mxu0 %v175
    %1444 = vmatprep.subr.mxu0 %v180
    %1445 = vmatpush1.msra.mxu0 %v179
    %1446 = vmatprep.subr.mxu0 %v184
    %1447 = vmatpush1.msra.mxu0 %v183
    %1448 = vmatprep.subr.mxu0 %v188
    %1449 = vmatpush1.msra.mxu0 %v187
    %1450 = vmatprep.subr.mxu0 %v192
    %1451 = vmatpush1.msra.mxu0 %v191
    %1452 = vmatprep.subr.mxu0 %v196
    %1453 = vmatpush1.msra.mxu0 %v195
    %1454 = vmatprep.subr.mxu0 %v200
    %1455 = vmatpush1.msra.mxu0 %v199
    %1456 = vmatprep.subr.mxu0 %v204
    %1457 = vmatpush1.msra.mxu0 %v203
    %1458 = vmatprep.subr.mxu0 %v208
    %1459 = vmatpush1.msra.mxu0 %v207
    %1460 = vmatprep.subr.mxu0 %v212
    %1461 = vmatpush1.msra.mxu0 %v211
    %1462 = vmatprep.subr.mxu0 0.0
    %1463 = vmatpush1.msra.mxu0 0.0
    %1464 = vmatprep.subr.mxu0 0.0
    %1465 = vmatpush1.msra.mxu0 0.0
    %1466 = vmatprep.subr.mxu0 0.0
    %1467 = vmatpush1.msra.mxu0 0.0
    %1468 = vmatprep.subr.mxu0 0.0
    %1469 = vmatpush1.msra.mxu0 0.0
    %1470 = vmatprep.subr.mxu0 0.0
    %1471 = vmatpush1.msra.mxu0 0.0
    %1472 = vmatprep.subr.mxu0 0.0
    %1473 = vmatpush1.msra.mxu0 0.0
    %1474 = vmatprep.subr.mxu0 0.0
    %1475 = vmatpush1.msra.mxu0 0.0
    %1476 = vmatprep.subr.mxu0 0.0
    %1477 = vmatpush1.msra.mxu0 0.0
    %1478 = vmatprep.subr.mxu0 0.0
    %1479 = vmatpush1.msra.mxu0 0.0
    %1480 = vmatprep.subr.mxu0 0.0
    %1481 = vmatpush1.msra.mxu0 0.0
    %1482 = vmatprep.subr.mxu0 0.0
    %1483 = vmatpush1.msra.mxu0 0.0
    %1484 = vmatprep.subr.mxu0 0.0
    %1485 = vmatpush1.msra.mxu0 0.0
    %1486 = vmatprep.subr.mxu0 0.0
    %1487 = vmatpush1.msra.mxu0 0.0
    %1488 = vmatprep.subr.mxu0 0.0
    %1489 = vmatpush1.msra.mxu0 0.0
    %1490 = vmatprep.subr.mxu0 0.0
    %1491 = vmatpush1.msra.mxu0 0.0
    %1492 = vmatprep.subr.mxu0 0.0
    %1493 = vmatpush1.msra.mxu0 0.0
    %1494 = vmatprep.mubr.f32.mxu0 0.0
    %1495 = vmatmul.mubr.f32.gmra.mrb[0].mxu0 %v1413
    %v1496 = vpop.f32.mrb[0].mxu0
    %v1497 = vadd.f32 0.0, %v1496
    %v1498 = vpop.f32.mrb[0].mxu0
    %v1499 = vadd.f32 0.0, %v1498
    %1500 = vdwg.mxu0
    %1501 = vmatprep.subr.mxu0 %v154
    %1502 = vmatpush1.msra.mxu0 %v153
    %1503 = vmatprep.subr.mxu0 %v158
    %1504 = vmatpush1.msra.mxu0 %v157
    %1505 = vmatprep.subr.mxu0 %v162
    %1506 = vmatpush1.msra.mxu0 %v161
    %1507 = vmatprep.subr.mxu0 %v166
    %1508 = vmatpush1.msra.mxu0 %v165
    %1509 = vmatprep.subr.mxu0 %v170
    %1510 = vmatpush1.msra.mxu0 %v169
    %1511 = vmatprep.subr.mxu0 %v174
    %1512 = vmatpush1.msra.mxu0 %v173
    %1513 = vmatprep.subr.mxu0 %v178
    %1514 = vmatpush1.msra.mxu0 %v177
    %1515 = vmatprep.subr.mxu0 %v182
    %1516 = vmatpush1.msra.mxu0 %v181
    %1517 = vmatprep.subr.mxu0 %v186
    %1518 = vmatpush1.msra.mxu0 %v185
    %1519 = vmatprep.subr.mxu0 %v190
    %1520 = vmatpush1.msra.mxu0 %v189
    %1521 = vmatprep.subr.mxu0 %v194
    %1522 = vmatpush1.msra.mxu0 %v193
    %1523 = vmatprep.subr.mxu0 %v198
    %1524 = vmatpush1.msra.mxu0 %v197
    %1525 = vmatprep.subr.mxu0 %v202
    %1526 = vmatpush1.msra.mxu0 %v201
    %1527 = vmatprep.subr.mxu0 %v206
    %1528 = vmatpush1.msra.mxu0 %v205
    %1529 = vmatprep.subr.mxu0 %v210
    %1530 = vmatpush1.msra.mxu0 %v209
    %1531 = vmatprep.subr.mxu0 %v214
    %1532 = vmatpush1.msra.mxu0 %v213
    %1533 = vmatprep.subr.mxu0 0.0
    %1534 = vmatpush1.msra.mxu0 0.0
    %1535 = vmatprep.subr.mxu0 0.0
    %1536 = vmatpush1.msra.mxu0 0.0
    %1537 = vmatprep.subr.mxu0 0.0
    %1538 = vmatpush1.msra.mxu0 0.0
    %1539 = vmatprep.subr.mxu0 0.0
    %1540 = vmatpush1.msra.mxu0 0.0
    %1541 = vmatprep.subr.mxu0 0.0
    %1542 = vmatpush1.msra.mxu0 0.0
    %1543 = vmatprep.subr.mxu0 0.0
    %1544 = vmatpush1.msra.mxu0 0.0
    %1545 = vmatprep.subr.mxu0 0.0
    %1546 = vmatpush1.msra.mxu0 0.0
    %1547 = vmatprep.subr.mxu0 0.0
    %1548 = vmatpush1.msra.mxu0 0.0
    %1549 = vmatprep.subr.mxu0 0.0
    %1550 = vmatpush1.msra.mxu0 0.0
    %1551 = vmatprep.subr.mxu0 0.0
    %1552 = vmatpush1.msra.mxu0 0.0
    %1553 = vmatprep.subr.mxu0 0.0
    %1554 = vmatpush1.msra.mxu0 0.0
    %1555 = vmatprep.subr.mxu0 0.0
    %1556 = vmatpush1.msra.mxu0 0.0
    %1557 = vmatprep.subr.mxu0 0.0
    %1558 = vmatpush1.msra.mxu0 0.0
    %1559 = vmatprep.subr.mxu0 0.0
    %1560 = vmatpush1.msra.mxu0 0.0
    %1561 = vmatprep.subr.mxu0 0.0
    %1562 = vmatpush1.msra.mxu0 0.0
    %1563 = vmatprep.subr.mxu0 0.0
    %1564 = vmatpush1.msra.mxu0 0.0
    %1565 = vmatprep.mubr.f32.mxu0 0.0
    %1566 = vmatmul.mubr.f32.gmra.mrb[0].mxu0 %v1413
    %v1567 = vpop.f32.mrb[0].mxu0
    %v1568 = vadd.f32 0.0, %v1567
    %v1569 = vpop.f32.mrb[0].mxu0
    %v1570 = vadd.f32 0.0, %v1569
    %1571 = vdwg.mxu0
    %v1572 = vadd.f32 %v1426, %v1497
    %v1573 = vadd.f32 %v1427, %v1499
    %v1574 = vadd.f32 %v1428, %v1568
    %v1575 = vadd.f32 %v1429, %v1570
    %s1576 = scalar_lea.vmem [#allocation7], 64
    %v1577 = vld [vmem:[%s1576] sm:$0xff]
    %v1578 = vld [vmem:[%s1576 + $0x8] sm:$0xff]
    %v1579 = vunpack.c.l.bf16 %v1577
    %v1580 = vunpack.c.h.bf16 %v1577
    %v1581 = vunpack.c.l.bf16 %v1578
    %v1582 = vunpack.c.h.bf16 %v1578
    %1583 = vmatprep.subr.mxu0 %v216
    %1584 = vmatpush1.msra.mxu0 %v215
    %1585 = vmatprep.subr.mxu0 %v220
    %1586 = vmatpush1.msra.mxu0 %v219
    %1587 = vmatprep.subr.mxu0 %v224
    %1588 = vmatpush1.msra.mxu0 %v223
    %1589 = vmatprep.subr.mxu0 %v228
    %1590 = vmatpush1.msra.mxu0 %v227
    %1591 = vmatprep.subr.mxu0 %v232
    %1592 = vmatpush1.msra.mxu0 %v231
    %1593 = vmatprep.subr.mxu0 %v236
    %1594 = vmatpush1.msra.mxu0 %v235
    %1595 = vmatprep.subr.mxu0 %v240
    %1596 = vmatpush1.msra.mxu0 %v239
    %1597 = vmatprep.subr.mxu0 %v244
    %1598 = vmatpush1.msra.mxu0 %v243
    %1599 = vmatprep.subr.mxu0 %v248
    %1600 = vmatpush1.msra.mxu0 %v247
    %1601 = vmatprep.subr.mxu0 %v252
    %1602 = vmatpush1.msra.mxu0 %v251
    %1603 = vmatprep.subr.mxu0 %v256
    %1604 = vmatpush1.msra.mxu0 %v255
    %1605 = vmatprep.subr.mxu0 %v260
    %1606 = vmatpush1.msra.mxu0 %v259
    %1607 = vmatprep.subr.mxu0 %v264
    %1608 = vmatpush1.msra.mxu0 %v263
    %1609 = vmatprep.subr.mxu0 %v268
    %1610 = vmatpush1.msra.mxu0 %v267
    %1611 = vmatprep.subr.mxu0 %v272
    %1612 = vmatpush1.msra.mxu0 %v271
    %1613 = vmatprep.subr.mxu0 %v276
    %1614 = vmatpush1.msra.mxu0 %v275
    %1615 = vmatprep.subr.mxu0 0.0
    %1616 = vmatpush1.msra.mxu0 0.0
    %1617 = vmatprep.subr.mxu0 0.0
    %1618 = vmatpush1.msra.mxu0 0.0
    %1619 = vmatprep.subr.mxu0 0.0
    %1620 = vmatpush1.msra.mxu0 0.0
    %1621 = vmatprep.subr.mxu0 0.0
    %1622 = vmatpush1.msra.mxu0 0.0
    %1623 = vmatprep.subr.mxu0 0.0
    %1624 = vmatpush1.msra.mxu0 0.0
    %1625 = vmatprep.subr.mxu0 0.0
    %1626 = vmatpush1.msra.mxu0 0.0
    %1627 = vmatprep.subr.mxu0 0.0
    %1628 = vmatpush1.msra.mxu0 0.0
    %1629 = vmatprep.subr.mxu0 0.0
    %1630 = vmatpush1.msra.mxu0 0.0
    %1631 = vmatprep.subr.mxu0 0.0
    %1632 = vmatpush1.msra.mxu0 0.0
    %1633 = vmatprep.subr.mxu0 0.0
    %1634 = vmatpush1.msra.mxu0 0.0
    %1635 = vmatprep.subr.mxu0 0.0
    %1636 = vmatpush1.msra.mxu0 0.0
    %1637 = vmatprep.subr.mxu0 0.0
    %1638 = vmatpush1.msra.mxu0 0.0
    %1639 = vmatprep.subr.mxu0 0.0
    %1640 = vmatpush1.msra.mxu0 0.0
    %1641 = vmatprep.subr.mxu0 0.0
    %1642 = vmatpush1.msra.mxu0 0.0
    %1643 = vmatprep.subr.mxu0 0.0
    %1644 = vmatpush1.msra.mxu0 0.0
    %1645 = vmatprep.subr.mxu0 0.0
    %1646 = vmatpush1.msra.mxu0 0.0
    %1647 = vmatprep.mubr.f32.mxu0 0.0
    %1648 = vmatmul.mubr.f32.gmra.mrb[0].mxu0 %v1419
    %v1649 = vpop.f32.mrb[0].mxu0
    %v1650 = vadd.f32 0.0, %v1649
    %v1651 = vpop.f32.mrb[0].mxu0
    %v1652 = vadd.f32 0.0, %v1651
    %1653 = vdwg.mxu0
    %1654 = vmatprep.subr.mxu0 %v218
    %1655 = vmatpush1.msra.mxu0 %v217
    %1656 = vmatprep.subr.mxu0 %v222
    %1657 = vmatpush1.msra.mxu0 %v221
    %1658 = vmatprep.subr.mxu0 %v226
    %1659 = vmatpush1.msra.mxu0 %v225
    %1660 = vmatprep.subr.mxu0 %v230
    %1661 = vmatpush1.msra.mxu0 %v229
    %1662 = vmatprep.subr.mxu0 %v234
    %1663 = vmatpush1.msra.mxu0 %v233
    %1664 = vmatprep.subr.mxu0 %v238
    %1665 = vmatpush1.msra.mxu0 %v237
    %1666 = vmatprep.subr.mxu0 %v242
    %1667 = vmatpush1.msra.mxu0 %v241
    %1668 = vmatprep.subr.mxu0 %v246
    %1669 = vmatpush1.msra.mxu0 %v245
    %1670 = vmatprep.subr.mxu0 %v250
    %1671 = vmatpush1.msra.mxu0 %v249
    %1672 = vmatprep.subr.mxu0 %v254
    %1673 = vmatpush1.msra.mxu0 %v253
    %1674 = vmatprep.subr.mxu0 %v258
    %1675 = vmatpush1.msra.mxu0 %v257
    %1676 = vmatprep.subr.mxu0 %v262
    %1677 = vmatpush1.msra.mxu0 %v261
    %1678 = vmatprep.subr.mxu0 %v266
    %1679 = vmatpush1.msra.mxu0 %v265
    %1680 = vmatprep.subr.mxu0 %v270
    %1681 = vmatpush1.msra.mxu0 %v269
    %1682 = vmatprep.subr.mxu0 %v274
    %1683 = vmatpush1.msra.mxu0 %v273
    %1684 = vmatprep.subr.mxu0 %v278
    %1685 = vmatpush1.msra.mxu0 %v277
    %1686 = vmatprep.subr.mxu0 0.0
    %1687 = vmatpush1.msra.mxu0 0.0
    %1688 = vmatprep.subr.mxu0 0.0
    %1689 = vmatpush1.msra.mxu0 0.0
    %1690 = vmatprep.subr.mxu0 0.0
    %1691 = vmatpush1.msra.mxu0 0.0
    %1692 = vmatprep.subr.mxu0 0.0
    %1693 = vmatpush1.msra.mxu0 0.0
    %1694 = vmatprep.subr.mxu0 0.0
    %1695 = vmatpush1.msra.mxu0 0.0
    %1696 = vmatprep.subr.mxu0 0.0
    %1697 = vmatpush1.msra.mxu0 0.0
    %1698 = vmatprep.subr.mxu0 0.0
    %1699 = vmatpush1.msra.mxu0 0.0
    %1700 = vmatprep.subr.mxu0 0.0
    %1701 = vmatpush1.msra.mxu0 0.0
    %1702 = vmatprep.subr.mxu0 0.0
    %1703 = vmatpush1.msra.mxu0 0.0
    %1704 = vmatprep.subr.mxu0 0.0
    %1705 = vmatpush1.msra.mxu0 0.0
    %1706 = vmatprep.subr.mxu0 0.0
    %1707 = vmatpush1.msra.mxu0 0.0
    %1708 = vmatprep.subr.mxu0 0.0
    %1709 = vmatpush1.msra.mxu0 0.0
    %1710 = vmatprep.subr.mxu0 0.0
    %1711 = vmatpush1.msra.mxu0 0.0
    %1712 = vmatprep.subr.mxu0 0.0
    %1713 = vmatpush1.msra.mxu0 0.0
    %1714 = vmatprep.subr.mxu0 0.0
    %1715 = vmatpush1.msra.mxu0 0.0
    %1716 = vmatprep.subr.mxu0 0.0
    %1717 = vmatpush1.msra.mxu0 0.0
    %1718 = vmatprep.mubr.f32.mxu0 0.0
    %1719 = vmatmul.mubr.f32.gmra.mrb[0].mxu0 %v1419
    %v1720 = vpop.f32.mrb[0].mxu0
    %v1721 = vadd.f32 0.0, %v1720
    %v1722 = vpop.f32.mrb[0].mxu0
    %v1723 = vadd.f32 0.0, %v1722
    %1724 = vdwg.mxu0
    %v1725 = vadd.f32 %v1579, %v1650
    %v1726 = vadd.f32 %v1580, %v1652
    %v1727 = vadd.f32 %v1581, %v1721
    %v1728 = vadd.f32 %v1582, %v1723
    %v1729 = vmul.f32 %v1572, 0.5
    %v1730 = vtanh.pop %v1729
    %v1731 = vmul.f32 %v1730, 0.5
    %v1732 = vadd.f32 %v1731, 0.5
    %v1733 = vmul.f32 %v1573, 0.5
    %v1734 = vtanh.pop %v1733
    %v1735 = vmul.f32 %v1734, 0.5
    %v1736 = vadd.f32 %v1735, 0.5
    %v1737 = vtanh.pop %v1574
    %v1738 = vmul.f32 %v1575, 0.5
    %v1739 = vtanh.pop %v1738
    %v1740 = vmul.f32 %v1739, 0.5
    %v1741 = vadd.f32 %v1740, 0.5
    %v1742 = vmul.f32 %v1736, %v1416
    %v1743 = vmul.f32 %v1732, %v1737
    %v1744 = vadd.f32 %v1742, %v1743
    %v1745 = vtanh.pop %v1744
    %v1746 = vmul.f32 %v1741, %v1745
    %v1747 = vmul.f32 %v1725, 0.5
    %v1748 = vtanh.pop %v1747
    %v1749 = vmul.f32 %v1748, 0.5
    %v1750 = vadd.f32 %v1749, 0.5
    %v1751 = vmul.f32 %v1726, 0.5
    %v1752 = vtanh.pop %v1751
    %v1753 = vmul.f32 %v1752, 0.5
    %v1754 = vadd.f32 %v1753, 0.5
    %v1755 = vtanh.pop %v1727
    %v1756 = vmul.f32 %v1728, 0.5
    %v1757 = vtanh.pop %v1756
    %v1758 = vmul.f32 %v1757, 0.5
    %v1759 = vadd.f32 %v1758, 0.5
    %v1760 = vmul.f32 %v1754, %v1422
    %v1761 = vmul.f32 %v1750, %v1755
    %v1762 = vadd.f32 %v1760, %v1761
    %v1763 = vtanh.pop %v1762
    %v1764 = vmul.f32 %v1759, %v1763
    %s1765 = sadd.s32 %s279, 3
    %v1766 = vstv %s1765
    %vm1767 = vcmp.lt.s32.totalorder %v1766, %v150
    %v1768 = vsel %vm1767, 1, 0
    %v1769 = vcvt.s32.f32 %v1768
    %s1770 = sadd.s32 %s281, 4
    %v1771 = vstv %s1770
    %vm1772 = vcmp.lt.s32.totalorder %v1771, %v150
    %v1773 = vsel %vm1772, 1, 0
    %v1774 = vcvt.s32.f32 %v1773
    %1776 = vset.pattern.permute.xlu0 0
    %1777 = vperm.xlu0 %1776, %v1769
    %v1778 = vpop.permute.xlu0 %1777
    %v1780 = vmul.f32 %v1746, %v1778
    %s1781 = scalar_lea.vmem %s5, 24
    %1782 = vst [vmem:[%s1781] sm:$0xff] %v1780
    %1784 = vset.pattern.permute.xlu0 0
    %1785 = vperm.xlu0 %1784, %v1774
    %v1786 = vpop.permute.xlu0 %1785
    %v1788 = vmul.f32 %v1764, %v1786
    %s1789 = scalar_lea.vmem %s139, 32
    %1790 = vst [vmem:[%s1789] sm:$0xff] %v1788
    %v1791 = vsub.f32 %v1746, %v1413
    %v1792 = vmul.f32 %v1778, %v1791
    %v1793 = vadd.f32 %v1413, %v1792
    %v1794 = vsub.f32 %v1744, %v1416
    %v1795 = vmul.f32 %v1778, %v1794
    %v1796 = vadd.f32 %v1416, %v1795
    %v1797 = vsub.f32 %v1764, %v1419
    %v1798 = vmul.f32 %v1786, %v1797
    %v1799 = vadd.f32 %v1419, %v1798
    %v1800 = vsub.f32 %v1762, %v1422
    %v1801 = vmul.f32 %v1786, %v1800
    %v1802 = vadd.f32 %v1422, %v1801
    %s1803 = scalar_lea.vmem [#allocation6], 64
    %v1804 = vld [vmem:[%s1803] sm:$0xff]
    %v1805 = vld [vmem:[%s1803 + $0x8] sm:$0xff]
    %v1806 = vunpack.c.l.bf16 %v1804
    %v1807 = vunpack.c.h.bf16 %v1804
    %v1808 = vunpack.c.l.bf16 %v1805
    %v1809 = vunpack.c.h.bf16 %v1805
    %1810 = vmatprep.subr.mxu0 %v152
    %1811 = vmatpush1.msra.mxu0 %v151
    %1812 = vmatprep.subr.mxu0 %v156
    %1813 = vmatpush1.msra.mxu0 %v155
    %1814 = vmatprep.subr.mxu0 %v160
    %1815 = vmatpush1.msra.mxu0 %v159
    %1816 = vmatprep.subr.mxu0 %v164
    %1817 = vmatpush1.msra.mxu0 %v163
    %1818 = vmatprep.subr.mxu0 %v168
    %1819 = vmatpush1.msra.mxu0 %v167
    %1820 = vmatprep.subr.mxu0 %v172
    %1821 = vmatpush1.msra.mxu0 %v171
    %1822 = vmatprep.subr.mxu0 %v176
    %1823 = vmatpush1.msra.mxu0 %v175
    %1824 = vmatprep.subr.mxu0 %v180
    %1825 = vmatpush1.msra.mxu0 %v179
    %1826 = vmatprep.subr.mxu0 %v184
    %1827 = vmatpush1.msra.mxu0 %v183
    %1828 = vmatprep.subr.mxu0 %v188
    %1829 = vmatpush1.msra.mxu0 %v187
    %1830 = vmatprep.subr.mxu0 %v192
    %1831 = vmatpush1.msra.mxu0 %v191
    %1832 = vmatprep.subr.mxu0 %v196
    %1833 = vmatpush1.msra.mxu0 %v195
    %1834 = vmatprep.subr.mxu0 %v200
    %1835 = vmatpush1.msra.mxu0 %v199
    %1836 = vmatprep.subr.mxu0 %v204
    %1837 = vmatpush1.msra.mxu0 %v203
    %1838 = vmatprep.subr.mxu0 %v208
    %1839 = vmatpush1.msra.mxu0 %v207
    %1840 = vmatprep.subr.mxu0 %v212
    %1841 = vmatpush1.msra.mxu0 %v211
    %1842 = vmatprep.subr.mxu0 0.0
    %1843 = vmatpush1.msra.mxu0 0.0
    %1844 = vmatprep.subr.mxu0 0.0
    %1845 = vmatpush1.msra.mxu0 0.0
    %1846 = vmatprep.subr.mxu0 0.0
    %1847 = vmatpush1.msra.mxu0 0.0
    %1848 = vmatprep.subr.mxu0 0.0
    %1849 = vmatpush1.msra.mxu0 0.0
    %1850 = vmatprep.subr.mxu0 0.0
    %1851 = vmatpush1.msra.mxu0 0.0
    %1852 = vmatprep.subr.mxu0 0.0
    %1853 = vmatpush1.msra.mxu0 0.0
    %1854 = vmatprep.subr.mxu0 0.0
    %1855 = vmatpush1.msra.mxu0 0.0
    %1856 = vmatprep.subr.mxu0 0.0
    %1857 = vmatpush1.msra.mxu0 0.0
    %1858 = vmatprep.subr.mxu0 0.0
    %1859 = vmatpush1.msra.mxu0 0.0
    %1860 = vmatprep.subr.mxu0 0.0
    %1861 = vmatpush1.msra.mxu0 0.0
    %1862 = vmatprep.subr.mxu0 0.0
    %1863 = vmatpush1.msra.mxu0 0.0
    %1864 = vmatprep.subr.mxu0 0.0
    %1865 = vmatpush1.msra.mxu0 0.0
    %1866 = vmatprep.subr.mxu0 0.0
    %1867 = vmatpush1.msra.mxu0 0.0
    %1868 = vmatprep.subr.mxu0 0.0
    %1869 = vmatpush1.msra.mxu0 0.0
    %1870 = vmatprep.subr.mxu0 0.0
    %1871 = vmatpush1.msra.mxu0 0.0
    %1872 = vmatprep.subr.mxu0 0.0
    %1873 = vmatpush1.msra.mxu0 0.0
    %1874 = vmatprep.mubr.f32.mxu0 0.0
    %1875 = vmatmul.mubr.f32.gmra.mrb[0].mxu0 %v1793
    %v1876 = vpop.f32.mrb[0].mxu0
    %v1877 = vadd.f32 0.0, %v1876
    %v1878 = vpop.f32.mrb[0].mxu0
    %v1879 = vadd.f32 0.0, %v1878
    %1880 = vdwg.mxu0
    %1881 = vmatprep.subr.mxu0 %v154
    %1882 = vmatpush1.msra.mxu0 %v153
    %1883 = vmatprep.subr.mxu0 %v158
    %1884 = vmatpush1.msra.mxu0 %v157
    %1885 = vmatprep.subr.mxu0 %v162
    %1886 = vmatpush1.msra.mxu0 %v161
    %1887 = vmatprep.subr.mxu0 %v166
    %1888 = vmatpush1.msra.mxu0 %v165
    %1889 = vmatprep.subr.mxu0 %v170
    %1890 = vmatpush1.msra.mxu0 %v169
    %1891 = vmatprep.subr.mxu0 %v174
    %1892 = vmatpush1.msra.mxu0 %v173
    %1893 = vmatprep.subr.mxu0 %v178
    %1894 = vmatpush1.msra.mxu0 %v177
    %1895 = vmatprep.subr.mxu0 %v182
    %1896 = vmatpush1.msra.mxu0 %v181
    %1897 = vmatprep.subr.mxu0 %v186
    %1898 = vmatpush1.msra.mxu0 %v185
    %1899 = vmatprep.subr.mxu0 %v190
    %1900 = vmatpush1.msra.mxu0 %v189
    %1901 = vmatprep.subr.mxu0 %v194
    %1902 = vmatpush1.msra.mxu0 %v193
    %1903 = vmatprep.subr.mxu0 %v198
    %1904 = vmatpush1.msra.mxu0 %v197
    %1905 = vmatprep.subr.mxu0 %v202
    %1906 = vmatpush1.msra.mxu0 %v201
    %1907 = vmatprep.subr.mxu0 %v206
    %1908 = vmatpush1.msra.mxu0 %v205
    %1909 = vmatprep.subr.mxu0 %v210
    %1910 = vmatpush1.msra.mxu0 %v209
    %1911 = vmatprep.subr.mxu0 %v214
    %1912 = vmatpush1.msra.mxu0 %v213
    %1913 = vmatprep.subr.mxu0 0.0
    %1914 = vmatpush1.msra.mxu0 0.0
    %1915 = vmatprep.subr.mxu0 0.0
    %1916 = vmatpush1.msra.mxu0 0.0
    %1917 = vmatprep.subr.mxu0 0.0
    %1918 = vmatpush1.msra.mxu0 0.0
    %1919 = vmatprep.subr.mxu0 0.0
    %1920 = vmatpush1.msra.mxu0 0.0
    %1921 = vmatprep.subr.mxu0 0.0
    %1922 = vmatpush1.msra.mxu0 0.0
    %1923 = vmatprep.subr.mxu0 0.0
    %1924 = vmatpush1.msra.mxu0 0.0
    %1925 = vmatprep.subr.mxu0 0.0
    %1926 = vmatpush1.msra.mxu0 0.0
    %1927 = vmatprep.subr.mxu0 0.0
    %1928 = vmatpush1.msra.mxu0 0.0
    %1929 = vmatprep.subr.mxu0 0.0
    %1930 = vmatpush1.msra.mxu0 0.0
    %1931 = vmatprep.subr.mxu0 0.0
    %1932 = vmatpush1.msra.mxu0 0.0
    %1933 = vmatprep.subr.mxu0 0.0
    %1934 = vmatpush1.msra.mxu0 0.0
    %1935 = vmatprep.subr.mxu0 0.0
    %1936 = vmatpush1.msra.mxu0 0.0
    %1937 = vmatprep.subr.mxu0 0.0
    %1938 = vmatpush1.msra.mxu0 0.0
    %1939 = vmatprep.subr.mxu0 0.0
    %1940 = vmatpush1.msra.mxu0 0.0
    %1941 = vmatprep.subr.mxu0 0.0
    %1942 = vmatpush1.msra.mxu0 0.0
    %1943 = vmatprep.subr.mxu0 0.0
    %1944 = vmatpush1.msra.mxu0 0.0
    %1945 = vmatprep.mubr.f32.mxu0 0.0
    %1946 = vmatmul.mubr.f32.gmra.mrb[0].mxu0 %v1793
    %v1947 = vpop.f32.mrb[0].mxu0
    %v1948 = vadd.f32 0.0, %v1947
    %v1949 = vpop.f32.mrb[0].mxu0
    %v1950 = vadd.f32 0.0, %v1949
    %1951 = vdwg.mxu0
    %v1952 = vadd.f32 %v1806, %v1877
    %v1953 = vadd.f32 %v1807, %v1879
    %v1954 = vadd.f32 %v1808, %v1948
    %v1955 = vadd.f32 %v1809, %v1950
    %s1956 = scalar_lea.vmem [#allocation7], 48
    %v1957 = vld [vmem:[%s1956] sm:$0xff]
    %v1958 = vld [vmem:[%s1956 + $0x8] sm:$0xff]
    %v1959 = vunpack.c.l.bf16 %v1957
    %v1960 = vunpack.c.h.bf16 %v1957
    %v1961 = vunpack.c.l.bf16 %v1958
    %v1962 = vunpack.c.h.bf16 %v1958
    %1963 = vmatprep.subr.mxu0 %v216
    %1964 = vmatpush1.msra.mxu0 %v215
    %1965 = vmatprep.subr.mxu0 %v220
    %1966 = vmatpush1.msra.mxu0 %v219
    %1967 = vmatprep.subr.mxu0 %v224
    %1968 = vmatpush1.msra.mxu0 %v223
    %1969 = vmatprep.subr.mxu0 %v228
    %1970 = vmatpush1.msra.mxu0 %v227
    %1971 = vmatprep.subr.mxu0 %v232
    %1972 = vmatpush1.msra.mxu0 %v231
    %1973 = vmatprep.subr.mxu0 %v236
    %1974 = vmatpush1.msra.mxu0 %v235
    %1975 = vmatprep.subr.mxu0 %v240
    %1976 = vmatpush1.msra.mxu0 %v239
    %1977 = vmatprep.subr.mxu0 %v244
    %1978 = vmatpush1.msra.mxu0 %v243
    %1979 = vmatprep.subr.mxu0 %v248
    %1980 = vmatpush1.msra.mxu0 %v247
    %1981 = vmatprep.subr.mxu0 %v252
    %1982 = vmatpush1.msra.mxu0 %v251
    %1983 = vmatprep.subr.mxu0 %v256
    %1984 = vmatpush1.msra.mxu0 %v255
    %1985 = vmatprep.subr.mxu0 %v260
    %1986 = vmatpush1.msra.mxu0 %v259
    %1987 = vmatprep.subr.mxu0 %v264
    %1988 = vmatpush1.msra.mxu0 %v263
    %1989 = vmatprep.subr.mxu0 %v268
    %1990 = vmatpush1.msra.mxu0 %v267
    %1991 = vmatprep.subr.mxu0 %v272
    %1992 = vmatpush1.msra.mxu0 %v271
    %1993 = vmatprep.subr.mxu0 %v276
    %1994 = vmatpush1.msra.mxu0 %v275
    %1995 = vmatprep.subr.mxu0 0.0
    %1996 = vmatpush1.msra.mxu0 0.0
    %1997 = vmatprep.subr.mxu0 0.0
    %1998 = vmatpush1.msra.mxu0 0.0
    %1999 = vmatprep.subr.mxu0 0.0
    %2000 = vmatpush1.msra.mxu0 0.0
    %2001 = vmatprep.subr.mxu0 0.0
    %2002 = vmatpush1.msra.mxu0 0.0
    %2003 = vmatprep.subr.mxu0 0.0
    %2004 = vmatpush1.msra.mxu0 0.0
    %2005 = vmatprep.subr.mxu0 0.0
    %2006 = vmatpush1.msra.mxu0 0.0
    %2007 = vmatprep.subr.mxu0 0.0
    %2008 = vmatpush1.msra.mxu0 0.0
    %2009 = vmatprep.subr.mxu0 0.0
    %2010 = vmatpush1.msra.mxu0 0.0
    %2011 = vmatprep.subr.mxu0 0.0
    %2012 = vmatpush1.msra.mxu0 0.0
    %2013 = vmatprep.subr.mxu0 0.0
    %2014 = vmatpush1.msra.mxu0 0.0
    %2015 = vmatprep.subr.mxu0 0.0
    %2016 = vmatpush1.msra.mxu0 0.0
    %2017 = vmatprep.subr.mxu0 0.0
    %2018 = vmatpush1.msra.mxu0 0.0
    %2019 = vmatprep.subr.mxu0 0.0
    %2020 = vmatpush1.msra.mxu0 0.0
    %2021 = vmatprep.subr.mxu0 0.0
    %2022 = vmatpush1.msra.mxu0 0.0
    %2023 = vmatprep.subr.mxu0 0.0
    %2024 = vmatpush1.msra.mxu0 0.0
    %2025 = vmatprep.subr.mxu0 0.0
    %2026 = vmatpush1.msra.mxu0 0.0
    %2027 = vmatprep.mubr.f32.mxu0 0.0
    %2028 = vmatmul.mubr.f32.gmra.mrb[0].mxu0 %v1799
    %v2029 = vpop.f32.mrb[0].mxu0
    %v2030 = vadd.f32 0.0, %v2029
    %v2031 = vpop.f32.mrb[0].mxu0
    %v2032 = vadd.f32 0.0, %v2031
    %2033 = vdwg.mxu0
    %2034 = vmatprep.subr.mxu0 %v218
    %2035 = vmatpush1.msra.mxu0 %v217
    %2036 = vmatprep.subr.mxu0 %v222
    %2037 = vmatpush1.msra.mxu0 %v221
    %2038 = vmatprep.subr.mxu0 %v226
    %2039 = vmatpush1.msra.mxu0 %v225
    %2040 = vmatprep.subr.mxu0 %v230
    %2041 = vmatpush1.msra.mxu0 %v229
    %2042 = vmatprep.subr.mxu0 %v234
    %2043 = vmatpush1.msra.mxu0 %v233
    %2044 = vmatprep.subr.mxu0 %v238
    %2045 = vmatpush1.msra.mxu0 %v237
    %2046 = vmatprep.subr.mxu0 %v242
    %2047 = vmatpush1.msra.mxu0 %v241
    %2048 = vmatprep.subr.mxu0 %v246
    %2049 = vmatpush1.msra.mxu0 %v245
    %2050 = vmatprep.subr.mxu0 %v250
    %2051 = vmatpush1.msra.mxu0 %v249
    %2052 = vmatprep.subr.mxu0 %v254
    %2053 = vmatpush1.msra.mxu0 %v253
    %2054 = vmatprep.subr.mxu0 %v258
    %2055 = vmatpush1.msra.mxu0 %v257
    %2056 = vmatprep.subr.mxu0 %v262
    %2057 = vmatpush1.msra.mxu0 %v261
    %2058 = vmatprep.subr.mxu0 %v266
    %2059 = vmatpush1.msra.mxu0 %v265
    %2060 = vmatprep.subr.mxu0 %v270
    %2061 = vmatpush1.msra.mxu0 %v269
    %2062 = vmatprep.subr.mxu0 %v274
    %2063 = vmatpush1.msra.mxu0 %v273
    %2064 = vmatprep.subr.mxu0 %v278
    %2065 = vmatpush1.msra.mxu0 %v277
    %2066 = vmatprep.subr.mxu0 0.0
    %2067 = vmatpush1.msra.mxu0 0.0
    %2068 = vmatprep.subr.mxu0 0.0
    %2069 = vmatpush1.msra.mxu0 0.0
    %2070 = vmatprep.subr.mxu0 0.0
    %2071 = vmatpush1.msra.mxu0 0.0
    %2072 = vmatprep.subr.mxu0 0.0
    %2073 = vmatpush1.msra.mxu0 0.0
    %2074 = vmatprep.subr.mxu0 0.0
    %2075 = vmatpush1.msra.mxu0 0.0
    %2076 = vmatprep.subr.mxu0 0.0
    %2077 = vmatpush1.msra.mxu0 0.0
    %2078 = vmatprep.subr.mxu0 0.0
    %2079 = vmatpush1.msra.mxu0 0.0
    %2080 = vmatprep.subr.mxu0 0.0
    %2081 = vmatpush1.msra.mxu0 0.0
    %2082 = vmatprep.subr.mxu0 0.0
    %2083 = vmatpush1.msra.mxu0 0.0
    %2084 = vmatprep.subr.mxu0 0.0
    %2085 = vmatpush1.msra.mxu0 0.0
    %2086 = vmatprep.subr.mxu0 0.0
    %2087 = vmatpush1.msra.mxu0 0.0
    %2088 = vmatprep.subr.mxu0 0.0
    %2089 = vmatpush1.msra.mxu0 0.0
    %2090 = vmatprep.subr.mxu0 0.0
    %2091 = vmatpush1.msra.mxu0 0.0
    %2092 = vmatprep.subr.mxu0 0.0
    %2093 = vmatpush1.msra.mxu0 0.0
    %2094 = vmatprep.subr.mxu0 0.0
    %2095 = vmatpush1.msra.mxu0 0.0
    %2096 = vmatprep.subr.mxu0 0.0
    %2097 = vmatpush1.msra.mxu0 0.0
    %2098 = vmatprep.mubr.f32.mxu0 0.0
    %2099 = vmatmul.mubr.f32.gmra.mrb[0].mxu0 %v1799
    %v2100 = vpop.f32.mrb[0].mxu0
    %v2101 = vadd.f32 0.0, %v2100
    %v2102 = vpop.f32.mrb[0].mxu0
    %v2103 = vadd.f32 0.0, %v2102
    %2104 = vdwg.mxu0
    %v2105 = vadd.f32 %v1959, %v2030
    %v2106 = vadd.f32 %v1960, %v2032
    %v2107 = vadd.f32 %v1961, %v2101
    %v2108 = vadd.f32 %v1962, %v2103
    %v2109 = vmul.f32 %v1952, 0.5
    %v2110 = vtanh.pop %v2109
    %v2111 = vmul.f32 %v2110, 0.5
    %v2112 = vadd.f32 %v2111, 0.5
    %v2113 = vmul.f32 %v1953, 0.5
    %v2114 = vtanh.pop %v2113
    %v2115 = vmul.f32 %v2114, 0.5
    %v2116 = vadd.f32 %v2115, 0.5
    %v2117 = vtanh.pop %v1954
    %v2118 = vmul.f32 %v1955, 0.5
    %v2119 = vtanh.pop %v2118
    %v2120 = vmul.f32 %v2119, 0.5
    %v2121 = vadd.f32 %v2120, 0.5
    %v2122 = vmul.f32 %v2116, %v1796
    %v2123 = vmul.f32 %v2112, %v2117
    %v2124 = vadd.f32 %v2122, %v2123
    %v2125 = vtanh.pop %v2124
    %v2126 = vmul.f32 %v2121, %v2125
    %v2127 = vmul.f32 %v2105, 0.5
    %v2128 = vtanh.pop %v2127
    %v2129 = vmul.f32 %v2128, 0.5
    %v2130 = vadd.f32 %v2129, 0.5
    %v2131 = vmul.f32 %v2106, 0.5
    %v2132 = vtanh.pop %v2131
    %v2133 = vmul.f32 %v2132, 0.5
    %v2134 = vadd.f32 %v2133, 0.5
    %v2135 = vtanh.pop %v2107
    %v2136 = vmul.f32 %v2108, 0.5
    %v2137 = vtanh.pop %v2136
    %v2138 = vmul.f32 %v2137, 0.5
    %v2139 = vadd.f32 %v2138, 0.5
    %v2140 = vmul.f32 %v2134, %v1802
    %v2141 = vmul.f32 %v2130, %v2135
    %v2142 = vadd.f32 %v2140, %v2141
    %v2143 = vtanh.pop %v2142
    %v2144 = vmul.f32 %v2139, %v2143
    %s2145 = sadd.s32 %s279, 4
    %v2146 = vstv %s2145
    %vm2147 = vcmp.lt.s32.totalorder %v2146, %v150
    %v2148 = vsel %vm2147, 1, 0
    %v2149 = vcvt.s32.f32 %v2148
    %s2150 = sadd.s32 %s281, 3
    %v2151 = vstv %s2150
    %vm2152 = vcmp.lt.s32.totalorder %v2151, %v150
    %v2153 = vsel %vm2152, 1, 0
    %v2154 = vcvt.s32.f32 %v2153
    %2156 = vset.pattern.permute.xlu0 0
    %2157 = vperm.xlu0 %2156, %v2149
    %v2158 = vpop.permute.xlu0 %2157
    %v2160 = vmul.f32 %v2126, %v2158
    %s2161 = scalar_lea.vmem %s5, 32
    %2162 = vst [vmem:[%s2161] sm:$0xff] %v2160
    %2164 = vset.pattern.permute.xlu0 0
    %2165 = vperm.xlu0 %2164, %v2154
    %v2166 = vpop.permute.xlu0 %2165
    %v2168 = vmul.f32 %v2144, %v2166
    %s2169 = scalar_lea.vmem %s139, 24
    %2170 = vst [vmem:[%s2169] sm:$0xff] %v2168
    %v2171 = vsub.f32 %v2126, %v1793
    %v2172 = vmul.f32 %v2158, %v2171
    %v2173 = vadd.f32 %v1793, %v2172
    %v2174 = vsub.f32 %v2124, %v1796
    %v2175 = vmul.f32 %v2158, %v2174
    %v2176 = vadd.f32 %v1796, %v2175
    %v2177 = vsub.f32 %v2144, %v1799
    %v2178 = vmul.f32 %v2166, %v2177
    %v2179 = vadd.f32 %v1799, %v2178
    %v2180 = vsub.f32 %v2142, %v1802
    %v2181 = vmul.f32 %v2166, %v2180
    %v2182 = vadd.f32 %v1802, %v2181
    %s2183 = scalar_lea.vmem [#allocation6], 80
    %v2184 = vld [vmem:[%s2183] sm:$0xff]
    %v2185 = vld [vmem:[%s2183 + $0x8] sm:$0xff]
    %v2186 = vunpack.c.l.bf16 %v2184
    %v2187 = vunpack.c.h.bf16 %v2184
    %v2188 = vunpack.c.l.bf16 %v2185
    %v2189 = vunpack.c.h.bf16 %v2185
    %2190 = vmatprep.subr.mxu0 %v152
    %2191 = vmatpush1.msra.mxu0 %v151
    %2192 = vmatprep.subr.mxu0 %v156
    %2193 = vmatpush1.msra.mxu0 %v155
    %2194 = vmatprep.subr.mxu0 %v160
    %2195 = vmatpush1.msra.mxu0 %v159
    %2196 = vmatprep.subr.mxu0 %v164
    %2197 = vmatpush1.msra.mxu0 %v163
    %2198 = vmatprep.subr.mxu0 %v168
    %2199 = vmatpush1.msra.mxu0 %v167
    %2200 = vmatprep.subr.mxu0 %v172
    %2201 = vmatpush1.msra.mxu0 %v171
    %2202 = vmatprep.subr.mxu0 %v176
    %2203 = vmatpush1.msra.mxu0 %v175
    %2204 = vmatprep.subr.mxu0 %v180
    %2205 = vmatpush1.msra.mxu0 %v179
    %2206 = vmatprep.subr.mxu0 %v184
    %2207 = vmatpush1.msra.mxu0 %v183
    %2208 = vmatprep.subr.mxu0 %v188
    %2209 = vmatpush1.msra.mxu0 %v187
    %2210 = vmatprep.subr.mxu0 %v192
    %2211 = vmatpush1.msra.mxu0 %v191
    %2212 = vmatprep.subr.mxu0 %v196
    %2213 = vmatpush1.msra.mxu0 %v195
    %2214 = vmatprep.subr.mxu0 %v200
    %2215 = vmatpush1.msra.mxu0 %v199
    %2216 = vmatprep.subr.mxu0 %v204
    %2217 = vmatpush1.msra.mxu0 %v203
    %2218 = vmatprep.subr.mxu0 %v208
    %2219 = vmatpush1.msra.mxu0 %v207
    %2220 = vmatprep.subr.mxu0 %v212
    %2221 = vmatpush1.msra.mxu0 %v211
    %2222 = vmatprep.subr.mxu0 0.0
    %2223 = vmatpush1.msra.mxu0 0.0
    %2224 = vmatprep.subr.mxu0 0.0
    %2225 = vmatpush1.msra.mxu0 0.0
    %2226 = vmatprep.subr.mxu0 0.0
    %2227 = vmatpush1.msra.mxu0 0.0
    %2228 = vmatprep.subr.mxu0 0.0
    %2229 = vmatpush1.msra.mxu0 0.0
    %2230 = vmatprep.subr.mxu0 0.0
    %2231 = vmatpush1.msra.mxu0 0.0
    %2232 = vmatprep.subr.mxu0 0.0
    %2233 = vmatpush1.msra.mxu0 0.0
    %2234 = vmatprep.subr.mxu0 0.0
    %2235 = vmatpush1.msra.mxu0 0.0
    %2236 = vmatprep.subr.mxu0 0.0
    %2237 = vmatpush1.msra.mxu0 0.0
    %2238 = vmatprep.subr.mxu0 0.0
    %2239 = vmatpush1.msra.mxu0 0.0
    %2240 = vmatprep.subr.mxu0 0.0
    %2241 = vmatpush1.msra.mxu0 0.0
    %2242 = vmatprep.subr.mxu0 0.0
    %2243 = vmatpush1.msra.mxu0 0.0
    %2244 = vmatprep.subr.mxu0 0.0
    %2245 = vmatpush1.msra.mxu0 0.0
    %2246 = vmatprep.subr.mxu0 0.0
    %2247 = vmatpush1.msra.mxu0 0.0
    %2248 = vmatprep.subr.mxu0 0.0
    %2249 = vmatpush1.msra.mxu0 0.0
    %2250 = vmatprep.subr.mxu0 0.0
    %2251 = vmatpush1.msra.mxu0 0.0
    %2252 = vmatprep.subr.mxu0 0.0
    %2253 = vmatpush1.msra.mxu0 0.0
    %2254 = vmatprep.mubr.f32.mxu0 0.0
    %2255 = vmatmul.mubr.f32.gmra.mrb[0].mxu0 %v2173
    %v2256 = vpop.f32.mrb[0].mxu0
    %v2257 = vadd.f32 0.0, %v2256
    %v2258 = vpop.f32.mrb[0].mxu0
    %v2259 = vadd.f32 0.0, %v2258
    %2260 = vdwg.mxu0
    %2261 = vmatprep.subr.mxu0 %v154
    %2262 = vmatpush1.msra.mxu0 %v153
    %2263 = vmatprep.subr.mxu0 %v158
    %2264 = vmatpush1.msra.mxu0 %v157
    %2265 = vmatprep.subr.mxu0 %v162
    %2266 = vmatpush1.msra.mxu0 %v161
    %2267 = vmatprep.subr.mxu0 %v166
    %2268 = vmatpush1.msra.mxu0 %v165
    %2269 = vmatprep.subr.mxu0 %v170
    %2270 = vmatpush1.msra.mxu0 %v169
    %2271 = vmatprep.subr.mxu0 %v174
    %2272 = vmatpush1.msra.mxu0 %v173
    %2273 = vmatprep.subr.mxu0 %v178
    %2274 = vmatpush1.msra.mxu0 %v177
    %2275 = vmatprep.subr.mxu0 %v182
    %2276 = vmatpush1.msra.mxu0 %v181
    %2277 = vmatprep.subr.mxu0 %v186
    %2278 = vmatpush1.msra.mxu0 %v185
    %2279 = vmatprep.subr.mxu0 %v190
    %2280 = vmatpush1.msra.mxu0 %v189
    %2281 = vmatprep.subr.mxu0 %v194
    %2282 = vmatpush1.msra.mxu0 %v193
    %2283 = vmatprep.subr.mxu0 %v198
    %2284 = vmatpush1.msra.mxu0 %v197
    %2285 = vmatprep.subr.mxu0 %v202
    %2286 = vmatpush1.msra.mxu0 %v201
    %2287 = vmatprep.subr.mxu0 %v206
    %2288 = vmatpush1.msra.mxu0 %v205
    %2289 = vmatprep.subr.mxu0 %v210
    %2290 = vmatpush1.msra.mxu0 %v209
    %2291 = vmatprep.subr.mxu0 %v214
    %2292 = vmatpush1.msra.mxu0 %v213
    %2293 = vmatprep.subr.mxu0 0.0
    %2294 = vmatpush1.msra.mxu0 0.0
    %2295 = vmatprep.subr.mxu0 0.0
    %2296 = vmatpush1.msra.mxu0 0.0
    %2297 = vmatprep.subr.mxu0 0.0
    %2298 = vmatpush1.msra.mxu0 0.0
    %2299 = vmatprep.subr.mxu0 0.0
    %2300 = vmatpush1.msra.mxu0 0.0
    %2301 = vmatprep.subr.mxu0 0.0
    %2302 = vmatpush1.msra.mxu0 0.0
    %2303 = vmatprep.subr.mxu0 0.0
    %2304 = vmatpush1.msra.mxu0 0.0
    %2305 = vmatprep.subr.mxu0 0.0
    %2306 = vmatpush1.msra.mxu0 0.0
    %2307 = vmatprep.subr.mxu0 0.0
    %2308 = vmatpush1.msra.mxu0 0.0
    %2309 = vmatprep.subr.mxu0 0.0
    %2310 = vmatpush1.msra.mxu0 0.0
    %2311 = vmatprep.subr.mxu0 0.0
    %2312 = vmatpush1.msra.mxu0 0.0
    %2313 = vmatprep.subr.mxu0 0.0
    %2314 = vmatpush1.msra.mxu0 0.0
    %2315 = vmatprep.subr.mxu0 0.0
    %2316 = vmatpush1.msra.mxu0 0.0
    %2317 = vmatprep.subr.mxu0 0.0
    %2318 = vmatpush1.msra.mxu0 0.0
    %2319 = vmatprep.subr.mxu0 0.0
    %2320 = vmatpush1.msra.mxu0 0.0
    %2321 = vmatprep.subr.mxu0 0.0
    %2322 = vmatpush1.msra.mxu0 0.0
    %2323 = vmatprep.subr.mxu0 0.0
    %2324 = vmatpush1.msra.mxu0 0.0
    %2325 = vmatprep.mubr.f32.mxu0 0.0
    %2326 = vmatmul.mubr.f32.gmra.mrb[0].mxu0 %v2173
    %v2327 = vpop.f32.mrb[0].mxu0
    %v2328 = vadd.f32 0.0, %v2327
    %v2329 = vpop.f32.mrb[0].mxu0
    %v2330 = vadd.f32 0.0, %v2329
    %2331 = vdwg.mxu0
    %v2332 = vadd.f32 %v2186, %v2257
    %v2333 = vadd.f32 %v2187, %v2259
    %v2334 = vadd.f32 %v2188, %v2328
    %v2335 = vadd.f32 %v2189, %v2330
    %s2336 = scalar_lea.vmem [#allocation7], 32
    %v2337 = vld [vmem:[%s2336] sm:$0xff]
    %v2338 = vld [vmem:[%s2336 + $0x8] sm:$0xff]
    %v2339 = vunpack.c.l.bf16 %v2337
    %v2340 = vunpack.c.h.bf16 %v2337
    %v2341 = vunpack.c.l.bf16 %v2338
    %v2342 = vunpack.c.h.bf16 %v2338
    %2343 = vmatprep.subr.mxu0 %v216
    %2344 = vmatpush1.msra.mxu0 %v215
    %2345 = vmatprep.subr.mxu0 %v220
    %2346 = vmatpush1.msra.mxu0 %v219
    %2347 = vmatprep.subr.mxu0 %v224
    %2348 = vmatpush1.msra.mxu0 %v223
    %2349 = vmatprep.subr.mxu0 %v228
    %2350 = vmatpush1.msra.mxu0 %v227
    %2351 = vmatprep.subr.mxu0 %v232
    %2352 = vmatpush1.msra.mxu0 %v231
    %2353 = vmatprep.subr.mxu0 %v236
    %2354 = vmatpush1.msra.mxu0 %v235
    %2355 = vmatprep.subr.mxu0 %v240
    %2356 = vmatpush1.msra.mxu0 %v239
    %2357 = vmatprep.subr.mxu0 %v244
    %2358 = vmatpush1.msra.mxu0 %v243
    %2359 = vmatprep.subr.mxu0 %v248
    %2360 = vmatpush1.msra.mxu0 %v247
    %2361 = vmatprep.subr.mxu0 %v252
    %2362 = vmatpush1.msra.mxu0 %v251
    %2363 = vmatprep.subr.mxu0 %v256
    %2364 = vmatpush1.msra.mxu0 %v255
    %2365 = vmatprep.subr.mxu0 %v260
    %2366 = vmatpush1.msra.mxu0 %v259
    %2367 = vmatprep.subr.mxu0 %v264
    %2368 = vmatpush1.msra.mxu0 %v263
    %2369 = vmatprep.subr.mxu0 %v268
    %2370 = vmatpush1.msra.mxu0 %v267
    %2371 = vmatprep.subr.mxu0 %v272
    %2372 = vmatpush1.msra.mxu0 %v271
    %2373 = vmatprep.subr.mxu0 %v276
    %2374 = vmatpush1.msra.mxu0 %v275
    %2375 = vmatprep.subr.mxu0 0.0
    %2376 = vmatpush1.msra.mxu0 0.0
    %2377 = vmatprep.subr.mxu0 0.0
    %2378 = vmatpush1.msra.mxu0 0.0
    %2379 = vmatprep.subr.mxu0 0.0
    %2380 = vmatpush1.msra.mxu0 0.0
    %2381 = vmatprep.subr.mxu0 0.0
    %2382 = vmatpush1.msra.mxu0 0.0
    %2383 = vmatprep.subr.mxu0 0.0
    %2384 = vmatpush1.msra.mxu0 0.0
    %2385 = vmatprep.subr.mxu0 0.0
    %2386 = vmatpush1.msra.mxu0 0.0
    %2387 = vmatprep.subr.mxu0 0.0
    %2388 = vmatpush1.msra.mxu0 0.0
    %2389 = vmatprep.subr.mxu0 0.0
    %2390 = vmatpush1.msra.mxu0 0.0
    %2391 = vmatprep.subr.mxu0 0.0
    %2392 = vmatpush1.msra.mxu0 0.0
    %2393 = vmatprep.subr.mxu0 0.0
    %2394 = vmatpush1.msra.mxu0 0.0
    %2395 = vmatprep.subr.mxu0 0.0
    %2396 = vmatpush1.msra.mxu0 0.0
    %2397 = vmatprep.subr.mxu0 0.0
    %2398 = vmatpush1.msra.mxu0 0.0
    %2399 = vmatprep.subr.mxu0 0.0
    %2400 = vmatpush1.msra.mxu0 0.0
    %2401 = vmatprep.subr.mxu0 0.0
    %2402 = vmatpush1.msra.mxu0 0.0
    %2403 = vmatprep.subr.mxu0 0.0
    %2404 = vmatpush1.msra.mxu0 0.0
    %2405 = vmatprep.subr.mxu0 0.0
    %2406 = vmatpush1.msra.mxu0 0.0
    %2407 = vmatprep.mubr.f32.mxu0 0.0
    %2408 = vmatmul.mubr.f32.gmra.mrb[0].mxu0 %v2179
    %v2409 = vpop.f32.mrb[0].mxu0
    %v2410 = vadd.f32 0.0, %v2409
    %v2411 = vpop.f32.mrb[0].mxu0
    %v2412 = vadd.f32 0.0, %v2411
    %2413 = vdwg.mxu0
    %2414 = vmatprep.subr.mxu0 %v218
    %2415 = vmatpush1.msra.mxu0 %v217
    %2416 = vmatprep.subr.mxu0 %v222
    %2417 = vmatpush1.msra.mxu0 %v221
    %2418 = vmatprep.subr.mxu0 %v226
    %2419 = vmatpush1.msra.mxu0 %v225
    %2420 = vmatprep.subr.mxu0 %v230
    %2421 = vmatpush1.msra.mxu0 %v229
    %2422 = vmatprep.subr.mxu0 %v234
    %2423 = vmatpush1.msra.mxu0 %v233
    %2424 = vmatprep.subr.mxu0 %v238
    %2425 = vmatpush1.msra.mxu0 %v237
    %2426 = vmatprep.subr.mxu0 %v242
    %2427 = vmatpush1.msra.mxu0 %v241
    %2428 = vmatprep.subr.mxu0 %v246
    %2429 = vmatpush1.msra.mxu0 %v245
    %2430 = vmatprep.subr.mxu0 %v250
    %2431 = vmatpush1.msra.mxu0 %v249
    %2432 = vmatprep.subr.mxu0 %v254
    %2433 = vmatpush1.msra.mxu0 %v253
    %2434 = vmatprep.subr.mxu0 %v258
    %2435 = vmatpush1.msra.mxu0 %v257
    %2436 = vmatprep.subr.mxu0 %v262
    %2437 = vmatpush1.msra.mxu0 %v261
    %2438 = vmatprep.subr.mxu0 %v266
    %2439 = vmatpush1.msra.mxu0 %v265
    %2440 = vmatprep.subr.mxu0 %v270
    %2441 = vmatpush1.msra.mxu0 %v269
    %2442 = vmatprep.subr.mxu0 %v274
    %2443 = vmatpush1.msra.mxu0 %v273
    %2444 = vmatprep.subr.mxu0 %v278
    %2445 = vmatpush1.msra.mxu0 %v277
    %2446 = vmatprep.subr.mxu0 0.0
    %2447 = vmatpush1.msra.mxu0 0.0
    %2448 = vmatprep.subr.mxu0 0.0
    %2449 = vmatpush1.msra.mxu0 0.0
    %2450 = vmatprep.subr.mxu0 0.0
    %2451 = vmatpush1.msra.mxu0 0.0
    %2452 = vmatprep.subr.mxu0 0.0
    %2453 = vmatpush1.msra.mxu0 0.0
    %2454 = vmatprep.subr.mxu0 0.0
    %2455 = vmatpush1.msra.mxu0 0.0
    %2456 = vmatprep.subr.mxu0 0.0
    %2457 = vmatpush1.msra.mxu0 0.0
    %2458 = vmatprep.subr.mxu0 0.0
    %2459 = vmatpush1.msra.mxu0 0.0
    %2460 = vmatprep.subr.mxu0 0.0
    %2461 = vmatpush1.msra.mxu0 0.0
    %2462 = vmatprep.subr.mxu0 0.0
    %2463 = vmatpush1.msra.mxu0 0.0
    %2464 = vmatprep.subr.mxu0 0.0
    %2465 = vmatpush1.msra.mxu0 0.0
    %2466 = vmatprep.subr.mxu0 0.0
    %2467 = vmatpush1.msra.mxu0 0.0
    %2468 = vmatprep.subr.mxu0 0.0
    %2469 = vmatpush1.msra.mxu0 0.0
    %2470 = vmatprep.subr.mxu0 0.0
    %2471 = vmatpush1.msra.mxu0 0.0
    %2472 = vmatprep.subr.mxu0 0.0
    %2473 = vmatpush1.msra.mxu0 0.0
    %2474 = vmatprep.subr.mxu0 0.0
    %2475 = vmatpush1.msra.mxu0 0.0
    %2476 = vmatprep.subr.mxu0 0.0
    %2477 = vmatpush1.msra.mxu0 0.0
    %2478 = vmatprep.mubr.f32.mxu0 0.0
    %2479 = vmatmul.mubr.f32.gmra.mrb[0].mxu0 %v2179
    %v2480 = vpop.f32.mrb[0].mxu0
    %v2481 = vadd.f32 0.0, %v2480
    %v2482 = vpop.f32.mrb[0].mxu0
    %v2483 = vadd.f32 0.0, %v2482
    %2484 = vdwg.mxu0
    %v2485 = vadd.f32 %v2339, %v2410
    %v2486 = vadd.f32 %v2340, %v2412
    %v2487 = vadd.f32 %v2341, %v2481
    %v2488 = vadd.f32 %v2342, %v2483
    %v2489 = vmul.f32 %v2332, 0.5
    %v2490 = vtanh.pop %v2489
    %v2491 = vmul.f32 %v2490, 0.5
    %v2492 = vadd.f32 %v2491, 0.5
    %v2493 = vmul.f32 %v2333, 0.5
    %v2494 = vtanh.pop %v2493
    %v2495 = vmul.f32 %v2494, 0.5
    %v2496 = vadd.f32 %v2495, 0.5
    %v2497 = vtanh.pop %v2334
    %v2498 = vmul.f32 %v2335, 0.5
    %v2499 = vtanh.pop %v2498
    %v2500 = vmul.f32 %v2499, 0.5
    %v2501 = vadd.f32 %v2500, 0.5
    %v2502 = vmul.f32 %v2496, %v2176
    %v2503 = vmul.f32 %v2492, %v2497
    %v2504 = vadd.f32 %v2502, %v2503
    %v2505 = vtanh.pop %v2504
    %v2506 = vmul.f32 %v2501, %v2505
    %v2507 = vmul.f32 %v2485, 0.5
    %v2508 = vtanh.pop %v2507
    %v2509 = vmul.f32 %v2508, 0.5
    %v2510 = vadd.f32 %v2509, 0.5
    %v2511 = vmul.f32 %v2486, 0.5
    %v2512 = vtanh.pop %v2511
    %v2513 = vmul.f32 %v2512, 0.5
    %v2514 = vadd.f32 %v2513, 0.5
    %v2515 = vtanh.pop %v2487
    %v2516 = vmul.f32 %v2488, 0.5
    %v2517 = vtanh.pop %v2516
    %v2518 = vmul.f32 %v2517, 0.5
    %v2519 = vadd.f32 %v2518, 0.5
    %v2520 = vmul.f32 %v2514, %v2182
    %v2521 = vmul.f32 %v2510, %v2515
    %v2522 = vadd.f32 %v2520, %v2521
    %v2523 = vtanh.pop %v2522
    %v2524 = vmul.f32 %v2519, %v2523
    %s2525 = sadd.s32 %s279, 5
    %v2526 = vstv %s2525
    %vm2527 = vcmp.lt.s32.totalorder %v2526, %v150
    %v2528 = vsel %vm2527, 1, 0
    %v2529 = vcvt.s32.f32 %v2528
    %s2530 = sadd.s32 %s281, 2
    %v2531 = vstv %s2530
    %vm2532 = vcmp.lt.s32.totalorder %v2531, %v150
    %v2533 = vsel %vm2532, 1, 0
    %v2534 = vcvt.s32.f32 %v2533
    %2536 = vset.pattern.permute.xlu0 0
    %2537 = vperm.xlu0 %2536, %v2529
    %v2538 = vpop.permute.xlu0 %2537
    %v2540 = vmul.f32 %v2506, %v2538
    %s2541 = scalar_lea.vmem %s5, 40
    %2542 = vst [vmem:[%s2541] sm:$0xff] %v2540
    %2544 = vset.pattern.permute.xlu0 0
    %2545 = vperm.xlu0 %2544, %v2534
    %v2546 = vpop.permute.xlu0 %2545
    %v2548 = vmul.f32 %v2524, %v2546
    %s2549 = scalar_lea.vmem %s139, 16
    %2550 = vst [vmem:[%s2549] sm:$0xff] %v2548
    %v2551 = vsub.f32 %v2506, %v2173
    %v2552 = vmul.f32 %v2538, %v2551
    %v2553 = vadd.f32 %v2173, %v2552
    %v2554 = vsub.f32 %v2504, %v2176
    %v2555 = vmul.f32 %v2538, %v2554
    %v2556 = vadd.f32 %v2176, %v2555
    %v2557 = vsub.f32 %v2524, %v2179
    %v2558 = vmul.f32 %v2546, %v2557
    %v2559 = vadd.f32 %v2179, %v2558
    %v2560 = vsub.f32 %v2522, %v2182
    %v2561 = vmul.f32 %v2546, %v2560
    %v2562 = vadd.f32 %v2182, %v2561
    %s2563 = scalar_lea.vmem [#allocation6], 96
    %v2564 = vld [vmem:[%s2563] sm:$0xff]
    %v2565 = vld [vmem:[%s2563 + $0x8] sm:$0xff]
    %v2566 = vunpack.c.l.bf16 %v2564
    %v2567 = vunpack.c.h.bf16 %v2564
    %v2568 = vunpack.c.l.bf16 %v2565
    %v2569 = vunpack.c.h.bf16 %v2565
    %2570 = vmatprep.subr.mxu0 %v152
    %2571 = vmatpush1.msra.mxu0 %v151
    %2572 = vmatprep.subr.mxu0 %v156
    %2573 = vmatpush1.msra.mxu0 %v155
    %2574 = vmatprep.subr.mxu0 %v160
    %2575 = vmatpush1.msra.mxu0 %v159
    %2576 = vmatprep.subr.mxu0 %v164
    %2577 = vmatpush1.msra.mxu0 %v163
    %2578 = vmatprep.subr.mxu0 %v168
    %2579 = vmatpush1.msra.mxu0 %v167
    %2580 = vmatprep.subr.mxu0 %v172
    %2581 = vmatpush1.msra.mxu0 %v171
    %2582 = vmatprep.subr.mxu0 %v176
    %2583 = vmatpush1.msra.mxu0 %v175
    %2584 = vmatprep.subr.mxu0 %v180
    %2585 = vmatpush1.msra.mxu0 %v179
    %2586 = vmatprep.subr.mxu0 %v184
    %2587 = vmatpush1.msra.mxu0 %v183
    %2588 = vmatprep.subr.mxu0 %v188
    %2589 = vmatpush1.msra.mxu0 %v187
    %2590 = vmatprep.subr.mxu0 %v192
    %2591 = vmatpush1.msra.mxu0 %v191
    %2592 = vmatprep.subr.mxu0 %v196
    %2593 = vmatpush1.msra.mxu0 %v195
    %2594 = vmatprep.subr.mxu0 %v200
    %2595 = vmatpush1.msra.mxu0 %v199
    %2596 = vmatprep.subr.mxu0 %v204
    %2597 = vmatpush1.msra.mxu0 %v203
    %2598 = vmatprep.subr.mxu0 %v208
    %2599 = vmatpush1.msra.mxu0 %v207
    %2600 = vmatprep.subr.mxu0 %v212
    %2601 = vmatpush1.msra.mxu0 %v211
    %2602 = vmatprep.subr.mxu0 0.0
    %2603 = vmatpush1.msra.mxu0 0.0
    %2604 = vmatprep.subr.mxu0 0.0
    %2605 = vmatpush1.msra.mxu0 0.0
    %2606 = vmatprep.subr.mxu0 0.0
    %2607 = vmatpush1.msra.mxu0 0.0
    %2608 = vmatprep.subr.mxu0 0.0
    %2609 = vmatpush1.msra.mxu0 0.0
    %2610 = vmatprep.subr.mxu0 0.0
    %2611 = vmatpush1.msra.mxu0 0.0
    %2612 = vmatprep.subr.mxu0 0.0
    %2613 = vmatpush1.msra.mxu0 0.0
    %2614 = vmatprep.subr.mxu0 0.0
    %2615 = vmatpush1.msra.mxu0 0.0
    %2616 = vmatprep.subr.mxu0 0.0
    %2617 = vmatpush1.msra.mxu0 0.0
    %2618 = vmatprep.subr.mxu0 0.0
    %2619 = vmatpush1.msra.mxu0 0.0
    %2620 = vmatprep.subr.mxu0 0.0
    %2621 = vmatpush1.msra.mxu0 0.0
    %2622 = vmatprep.subr.mxu0 0.0
    %2623 = vmatpush1.msra.mxu0 0.0
    %2624 = vmatprep.subr.mxu0 0.0
    %2625 = vmatpush1.msra.mxu0 0.0
    %2626 = vmatprep.subr.mxu0 0.0
    %2627 = vmatpush1.msra.mxu0 0.0
    %2628 = vmatprep.subr.mxu0 0.0
    %2629 = vmatpush1.msra.mxu0 0.0
    %2630 = vmatprep.subr.mxu0 0.0
    %2631 = vmatpush1.msra.mxu0 0.0
    %2632 = vmatprep.subr.mxu0 0.0
    %2633 = vmatpush1.msra.mxu0 0.0
    %2634 = vmatprep.mubr.f32.mxu0 0.0
    %2635 = vmatmul.mubr.f32.gmra.mrb[0].mxu0 %v2553
    %v2636 = vpop.f32.mrb[0].mxu0
    %v2637 = vadd.f32 0.0, %v2636
    %v2638 = vpop.f32.mrb[0].mxu0
    %v2639 = vadd.f32 0.0, %v2638
    %2640 = vdwg.mxu0
    %2641 = vmatprep.subr.mxu0 %v154
    %2642 = vmatpush1.msra.mxu0 %v153
    %2643 = vmatprep.subr.mxu0 %v158
    %2644 = vmatpush1.msra.mxu0 %v157
    %2645 = vmatprep.subr.mxu0 %v162
    %2646 = vmatpush1.msra.mxu0 %v161
    %2647 = vmatprep.subr.mxu0 %v166
    %2648 = vmatpush1.msra.mxu0 %v165
    %2649 = vmatprep.subr.mxu0 %v170
    %2650 = vmatpush1.msra.mxu0 %v169
    %2651 = vmatprep.subr.mxu0 %v174
    %2652 = vmatpush1.msra.mxu0 %v173
    %2653 = vmatprep.subr.mxu0 %v178
    %2654 = vmatpush1.msra.mxu0 %v177
    %2655 = vmatprep.subr.mxu0 %v182
    %2656 = vmatpush1.msra.mxu0 %v181
    %2657 = vmatprep.subr.mxu0 %v186
    %2658 = vmatpush1.msra.mxu0 %v185
    %2659 = vmatprep.subr.mxu0 %v190
    %2660 = vmatpush1.msra.mxu0 %v189
    %2661 = vmatprep.subr.mxu0 %v194
    %2662 = vmatpush1.msra.mxu0 %v193
    %2663 = vmatprep.subr.mxu0 %v198
    %2664 = vmatpush1.msra.mxu0 %v197
    %2665 = vmatprep.subr.mxu0 %v202
    %2666 = vmatpush1.msra.mxu0 %v201
    %2667 = vmatprep.subr.mxu0 %v206
    %2668 = vmatpush1.msra.mxu0 %v205
    %2669 = vmatprep.subr.mxu0 %v210
    %2670 = vmatpush1.msra.mxu0 %v209
    %2671 = vmatprep.subr.mxu0 %v214
    %2672 = vmatpush1.msra.mxu0 %v213
    %2673 = vmatprep.subr.mxu0 0.0
    %2674 = vmatpush1.msra.mxu0 0.0
    %2675 = vmatprep.subr.mxu0 0.0
    %2676 = vmatpush1.msra.mxu0 0.0
    %2677 = vmatprep.subr.mxu0 0.0
    %2678 = vmatpush1.msra.mxu0 0.0
    %2679 = vmatprep.subr.mxu0 0.0
    %2680 = vmatpush1.msra.mxu0 0.0
    %2681 = vmatprep.subr.mxu0 0.0
    %2682 = vmatpush1.msra.mxu0 0.0
    %2683 = vmatprep.subr.mxu0 0.0
    %2684 = vmatpush1.msra.mxu0 0.0
    %2685 = vmatprep.subr.mxu0 0.0
    %2686 = vmatpush1.msra.mxu0 0.0
    %2687 = vmatprep.subr.mxu0 0.0
    %2688 = vmatpush1.msra.mxu0 0.0
    %2689 = vmatprep.subr.mxu0 0.0
    %2690 = vmatpush1.msra.mxu0 0.0
    %2691 = vmatprep.subr.mxu0 0.0
    %2692 = vmatpush1.msra.mxu0 0.0
    %2693 = vmatprep.subr.mxu0 0.0
    %2694 = vmatpush1.msra.mxu0 0.0
    %2695 = vmatprep.subr.mxu0 0.0
    %2696 = vmatpush1.msra.mxu0 0.0
    %2697 = vmatprep.subr.mxu0 0.0
    %2698 = vmatpush1.msra.mxu0 0.0
    %2699 = vmatprep.subr.mxu0 0.0
    %2700 = vmatpush1.msra.mxu0 0.0
    %2701 = vmatprep.subr.mxu0 0.0
    %2702 = vmatpush1.msra.mxu0 0.0
    %2703 = vmatprep.subr.mxu0 0.0
    %2704 = vmatpush1.msra.mxu0 0.0
    %2705 = vmatprep.mubr.f32.mxu0 0.0
    %2706 = vmatmul.mubr.f32.gmra.mrb[0].mxu0 %v2553
    %v2707 = vpop.f32.mrb[0].mxu0
    %v2708 = vadd.f32 0.0, %v2707
    %v2709 = vpop.f32.mrb[0].mxu0
    %v2710 = vadd.f32 0.0, %v2709
    %2711 = vdwg.mxu0
    %v2712 = vadd.f32 %v2566, %v2637
    %v2713 = vadd.f32 %v2567, %v2639
    %v2714 = vadd.f32 %v2568, %v2708
    %v2715 = vadd.f32 %v2569, %v2710
    %s2716 = scalar_lea.vmem [#allocation7], 16
    %v2717 = vld [vmem:[%s2716] sm:$0xff]
    %v2718 = vld [vmem:[%s2716 + $0x8] sm:$0xff]
    %v2719 = vunpack.c.l.bf16 %v2717
    %v2720 = vunpack.c.h.bf16 %v2717
    %v2721 = vunpack.c.l.bf16 %v2718
    %v2722 = vunpack.c.h.bf16 %v2718
    %2723 = vmatprep.subr.mxu0 %v216
    %2724 = vmatpush1.msra.mxu0 %v215
    %2725 = vmatprep.subr.mxu0 %v220
    %2726 = vmatpush1.msra.mxu0 %v219
    %2727 = vmatprep.subr.mxu0 %v224
    %2728 = vmatpush1.msra.mxu0 %v223
    %2729 = vmatprep.subr.mxu0 %v228
    %2730 = vmatpush1.msra.mxu0 %v227
    %2731 = vmatprep.subr.mxu0 %v232
    %2732 = vmatpush1.msra.mxu0 %v231
    %2733 = vmatprep.subr.mxu0 %v236
    %2734 = vmatpush1.msra.mxu0 %v235
    %2735 = vmatprep.subr.mxu0 %v240
    %2736 = vmatpush1.msra.mxu0 %v239
    %2737 = vmatprep.subr.mxu0 %v244
    %2738 = vmatpush1.msra.mxu0 %v243
    %2739 = vmatprep.subr.mxu0 %v248
    %2740 = vmatpush1.msra.mxu0 %v247
    %2741 = vmatprep.subr.mxu0 %v252
    %2742 = vmatpush1.msra.mxu0 %v251
    %2743 = vmatprep.subr.mxu0 %v256
    %2744 = vmatpush1.msra.mxu0 %v255
    %2745 = vmatprep.subr.mxu0 %v260
    %2746 = vmatpush1.msra.mxu0 %v259
    %2747 = vmatprep.subr.mxu0 %v264
    %2748 = vmatpush1.msra.mxu0 %v263
    %2749 = vmatprep.subr.mxu0 %v268
    %2750 = vmatpush1.msra.mxu0 %v267
    %2751 = vmatprep.subr.mxu0 %v272
    %2752 = vmatpush1.msra.mxu0 %v271
    %2753 = vmatprep.subr.mxu0 %v276
    %2754 = vmatpush1.msra.mxu0 %v275
    %2755 = vmatprep.subr.mxu0 0.0
    %2756 = vmatpush1.msra.mxu0 0.0
    %2757 = vmatprep.subr.mxu0 0.0
    %2758 = vmatpush1.msra.mxu0 0.0
    %2759 = vmatprep.subr.mxu0 0.0
    %2760 = vmatpush1.msra.mxu0 0.0
    %2761 = vmatprep.subr.mxu0 0.0
    %2762 = vmatpush1.msra.mxu0 0.0
    %2763 = vmatprep.subr.mxu0 0.0
    %2764 = vmatpush1.msra.mxu0 0.0
    %2765 = vmatprep.subr.mxu0 0.0
    %2766 = vmatpush1.msra.mxu0 0.0
    %2767 = vmatprep.subr.mxu0 0.0
    %2768 = vmatpush1.msra.mxu0 0.0
    %2769 = vmatprep.subr.mxu0 0.0
    %2770 = vmatpush1.msra.mxu0 0.0
    %2771 = vmatprep.subr.mxu0 0.0
    %2772 = vmatpush1.msra.mxu0 0.0
    %2773 = vmatprep.subr.mxu0 0.0
    %2774 = vmatpush1.msra.mxu0 0.0
    %2775 = vmatprep.subr.mxu0 0.0
    %2776 = vmatpush1.msra.mxu0 0.0
    %2777 = vmatprep.subr.mxu0 0.0
    %2778 = vmatpush1.msra.mxu0 0.0
    %2779 = vmatprep.subr.mxu0 0.0
    %2780 = vmatpush1.msra.mxu0 0.0
    %2781 = vmatprep.subr.mxu0 0.0
    %2782 = vmatpush1.msra.mxu0 0.0
    %2783 = vmatprep.subr.mxu0 0.0
    %2784 = vmatpush1.msra.mxu0 0.0
    %2785 = vmatprep.subr.mxu0 0.0
    %2786 = vmatpush1.msra.mxu0 0.0
    %2787 = vmatprep.mubr.f32.mxu0 0.0
    %2788 = vmatmul.mubr.f32.gmra.mrb[0].mxu0 %v2559
    %v2789 = vpop.f32.mrb[0].mxu0
    %v2790 = vadd.f32 0.0, %v2789
    %v2791 = vpop.f32.mrb[0].mxu0
    %v2792 = vadd.f32 0.0, %v2791
    %2793 = vdwg.mxu0
    %2794 = vmatprep.subr.mxu0 %v218
    %2795 = vmatpush1.msra.mxu0 %v217
    %2796 = vmatprep.subr.mxu0 %v222
    %2797 = vmatpush1.msra.mxu0 %v221
    %2798 = vmatprep.subr.mxu0 %v226
    %2799 = vmatpush1.msra.mxu0 %v225
    %2800 = vmatprep.subr.mxu0 %v230
    %2801 = vmatpush1.msra.mxu0 %v229
    %2802 = vmatprep.subr.mxu0 %v234
    %2803 = vmatpush1.msra.mxu0 %v233
    %2804 = vmatprep.subr.mxu0 %v238
    %2805 = vmatpush1.msra.mxu0 %v237
    %2806 = vmatprep.subr.mxu0 %v242
    %2807 = vmatpush1.msra.mxu0 %v241
    %2808 = vmatprep.subr.mxu0 %v246
    %2809 = vmatpush1.msra.mxu0 %v245
    %2810 = vmatprep.subr.mxu0 %v250
    %2811 = vmatpush1.msra.mxu0 %v249
    %2812 = vmatprep.subr.mxu0 %v254
    %2813 = vmatpush1.msra.mxu0 %v253
    %2814 = vmatprep.subr.mxu0 %v258
    %2815 = vmatpush1.msra.mxu0 %v257
    %2816 = vmatprep.subr.mxu0 %v262
    %2817 = vmatpush1.msra.mxu0 %v261
    %2818 = vmatprep.subr.mxu0 %v266
    %2819 = vmatpush1.msra.mxu0 %v265
    %2820 = vmatprep.subr.mxu0 %v270
    %2821 = vmatpush1.msra.mxu0 %v269
    %2822 = vmatprep.subr.mxu0 %v274
    %2823 = vmatpush1.msra.mxu0 %v273
    %2824 = vmatprep.subr.mxu0 %v278
    %2825 = vmatpush1.msra.mxu0 %v277
    %2826 = vmatprep.subr.mxu0 0.0
    %2827 = vmatpush1.msra.mxu0 0.0
    %2828 = vmatprep.subr.mxu0 0.0
    %2829 = vmatpush1.msra.mxu0 0.0
    %2830 = vmatprep.subr.mxu0 0.0
    %2831 = vmatpush1.msra.mxu0 0.0
    %2832 = vmatprep.subr.mxu0 0.0
    %2833 = vmatpush1.msra.mxu0 0.0
    %2834 = vmatprep.subr.mxu0 0.0
    %2835 = vmatpush1.msra.mxu0 0.0
    %2836 = vmatprep.subr.mxu0 0.0
    %2837 = vmatpush1.msra.mxu0 0.0
    %2838 = vmatprep.subr.mxu0 0.0
    %2839 = vmatpush1.msra.mxu0 0.0
    %2840 = vmatprep.subr.mxu0 0.0
    %2841 = vmatpush1.msra.mxu0 0.0
    %2842 = vmatprep.subr.mxu0 0.0
    %2843 = vmatpush1.msra.mxu0 0.0
    %2844 = vmatprep.subr.mxu0 0.0
    %2845 = vmatpush1.msra.mxu0 0.0
    %2846 = vmatprep.subr.mxu0 0.0
    %2847 = vmatpush1.msra.mxu0 0.0
    %2848 = vmatprep.subr.mxu0 0.0
    %2849 = vmatpush1.msra.mxu0 0.0
    %2850 = vmatprep.subr.mxu0 0.0
    %2851 = vmatpush1.msra.mxu0 0.0
    %2852 = vmatprep.subr.mxu0 0.0
    %2853 = vmatpush1.msra.mxu0 0.0
    %2854 = vmatprep.subr.mxu0 0.0
    %2855 = vmatpush1.msra.mxu0 0.0
    %2856 = vmatprep.subr.mxu0 0.0
    %2857 = vmatpush1.msra.mxu0 0.0
    %2858 = vmatprep.mubr.f32.mxu0 0.0
    %2859 = vmatmul.mubr.f32.gmra.mrb[0].mxu0 %v2559
    %v2860 = vpop.f32.mrb[0].mxu0
    %v2861 = vadd.f32 0.0, %v2860
    %v2862 = vpop.f32.mrb[0].mxu0
    %v2863 = vadd.f32 0.0, %v2862
    %2864 = vdwg.mxu0
    %v2865 = vadd.f32 %v2719, %v2790
    %v2866 = vadd.f32 %v2720, %v2792
    %v2867 = vadd.f32 %v2721, %v2861
    %v2868 = vadd.f32 %v2722, %v2863
    %v2869 = vmul.f32 %v2712, 0.5
    %v2870 = vtanh.pop %v2869
    %v2871 = vmul.f32 %v2870, 0.5
    %v2872 = vadd.f32 %v2871, 0.5
    %v2873 = vmul.f32 %v2713, 0.5
    %v2874 = vtanh.pop %v2873
    %v2875 = vmul.f32 %v2874, 0.5
    %v2876 = vadd.f32 %v2875, 0.5
    %v2877 = vtanh.pop %v2714
    %v2878 = vmul.f32 %v2715, 0.5
    %v2879 = vtanh.pop %v2878
    %v2880 = vmul.f32 %v2879, 0.5
    %v2881 = vadd.f32 %v2880, 0.5
    %v2882 = vmul.f32 %v2876, %v2556
    %v2883 = vmul.f32 %v2872, %v2877
    %v2884 = vadd.f32 %v2882, %v2883
    %v2885 = vtanh.pop %v2884
    %v2886 = vmul.f32 %v2881, %v2885
    %v2887 = vmul.f32 %v2865, 0.5
    %v2888 = vtanh.pop %v2887
    %v2889 = vmul.f32 %v2888, 0.5
    %v2890 = vadd.f32 %v2889, 0.5
    %v2891 = vmul.f32 %v2866, 0.5
    %v2892 = vtanh.pop %v2891
    %v2893 = vmul.f32 %v2892, 0.5
    %v2894 = vadd.f32 %v2893, 0.5
    %v2895 = vtanh.pop %v2867
    %v2896 = vmul.f32 %v2868, 0.5
    %v2897 = vtanh.pop %v2896
    %v2898 = vmul.f32 %v2897, 0.5
    %v2899 = vadd.f32 %v2898, 0.5
    %v2900 = vmul.f32 %v2894, %v2562
    %v2901 = vmul.f32 %v2890, %v2895
    %v2902 = vadd.f32 %v2900, %v2901
    %v2903 = vtanh.pop %v2902
    %v2904 = vmul.f32 %v2899, %v2903
    %s2905 = sadd.s32 %s279, 6
    %v2906 = vstv %s2905
    %vm2907 = vcmp.lt.s32.totalorder %v2906, %v150
    %v2908 = vsel %vm2907, 1, 0
    %v2909 = vcvt.s32.f32 %v2908
    %s2910 = sadd.s32 %s281, 1
    %v2911 = vstv %s2910
    %vm2912 = vcmp.lt.s32.totalorder %v2911, %v150
    %v2913 = vsel %vm2912, 1, 0
    %v2914 = vcvt.s32.f32 %v2913
    %2916 = vset.pattern.permute.xlu0 0
    %2917 = vperm.xlu0 %2916, %v2909
    %v2918 = vpop.permute.xlu0 %2917
    %v2920 = vmul.f32 %v2886, %v2918
    %s2921 = scalar_lea.vmem %s5, 48
    %2922 = vst [vmem:[%s2921] sm:$0xff] %v2920
    %2924 = vset.pattern.permute.xlu0 0
    %2925 = vperm.xlu0 %2924, %v2914
    %v2926 = vpop.permute.xlu0 %2925
    %v2928 = vmul.f32 %v2904, %v2926
    %s2929 = scalar_lea.vmem %s139, 8
    %2930 = vst [vmem:[%s2929] sm:$0xff] %v2928
    %v2931 = vsub.f32 %v2886, %v2553
    %v2932 = vmul.f32 %v2918, %v2931
    %v2933 = vadd.f32 %v2553, %v2932
    %v2934 = vsub.f32 %v2884, %v2556
    %v2935 = vmul.f32 %v2918, %v2934
    %v2936 = vadd.f32 %v2556, %v2935
    %v2937 = vsub.f32 %v2904, %v2559
    %v2938 = vmul.f32 %v2926, %v2937
    %v2939 = vadd.f32 %v2559, %v2938
    %v2940 = vsub.f32 %v2902, %v2562
    %v2941 = vmul.f32 %v2926, %v2940
    %v2942 = vadd.f32 %v2562, %v2941
    %s2943 = scalar_lea.vmem [#allocation6], 112
    %v2944 = vld [vmem:[%s2943] sm:$0xff]
    %v2945 = vld [vmem:[%s2943 + $0x8] sm:$0xff]
    %v2946 = vunpack.c.l.bf16 %v2944
    %v2947 = vunpack.c.h.bf16 %v2944
    %v2948 = vunpack.c.l.bf16 %v2945
    %v2949 = vunpack.c.h.bf16 %v2945
    %2950 = vmatprep.subr.mxu0 %v152
    %2951 = vmatpush1.msra.mxu0 %v151
    %2952 = vmatprep.subr.mxu0 %v156
    %2953 = vmatpush1.msra.mxu0 %v155
    %2954 = vmatprep.subr.mxu0 %v160
    %2955 = vmatpush1.msra.mxu0 %v159
    %2956 = vmatprep.subr.mxu0 %v164
    %2957 = vmatpush1.msra.mxu0 %v163
    %2958 = vmatprep.subr.mxu0 %v168
    %2959 = vmatpush1.msra.mxu0 %v167
    %2960 = vmatprep.subr.mxu0 %v172
    %2961 = vmatpush1.msra.mxu0 %v171
    %2962 = vmatprep.subr.mxu0 %v176
    %2963 = vmatpush1.msra.mxu0 %v175
    %2964 = vmatprep.subr.mxu0 %v180
    %2965 = vmatpush1.msra.mxu0 %v179
    %2966 = vmatprep.subr.mxu0 %v184
    %2967 = vmatpush1.msra.mxu0 %v183
    %2968 = vmatprep.subr.mxu0 %v188
    %2969 = vmatpush1.msra.mxu0 %v187
    %2970 = vmatprep.subr.mxu0 %v192
    %2971 = vmatpush1.msra.mxu0 %v191
    %2972 = vmatprep.subr.mxu0 %v196
    %2973 = vmatpush1.msra.mxu0 %v195
    %2974 = vmatprep.subr.mxu0 %v200
    %2975 = vmatpush1.msra.mxu0 %v199
    %2976 = vmatprep.subr.mxu0 %v204
    %2977 = vmatpush1.msra.mxu0 %v203
    %2978 = vmatprep.subr.mxu0 %v208
    %2979 = vmatpush1.msra.mxu0 %v207
    %2980 = vmatprep.subr.mxu0 %v212
    %2981 = vmatpush1.msra.mxu0 %v211
    %2982 = vmatprep.subr.mxu0 0.0
    %2983 = vmatpush1.msra.mxu0 0.0
    %2984 = vmatprep.subr.mxu0 0.0
    %2985 = vmatpush1.msra.mxu0 0.0
    %2986 = vmatprep.subr.mxu0 0.0
    %2987 = vmatpush1.msra.mxu0 0.0
    %2988 = vmatprep.subr.mxu0 0.0
    %2989 = vmatpush1.msra.mxu0 0.0
    %2990 = vmatprep.subr.mxu0 0.0
    %2991 = vmatpush1.msra.mxu0 0.0
    %2992 = vmatprep.subr.mxu0 0.0
    %2993 = vmatpush1.msra.mxu0 0.0
    %2994 = vmatprep.subr.mxu0 0.0
    %2995 = vmatpush1.msra.mxu0 0.0
    %2996 = vmatprep.subr.mxu0 0.0
    %2997 = vmatpush1.msra.mxu0 0.0
    %2998 = vmatprep.subr.mxu0 0.0
    %2999 = vmatpush1.msra.mxu0 0.0
    %3000 = vmatprep.subr.mxu0 0.0
    %3001 = vmatpush1.msra.mxu0 0.0
    %3002 = vmatprep.subr.mxu0 0.0
    %3003 = vmatpush1.msra.mxu0 0.0
    %3004 = vmatprep.subr.mxu0 0.0
    %3005 = vmatpush1.msra.mxu0 0.0
    %3006 = vmatprep.subr.mxu0 0.0
    %3007 = vmatpush1.msra.mxu0 0.0
    %3008 = vmatprep.subr.mxu0 0.0
    %3009 = vmatpush1.msra.mxu0 0.0
    %3010 = vmatprep.subr.mxu0 0.0
    %3011 = vmatpush1.msra.mxu0 0.0
    %3012 = vmatprep.subr.mxu0 0.0
    %3013 = vmatpush1.msra.mxu0 0.0
    %3014 = vmatprep.mubr.f32.mxu0 0.0
    %3015 = vmatmul.mubr.f32.gmra.mrb[0].mxu0 %v2933
    %v3016 = vpop.f32.mrb[0].mxu0
    %v3017 = vadd.f32 0.0, %v3016
    %v3018 = vpop.f32.mrb[0].mxu0
    %v3019 = vadd.f32 0.0, %v3018
    %3020 = vdwg.mxu0
    %3021 = vmatprep.subr.mxu0 %v154
    %3022 = vmatpush1.msra.mxu0 %v153
    %3023 = vmatprep.subr.mxu0 %v158
    %3024 = vmatpush1.msra.mxu0 %v157
    %3025 = vmatprep.subr.mxu0 %v162
    %3026 = vmatpush1.msra.mxu0 %v161
    %3027 = vmatprep.subr.mxu0 %v166
    %3028 = vmatpush1.msra.mxu0 %v165
    %3029 = vmatprep.subr.mxu0 %v170
    %3030 = vmatpush1.msra.mxu0 %v169
    %3031 = vmatprep.subr.mxu0 %v174
    %3032 = vmatpush1.msra.mxu0 %v173
    %3033 = vmatprep.subr.mxu0 %v178
    %3034 = vmatpush1.msra.mxu0 %v177
    %3035 = vmatprep.subr.mxu0 %v182
    %3036 = vmatpush1.msra.mxu0 %v181
    %3037 = vmatprep.subr.mxu0 %v186
    %3038 = vmatpush1.msra.mxu0 %v185
    %3039 = vmatprep.subr.mxu0 %v190
    %3040 = vmatpush1.msra.mxu0 %v189
    %3041 = vmatprep.subr.mxu0 %v194
    %3042 = vmatpush1.msra.mxu0 %v193
    %3043 = vmatprep.subr.mxu0 %v198
    %3044 = vmatpush1.msra.mxu0 %v197
    %3045 = vmatprep.subr.mxu0 %v202
    %3046 = vmatpush1.msra.mxu0 %v201
    %3047 = vmatprep.subr.mxu0 %v206
    %3048 = vmatpush1.msra.mxu0 %v205
    %3049 = vmatprep.subr.mxu0 %v210
    %3050 = vmatpush1.msra.mxu0 %v209
    %3051 = vmatprep.subr.mxu0 %v214
    %3052 = vmatpush1.msra.mxu0 %v213
    %3053 = vmatprep.subr.mxu0 0.0
    %3054 = vmatpush1.msra.mxu0 0.0
    %3055 = vmatprep.subr.mxu0 0.0
    %3056 = vmatpush1.msra.mxu0 0.0
    %3057 = vmatprep.subr.mxu0 0.0
    %3058 = vmatpush1.msra.mxu0 0.0
    %3059 = vmatprep.subr.mxu0 0.0
    %3060 = vmatpush1.msra.mxu0 0.0
    %3061 = vmatprep.subr.mxu0 0.0
    %3062 = vmatpush1.msra.mxu0 0.0
    %3063 = vmatprep.subr.mxu0 0.0
    %3064 = vmatpush1.msra.mxu0 0.0
    %3065 = vmatprep.subr.mxu0 0.0
    %3066 = vmatpush1.msra.mxu0 0.0
    %3067 = vmatprep.subr.mxu0 0.0
    %3068 = vmatpush1.msra.mxu0 0.0
    %3069 = vmatprep.subr.mxu0 0.0
    %3070 = vmatpush1.msra.mxu0 0.0
    %3071 = vmatprep.subr.mxu0 0.0
    %3072 = vmatpush1.msra.mxu0 0.0
    %3073 = vmatprep.subr.mxu0 0.0
    %3074 = vmatpush1.msra.mxu0 0.0
    %3075 = vmatprep.subr.mxu0 0.0
    %3076 = vmatpush1.msra.mxu0 0.0
    %3077 = vmatprep.subr.mxu0 0.0
    %3078 = vmatpush1.msra.mxu0 0.0
    %3079 = vmatprep.subr.mxu0 0.0
    %3080 = vmatpush1.msra.mxu0 0.0
    %3081 = vmatprep.subr.mxu0 0.0
    %3082 = vmatpush1.msra.mxu0 0.0
    %3083 = vmatprep.subr.mxu0 0.0
    %3084 = vmatpush1.msra.mxu0 0.0
    %3085 = vmatprep.mubr.f32.mxu0 0.0
    %3086 = vmatmul.mubr.f32.gmra.mrb[0].mxu0 %v2933
    %v3087 = vpop.f32.mrb[0].mxu0
    %v3088 = vadd.f32 0.0, %v3087
    %v3089 = vpop.f32.mrb[0].mxu0
    %v3090 = vadd.f32 0.0, %v3089
    %3091 = vdwg.mxu0
    %v3092 = vadd.f32 %v2946, %v3017
    %v3093 = vadd.f32 %v2947, %v3019
    %v3094 = vadd.f32 %v2948, %v3088
    %v3095 = vadd.f32 %v2949, %v3090
    %v3096 = vld [vmem:[#allocation7] sm:$0xff]
    %v3097 = vld [vmem:[#allocation7 + $0x8] sm:$0xff]
    %v3098 = vunpack.c.l.bf16 %v3096
    %v3099 = vunpack.c.h.bf16 %v3096
    %v3100 = vunpack.c.l.bf16 %v3097
    %v3101 = vunpack.c.h.bf16 %v3097
    %3102 = vmatprep.subr.mxu0 %v216
    %3103 = vmatpush1.msra.mxu0 %v215
    %3104 = vmatprep.subr.mxu0 %v220
    %3105 = vmatpush1.msra.mxu0 %v219
    %3106 = vmatprep.subr.mxu0 %v224
    %3107 = vmatpush1.msra.mxu0 %v223
    %3108 = vmatprep.subr.mxu0 %v228
    %3109 = vmatpush1.msra.mxu0 %v227
    %3110 = vmatprep.subr.mxu0 %v232
    %3111 = vmatpush1.msra.mxu0 %v231
    %3112 = vmatprep.subr.mxu0 %v236
    %3113 = vmatpush1.msra.mxu0 %v235
    %3114 = vmatprep.subr.mxu0 %v240
    %3115 = vmatpush1.msra.mxu0 %v239
    %3116 = vmatprep.subr.mxu0 %v244
    %3117 = vmatpush1.msra.mxu0 %v243
    %3118 = vmatprep.subr.mxu0 %v248
    %3119 = vmatpush1.msra.mxu0 %v247
    %3120 = vmatprep.subr.mxu0 %v252
    %3121 = vmatpush1.msra.mxu0 %v251
    %3122 = vmatprep.subr.mxu0 %v256
    %3123 = vmatpush1.msra.mxu0 %v255
    %3124 = vmatprep.subr.mxu0 %v260
    %3125 = vmatpush1.msra.mxu0 %v259
    %3126 = vmatprep.subr.mxu0 %v264
    %3127 = vmatpush1.msra.mxu0 %v263
    %3128 = vmatprep.subr.mxu0 %v268
    %3129 = vmatpush1.msra.mxu0 %v267
    %3130 = vmatprep.subr.mxu0 %v272
    %3131 = vmatpush1.msra.mxu0 %v271
    %3132 = vmatprep.subr.mxu0 %v276
    %3133 = vmatpush1.msra.mxu0 %v275
    %3134 = vmatprep.subr.mxu0 0.0
    %3135 = vmatpush1.msra.mxu0 0.0
    %3136 = vmatprep.subr.mxu0 0.0
    %3137 = vmatpush1.msra.mxu0 0.0
    %3138 = vmatprep.subr.mxu0 0.0
    %3139 = vmatpush1.msra.mxu0 0.0
    %3140 = vmatprep.subr.mxu0 0.0
    %3141 = vmatpush1.msra.mxu0 0.0
    %3142 = vmatprep.subr.mxu0 0.0
    %3143 = vmatpush1.msra.mxu0 0.0
    %3144 = vmatprep.subr.mxu0 0.0
    %3145 = vmatpush1.msra.mxu0 0.0
    %3146 = vmatprep.subr.mxu0 0.0
    %3147 = vmatpush1.msra.mxu0 0.0
    %3148 = vmatprep.subr.mxu0 0.0
    %3149 = vmatpush1.msra.mxu0 0.0
    %3150 = vmatprep.subr.mxu0 0.0
    %3151 = vmatpush1.msra.mxu0 0.0
    %3152 = vmatprep.subr.mxu0 0.0
    %3153 = vmatpush1.msra.mxu0 0.0
    %3154 = vmatprep.subr.mxu0 0.0
    %3155 = vmatpush1.msra.mxu0 0.0
    %3156 = vmatprep.subr.mxu0 0.0
    %3157 = vmatpush1.msra.mxu0 0.0
    %3158 = vmatprep.subr.mxu0 0.0
    %3159 = vmatpush1.msra.mxu0 0.0
    %3160 = vmatprep.subr.mxu0 0.0
    %3161 = vmatpush1.msra.mxu0 0.0
    %3162 = vmatprep.subr.mxu0 0.0
    %3163 = vmatpush1.msra.mxu0 0.0
    %3164 = vmatprep.subr.mxu0 0.0
    %3165 = vmatpush1.msra.mxu0 0.0
    %3166 = vmatprep.mubr.f32.mxu0 0.0
    %3167 = vmatmul.mubr.f32.gmra.mrb[0].mxu0 %v2939
    %v3168 = vpop.f32.mrb[0].mxu0
    %v3169 = vadd.f32 0.0, %v3168
    %v3170 = vpop.f32.mrb[0].mxu0
    %v3171 = vadd.f32 0.0, %v3170
    %3172 = vdwg.mxu0
    %3173 = vmatprep.subr.mxu0 %v218
    %3174 = vmatpush1.msra.mxu0 %v217
    %3175 = vmatprep.subr.mxu0 %v222
    %3176 = vmatpush1.msra.mxu0 %v221
    %3177 = vmatprep.subr.mxu0 %v226
    %3178 = vmatpush1.msra.mxu0 %v225
    %3179 = vmatprep.subr.mxu0 %v230
    %3180 = vmatpush1.msra.mxu0 %v229
    %3181 = vmatprep.subr.mxu0 %v234
    %3182 = vmatpush1.msra.mxu0 %v233
    %3183 = vmatprep.subr.mxu0 %v238
    %3184 = vmatpush1.msra.mxu0 %v237
    %3185 = vmatprep.subr.mxu0 %v242
    %3186 = vmatpush1.msra.mxu0 %v241
    %3187 = vmatprep.subr.mxu0 %v246
    %3188 = vmatpush1.msra.mxu0 %v245
    %3189 = vmatprep.subr.mxu0 %v250
    %3190 = vmatpush1.msra.mxu0 %v249
    %3191 = vmatprep.subr.mxu0 %v254
    %3192 = vmatpush1.msra.mxu0 %v253
    %3193 = vmatprep.subr.mxu0 %v258
    %3194 = vmatpush1.msra.mxu0 %v257
    %3195 = vmatprep.subr.mxu0 %v262
    %3196 = vmatpush1.msra.mxu0 %v261
    %3197 = vmatprep.subr.mxu0 %v266
    %3198 = vmatpush1.msra.mxu0 %v265
    %3199 = vmatprep.subr.mxu0 %v270
    %3200 = vmatpush1.msra.mxu0 %v269
    %3201 = vmatprep.subr.mxu0 %v274
    %3202 = vmatpush1.msra.mxu0 %v273
    %3203 = vmatprep.subr.mxu0 %v278
    %3204 = vmatpush1.msra.mxu0 %v277
    %3205 = vmatprep.subr.mxu0 0.0
    %3206 = vmatpush1.msra.mxu0 0.0
    %3207 = vmatprep.subr.mxu0 0.0
    %3208 = vmatpush1.msra.mxu0 0.0
    %3209 = vmatprep.subr.mxu0 0.0
    %3210 = vmatpush1.msra.mxu0 0.0
    %3211 = vmatprep.subr.mxu0 0.0
    %3212 = vmatpush1.msra.mxu0 0.0
    %3213 = vmatprep.subr.mxu0 0.0
    %3214 = vmatpush1.msra.mxu0 0.0
    %3215 = vmatprep.subr.mxu0 0.0
    %3216 = vmatpush1.msra.mxu0 0.0
    %3217 = vmatprep.subr.mxu0 0.0
    %3218 = vmatpush1.msra.mxu0 0.0
    %3219 = vmatprep.subr.mxu0 0.0
    %3220 = vmatpush1.msra.mxu0 0.0
    %3221 = vmatprep.subr.mxu0 0.0
    %3222 = vmatpush1.msra.mxu0 0.0
    %3223 = vmatprep.subr.mxu0 0.0
    %3224 = vmatpush1.msra.mxu0 0.0
    %3225 = vmatprep.subr.mxu0 0.0
    %3226 = vmatpush1.msra.mxu0 0.0
    %3227 = vmatprep.subr.mxu0 0.0
    %3228 = vmatpush1.msra.mxu0 0.0
    %3229 = vmatprep.subr.mxu0 0.0
    %3230 = vmatpush1.msra.mxu0 0.0
    %3231 = vmatprep.subr.mxu0 0.0
    %3232 = vmatpush1.msra.mxu0 0.0
    %3233 = vmatprep.subr.mxu0 0.0
    %3234 = vmatpush1.msra.mxu0 0.0
    %3235 = vmatprep.subr.mxu0 0.0
    %3236 = vmatpush1.msra.mxu0 0.0
    %3237 = vmatprep.mubr.f32.mxu0 0.0
    %3238 = vmatmul.mubr.f32.gmra.mrb[0].mxu0 %v2939
    %v3239 = vpop.f32.mrb[0].mxu0
    %v3240 = vadd.f32 0.0, %v3239
    %v3241 = vpop.f32.mrb[0].mxu0
    %v3242 = vadd.f32 0.0, %v3241
    %3243 = vdwg.mxu0
    %v3244 = vadd.f32 %v3098, %v3169
    %v3245 = vadd.f32 %v3099, %v3171
    %v3246 = vadd.f32 %v3100, %v3240
    %v3247 = vadd.f32 %v3101, %v3242
    %v3248 = vmul.f32 %v3092, 0.5
    %v3249 = vtanh.pop %v3248
    %v3250 = vmul.f32 %v3249, 0.5
    %v3251 = vadd.f32 %v3250, 0.5
    %v3252 = vmul.f32 %v3093, 0.5
    %v3253 = vtanh.pop %v3252
    %v3254 = vmul.f32 %v3253, 0.5
    %v3255 = vadd.f32 %v3254, 0.5
    %v3256 = vtanh.pop %v3094
    %v3257 = vmul.f32 %v3095, 0.5
    %v3258 = vtanh.pop %v3257
    %v3259 = vmul.f32 %v3258, 0.5
    %v3260 = vadd.f32 %v3259, 0.5
    %v3261 = vmul.f32 %v3255, %v2936
    %v3262 = vmul.f32 %v3251, %v3256
    %v3263 = vadd.f32 %v3261, %v3262
    %v3264 = vtanh.pop %v3263
    %v3265 = vmul.f32 %v3260, %v3264
    %v3266 = vmul.f32 %v3244, 0.5
    %v3267 = vtanh.pop %v3266
    %v3268 = vmul.f32 %v3267, 0.5
    %v3269 = vadd.f32 %v3268, 0.5
    %v3270 = vmul.f32 %v3245, 0.5
    %v3271 = vtanh.pop %v3270
    %v3272 = vmul.f32 %v3271, 0.5
    %v3273 = vadd.f32 %v3272, 0.5
    %v3274 = vtanh.pop %v3246
    %v3275 = vmul.f32 %v3247, 0.5
    %v3276 = vtanh.pop %v3275
    %v3277 = vmul.f32 %v3276, 0.5
    %v3278 = vadd.f32 %v3277, 0.5
    %v3279 = vmul.f32 %v3273, %v2942
    %v3280 = vmul.f32 %v3269, %v3274
    %v3281 = vadd.f32 %v3279, %v3280
    %v3282 = vtanh.pop %v3281
    %v3283 = vmul.f32 %v3278, %v3282
    %s3284 = sadd.s32 %s279, 7
    %v3285 = vstv %s3284
    %vm3286 = vcmp.lt.s32.totalorder %v3285, %v150
    %v3287 = vsel %vm3286, 1, 0
    %v3288 = vcvt.s32.f32 %v3287
    %v3289 = vstv %s281
    %vm3290 = vcmp.lt.s32.totalorder %v3289, %v150
    %v3291 = vsel %vm3290, 1, 0
    %v3292 = vcvt.s32.f32 %v3291
    %3294 = vset.pattern.permute.xlu0 0
    %3295 = vperm.xlu0 %3294, %v3288
    %v3296 = vpop.permute.xlu0 %3295
    %v3298 = vmul.f32 %v3265, %v3296
    %s3299 = scalar_lea.vmem %s5, 56
    %3300 = vst [vmem:[%s3299] sm:$0xff] %v3298
    %3302 = vset.pattern.permute.xlu0 0
    %3303 = vperm.xlu0 %3302, %v3292
    %v3304 = vpop.permute.xlu0 %3303
    %v3306 = vmul.f32 %v3283, %v3304
    %3307 = vst [vmem:[%s139] sm:$0xff] %v3306
    %v3308 = vsub.f32 %v3265, %v2933
    %v3309 = vmul.f32 %v3296, %v3308
    %v3310 = vadd.f32 %v2933, %v3309
    %v3311 = vsub.f32 %v3263, %v2936
    %v3312 = vmul.f32 %v3296, %v3311
    %v3313 = vadd.f32 %v2936, %v3312
    %v3314 = vsub.f32 %v3283, %v2939
    %v3315 = vmul.f32 %v3304, %v3314
    %v3316 = vadd.f32 %v2939, %v3315
    %v3317 = vsub.f32 %v3281, %v2942
    %v3318 = vmul.f32 %v3304, %v3317
    %v3319 = vadd.f32 %v2942, %v3318
    %3320 = vst [vmem:[#allocation2] sm:$0xff] %v3310
    %3321 = vst [vmem:[#allocation3] sm:$0xff] %v3313
    %3322 = vst [vmem:[#allocation4] sm:$0xff] %v3316
    %3323 = vst [vmem:[#allocation5] sm:$0xff] %v3319
    %s3324 = ssub.s32 0, 0
    %s3325 = smul.u32 8, %s3324
    %p3326 = scmp.lt.s32.totalorder %s3325, 7
    %s3327 = scalar_select %p3326, %s3325, 7
    %s3328 = smul.addr %s3327, 8
    %s3329 = scalar_lea.vmem %s6, %s3328
    // Predicated region
    $region72: #{bilstm_forward.4} parent=1 // pred_check
      _
    $region73: #{bilstm_forward.4} parent=1 // pred_check_branch
      %3331 = sbr.rel (0) target = $region75
    $region74: #{bilstm_forward.4} parent=1 // pred_region
      _
    $region75: #{bilstm_forward.4} parent=1 // pred_fallthru
      _
    // Predicated region
    $region76: #{bilstm_forward.4} parent=1 // pred_check
      _
    $region77: #{bilstm_forward.4} parent=1 // pred_check_branch
      %3333 = sbr.rel (0) target = $region79
    $region78: #{bilstm_forward.4} parent=1 // pred_region
      %s3334 = ssub.s32 0, 0
      %s3335 = smul.u32 8, %s3334
    $region79: #{bilstm_forward.4} parent=1 // pred_fallthru
      _
    // Predicated region
    $region80: #{bilstm_forward.4} parent=1 // pred_check
      _
    $region81: #{bilstm_forward.4} parent=1 // pred_check_branch
      %3337 = sbr.rel (0) target = $region83
    $region82: #{bilstm_forward.4} parent=1 // pred_region
      _
    $region83: #{bilstm_forward.4} parent=1 // pred_fallthru
      _
    // Predicated region
    $region84: #{bilstm_forward.4} parent=1 // pred_check
      _
    $region85: #{bilstm_forward.4} parent=1 // pred_check_branch
      %3339 = sbr.rel (0) target = $region87
    $region86: #{bilstm_forward.4} parent=1 // pred_region
      %s3340 = ssub.s32 0, 0
      %s3341 = smul.u32 8, %s3340
      %p3342 = scmp.lt.s32.totalorder %s3341, 7
      %s3343 = scalar_select %p3342, %s3341, 7
      %s3344 = smul.addr %s3343, 8
      %s3345 = scalar_lea.vmem %s6, %s3344
    $region87: #{bilstm_forward.4} parent=1 // pred_fallthru
      _

</llo_original>
